<compile_context>
chip_gen: v7x
topology: tpu7x:2x2x1
jax: 0.10.0
libtpu: 0.0.40
codegen_flags: <defaults>
</compile_context>

<pallas_src>
import jax
import jax.numpy as jnp
from jax.experimental import pallas as pl
from jax.experimental.pallas import tpu as pltpu

INPUT_SIZE = 28 * 28   # 784  (decoder unflattens to (1, 28, 28))
HIDDEN = 400
HIDDEN_PAD = 512       # hidden dim zero-padded to a multiple of 128 lanes
LATENT = 15
LPAD = 128             # fused mu|logvar slab width (one full lane group)
MU_OFF = 0             # mu packed in lanes [0, 64)
LV_OFF = 64            # logvar packed in lanes [64, 128)


def _round_up(x, m):
    return (x + m - 1) // m * m


def vae_kernel(x_ref, eps_ref,
               w1, b1, w2, b2, w3, b3,                    # encoder (HIDDEN padded to 512)
               wh, bh,                                     # fused 128-lane mu|logvar head
               wd1, bd1, wd2, bd2, wd3, bd3, wd4, bd4,     # decoder
               xhat_ref, heads_ref):
    f32 = jnp.float32
    bf16 = jnp.bfloat16

    # --- encoder: 3x (Linear + ReLU); bf16 MXU inputs, f32 accumulate/elementwise ---
    h = jnp.maximum(jnp.dot(x_ref[...], w1[...], preferred_element_type=f32) + b1[...], 0.0)
    h = jnp.maximum(jnp.dot(h.astype(bf16), w2[...], preferred_element_type=f32) + b2[...], 0.0)
    h = jnp.maximum(jnp.dot(h.astype(bf16), w3[...], preferred_element_type=f32) + b3[...], 0.0)

    # --- fused 128-lane mu|logvar head: one (512, 128) matmul, one lane-dense store ---
    heads = jnp.dot(h.astype(bf16), wh[...], preferred_element_type=f32) + bh[...]
    heads_ref[...] = heads

    # --- reparametrize: z = eps * exp(0.5*logvar) + mu.
    # Roll the slab by 64 lanes so logvar lines up with mu/eps (XLU slot, ~free),
    # then mask padded latent lanes so the decoder sees clean zeros there.
    lv_aligned = pltpu.roll(heads, shift=LV_OFF, axis=1)
    z = eps_ref[...] * jnp.exp(0.5 * lv_aligned) + heads
    lane = jax.lax.broadcasted_iota(jnp.int32, z.shape, dimension=1)
    z = jnp.where(lane < LATENT, z, 0.0)

    # --- decoder: 3x (Linear + ReLU), Linear, Sigmoid; bf16 writeback ---
    d = jnp.maximum(jnp.dot(z.astype(bf16), wd1[...], preferred_element_type=f32) + bd1[...], 0.0)
    d = jnp.maximum(jnp.dot(d.astype(bf16), wd2[...], preferred_element_type=f32) + bd2[...], 0.0)
    d = jnp.maximum(jnp.dot(d.astype(bf16), wd3[...], preferred_element_type=f32) + bd3[...], 0.0)
    logits = jnp.dot(d.astype(bf16), wd4[...], preferred_element_type=f32) + bd4[...]
    xhat_ref[...] = jax.nn.sigmoid(logits).astype(xhat_ref.dtype)


def init_linear(key, fan_in, fan_out):
    """Deterministic PyTorch-style nn.Linear init; weight stored as (in, out), f32."""
    kw, kb = jax.random.split(key)
    bound = 1.0 / jnp.sqrt(jnp.float32(fan_in))
    w = jax.random.uniform(kw, (fan_in, fan_out), jnp.float32, -bound, bound)
    b = jax.random.uniform(kb, (1, fan_out), jnp.float32, -bound, bound)
    return w, b


def make_params(key):
    """f32 'PyTorch-equivalent' parameters (weights stored as (in, out))."""
    keys = jax.random.split(key, 9)
    w1, b1 = init_linear(keys[0], INPUT_SIZE, HIDDEN)
    w2, b2 = init_linear(keys[1], HIDDEN, HIDDEN)
    w3, b3 = init_linear(keys[2], HIDDEN, HIDDEN)
    wmu, bmu = init_linear(keys[3], HIDDEN, LATENT)
    wlv, blv = init_linear(keys[4], HIDDEN, LATENT)
    wd1, bd1 = init_linear(keys[5], LATENT, HIDDEN)
    wd2, bd2 = init_linear(keys[6], HIDDEN, HIDDEN)
    wd3, bd3 = init_linear(keys[7], HIDDEN, HIDDEN)
    wd4, bd4 = init_linear(keys[8], HIDDEN, INPUT_SIZE)
    return (w1, b1, w2, b2, w3, b3, wmu, bmu, wlv, blv,
            wd1, bd1, wd2, bd2, wd3, bd3, wd4, bd4)


def _pad_to(a, rows, cols):
    out = jnp.zeros((rows, cols), jnp.float32)
    return out.at[:a.shape[0], :a.shape[1]].set(a)


def prep_kernel_params(params):
    """bf16 weights, HIDDEN zero-padded 400->512, fused 128-lane mu|logvar head."""
    (w1, b1, w2, b2, w3, b3, wmu, bmu, wlv, blv,
     wd1, bd1, wd2, bd2, wd3, bd3, wd4, bd4) = params
    bf16 = jnp.bfloat16
    H = HIDDEN_PAD

    # fused latent head: mu -> lanes [0, LATENT), logvar -> lanes [LV_OFF, LV_OFF+LATENT)
    wh = jnp.zeros((H, LPAD), jnp.float32)
    wh = wh.at[:HIDDEN, MU_OFF:MU_OFF + LATENT].set(wmu)
    wh = wh.at[:HIDDEN, LV_OFF:LV_OFF + LATENT].set(wlv)
    bh = jnp.zeros((1, LPAD), jnp.float32)
    bh = bh.at[:, MU_OFF:MU_OFF + LATENT].set(bmu[0])
    bh = bh.at[:, LV_OFF:LV_OFF + LATENT].set(blv[0])

    w1p = _pad_to(w1, INPUT_SIZE, H)
    w2p = _pad_to(w2, H, H)
    w3p = _pad_to(w3, H, H)
    wd1p = _pad_to(wd1, LPAD, H)          # only the first LATENT rows are nonzero
    wd2p = _pad_to(wd2, H, H)
    wd3p = _pad_to(wd3, H, H)
    wd4p = _pad_to(wd4, H, INPUT_SIZE)

    b1p = _pad_to(b1, 1, H)
    b2p = _pad_to(b2, 1, H)
    b3p = _pad_to(b3, 1, H)
    bd1p = _pad_to(bd1, 1, H)
    bd2p = _pad_to(bd2, 1, H)
    bd3p = _pad_to(bd3, 1, H)

    # TODO(synk): on v7x the two widest weights (w1, wd4) could be stored fp8 for the
    # MXU; kept bf16 here for v5e/v6e portability and accuracy.
    return (w1p.astype(bf16), b1p, w2p.astype(bf16), b2p, w3p.astype(bf16), b3p,
            wh.astype(bf16), bh,
            wd1p.astype(bf16), bd1p, wd2p.astype(bf16), bd2p,
            wd3p.astype(bf16), bd3p, wd4p.astype(bf16), bd4)


def vae_forward(x_nchw, eps, kparams, *, block_m=512):
    """x_nchw: (N, 1, 28, 28) f32; eps: (N, LATENT) f32 (the randn_like sample)."""
    n = x_nchw.shape[0]
    n8 = _round_up(max(n, 1), 8)

    # Tile the batch so (a) padding is minimal and (b) there are >=2 grid steps
    # whenever the batch allows it, so v7x's 2 TensorCores both get work.
    num_blocks = max(-(-n8 // block_m), 2 if n8 >= 16 else 1)
    tm = _round_up(-(-n8 // num_blocks), 8)
    n_pad = tm * num_blocks

    x = jnp.zeros((n_pad, INPUT_SIZE), jnp.bfloat16).at[:n].set(
        x_nchw.reshape(n, INPUT_SIZE).astype(jnp.bfloat16))
    eps_p = jnp.zeros((n_pad, LPAD), jnp.float32).at[:n, :LATENT].set(eps)

    grid = (num_blocks,)
    row_map = lambda i: (i, 0)
    const_map = lambda i: (0, 0)              # weights/biases resident across grid steps

    in_specs = ([pl.BlockSpec((tm, INPUT_SIZE), row_map),
                 pl.BlockSpec((tm, LPAD), row_map)]
                + [pl.BlockSpec(p.shape, const_map) for p in kparams])
    out_specs = (pl.BlockSpec((tm, INPUT_SIZE), row_map),
                 pl.BlockSpec((tm, LPAD), row_map))

    # cost hints for XLA scheduling
    macs_per_row = (INPUT_SIZE * HIDDEN_PAD + 4 * HIDDEN_PAD * HIDDEN_PAD
                    + 2 * HIDDEN_PAD * LPAD + HIDDEN_PAD * INPUT_SIZE)
    param_bytes = sum(int(p.size) * p.dtype.itemsize for p in kparams)
    bytes_accessed = (int(x.size) * 2 + int(eps_p.size) * 4 + param_bytes
                      + n_pad * INPUT_SIZE * 2 + n_pad * LPAD * 4)

    xhat_flat, heads = pl.pallas_call(
        vae_kernel,
        grid=grid,
        in_specs=in_specs,
        out_specs=out_specs,
        out_shape=(
            jax.ShapeDtypeStruct((n_pad, INPUT_SIZE), jnp.bfloat16),   # bf16 writeback
            jax.ShapeDtypeStruct((n_pad, LPAD), jnp.float32),
        ),
        compiler_params=pltpu.CompilerParams(
            dimension_semantics=("parallel",),
            vmem_limit_bytes=48 << 20,        # safe on v5e/v6e/v7x; per-step need is far lower
        ),
        cost_estimate=pl.CostEstimate(
            flops=2 * n_pad * macs_per_row,
            transcendentals=n_pad * (LPAD + INPUT_SIZE),
            bytes_accessed=bytes_accessed,
        ),
    )(x, eps_p, *kparams)

    x_hat = xhat_flat[:n].astype(jnp.float32).reshape(n, 1, 28, 28)
    mu = heads[:n, MU_OFF:MU_OFF + LATENT]
    logvar = heads[:n, LV_OFF:LV_OFF + LATENT]
    return x_hat, mu, logvar


def vae_forward_ref(x_nchw, eps, params):
    """Pure-JAX reference with the same bf16-in / f32-accumulate dot convention."""
    (w1, b1, w2, b2, w3, b3, wmu, bmu, wlv, blv,
     wd1, bd1, wd2, bd2, wd3, bd3, wd4, bd4) = params
    bf16, f32 = jnp.bfloat16, jnp.float32

    def dot(a, w):
        return jnp.dot(a.astype(bf16), w.astype(bf16), preferred_element_type=f32)

    n = x_nchw.shape[0]
    x = x_nchw.reshape(n, INPUT_SIZE)
    h = jnp.maximum(dot(x, w1) + b1, 0.0)
    h = jnp.maximum(dot(h, w2) + b2, 0.0)
    h = jnp.maximum(dot(h, w3) + b3, 0.0)
    mu = dot(h, wmu) + bmu
    logvar = dot(h, wlv) + blv
    z = eps * jnp.exp(0.5 * logvar) + mu
    d = jnp.maximum(dot(z, wd1) + bd1, 0.0)
    d = jnp.maximum(dot(d, wd2) + bd2, 0.0)
    d = jnp.maximum(dot(d, wd3) + bd3, 0.0)
    x_hat = jax.nn.sigmoid(dot(d, wd4) + bd4).reshape(n, 1, 28, 28)
    return x_hat, mu, logvar


if __name__ == "__main__":
    key = jax.random.PRNGKey(0)
    k_x, k_eps, k_params = jax.random.split(key, 3)

    N = 4
    x = jax.random.uniform(k_x, (N, 1, 28, 28), jnp.float32)   # image-like input
    eps = jax.random.normal(k_eps, (N, LATENT), jnp.float32)   # reparametrize noise
    params = make_params(k_params)
    kparams = prep_kernel_params(params)

    x_hat, mu, logvar = jax.block_until_ready(vae_forward(x, eps, kparams))

    # correctness check against pure-JAX reference (same bf16 dot convention)
    x_hat_r, mu_r, logvar_r = jax.block_until_ready(vae_forward_ref(x, eps, params))
    assert x_hat.shape == (N, 1, 28, 28) and mu.shape == (N, LATENT) and logvar.shape == (N, LATENT)
    assert jnp.allclose(mu, mu_r, atol=5e-3, rtol=5e-3)
    assert jnp.allclose(logvar, logvar_r, atol=5e-3, rtol=5e-3)
    assert jnp.allclose(x_hat, x_hat_r, atol=2e-2, rtol=2e-2)   # x_hat round-trips through bf16

    print("KERNEL_OK")
</pallas_src>

<mosaic_0001>
module attributes {stable_mosaic.version = 11 : i64} {
  func.func @vae_kernel(%arg0: i32, %arg1: memref<8x784xbf16, #tpu.memory_space<vmem>>, %arg2: memref<8x128xf32, #tpu.memory_space<vmem>>, %arg3: memref<784x512xbf16, #tpu.memory_space<vmem>>, %arg4: memref<1x512xf32, #tpu.memory_space<vmem>>, %arg5: memref<512x512xbf16, #tpu.memory_space<vmem>>, %arg6: memref<1x512xf32, #tpu.memory_space<vmem>>, %arg7: memref<512x512xbf16, #tpu.memory_space<vmem>>, %arg8: memref<1x512xf32, #tpu.memory_space<vmem>>, %arg9: memref<512x128xbf16, #tpu.memory_space<vmem>>, %arg10: memref<1x128xf32, #tpu.memory_space<vmem>>, %arg11: memref<128x512xbf16, #tpu.memory_space<vmem>>, %arg12: memref<1x512xf32, #tpu.memory_space<vmem>>, %arg13: memref<512x512xbf16, #tpu.memory_space<vmem>>, %arg14: memref<1x512xf32, #tpu.memory_space<vmem>>, %arg15: memref<512x512xbf16, #tpu.memory_space<vmem>>, %arg16: memref<1x512xf32, #tpu.memory_space<vmem>>, %arg17: memref<512x784xbf16, #tpu.memory_space<vmem>>, %arg18: memref<1x784xf32, #tpu.memory_space<vmem>>, %arg19: memref<8x784xbf16, #tpu.memory_space<vmem>>, %arg20: memref<8x128xf32, #tpu.memory_space<vmem>>) attributes {dimension_semantics = [#tpu.dimension_semantics<parallel>], iteration_bounds = array<i64: 1>, scalar_prefetch = 0 : i64, scratch_operands = 0 : i64, tpu.core_type = #tpu.core_type<tc>, window_params = [{transform_indices = @transform_0, window_bounds = array<i64: 8, 784>}, {transform_indices = @transform_1, window_bounds = array<i64: 8, 128>}, {pipeline_mode = #tpu.pipeline_mode<synchronous>, transform_indices = @transform_2, window_bounds = array<i64: 784, 512>}, {pipeline_mode = #tpu.pipeline_mode<synchronous>, transform_indices = @transform_3, window_bounds = array<i64: 1, 512>}, {pipeline_mode = #tpu.pipeline_mode<synchronous>, transform_indices = @transform_4, window_bounds = array<i64: 512, 512>}, {pipeline_mode = #tpu.pipeline_mode<synchronous>, transform_indices = @transform_5, window_bounds = array<i64: 1, 512>}, {pipeline_mode = #tpu.pipeline_mode<synchronous>, transform_indices = @transform_6, window_bounds = array<i64: 512, 512>}, {pipeline_mode = #tpu.pipeline_mode<synchronous>, transform_indices = @transform_7, window_bounds = array<i64: 1, 512>}, {pipeline_mode = #tpu.pipeline_mode<synchronous>, transform_indices = @transform_8, window_bounds = array<i64: 512, 128>}, {pipeline_mode = #tpu.pipeline_mode<synchronous>, transform_indices = @transform_9, window_bounds = array<i64: 1, 128>}, {pipeline_mode = #tpu.pipeline_mode<synchronous>, transform_indices = @transform_10, window_bounds = array<i64: 128, 512>}, {pipeline_mode = #tpu.pipeline_mode<synchronous>, transform_indices = @transform_11, window_bounds = array<i64: 1, 512>}, {pipeline_mode = #tpu.pipeline_mode<synchronous>, transform_indices = @transform_12, window_bounds = array<i64: 512, 512>}, {pipeline_mode = #tpu.pipeline_mode<synchronous>, transform_indices = @transform_13, window_bounds = array<i64: 1, 512>}, {pipeline_mode = #tpu.pipeline_mode<synchronous>, transform_indices = @transform_14, window_bounds = array<i64: 512, 512>}, {pipeline_mode = #tpu.pipeline_mode<synchronous>, transform_indices = @transform_15, window_bounds = array<i64: 1, 512>}, {pipeline_mode = #tpu.pipeline_mode<synchronous>, transform_indices = @transform_16, window_bounds = array<i64: 512, 784>}, {pipeline_mode = #tpu.pipeline_mode<synchronous>, transform_indices = @transform_17, window_bounds = array<i64: 1, 784>}, {transform_indices = @transform_18, window_bounds = array<i64: 8, 784>}, {transform_indices = @transform_19, window_bounds = array<i64: 8, 128>}]} {
    %c0 = arith.constant 0 : index
    %c0_0 = arith.constant 0 : index
    %0 = vector.load %arg1[%c0, %c0_0] : memref<8x784xbf16, #tpu.memory_space<vmem>>, vector<8x784xbf16>
    %c0_1 = arith.constant 0 : index
    %c0_2 = arith.constant 0 : index
    %1 = vector.load %arg3[%c0_1, %c0_2] : memref<784x512xbf16, #tpu.memory_space<vmem>>, vector<784x512xbf16>
    %cst = arith.constant dense<0.000000e+00> : vector<8x512xf32>
    %2 = tpu.matmul %0, %1, %cst {dimension_numbers = #tpu.dot_dimension_numbers<[1], [0], [0], [1], [0, 0, 1, 1], [], []>} : vector<8x784xbf16>, vector<784x512xbf16>, vector<8x512xf32> -> vector<8x512xf32>
    %c0_3 = arith.constant 0 : index
    %c0_4 = arith.constant 0 : index
    %3 = vector.load %arg4[%c0_3, %c0_4] : memref<1x512xf32, #tpu.memory_space<vmem>>, vector<1x512xf32>
    %4 = vector.broadcast %3 : vector<1x512xf32> to vector<8x512xf32>
    %5 = arith.addf %2, %4 : vector<8x512xf32>
    %cst_5 = arith.constant 0.000000e+00 : f32
    %6 = vector.broadcast %cst_5 : f32 to vector<8x512xf32>
    %7 = arith.maximumf %5, %6 : vector<8x512xf32>
    %8 = arith.truncf %7 : vector<8x512xf32> to vector<8x512xbf16>
    %c0_6 = arith.constant 0 : index
    %c0_7 = arith.constant 0 : index
    %9 = vector.load %arg5[%c0_6, %c0_7] : memref<512x512xbf16, #tpu.memory_space<vmem>>, vector<512x512xbf16>
    %cst_8 = arith.constant dense<0.000000e+00> : vector<8x512xf32>
    %10 = tpu.matmul %8, %9, %cst_8 {dimension_numbers = #tpu.dot_dimension_numbers<[1], [0], [0], [1], [0, 0, 1, 1], [], []>} : vector<8x512xbf16>, vector<512x512xbf16>, vector<8x512xf32> -> vector<8x512xf32>
    %c0_9 = arith.constant 0 : index
    %c0_10 = arith.constant 0 : index
    %11 = vector.load %arg6[%c0_9, %c0_10] : memref<1x512xf32, #tpu.memory_space<vmem>>, vector<1x512xf32>
    %12 = vector.broadcast %11 : vector<1x512xf32> to vector<8x512xf32>
    %13 = arith.addf %10, %12 : vector<8x512xf32>
    %cst_11 = arith.constant 0.000000e+00 : f32
    %14 = vector.broadcast %cst_11 : f32 to vector<8x512xf32>
    %15 = arith.maximumf %13, %14 : vector<8x512xf32>
    %16 = arith.truncf %15 : vector<8x512xf32> to vector<8x512xbf16>
    %c0_12 = arith.constant 0 : index
    %c0_13 = arith.constant 0 : index
    %17 = vector.load %arg7[%c0_12, %c0_13] : memref<512x512xbf16, #tpu.memory_space<vmem>>, vector<512x512xbf16>
    %cst_14 = arith.constant dense<0.000000e+00> : vector<8x512xf32>
    %18 = tpu.matmul %16, %17, %cst_14 {dimension_numbers = #tpu.dot_dimension_numbers<[1], [0], [0], [1], [0, 0, 1, 1], [], []>} : vector<8x512xbf16>, vector<512x512xbf16>, vector<8x512xf32> -> vector<8x512xf32>
    %c0_15 = arith.constant 0 : index
    %c0_16 = arith.constant 0 : index
    %19 = vector.load %arg8[%c0_15, %c0_16] : memref<1x512xf32, #tpu.memory_space<vmem>>, vector<1x512xf32>
    %20 = vector.broadcast %19 : vector<1x512xf32> to vector<8x512xf32>
    %21 = arith.addf %18, %20 : vector<8x512xf32>
    %cst_17 = arith.constant 0.000000e+00 : f32
    %22 = vector.broadcast %cst_17 : f32 to vector<8x512xf32>
    %23 = arith.maximumf %21, %22 : vector<8x512xf32>
    %24 = arith.truncf %23 : vector<8x512xf32> to vector<8x512xbf16>
    %c0_18 = arith.constant 0 : index
    %c0_19 = arith.constant 0 : index
    %25 = vector.load %arg9[%c0_18, %c0_19] : memref<512x128xbf16, #tpu.memory_space<vmem>>, vector<512x128xbf16>
    %cst_20 = arith.constant dense<0.000000e+00> : vector<8x128xf32>
    %26 = tpu.matmul %24, %25, %cst_20 {dimension_numbers = #tpu.dot_dimension_numbers<[1], [0], [0], [1], [0, 0, 1, 1], [], []>} : vector<8x512xbf16>, vector<512x128xbf16>, vector<8x128xf32> -> vector<8x128xf32>
    %c0_21 = arith.constant 0 : index
    %c0_22 = arith.constant 0 : index
    %27 = vector.load %arg10[%c0_21, %c0_22] : memref<1x128xf32, #tpu.memory_space<vmem>>, vector<1x128xf32>
    %28 = vector.broadcast %27 : vector<1x128xf32> to vector<8x128xf32>
    %29 = arith.addf %26, %28 : vector<8x128xf32>
    %c0_23 = arith.constant 0 : index
    %c0_24 = arith.constant 0 : index
    %30 = vector.load %arg20[%c0_23, %c0_24] : memref<8x128xf32, #tpu.memory_space<vmem>>, vector<8x128xf32>
    tpu.vector_store %arg20[%c0_23, %c0_24], %29 {strides = array<i32>} : memref<8x128xf32, #tpu.memory_space<vmem>>, vector<8x128xf32>,
    %c64_i32 = arith.constant 64 : i32
    %31 = tpu.dynamic_rotate %29 by %c64_i32 dim 1 : vector<8x128xf32>, i32 -> vector<8x128xf32>
    %c0_25 = arith.constant 0 : index
    %c0_26 = arith.constant 0 : index
    %32 = vector.load %arg2[%c0_25, %c0_26] : memref<8x128xf32, #tpu.memory_space<vmem>>, vector<8x128xf32>
    %cst_27 = arith.constant 5.000000e-01 : f32
    %33 = vector.broadcast %cst_27 : f32 to vector<8x128xf32>
    %34 = arith.mulf %33, %31 : vector<8x128xf32>
    %35 = math.exp %34 : vector<8x128xf32>
    %36 = arith.mulf %32, %35 : vector<8x128xf32>
    %37 = arith.addf %36, %29 : vector<8x128xf32>
    %38 = tpu.iota {dimensions = array<i32: 1>} : vector<8x128xi32>
    %c15_i32 = arith.constant 15 : i32
    %39 = vector.broadcast %c15_i32 : i32 to vector<8x128xi32>
    %40 = arith.cmpi slt, %38, %39 : vector<8x128xi32>
    %cst_28 = arith.constant 0.000000e+00 : f32
    %41 = vector.broadcast %cst_28 : f32 to vector<8x128xf32>
    %42 = arith.select %40, %37, %41 : vector<8x128xi1>, vector<8x128xf32>
    %43 = arith.truncf %42 : vector<8x128xf32> to vector<8x128xbf16>
    %c0_29 = arith.constant 0 : index
    %c0_30 = arith.constant 0 : index
    %44 = vector.load %arg11[%c0_29, %c0_30] : memref<128x512xbf16, #tpu.memory_space<vmem>>, vector<128x512xbf16>
    %cst_31 = arith.constant dense<0.000000e+00> : vector<8x512xf32>
    %45 = tpu.matmul %43, %44, %cst_31 {dimension_numbers = #tpu.dot_dimension_numbers<[1], [0], [0], [1], [0, 0, 1, 1], [], []>} : vector<8x128xbf16>, vector<128x512xbf16>, vector<8x512xf32> -> vector<8x512xf32>
    %c0_32 = arith.constant 0 : index
    %c0_33 = arith.constant 0 : index
    %46 = vector.load %arg12[%c0_32, %c0_33] : memref<1x512xf32, #tpu.memory_space<vmem>>, vector<1x512xf32>
    %47 = vector.broadcast %46 : vector<1x512xf32> to vector<8x512xf32>
    %48 = arith.addf %45, %47 : vector<8x512xf32>
    %cst_34 = arith.constant 0.000000e+00 : f32
    %49 = vector.broadcast %cst_34 : f32 to vector<8x512xf32>
    %50 = arith.maximumf %48, %49 : vector<8x512xf32>
    %51 = arith.truncf %50 : vector<8x512xf32> to vector<8x512xbf16>
    %c0_35 = arith.constant 0 : index
    %c0_36 = arith.constant 0 : index
    %52 = vector.load %arg13[%c0_35, %c0_36] : memref<512x512xbf16, #tpu.memory_space<vmem>>, vector<512x512xbf16>
    %cst_37 = arith.constant dense<0.000000e+00> : vector<8x512xf32>
    %53 = tpu.matmul %51, %52, %cst_37 {dimension_numbers = #tpu.dot_dimension_numbers<[1], [0], [0], [1], [0, 0, 1, 1], [], []>} : vector<8x512xbf16>, vector<512x512xbf16>, vector<8x512xf32> -> vector<8x512xf32>
    %c0_38 = arith.constant 0 : index
    %c0_39 = arith.constant 0 : index
    %54 = vector.load %arg14[%c0_38, %c0_39] : memref<1x512xf32, #tpu.memory_space<vmem>>, vector<1x512xf32>
    %55 = vector.broadcast %54 : vector<1x512xf32> to vector<8x512xf32>
    %56 = arith.addf %53, %55 : vector<8x512xf32>
    %cst_40 = arith.constant 0.000000e+00 : f32
    %57 = vector.broadcast %cst_40 : f32 to vector<8x512xf32>
    %58 = arith.maximumf %56, %57 : vector<8x512xf32>
    %59 = arith.truncf %58 : vector<8x512xf32> to vector<8x512xbf16>
    %c0_41 = arith.constant 0 : index
    %c0_42 = arith.constant 0 : index
    %60 = vector.load %arg15[%c0_41, %c0_42] : memref<512x512xbf16, #tpu.memory_space<vmem>>, vector<512x512xbf16>
    %cst_43 = arith.constant dense<0.000000e+00> : vector<8x512xf32>
    %61 = tpu.matmul %59, %60, %cst_43 {dimension_numbers = #tpu.dot_dimension_numbers<[1], [0], [0], [1], [0, 0, 1, 1], [], []>} : vector<8x512xbf16>, vector<512x512xbf16>, vector<8x512xf32> -> vector<8x512xf32>
    %c0_44 = arith.constant 0 : index
    %c0_45 = arith.constant 0 : index
    %62 = vector.load %arg16[%c0_44, %c0_45] : memref<1x512xf32, #tpu.memory_space<vmem>>, vector<1x512xf32>
    %63 = vector.broadcast %62 : vector<1x512xf32> to vector<8x512xf32>
    %64 = arith.addf %61, %63 : vector<8x512xf32>
    %cst_46 = arith.constant 0.000000e+00 : f32
    %65 = vector.broadcast %cst_46 : f32 to vector<8x512xf32>
    %66 = arith.maximumf %64, %65 : vector<8x512xf32>
    %67 = arith.truncf %66 : vector<8x512xf32> to vector<8x512xbf16>
    %c0_47 = arith.constant 0 : index
    %c0_48 = arith.constant 0 : index
    %68 = vector.load %arg17[%c0_47, %c0_48] : memref<512x784xbf16, #tpu.memory_space<vmem>>, vector<512x784xbf16>
    %cst_49 = arith.constant dense<0.000000e+00> : vector<8x784xf32>
    %69 = tpu.matmul %67, %68, %cst_49 {dimension_numbers = #tpu.dot_dimension_numbers<[1], [0], [0], [1], [0, 0, 1, 1], [], []>} : vector<8x512xbf16>, vector<512x784xbf16>, vector<8x784xf32> -> vector<8x784xf32>
    %c0_50 = arith.constant 0 : index
    %c0_51 = arith.constant 0 : index
    %70 = vector.load %arg18[%c0_50, %c0_51] : memref<1x784xf32, #tpu.memory_space<vmem>>, vector<1x784xf32>
    %71 = vector.broadcast %70 : vector<1x784xf32> to vector<8x784xf32>
    %72 = arith.addf %69, %71 : vector<8x784xf32>
    %73 = arith.negf %72 : vector<8x784xf32>
    %74 = math.exp %73 : vector<8x784xf32>
    %cst_52 = arith.constant 1.000000e+00 : f32
    %75 = vector.broadcast %cst_52 : f32 to vector<8x784xf32>
    %76 = arith.addf %75, %74 : vector<8x784xf32>
    %77 = arith.divf %75, %76 : vector<8x784xf32>
    %78 = arith.truncf %77 : vector<8x784xf32> to vector<8x784xbf16>
    %c0_53 = arith.constant 0 : index
    %c0_54 = arith.constant 0 : index
    %79 = vector.load %arg19[%c0_53, %c0_54] : memref<8x784xbf16, #tpu.memory_space<vmem>>, vector<8x784xbf16>
    tpu.vector_store %arg19[%c0_53, %c0_54], %78 {strides = array<i32>} : memref<8x784xbf16, #tpu.memory_space<vmem>>, vector<8x784xbf16>,
    return
  }
  func.func @transform_0(%arg0: i32) -> (i32, i32) {
    %c0_i32 = arith.constant 0 : i32
    %c0_i32_0 = arith.constant 0 : i32
    return %arg0, %c0_i32 : i32, i32
  }
  func.func @transform_1(%arg0: i32) -> (i32, i32) {
    %c0_i32 = arith.constant 0 : i32
    %c0_i32_0 = arith.constant 0 : i32
    return %arg0, %c0_i32 : i32, i32
  }
  func.func @transform_2(%arg0: i32) -> (i32, i32) {
    %c0_i32 = arith.constant 0 : i32
    %c0_i32_0 = arith.constant 0 : i32
    %c0_i32_1 = arith.constant 0 : i32
    return %c0_i32, %c0_i32_0 : i32, i32
  }
  func.func @transform_3(%arg0: i32) -> (i32, i32) {
    %c0_i32 = arith.constant 0 : i32
    %c0_i32_0 = arith.constant 0 : i32
    %c0_i32_1 = arith.constant 0 : i32
    return %c0_i32, %c0_i32_0 : i32, i32
  }
  func.func @transform_4(%arg0: i32) -> (i32, i32) {
    %c0_i32 = arith.constant 0 : i32
    %c0_i32_0 = arith.constant 0 : i32
    %c0_i32_1 = arith.constant 0 : i32
    return %c0_i32, %c0_i32_0 : i32, i32
  }
  func.func @transform_5(%arg0: i32) -> (i32, i32) {
    %c0_i32 = arith.constant 0 : i32
    %c0_i32_0 = arith.constant 0 : i32
    %c0_i32_1 = arith.constant 0 : i32
    return %c0_i32, %c0_i32_0 : i32, i32
  }
  func.func @transform_6(%arg0: i32) -> (i32, i32) {
    %c0_i32 = arith.constant 0 : i32
    %c0_i32_0 = arith.constant 0 : i32
    %c0_i32_1 = arith.constant 0 : i32
    return %c0_i32, %c0_i32_0 : i32, i32
  }
  func.func @transform_7(%arg0: i32) -> (i32, i32) {
    %c0_i32 = arith.constant 0 : i32
    %c0_i32_0 = arith.constant 0 : i32
    %c0_i32_1 = arith.constant 0 : i32
    return %c0_i32, %c0_i32_0 : i32, i32
  }
  func.func @transform_8(%arg0: i32) -> (i32, i32) {
    %c0_i32 = arith.constant 0 : i32
    %c0_i32_0 = arith.constant 0 : i32
    %c0_i32_1 = arith.constant 0 : i32
    return %c0_i32, %c0_i32_0 : i32, i32
  }
  func.func @transform_9(%arg0: i32) -> (i32, i32) {
    %c0_i32 = arith.constant 0 : i32
    %c0_i32_0 = arith.constant 0 : i32
    %c0_i32_1 = arith.constant 0 : i32
    return %c0_i32, %c0_i32_0 : i32, i32
  }
  func.func @transform_10(%arg0: i32) -> (i32, i32) {
    %c0_i32 = arith.constant 0 : i32
    %c0_i32_0 = arith.constant 0 : i32
    %c0_i32_1 = arith.constant 0 : i32
    return %c0_i32, %c0_i32_0 : i32, i32
  }
  func.func @transform_11(%arg0: i32) -> (i32, i32) {
    %c0_i32 = arith.constant 0 : i32
    %c0_i32_0 = arith.constant 0 : i32
    %c0_i32_1 = arith.constant 0 : i32
    return %c0_i32, %c0_i32_0 : i32, i32
  }
  func.func @transform_12(%arg0: i32) -> (i32, i32) {
    %c0_i32 = arith.constant 0 : i32
    %c0_i32_0 = arith.constant 0 : i32
    %c0_i32_1 = arith.constant 0 : i32
    return %c0_i32, %c0_i32_0 : i32, i32
  }
  func.func @transform_13(%arg0: i32) -> (i32, i32) {
    %c0_i32 = arith.constant 0 : i32
    %c0_i32_0 = arith.constant 0 : i32
    %c0_i32_1 = arith.constant 0 : i32
    return %c0_i32, %c0_i32_0 : i32, i32
  }
  func.func @transform_14(%arg0: i32) -> (i32, i32) {
    %c0_i32 = arith.constant 0 : i32
    %c0_i32_0 = arith.constant 0 : i32
    %c0_i32_1 = arith.constant 0 : i32
    return %c0_i32, %c0_i32_0 : i32, i32
  }
  func.func @transform_15(%arg0: i32) -> (i32, i32) {
    %c0_i32 = arith.constant 0 : i32
    %c0_i32_0 = arith.constant 0 : i32
    %c0_i32_1 = arith.constant 0 : i32
    return %c0_i32, %c0_i32_0 : i32, i32
  }
  func.func @transform_16(%arg0: i32) -> (i32, i32) {
    %c0_i32 = arith.constant 0 : i32
    %c0_i32_0 = arith.constant 0 : i32
    %c0_i32_1 = arith.constant 0 : i32
    return %c0_i32, %c0_i32_0 : i32, i32
  }
  func.func @transform_17(%arg0: i32) -> (i32, i32) {
    %c0_i32 = arith.constant 0 : i32
    %c0_i32_0 = arith.constant 0 : i32
    %c0_i32_1 = arith.constant 0 : i32
    return %c0_i32, %c0_i32_0 : i32, i32
  }
  func.func @transform_18(%arg0: i32) -> (i32, i32) {
    %c0_i32 = arith.constant 0 : i32
    %c0_i32_0 = arith.constant 0 : i32
    return %arg0, %c0_i32 : i32, i32
  }
  func.func @transform_19(%arg0: i32) -> (i32, i32) {
    %c0_i32 = arith.constant 0 : i32
    %c0_i32_0 = arith.constant 0 : i32
    return %arg0, %c0_i32 : i32, i32
  }
}

</mosaic_0001>

<llo_original>
// kernel: tpu_custom_call.1
$region0: #{tpu_custom_call.1}
  #allocation0 [shape = 'u32[]', space=smem, size = 0x4, offset = 0x4, fixed_abs, tag = 'smem constant byte address 0x4 - core index']
  #allocation1 [shape = 'u32[144,128]{1,0:T(1,128)}', space=vmem, size = 0x12000, scoped, tag = 'internal scratch']
  %s0 = inlined_call_operand.vmem [shape: bf16[8,784], index: 0, kind: input, shape index: {}]
  %s1 = inlined_call_operand.vmem [shape: f32[8,128], index: 1, kind: input, shape index: {}]
  %s2 = inlined_call_operand.vmem [shape: bf16[784,512], index: 2, kind: input, shape index: {}]
  %s3 = inlined_call_operand.vmem [shape: f32[1,512], index: 3, kind: input, shape index: {}]
  %s4 = inlined_call_operand.vmem [shape: bf16[512,512], index: 4, kind: input, shape index: {}]
  %s5 = inlined_call_operand.vmem [shape: f32[1,512], index: 5, kind: input, shape index: {}]
  %s6 = inlined_call_operand.hbm [shape: bf16[512,512], index: 6, kind: input, shape index: {}]
  %s7 = inlined_call_operand.vmem [shape: f32[1,512], index: 7, kind: input, shape index: {}]
  %s8 = inlined_call_operand.vmem [shape: bf16[512,128], index: 8, kind: input, shape index: {}]
  %s9 = inlined_call_operand.vmem [shape: f32[1,128], index: 9, kind: input, shape index: {}]
  %s10 = inlined_call_operand.vmem [shape: bf16[128,512], index: 10, kind: input, shape index: {}]
  %s11 = inlined_call_operand.vmem [shape: f32[1,512], index: 11, kind: input, shape index: {}]
  %s12 = inlined_call_operand.hbm [shape: bf16[512,512], index: 12, kind: input, shape index: {}]
  %s13 = inlined_call_operand.vmem [shape: f32[1,512], index: 13, kind: input, shape index: {}]
  %s14 = inlined_call_operand.hbm [shape: bf16[512,512], index: 14, kind: input, shape index: {}]
  %s15 = inlined_call_operand.vmem [shape: f32[1,512], index: 15, kind: input, shape index: {}]
  %s16 = inlined_call_operand.vmem [shape: bf16[512,784], index: 16, kind: input, shape index: {}]
  %s17 = inlined_call_operand.vmem [shape: f32[1,784], index: 17, kind: input, shape index: {}]
  %s18 = inlined_call_operand.hbm [shape: bf16[8,784], index: 18, kind: output, shape index: {0}]
  %s19 = inlined_call_operand.hbm [shape: f32[8,128], index: 19, kind: output, shape index: {1}]
  %20 = xla_tuple %s18, %s19
  %s21 = sld [smem:[#allocation0]]
  $region102: #{tpu_custom_call.1} parent=0
    _
  %s23 = ssub.s32 1, %s21
  %s24 = scalar_select 0, %s23, %s21
  $region1: #{tpu_custom_call.1} parent=0
    #allocation2 [shape = 'u8[524288]{0}', space=vmem, size = 0x80000, scoped, tag = 'input window, operand 6, single buffered']
    #allocation3 [shape = 's32[1]{0}', space=sflag, size = 0x4, scoped, tag = 'scoped memory for tpu_custom_call.1']
    #allocation4 [shape = 's32[1]{0}', space=sflag, size = 0x4, scoped, tag = 'scoped memory for tpu_custom_call.1']
    #allocation5 [shape = 'u8[524288]{0}', space=vmem, size = 0x80000, scoped, tag = 'input window, operand 12, single buffered']
    #allocation6 [shape = 's32[1]{0}', space=sflag, size = 0x4, scoped, tag = 'scoped memory for tpu_custom_call.1']
    #allocation7 [shape = 'u8[524288]{0}', space=vmem, size = 0x80000, scoped, tag = 'input window, operand 14, single buffered']
    #allocation8 [shape = 'u8[14336]{0}', space=vmem, size = 0x3800, scoped, tag = 'output window, operand 0, single buffered']
    #allocation9 [shape = 'u8[4096]{0}', space=vmem, size = 0x1000, scoped, tag = 'output window, operand 1, single buffered']
    #allocation10 [shape = 's32[1]{0}', space=sflag, size = 0x4, scoped, tag = 'scoped memory for tpu_custom_call.1']
    %25 = vsyncpa [#allocation3], 0
    %26 = vsyncpa [#allocation6], 0
    %27 = vsyncpa [#allocation4], 0
    %28 = vsyncpa [#allocation10], 0
    // Predicated region
    $region2: #{tpu_custom_call.1} parent=1 // pred_check
      _
    $region3: #{tpu_custom_call.1} parent=1 // pred_check_branch
      %30 = sbr.rel (0) target = $region5
    $region4: #{tpu_custom_call.1} parent=1 // pred_region
      _
    $region5: #{tpu_custom_call.1} parent=1 // pred_fallthru
      _
    // Predicated region
    $region6: #{tpu_custom_call.1} parent=1 // pred_check
      _
    $region7: #{tpu_custom_call.1} parent=1 // pred_check_branch
      %32 = sbr.rel (0) target = $region9
    $region8: #{tpu_custom_call.1} parent=1 // pred_region
      _
    $region9: #{tpu_custom_call.1} parent=1 // pred_fallthru
      _
    // Predicated region
    $region10: #{tpu_custom_call.1} parent=1 // pred_check
      _
    $region11: #{tpu_custom_call.1} parent=1 // pred_check_branch
      %34 = sbr.rel (0) target = $region13
    $region12: #{tpu_custom_call.1} parent=1 // pred_region
      _
    $region13: #{tpu_custom_call.1} parent=1 // pred_fallthru
      _
    // Predicated region
    $region14: #{tpu_custom_call.1} parent=1 // pred_check
      _
    $region15: #{tpu_custom_call.1} parent=1 // pred_check_branch
      %36 = sbr.rel (0) target = $region17
    $region16: #{tpu_custom_call.1} parent=1 // pred_region
      _
    $region17: #{tpu_custom_call.1} parent=1 // pred_fallthru
      _
    // Predicated region
    $region18: #{tpu_custom_call.1} parent=1 // pred_check
      _
    $region19: #{tpu_custom_call.1} parent=1 // pred_check_branch
      %38 = sbr.rel (0) target = $region21
    $region20: #{tpu_custom_call.1} parent=1 // pred_region
      _
    $region21: #{tpu_custom_call.1} parent=1 // pred_fallthru
      _
    // Predicated region
    $region22: #{tpu_custom_call.1} parent=1 // pred_check
      _
    $region23: #{tpu_custom_call.1} parent=1 // pred_check_branch
      %40 = sbr.rel (0) target = $region25
    $region24: #{tpu_custom_call.1} parent=1 // pred_region
      _
    $region25: #{tpu_custom_call.1} parent=1 // pred_fallthru
      _
    // Predicated region
    $region26: #{tpu_custom_call.1} parent=1 // pred_check
      _
    $region27: #{tpu_custom_call.1} parent=1 // pred_check_branch
      %42 = sbr.rel (0) target = $region29
    $region28: #{tpu_custom_call.1} parent=1 // pred_region
      %s44 = ssub.s32 16384, 16384
      %45 = vsyncadd [#allocation3], %s44
      %s46 = sshll.u32 [#allocation2], 4
      %s47 = int_to_ptr.vmem [resolvable:$true] %s46
      %52 = dma.hbm_to_vmem [thread:$0]  %s6, 16384, %s47, [#allocation3], 256, 256, 16
    $region29: #{tpu_custom_call.1} parent=1 // pred_fallthru
      _
    // Predicated region
    $region30: #{tpu_custom_call.1} parent=1 // pred_check
      _
    $region31: #{tpu_custom_call.1} parent=1 // pred_check_branch
      %54 = sbr.rel (0) target = $region33
    $region32: #{tpu_custom_call.1} parent=1 // pred_region
      _
    $region33: #{tpu_custom_call.1} parent=1 // pred_fallthru
      _
    // Predicated region
    $region34: #{tpu_custom_call.1} parent=1 // pred_check
      _
    $region35: #{tpu_custom_call.1} parent=1 // pred_check_branch
      %56 = sbr.rel (0) target = $region37
    $region36: #{tpu_custom_call.1} parent=1 // pred_region
      _
    $region37: #{tpu_custom_call.1} parent=1 // pred_fallthru
      _
    // Predicated region
    $region38: #{tpu_custom_call.1} parent=1 // pred_check
      _
    $region39: #{tpu_custom_call.1} parent=1 // pred_check_branch
      %58 = sbr.rel (0) target = $region41
    $region40: #{tpu_custom_call.1} parent=1 // pred_region
      _
    $region41: #{tpu_custom_call.1} parent=1 // pred_fallthru
      _
    // Predicated region
    $region42: #{tpu_custom_call.1} parent=1 // pred_check
      _
    $region43: #{tpu_custom_call.1} parent=1 // pred_check_branch
      %60 = sbr.rel (0) target = $region45
    $region44: #{tpu_custom_call.1} parent=1 // pred_region
      _
    $region45: #{tpu_custom_call.1} parent=1 // pred_fallthru
      _
    // Predicated region
    $region46: #{tpu_custom_call.1} parent=1 // pred_check
      _
    $region47: #{tpu_custom_call.1} parent=1 // pred_check_branch
      %62 = sbr.rel (0) target = $region49
    $region48: #{tpu_custom_call.1} parent=1 // pred_region
      _
    $region49: #{tpu_custom_call.1} parent=1 // pred_fallthru
      _
    // Predicated region
    $region50: #{tpu_custom_call.1} parent=1 // pred_check
      _
    $region51: #{tpu_custom_call.1} parent=1 // pred_check_branch
      %64 = sbr.rel (0) target = $region53
    $region52: #{tpu_custom_call.1} parent=1 // pred_region
      %s66 = ssub.s32 16384, 16384
      %67 = vsyncadd [#allocation6], %s66
      %s68 = sshll.u32 [#allocation5], 4
      %s69 = int_to_ptr.vmem [resolvable:$true] %s68
      %74 = dma.hbm_to_vmem [thread:$0]  %s12, 16384, %s69, [#allocation6], 256, 256, 16
    $region53: #{tpu_custom_call.1} parent=1 // pred_fallthru
      _
    // Predicated region
    $region54: #{tpu_custom_call.1} parent=1 // pred_check
      _
    $region55: #{tpu_custom_call.1} parent=1 // pred_check_branch
      %76 = sbr.rel (0) target = $region57
    $region56: #{tpu_custom_call.1} parent=1 // pred_region
      _
    $region57: #{tpu_custom_call.1} parent=1 // pred_fallthru
      _
    // Predicated region
    $region58: #{tpu_custom_call.1} parent=1 // pred_check
      _
    $region59: #{tpu_custom_call.1} parent=1 // pred_check_branch
      %78 = sbr.rel (0) target = $region61
    $region60: #{tpu_custom_call.1} parent=1 // pred_region
      %s80 = ssub.s32 16384, 16384
      %81 = vsyncadd [#allocation6], %s80
      %s82 = sshll.u32 [#allocation7], 4
      %s83 = int_to_ptr.vmem [resolvable:$true] %s82
      %88 = dma.hbm_to_vmem [thread:$0]  %s14, 16384, %s83, [#allocation6], 256, 256, 16
    $region61: #{tpu_custom_call.1} parent=1 // pred_fallthru
      _
    // Predicated region
    $region62: #{tpu_custom_call.1} parent=1 // pred_check
      _
    $region63: #{tpu_custom_call.1} parent=1 // pred_check_branch
      %90 = sbr.rel (0) target = $region65
    $region64: #{tpu_custom_call.1} parent=1 // pred_region
      _
    $region65: #{tpu_custom_call.1} parent=1 // pred_fallthru
      _
    // Predicated region
    $region66: #{tpu_custom_call.1} parent=1 // pred_check
      _
    $region67: #{tpu_custom_call.1} parent=1 // pred_check_branch
      %92 = sbr.rel (0) target = $region69
    $region68: #{tpu_custom_call.1} parent=1 // pred_region
      _
    $region69: #{tpu_custom_call.1} parent=1 // pred_fallthru
      _
    // Predicated region
    $region70: #{tpu_custom_call.1} parent=1 // pred_check
      _
    $region71: #{tpu_custom_call.1} parent=1 // pred_check_branch
      %94 = sbr.rel (0) target = $region73
    $region72: #{tpu_custom_call.1} parent=1 // pred_region
      _
    $region73: #{tpu_custom_call.1} parent=1 // pred_fallthru
      _
    // Predicated region
    $region74: #{tpu_custom_call.1} parent=1 // pred_check
      _
    $region75: #{tpu_custom_call.1} parent=1 // pred_check_branch
      %96 = sbr.rel (0) target = $region77
    $region76: #{tpu_custom_call.1} parent=1 // pred_region
      %97 = dma.done [#allocation3], 16384
    $region77: #{tpu_custom_call.1} parent=1 // pred_fallthru
      _
    // Predicated region
    $region78: #{tpu_custom_call.1} parent=1 // pred_check
      _
    $region79: #{tpu_custom_call.1} parent=1 // pred_check_branch
      %99 = sbr.rel (0) target = $region81
    $region80: #{tpu_custom_call.1} parent=1 // pred_region
      %100 = dma.done [#allocation6], 16384
    $region81: #{tpu_custom_call.1} parent=1 // pred_fallthru
      _
    // Predicated region
    $region82: #{tpu_custom_call.1} parent=1 // pred_check
      _
    $region83: #{tpu_custom_call.1} parent=1 // pred_check_branch
      %102 = sbr.rel (0) target = $region85
    $region84: #{tpu_custom_call.1} parent=1 // pred_region
      %103 = dma.done [#allocation6], 16384
    $region85: #{tpu_custom_call.1} parent=1 // pred_fallthru
      _
    %v105 = vld [vmem:[%s0] sm:$0xff]
    %v106 = vld [vmem:[%s0 + $0x8] sm:$0xff]
    %v107 = vld [vmem:[%s0 + $0x10] sm:$0xff]
    %v108 = vld [vmem:[%s0 + $0x18] sm:$0xf]
    %v109 = vld [vmem:[%s2] sm:$0xff]
    %v110 = vld [vmem:[%s2 + $0x8] sm:$0xff]
    %v111 = vld [vmem:[%s2 + $0x10] sm:$0xff]
    %v112 = vld [vmem:[%s2 + $0x18] sm:$0xff]
    %v113 = vld [vmem:[%s2 + $0x20] sm:$0xff]
    %v114 = vld [vmem:[%s2 + $0x28] sm:$0xff]
    %v115 = vld [vmem:[%s2 + $0x30] sm:$0xff]
    %v116 = vld [vmem:[%s2 + $0x38] sm:$0xff]
    %v117 = vld [vmem:[%s2 + $0x40] sm:$0xff]
    %v118 = vld [vmem:[%s2 + $0x48] sm:$0xff]
    %v119 = vld [vmem:[%s2 + $0x50] sm:$0xff]
    %v120 = vld [vmem:[%s2 + $0x58] sm:$0xff]
    %v121 = vld [vmem:[%s2 + $0x60] sm:$0xff]
    %v122 = vld [vmem:[%s2 + $0x68] sm:$0xff]
    %v123 = vld [vmem:[%s2 + $0x70] sm:$0xff]
    %v124 = vld [vmem:[%s2 + $0x78] sm:$0xff]
    %v125 = vld [vmem:[%s2 + $0x80] sm:$0xff]
    %v126 = vld [vmem:[%s2 + $0x88] sm:$0xff]
    %v127 = vld [vmem:[%s2 + $0x90] sm:$0xff]
    %v128 = vld [vmem:[%s2 + $0x98] sm:$0xff]
    %v129 = vld [vmem:[%s2 + $0xa0] sm:$0xff]
    %v130 = vld [vmem:[%s2 + $0xa8] sm:$0xff]
    %v131 = vld [vmem:[%s2 + $0xb0] sm:$0xff]
    %v132 = vld [vmem:[%s2 + $0xb8] sm:$0xff]
    %v133 = vld [vmem:[%s2 + $0xc0] sm:$0xff]
    %v134 = vld [vmem:[%s2 + $0xc8] sm:$0xff]
    %v135 = vld [vmem:[%s2 + $0xd0] sm:$0xff]
    %v136 = vld [vmem:[%s2 + $0xd8] sm:$0xff]
    %v137 = vld [vmem:[%s2 + $0xe0] sm:$0xff]
    %v138 = vld [vmem:[%s2 + $0xe8] sm:$0xff]
    %v139 = vld [vmem:[%s2 + $0xf0] sm:$0xff]
    %v140 = vld [vmem:[%s2 + $0xf8] sm:$0xff]
    %v141 = vld [vmem:[%s2 + $0x100] sm:$0xff]
    %v142 = vld [vmem:[%s2 + $0x108] sm:$0xff]
    %v143 = vld [vmem:[%s2 + $0x110] sm:$0xff]
    %v144 = vld [vmem:[%s2 + $0x118] sm:$0xff]
    %v145 = vld [vmem:[%s2 + $0x120] sm:$0xff]
    %v146 = vld [vmem:[%s2 + $0x128] sm:$0xff]
    %v147 = vld [vmem:[%s2 + $0x130] sm:$0xff]
    %v148 = vld [vmem:[%s2 + $0x138] sm:$0xff]
    %v149 = vld [vmem:[%s2 + $0x140] sm:$0xff]
    %v150 = vld [vmem:[%s2 + $0x148] sm:$0xff]
    %v151 = vld [vmem:[%s2 + $0x150] sm:$0xff]
    %v152 = vld [vmem:[%s2 + $0x158] sm:$0xff]
    %v153 = vld [vmem:[%s2 + $0x160] sm:$0xff]
    %v154 = vld [vmem:[%s2 + $0x168] sm:$0xff]
    %v155 = vld [vmem:[%s2 + $0x170] sm:$0xff]
    %v156 = vld [vmem:[%s2 + $0x178] sm:$0xff]
    %v157 = vld [vmem:[%s2 + $0x180] sm:$0xff]
    %v158 = vld [vmem:[%s2 + $0x188] sm:$0xff]
    %v159 = vld [vmem:[%s2 + $0x190] sm:$0xff]
    %v160 = vld [vmem:[%s2 + $0x198] sm:$0xff]
    %v161 = vld [vmem:[%s2 + $0x1a0] sm:$0xff]
    %v162 = vld [vmem:[%s2 + $0x1a8] sm:$0xff]
    %v163 = vld [vmem:[%s2 + $0x1b0] sm:$0xff]
    %v164 = vld [vmem:[%s2 + $0x1b8] sm:$0xff]
    %v165 = vld [vmem:[%s2 + $0x1c0] sm:$0xff]
    %v166 = vld [vmem:[%s2 + $0x1c8] sm:$0xff]
    %v167 = vld [vmem:[%s2 + $0x1d0] sm:$0xff]
    %v168 = vld [vmem:[%s2 + $0x1d8] sm:$0xff]
    %v169 = vld [vmem:[%s2 + $0x1e0] sm:$0xff]
    %v170 = vld [vmem:[%s2 + $0x1e8] sm:$0xff]
    %v171 = vld [vmem:[%s2 + $0x1f0] sm:$0xff]
    %v172 = vld [vmem:[%s2 + $0x1f8] sm:$0xff]
    %v173 = vld [vmem:[%s2 + $0x200] sm:$0xff]
    %v174 = vld [vmem:[%s2 + $0x208] sm:$0xff]
    %v175 = vld [vmem:[%s2 + $0x210] sm:$0xff]
    %v176 = vld [vmem:[%s2 + $0x218] sm:$0xff]
    %v177 = vld [vmem:[%s2 + $0x220] sm:$0xff]
    %v178 = vld [vmem:[%s2 + $0x228] sm:$0xff]
    %v179 = vld [vmem:[%s2 + $0x230] sm:$0xff]
    %v180 = vld [vmem:[%s2 + $0x238] sm:$0xff]
    %v181 = vld [vmem:[%s2 + $0x240] sm:$0xff]
    %v182 = vld [vmem:[%s2 + $0x248] sm:$0xff]
    %v183 = vld [vmem:[%s2 + $0x250] sm:$0xff]
    %v184 = vld [vmem:[%s2 + $0x258] sm:$0xff]
    %v185 = vld [vmem:[%s2 + $0x260] sm:$0xff]
    %v186 = vld [vmem:[%s2 + $0x268] sm:$0xff]
    %v187 = vld [vmem:[%s2 + $0x270] sm:$0xff]
    %v188 = vld [vmem:[%s2 + $0x278] sm:$0xff]
    %v189 = vld [vmem:[%s2 + $0x280] sm:$0xff]
    %v190 = vld [vmem:[%s2 + $0x288] sm:$0xff]
    %v191 = vld [vmem:[%s2 + $0x290] sm:$0xff]
    %v192 = vld [vmem:[%s2 + $0x298] sm:$0xff]
    %v193 = vld [vmem:[%s2 + $0x2a0] sm:$0xff]
    %v194 = vld [vmem:[%s2 + $0x2a8] sm:$0xff]
    %v195 = vld [vmem:[%s2 + $0x2b0] sm:$0xff]
    %v196 = vld [vmem:[%s2 + $0x2b8] sm:$0xff]
    %v197 = vld [vmem:[%s2 + $0x2c0] sm:$0xff]
    %v198 = vld [vmem:[%s2 + $0x2c8] sm:$0xff]
    %v199 = vld [vmem:[%s2 + $0x2d0] sm:$0xff]
    %v200 = vld [vmem:[%s2 + $0x2d8] sm:$0xff]
    %v201 = vld [vmem:[%s2 + $0x2e0] sm:$0xff]
    %v202 = vld [vmem:[%s2 + $0x2e8] sm:$0xff]
    %v203 = vld [vmem:[%s2 + $0x2f0] sm:$0xff]
    %v204 = vld [vmem:[%s2 + $0x2f8] sm:$0xff]
    %v205 = vld [vmem:[%s2 + $0x300] sm:$0xff]
    %v206 = vld [vmem:[%s2 + $0x308] sm:$0xff]
    %v207 = vld [vmem:[%s2 + $0x310] sm:$0xff]
    %v208 = vld [vmem:[%s2 + $0x318] sm:$0xff]
    %v209 = vld [vmem:[%s2 + $0x320] sm:$0xff]
    %v210 = vld [vmem:[%s2 + $0x328] sm:$0xff]
    %v211 = vld [vmem:[%s2 + $0x330] sm:$0xff]
    %v212 = vld [vmem:[%s2 + $0x338] sm:$0xff]
    %v213 = vld [vmem:[%s2 + $0x340] sm:$0xff]
    %v214 = vld [vmem:[%s2 + $0x348] sm:$0xff]
    %v215 = vld [vmem:[%s2 + $0x350] sm:$0xff]
    %v216 = vld [vmem:[%s2 + $0x358] sm:$0xff]
    %v217 = vld [vmem:[%s2 + $0x360] sm:$0xff]
    %v218 = vld [vmem:[%s2 + $0x368] sm:$0xff]
    %v219 = vld [vmem:[%s2 + $0x370] sm:$0xff]
    %v220 = vld [vmem:[%s2 + $0x378] sm:$0xff]
    %v221 = vld [vmem:[%s2 + $0x380] sm:$0xff]
    %v222 = vld [vmem:[%s2 + $0x388] sm:$0xff]
    %v223 = vld [vmem:[%s2 + $0x390] sm:$0xff]
    %v224 = vld [vmem:[%s2 + $0x398] sm:$0xff]
    %v225 = vld [vmem:[%s2 + $0x3a0] sm:$0xff]
    %v226 = vld [vmem:[%s2 + $0x3a8] sm:$0xff]
    %v227 = vld [vmem:[%s2 + $0x3b0] sm:$0xff]
    %v228 = vld [vmem:[%s2 + $0x3b8] sm:$0xff]
    %v229 = vld [vmem:[%s2 + $0x3c0] sm:$0xff]
    %v230 = vld [vmem:[%s2 + $0x3c8] sm:$0xff]
    %v231 = vld [vmem:[%s2 + $0x3d0] sm:$0xff]
    %v232 = vld [vmem:[%s2 + $0x3d8] sm:$0xff]
    %v233 = vld [vmem:[%s2 + $0x3e0] sm:$0xff]
    %v234 = vld [vmem:[%s2 + $0x3e8] sm:$0xff]
    %v235 = vld [vmem:[%s2 + $0x3f0] sm:$0xff]
    %v236 = vld [vmem:[%s2 + $0x3f8] sm:$0xff]
    %v237 = vld [vmem:[%s2 + $0x400] sm:$0xff]
    %v238 = vld [vmem:[%s2 + $0x408] sm:$0xff]
    %v239 = vld [vmem:[%s2 + $0x410] sm:$0xff]
    %v240 = vld [vmem:[%s2 + $0x418] sm:$0xff]
    %v241 = vld [vmem:[%s2 + $0x420] sm:$0xff]
    %v242 = vld [vmem:[%s2 + $0x428] sm:$0xff]
    %v243 = vld [vmem:[%s2 + $0x430] sm:$0xff]
    %v244 = vld [vmem:[%s2 + $0x438] sm:$0xff]
    %v245 = vld [vmem:[%s2 + $0x440] sm:$0xff]
    %v246 = vld [vmem:[%s2 + $0x448] sm:$0xff]
    %v247 = vld [vmem:[%s2 + $0x450] sm:$0xff]
    %v248 = vld [vmem:[%s2 + $0x458] sm:$0xff]
    %v249 = vld [vmem:[%s2 + $0x460] sm:$0xff]
    %v250 = vld [vmem:[%s2 + $0x468] sm:$0xff]
    %v251 = vld [vmem:[%s2 + $0x470] sm:$0xff]
    %v252 = vld [vmem:[%s2 + $0x478] sm:$0xff]
    %v253 = vld [vmem:[%s2 + $0x480] sm:$0xff]
    %v254 = vld [vmem:[%s2 + $0x488] sm:$0xff]
    %v255 = vld [vmem:[%s2 + $0x490] sm:$0xff]
    %v256 = vld [vmem:[%s2 + $0x498] sm:$0xff]
    %v257 = vld [vmem:[%s2 + $0x4a0] sm:$0xff]
    %v258 = vld [vmem:[%s2 + $0x4a8] sm:$0xff]
    %v259 = vld [vmem:[%s2 + $0x4b0] sm:$0xff]
    %v260 = vld [vmem:[%s2 + $0x4b8] sm:$0xff]
    %v261 = vld [vmem:[%s2 + $0x4c0] sm:$0xff]
    %v262 = vld [vmem:[%s2 + $0x4c8] sm:$0xff]
    %v263 = vld [vmem:[%s2 + $0x4d0] sm:$0xff]
    %v264 = vld [vmem:[%s2 + $0x4d8] sm:$0xff]
    %v265 = vld [vmem:[%s2 + $0x4e0] sm:$0xff]
    %v266 = vld [vmem:[%s2 + $0x4e8] sm:$0xff]
    %v267 = vld [vmem:[%s2 + $0x4f0] sm:$0xff]
    %v268 = vld [vmem:[%s2 + $0x4f8] sm:$0xff]
    %v269 = vld [vmem:[%s2 + $0x500] sm:$0xff]
    %v270 = vld [vmem:[%s2 + $0x508] sm:$0xff]
    %v271 = vld [vmem:[%s2 + $0x510] sm:$0xff]
    %v272 = vld [vmem:[%s2 + $0x518] sm:$0xff]
    %v273 = vld [vmem:[%s2 + $0x520] sm:$0xff]
    %v274 = vld [vmem:[%s2 + $0x528] sm:$0xff]
    %v275 = vld [vmem:[%s2 + $0x530] sm:$0xff]
    %v276 = vld [vmem:[%s2 + $0x538] sm:$0xff]
    %v277 = vld [vmem:[%s2 + $0x540] sm:$0xff]
    %v278 = vld [vmem:[%s2 + $0x548] sm:$0xff]
    %v279 = vld [vmem:[%s2 + $0x550] sm:$0xff]
    %v280 = vld [vmem:[%s2 + $0x558] sm:$0xff]
    %v281 = vld [vmem:[%s2 + $0x560] sm:$0xff]
    %v282 = vld [vmem:[%s2 + $0x568] sm:$0xff]
    %v283 = vld [vmem:[%s2 + $0x570] sm:$0xff]
    %v284 = vld [vmem:[%s2 + $0x578] sm:$0xff]
    %v285 = vld [vmem:[%s2 + $0x580] sm:$0xff]
    %v286 = vld [vmem:[%s2 + $0x588] sm:$0xff]
    %v287 = vld [vmem:[%s2 + $0x590] sm:$0xff]
    %v288 = vld [vmem:[%s2 + $0x598] sm:$0xff]
    %v289 = vld [vmem:[%s2 + $0x5a0] sm:$0xff]
    %v290 = vld [vmem:[%s2 + $0x5a8] sm:$0xff]
    %v291 = vld [vmem:[%s2 + $0x5b0] sm:$0xff]
    %v292 = vld [vmem:[%s2 + $0x5b8] sm:$0xff]
    %v293 = vld [vmem:[%s2 + $0x5c0] sm:$0xff]
    %v294 = vld [vmem:[%s2 + $0x5c8] sm:$0xff]
    %v295 = vld [vmem:[%s2 + $0x5d0] sm:$0xff]
    %v296 = vld [vmem:[%s2 + $0x5d8] sm:$0xff]
    %v297 = vld [vmem:[%s2 + $0x5e0] sm:$0xff]
    %v298 = vld [vmem:[%s2 + $0x5e8] sm:$0xff]
    %v299 = vld [vmem:[%s2 + $0x5f0] sm:$0xff]
    %v300 = vld [vmem:[%s2 + $0x5f8] sm:$0xff]
    %v301 = vld [vmem:[%s2 + $0x600] sm:$0xff]
    %v302 = vld [vmem:[%s2 + $0x608] sm:$0xff]
    %v303 = vld [vmem:[%s2 + $0x610] sm:$0xff]
    %v304 = vld [vmem:[%s2 + $0x618] sm:$0xff]
    %v305 = vld [vmem:[%s3] sm:$0xf]
    %v307 = vlaneseq
    %v308 = vshrl.u32 %v307, 7
    %v309 = vsub.s32 0, %v308
    %v310 = vrot.slane %v305, %v309
    %v311 = vlaneseq
    %v312 = vshrl.u32 %v311, 7
    %v313 = vsub.s32 1, %v312
    %v314 = vrot.slane %v305, %v313
    %v315 = vlaneseq
    %v316 = vshrl.u32 %v315, 7
    %v317 = vsub.s32 2, %v316
    %v318 = vrot.slane %v305, %v317
    %v319 = vlaneseq
    %v320 = vshrl.u32 %v319, 7
    %v321 = vsub.s32 3, %v320
    %v322 = vrot.slane %v305, %v321
    %v331 = vunpack.c.l.b16 %v105
    %v332 = vunpack.c.h.b16 %v105
    %v333 = vunpack.c.l.b16 %v106
    %v334 = vunpack.c.h.b16 %v106
    %v335 = vunpack.c.l.b16 %v107
    %v336 = vunpack.c.h.b16 %v107
    %v337 = vunpack.c.l.b16 %v108
    %v338 = vpack.c.b16 %v331, %v331
    %v339 = vpack.c.b16 %v332, %v332
    %v340 = vpack.c.b16 %v333, %v333
    %v341 = vpack.c.b16 %v334, %v334
    %v342 = vpack.c.b16 %v335, %v335
    %v343 = vpack.c.b16 %v336, %v336
    %v344 = vpack.c.b16 %v337, %v337
    %v547 = vunpack.c.l.b16 %v109
    %v548 = vunpack.c.h.b16 %v109
    %v549 = vunpack.c.l.b16 %v110
    %v550 = vunpack.c.h.b16 %v110
    %v551 = vunpack.c.l.b16 %v111
    %v552 = vunpack.c.h.b16 %v111
    %v553 = vunpack.c.l.b16 %v112
    %v554 = vunpack.c.h.b16 %v112
    %v555 = vunpack.c.l.b16 %v113
    %v556 = vunpack.c.h.b16 %v113
    %v557 = vunpack.c.l.b16 %v114
    %v558 = vunpack.c.h.b16 %v114
    %v559 = vunpack.c.l.b16 %v115
    %v560 = vunpack.c.h.b16 %v115
    %v561 = vunpack.c.l.b16 %v116
    %v562 = vunpack.c.h.b16 %v116
    %v563 = vunpack.c.l.b16 %v117
    %v564 = vunpack.c.h.b16 %v117
    %v565 = vunpack.c.l.b16 %v118
    %v566 = vunpack.c.h.b16 %v118
    %v567 = vunpack.c.l.b16 %v119
    %v568 = vunpack.c.h.b16 %v119
    %v569 = vunpack.c.l.b16 %v120
    %v570 = vunpack.c.h.b16 %v120
    %v571 = vunpack.c.l.b16 %v121
    %v572 = vunpack.c.h.b16 %v121
    %v573 = vunpack.c.l.b16 %v122
    %v574 = vunpack.c.h.b16 %v122
    %v575 = vunpack.c.l.b16 %v123
    %v576 = vunpack.c.h.b16 %v123
    %v577 = vunpack.c.l.b16 %v124
    %v578 = vunpack.c.h.b16 %v124
    %v579 = vunpack.c.l.b16 %v125
    %v580 = vunpack.c.h.b16 %v125
    %v581 = vunpack.c.l.b16 %v126
    %v582 = vunpack.c.h.b16 %v126
    %v583 = vunpack.c.l.b16 %v127
    %v584 = vunpack.c.h.b16 %v127
    %v585 = vunpack.c.l.b16 %v128
    %v586 = vunpack.c.h.b16 %v128
    %v587 = vunpack.c.l.b16 %v129
    %v588 = vunpack.c.h.b16 %v129
    %v589 = vunpack.c.l.b16 %v130
    %v590 = vunpack.c.h.b16 %v130
    %v591 = vunpack.c.l.b16 %v131
    %v592 = vunpack.c.h.b16 %v131
    %v593 = vunpack.c.l.b16 %v132
    %v594 = vunpack.c.h.b16 %v132
    %v595 = vunpack.c.l.b16 %v133
    %v596 = vunpack.c.h.b16 %v133
    %v597 = vunpack.c.l.b16 %v134
    %v598 = vunpack.c.h.b16 %v134
    %v599 = vunpack.c.l.b16 %v135
    %v600 = vunpack.c.h.b16 %v135
    %v601 = vunpack.c.l.b16 %v136
    %v602 = vunpack.c.h.b16 %v136
    %v603 = vunpack.c.l.b16 %v137
    %v604 = vunpack.c.h.b16 %v137
    %v605 = vunpack.c.l.b16 %v138
    %v606 = vunpack.c.h.b16 %v138
    %v607 = vunpack.c.l.b16 %v139
    %v608 = vunpack.c.h.b16 %v139
    %v609 = vunpack.c.l.b16 %v140
    %v610 = vunpack.c.h.b16 %v140
    %v611 = vunpack.c.l.b16 %v141
    %v612 = vunpack.c.h.b16 %v141
    %v613 = vunpack.c.l.b16 %v142
    %v614 = vunpack.c.h.b16 %v142
    %v615 = vunpack.c.l.b16 %v143
    %v616 = vunpack.c.h.b16 %v143
    %v617 = vunpack.c.l.b16 %v144
    %v618 = vunpack.c.h.b16 %v144
    %v619 = vunpack.c.l.b16 %v145
    %v620 = vunpack.c.h.b16 %v145
    %v621 = vunpack.c.l.b16 %v146
    %v622 = vunpack.c.h.b16 %v146
    %v623 = vunpack.c.l.b16 %v147
    %v624 = vunpack.c.h.b16 %v147
    %v625 = vunpack.c.l.b16 %v148
    %v626 = vunpack.c.h.b16 %v148
    %v627 = vunpack.c.l.b16 %v149
    %v628 = vunpack.c.h.b16 %v149
    %v629 = vunpack.c.l.b16 %v150
    %v630 = vunpack.c.h.b16 %v150
    %v631 = vunpack.c.l.b16 %v151
    %v632 = vunpack.c.h.b16 %v151
    %v633 = vunpack.c.l.b16 %v152
    %v634 = vunpack.c.h.b16 %v152
    %v635 = vunpack.c.l.b16 %v153
    %v636 = vunpack.c.h.b16 %v153
    %v637 = vunpack.c.l.b16 %v154
    %v638 = vunpack.c.h.b16 %v154
    %v639 = vunpack.c.l.b16 %v155
    %v640 = vunpack.c.h.b16 %v155
    %v641 = vunpack.c.l.b16 %v156
    %v642 = vunpack.c.h.b16 %v156
    %v643 = vunpack.c.l.b16 %v157
    %v644 = vunpack.c.h.b16 %v157
    %v645 = vunpack.c.l.b16 %v158
    %v646 = vunpack.c.h.b16 %v158
    %v647 = vunpack.c.l.b16 %v159
    %v648 = vunpack.c.h.b16 %v159
    %v649 = vunpack.c.l.b16 %v160
    %v650 = vunpack.c.h.b16 %v160
    %v651 = vunpack.c.l.b16 %v161
    %v652 = vunpack.c.h.b16 %v161
    %v653 = vunpack.c.l.b16 %v162
    %v654 = vunpack.c.h.b16 %v162
    %v655 = vunpack.c.l.b16 %v163
    %v656 = vunpack.c.h.b16 %v163
    %v657 = vunpack.c.l.b16 %v164
    %v658 = vunpack.c.h.b16 %v164
    %v659 = vunpack.c.l.b16 %v165
    %v660 = vunpack.c.h.b16 %v165
    %v661 = vunpack.c.l.b16 %v166
    %v662 = vunpack.c.h.b16 %v166
    %v663 = vunpack.c.l.b16 %v167
    %v664 = vunpack.c.h.b16 %v167
    %v665 = vunpack.c.l.b16 %v168
    %v666 = vunpack.c.h.b16 %v168
    %v667 = vunpack.c.l.b16 %v169
    %v668 = vunpack.c.h.b16 %v169
    %v669 = vunpack.c.l.b16 %v170
    %v670 = vunpack.c.h.b16 %v170
    %v671 = vunpack.c.l.b16 %v171
    %v672 = vunpack.c.h.b16 %v171
    %v673 = vunpack.c.l.b16 %v172
    %v674 = vunpack.c.h.b16 %v172
    %v675 = vunpack.c.l.b16 %v173
    %v676 = vunpack.c.h.b16 %v173
    %v677 = vunpack.c.l.b16 %v174
    %v678 = vunpack.c.h.b16 %v174
    %v679 = vunpack.c.l.b16 %v175
    %v680 = vunpack.c.h.b16 %v175
    %v681 = vunpack.c.l.b16 %v176
    %v682 = vunpack.c.h.b16 %v176
    %v683 = vunpack.c.l.b16 %v177
    %v684 = vunpack.c.h.b16 %v177
    %v685 = vunpack.c.l.b16 %v178
    %v686 = vunpack.c.h.b16 %v178
    %v687 = vunpack.c.l.b16 %v179
    %v688 = vunpack.c.h.b16 %v179
    %v689 = vunpack.c.l.b16 %v180
    %v690 = vunpack.c.h.b16 %v180
    %v691 = vunpack.c.l.b16 %v181
    %v692 = vunpack.c.h.b16 %v181
    %v693 = vunpack.c.l.b16 %v182
    %v694 = vunpack.c.h.b16 %v182
    %v695 = vunpack.c.l.b16 %v183
    %v696 = vunpack.c.h.b16 %v183
    %v697 = vunpack.c.l.b16 %v184
    %v698 = vunpack.c.h.b16 %v184
    %v699 = vunpack.c.l.b16 %v185
    %v700 = vunpack.c.h.b16 %v185
    %v701 = vunpack.c.l.b16 %v186
    %v702 = vunpack.c.h.b16 %v186
    %v703 = vunpack.c.l.b16 %v187
    %v704 = vunpack.c.h.b16 %v187
    %v705 = vunpack.c.l.b16 %v188
    %v706 = vunpack.c.h.b16 %v188
    %v707 = vunpack.c.l.b16 %v189
    %v708 = vunpack.c.h.b16 %v189
    %v709 = vunpack.c.l.b16 %v190
    %v710 = vunpack.c.h.b16 %v190
    %v711 = vunpack.c.l.b16 %v191
    %v712 = vunpack.c.h.b16 %v191
    %v713 = vunpack.c.l.b16 %v192
    %v714 = vunpack.c.h.b16 %v192
    %v715 = vunpack.c.l.b16 %v193
    %v716 = vunpack.c.h.b16 %v193
    %v717 = vunpack.c.l.b16 %v194
    %v718 = vunpack.c.h.b16 %v194
    %v719 = vunpack.c.l.b16 %v195
    %v720 = vunpack.c.h.b16 %v195
    %v721 = vunpack.c.l.b16 %v196
    %v722 = vunpack.c.h.b16 %v196
    %v723 = vunpack.c.l.b16 %v197
    %v724 = vunpack.c.h.b16 %v197
    %v725 = vunpack.c.l.b16 %v198
    %v726 = vunpack.c.h.b16 %v198
    %v727 = vunpack.c.l.b16 %v199
    %v728 = vunpack.c.h.b16 %v199
    %v729 = vunpack.c.l.b16 %v200
    %v730 = vunpack.c.h.b16 %v200
    %v731 = vunpack.c.l.b16 %v201
    %v732 = vunpack.c.h.b16 %v201
    %v733 = vunpack.c.l.b16 %v202
    %v734 = vunpack.c.h.b16 %v202
    %v735 = vunpack.c.l.b16 %v203
    %v736 = vunpack.c.h.b16 %v203
    %v737 = vunpack.c.l.b16 %v204
    %v738 = vunpack.c.h.b16 %v204
    %v739 = vunpack.c.l.b16 %v205
    %v740 = vunpack.c.h.b16 %v205
    %v741 = vunpack.c.l.b16 %v206
    %v742 = vunpack.c.h.b16 %v206
    %v743 = vunpack.c.l.b16 %v207
    %v744 = vunpack.c.h.b16 %v207
    %v745 = vunpack.c.l.b16 %v208
    %v746 = vunpack.c.h.b16 %v208
    %v747 = vunpack.c.l.b16 %v209
    %v748 = vunpack.c.h.b16 %v209
    %v749 = vunpack.c.l.b16 %v210
    %v750 = vunpack.c.h.b16 %v210
    %v751 = vunpack.c.l.b16 %v211
    %v752 = vunpack.c.h.b16 %v211
    %v753 = vunpack.c.l.b16 %v212
    %v754 = vunpack.c.h.b16 %v212
    %v755 = vunpack.c.l.b16 %v213
    %v756 = vunpack.c.h.b16 %v213
    %v757 = vunpack.c.l.b16 %v214
    %v758 = vunpack.c.h.b16 %v214
    %v759 = vunpack.c.l.b16 %v215
    %v760 = vunpack.c.h.b16 %v215
    %v761 = vunpack.c.l.b16 %v216
    %v762 = vunpack.c.h.b16 %v216
    %v763 = vunpack.c.l.b16 %v217
    %v764 = vunpack.c.h.b16 %v217
    %v765 = vunpack.c.l.b16 %v218
    %v766 = vunpack.c.h.b16 %v218
    %v767 = vunpack.c.l.b16 %v219
    %v768 = vunpack.c.h.b16 %v219
    %v769 = vunpack.c.l.b16 %v220
    %v770 = vunpack.c.h.b16 %v220
    %v771 = vunpack.c.l.b16 %v221
    %v772 = vunpack.c.h.b16 %v221
    %v773 = vunpack.c.l.b16 %v222
    %v774 = vunpack.c.h.b16 %v222
    %v775 = vunpack.c.l.b16 %v223
    %v776 = vunpack.c.h.b16 %v223
    %v777 = vunpack.c.l.b16 %v224
    %v778 = vunpack.c.h.b16 %v224
    %v779 = vunpack.c.l.b16 %v225
    %v780 = vunpack.c.h.b16 %v225
    %v781 = vunpack.c.l.b16 %v226
    %v782 = vunpack.c.h.b16 %v226
    %v783 = vunpack.c.l.b16 %v227
    %v784 = vunpack.c.h.b16 %v227
    %v785 = vunpack.c.l.b16 %v228
    %v786 = vunpack.c.h.b16 %v228
    %v787 = vunpack.c.l.b16 %v229
    %v788 = vunpack.c.h.b16 %v229
    %v789 = vunpack.c.l.b16 %v230
    %v790 = vunpack.c.h.b16 %v230
    %v791 = vunpack.c.l.b16 %v231
    %v792 = vunpack.c.h.b16 %v231
    %v793 = vunpack.c.l.b16 %v232
    %v794 = vunpack.c.h.b16 %v232
    %v795 = vunpack.c.l.b16 %v233
    %v796 = vunpack.c.h.b16 %v233
    %v797 = vunpack.c.l.b16 %v234
    %v798 = vunpack.c.h.b16 %v234
    %v799 = vunpack.c.l.b16 %v235
    %v800 = vunpack.c.h.b16 %v235
    %v801 = vunpack.c.l.b16 %v236
    %v802 = vunpack.c.h.b16 %v236
    %v803 = vunpack.c.l.b16 %v237
    %v804 = vunpack.c.h.b16 %v237
    %v805 = vunpack.c.l.b16 %v238
    %v806 = vunpack.c.h.b16 %v238
    %v807 = vunpack.c.l.b16 %v239
    %v808 = vunpack.c.h.b16 %v239
    %v809 = vunpack.c.l.b16 %v240
    %v810 = vunpack.c.h.b16 %v240
    %v811 = vunpack.c.l.b16 %v241
    %v812 = vunpack.c.h.b16 %v241
    %v813 = vunpack.c.l.b16 %v242
    %v814 = vunpack.c.h.b16 %v242
    %v815 = vunpack.c.l.b16 %v243
    %v816 = vunpack.c.h.b16 %v243
    %v817 = vunpack.c.l.b16 %v244
    %v818 = vunpack.c.h.b16 %v244
    %v819 = vunpack.c.l.b16 %v245
    %v820 = vunpack.c.h.b16 %v245
    %v821 = vunpack.c.l.b16 %v246
    %v822 = vunpack.c.h.b16 %v246
    %v823 = vunpack.c.l.b16 %v247
    %v824 = vunpack.c.h.b16 %v247
    %v825 = vunpack.c.l.b16 %v248
    %v826 = vunpack.c.h.b16 %v248
    %v827 = vunpack.c.l.b16 %v249
    %v828 = vunpack.c.h.b16 %v249
    %v829 = vunpack.c.l.b16 %v250
    %v830 = vunpack.c.h.b16 %v250
    %v831 = vunpack.c.l.b16 %v251
    %v832 = vunpack.c.h.b16 %v251
    %v833 = vunpack.c.l.b16 %v252
    %v834 = vunpack.c.h.b16 %v252
    %v835 = vunpack.c.l.b16 %v253
    %v836 = vunpack.c.h.b16 %v253
    %v837 = vunpack.c.l.b16 %v254
    %v838 = vunpack.c.h.b16 %v254
    %v839 = vunpack.c.l.b16 %v255
    %v840 = vunpack.c.h.b16 %v255
    %v841 = vunpack.c.l.b16 %v256
    %v842 = vunpack.c.h.b16 %v256
    %v843 = vunpack.c.l.b16 %v257
    %v844 = vunpack.c.h.b16 %v257
    %v845 = vunpack.c.l.b16 %v258
    %v846 = vunpack.c.h.b16 %v258
    %v847 = vunpack.c.l.b16 %v259
    %v848 = vunpack.c.h.b16 %v259
    %v849 = vunpack.c.l.b16 %v260
    %v850 = vunpack.c.h.b16 %v260
    %v851 = vunpack.c.l.b16 %v261
    %v852 = vunpack.c.h.b16 %v261
    %v853 = vunpack.c.l.b16 %v262
    %v854 = vunpack.c.h.b16 %v262
    %v855 = vunpack.c.l.b16 %v263
    %v856 = vunpack.c.h.b16 %v263
    %v857 = vunpack.c.l.b16 %v264
    %v858 = vunpack.c.h.b16 %v264
    %v859 = vunpack.c.l.b16 %v265
    %v860 = vunpack.c.h.b16 %v265
    %v861 = vunpack.c.l.b16 %v266
    %v862 = vunpack.c.h.b16 %v266
    %v863 = vunpack.c.l.b16 %v267
    %v864 = vunpack.c.h.b16 %v267
    %v865 = vunpack.c.l.b16 %v268
    %v866 = vunpack.c.h.b16 %v268
    %v867 = vunpack.c.l.b16 %v269
    %v868 = vunpack.c.h.b16 %v269
    %v869 = vunpack.c.l.b16 %v270
    %v870 = vunpack.c.h.b16 %v270
    %v871 = vunpack.c.l.b16 %v271
    %v872 = vunpack.c.h.b16 %v271
    %v873 = vunpack.c.l.b16 %v272
    %v874 = vunpack.c.h.b16 %v272
    %v875 = vunpack.c.l.b16 %v273
    %v876 = vunpack.c.h.b16 %v273
    %v877 = vunpack.c.l.b16 %v274
    %v878 = vunpack.c.h.b16 %v274
    %v879 = vunpack.c.l.b16 %v275
    %v880 = vunpack.c.h.b16 %v275
    %v881 = vunpack.c.l.b16 %v276
    %v882 = vunpack.c.h.b16 %v276
    %v883 = vunpack.c.l.b16 %v277
    %v884 = vunpack.c.h.b16 %v277
    %v885 = vunpack.c.l.b16 %v278
    %v886 = vunpack.c.h.b16 %v278
    %v887 = vunpack.c.l.b16 %v279
    %v888 = vunpack.c.h.b16 %v279
    %v889 = vunpack.c.l.b16 %v280
    %v890 = vunpack.c.h.b16 %v280
    %v891 = vunpack.c.l.b16 %v281
    %v892 = vunpack.c.h.b16 %v281
    %v893 = vunpack.c.l.b16 %v282
    %v894 = vunpack.c.h.b16 %v282
    %v895 = vunpack.c.l.b16 %v283
    %v896 = vunpack.c.h.b16 %v283
    %v897 = vunpack.c.l.b16 %v284
    %v898 = vunpack.c.h.b16 %v284
    %v899 = vunpack.c.l.b16 %v285
    %v900 = vunpack.c.h.b16 %v285
    %v901 = vunpack.c.l.b16 %v286
    %v902 = vunpack.c.h.b16 %v286
    %v903 = vunpack.c.l.b16 %v287
    %v904 = vunpack.c.h.b16 %v287
    %v905 = vunpack.c.l.b16 %v288
    %v906 = vunpack.c.h.b16 %v288
    %v907 = vunpack.c.l.b16 %v289
    %v908 = vunpack.c.h.b16 %v289
    %v909 = vunpack.c.l.b16 %v290
    %v910 = vunpack.c.h.b16 %v290
    %v911 = vunpack.c.l.b16 %v291
    %v912 = vunpack.c.h.b16 %v291
    %v913 = vunpack.c.l.b16 %v292
    %v914 = vunpack.c.h.b16 %v292
    %v915 = vunpack.c.l.b16 %v293
    %v916 = vunpack.c.h.b16 %v293
    %v917 = vunpack.c.l.b16 %v294
    %v918 = vunpack.c.h.b16 %v294
    %v919 = vunpack.c.l.b16 %v295
    %v920 = vunpack.c.h.b16 %v295
    %v921 = vunpack.c.l.b16 %v296
    %v922 = vunpack.c.h.b16 %v296
    %v923 = vunpack.c.l.b16 %v297
    %v924 = vunpack.c.h.b16 %v297
    %v925 = vunpack.c.l.b16 %v298
    %v926 = vunpack.c.h.b16 %v298
    %v927 = vunpack.c.l.b16 %v299
    %v928 = vunpack.c.h.b16 %v299
    %v929 = vunpack.c.l.b16 %v300
    %v930 = vunpack.c.h.b16 %v300
    %v931 = vunpack.c.l.b16 %v301
    %v932 = vunpack.c.h.b16 %v301
    %v933 = vunpack.c.l.b16 %v302
    %v934 = vunpack.c.h.b16 %v302
    %v935 = vunpack.c.l.b16 %v303
    %v936 = vunpack.c.h.b16 %v303
    %v937 = vunpack.c.l.b16 %v304
    %v938 = vunpack.c.h.b16 %v304
    %v939 = vpack.c.b16 %v551, %v547
    %v940 = vpack.c.b16 %v552, %v548
    %v941 = vpack.c.b16 %v553, %v549
    %v942 = vpack.c.b16 %v554, %v550
    %v943 = vpack.c.b16 %v559, %v555
    %v944 = vpack.c.b16 %v560, %v556
    %v945 = vpack.c.b16 %v561, %v557
    %v946 = vpack.c.b16 %v562, %v558
    %v947 = vpack.c.b16 %v567, %v563
    %v948 = vpack.c.b16 %v568, %v564
    %v949 = vpack.c.b16 %v569, %v565
    %v950 = vpack.c.b16 %v570, %v566
    %v951 = vpack.c.b16 %v575, %v571
    %v952 = vpack.c.b16 %v576, %v572
    %v953 = vpack.c.b16 %v577, %v573
    %v954 = vpack.c.b16 %v578, %v574
    %v955 = vpack.c.b16 %v583, %v579
    %v956 = vpack.c.b16 %v584, %v580
    %v957 = vpack.c.b16 %v585, %v581
    %v958 = vpack.c.b16 %v586, %v582
    %v959 = vpack.c.b16 %v591, %v587
    %v960 = vpack.c.b16 %v592, %v588
    %v961 = vpack.c.b16 %v593, %v589
    %v962 = vpack.c.b16 %v594, %v590
    %v963 = vpack.c.b16 %v599, %v595
    %v964 = vpack.c.b16 %v600, %v596
    %v965 = vpack.c.b16 %v601, %v597
    %v966 = vpack.c.b16 %v602, %v598
    %v967 = vpack.c.b16 %v607, %v603
    %v968 = vpack.c.b16 %v608, %v604
    %v969 = vpack.c.b16 %v609, %v605
    %v970 = vpack.c.b16 %v610, %v606
    %v971 = vpack.c.b16 %v615, %v611
    %v972 = vpack.c.b16 %v616, %v612
    %v973 = vpack.c.b16 %v617, %v613
    %v974 = vpack.c.b16 %v618, %v614
    %v975 = vpack.c.b16 %v623, %v619
    %v976 = vpack.c.b16 %v624, %v620
    %v977 = vpack.c.b16 %v625, %v621
    %v978 = vpack.c.b16 %v626, %v622
    %v979 = vpack.c.b16 %v631, %v627
    %v980 = vpack.c.b16 %v632, %v628
    %v981 = vpack.c.b16 %v633, %v629
    %v982 = vpack.c.b16 %v634, %v630
    %v983 = vpack.c.b16 %v639, %v635
    %v984 = vpack.c.b16 %v640, %v636
    %v985 = vpack.c.b16 %v641, %v637
    %v986 = vpack.c.b16 %v642, %v638
    %v987 = vpack.c.b16 %v647, %v643
    %v988 = vpack.c.b16 %v648, %v644
    %v989 = vpack.c.b16 %v649, %v645
    %v990 = vpack.c.b16 %v650, %v646
    %v991 = vpack.c.b16 %v655, %v651
    %v992 = vpack.c.b16 %v656, %v652
    %v993 = vpack.c.b16 %v657, %v653
    %v994 = vpack.c.b16 %v658, %v654
    %v995 = vpack.c.b16 %v663, %v659
    %v996 = vpack.c.b16 %v664, %v660
    %v997 = vpack.c.b16 %v665, %v661
    %v998 = vpack.c.b16 %v666, %v662
    %v999 = vpack.c.b16 %v671, %v667
    %v1000 = vpack.c.b16 %v672, %v668
    %v1001 = vpack.c.b16 %v673, %v669
    %v1002 = vpack.c.b16 %v674, %v670
    %v1003 = vpack.c.b16 %v679, %v675
    %v1004 = vpack.c.b16 %v680, %v676
    %v1005 = vpack.c.b16 %v681, %v677
    %v1006 = vpack.c.b16 %v682, %v678
    %v1007 = vpack.c.b16 %v687, %v683
    %v1008 = vpack.c.b16 %v688, %v684
    %v1009 = vpack.c.b16 %v689, %v685
    %v1010 = vpack.c.b16 %v690, %v686
    %v1011 = vpack.c.b16 %v695, %v691
    %v1012 = vpack.c.b16 %v696, %v692
    %v1013 = vpack.c.b16 %v697, %v693
    %v1014 = vpack.c.b16 %v698, %v694
    %v1015 = vpack.c.b16 %v703, %v699
    %v1016 = vpack.c.b16 %v704, %v700
    %v1017 = vpack.c.b16 %v705, %v701
    %v1018 = vpack.c.b16 %v706, %v702
    %v1019 = vpack.c.b16 %v711, %v707
    %v1020 = vpack.c.b16 %v712, %v708
    %v1021 = vpack.c.b16 %v713, %v709
    %v1022 = vpack.c.b16 %v714, %v710
    %v1023 = vpack.c.b16 %v719, %v715
    %v1024 = vpack.c.b16 %v720, %v716
    %v1025 = vpack.c.b16 %v721, %v717
    %v1026 = vpack.c.b16 %v722, %v718
    %v1027 = vpack.c.b16 %v727, %v723
    %v1028 = vpack.c.b16 %v728, %v724
    %v1029 = vpack.c.b16 %v729, %v725
    %v1030 = vpack.c.b16 %v730, %v726
    %v1031 = vpack.c.b16 %v735, %v731
    %v1032 = vpack.c.b16 %v736, %v732
    %v1033 = vpack.c.b16 %v737, %v733
    %v1034 = vpack.c.b16 %v738, %v734
    %v1035 = vpack.c.b16 %v743, %v739
    %v1036 = vpack.c.b16 %v744, %v740
    %v1037 = vpack.c.b16 %v745, %v741
    %v1038 = vpack.c.b16 %v746, %v742
    %v1039 = vpack.c.b16 %v751, %v747
    %v1040 = vpack.c.b16 %v752, %v748
    %v1041 = vpack.c.b16 %v753, %v749
    %v1042 = vpack.c.b16 %v754, %v750
    %v1043 = vpack.c.b16 %v759, %v755
    %v1044 = vpack.c.b16 %v760, %v756
    %v1045 = vpack.c.b16 %v761, %v757
    %v1046 = vpack.c.b16 %v762, %v758
    %v1047 = vpack.c.b16 %v767, %v763
    %v1048 = vpack.c.b16 %v768, %v764
    %v1049 = vpack.c.b16 %v769, %v765
    %v1050 = vpack.c.b16 %v770, %v766
    %v1051 = vpack.c.b16 %v775, %v771
    %v1052 = vpack.c.b16 %v776, %v772
    %v1053 = vpack.c.b16 %v777, %v773
    %v1054 = vpack.c.b16 %v778, %v774
    %v1055 = vpack.c.b16 %v783, %v779
    %v1056 = vpack.c.b16 %v784, %v780
    %v1057 = vpack.c.b16 %v785, %v781
    %v1058 = vpack.c.b16 %v786, %v782
    %v1059 = vpack.c.b16 %v791, %v787
    %v1060 = vpack.c.b16 %v792, %v788
    %v1061 = vpack.c.b16 %v793, %v789
    %v1062 = vpack.c.b16 %v794, %v790
    %v1063 = vpack.c.b16 %v799, %v795
    %v1064 = vpack.c.b16 %v800, %v796
    %v1065 = vpack.c.b16 %v801, %v797
    %v1066 = vpack.c.b16 %v802, %v798
    %v1067 = vpack.c.b16 %v807, %v803
    %v1068 = vpack.c.b16 %v808, %v804
    %v1069 = vpack.c.b16 %v809, %v805
    %v1070 = vpack.c.b16 %v810, %v806
    %v1071 = vpack.c.b16 %v815, %v811
    %v1072 = vpack.c.b16 %v816, %v812
    %v1073 = vpack.c.b16 %v817, %v813
    %v1074 = vpack.c.b16 %v818, %v814
    %v1075 = vpack.c.b16 %v823, %v819
    %v1076 = vpack.c.b16 %v824, %v820
    %v1077 = vpack.c.b16 %v825, %v821
    %v1078 = vpack.c.b16 %v826, %v822
    %v1079 = vpack.c.b16 %v831, %v827
    %v1080 = vpack.c.b16 %v832, %v828
    %v1081 = vpack.c.b16 %v833, %v829
    %v1082 = vpack.c.b16 %v834, %v830
    %v1083 = vpack.c.b16 %v839, %v835
    %v1084 = vpack.c.b16 %v840, %v836
    %v1085 = vpack.c.b16 %v841, %v837
    %v1086 = vpack.c.b16 %v842, %v838
    %v1087 = vpack.c.b16 %v847, %v843
    %v1088 = vpack.c.b16 %v848, %v844
    %v1089 = vpack.c.b16 %v849, %v845
    %v1090 = vpack.c.b16 %v850, %v846
    %v1091 = vpack.c.b16 %v855, %v851
    %v1092 = vpack.c.b16 %v856, %v852
    %v1093 = vpack.c.b16 %v857, %v853
    %v1094 = vpack.c.b16 %v858, %v854
    %v1095 = vpack.c.b16 %v863, %v859
    %v1096 = vpack.c.b16 %v864, %v860
    %v1097 = vpack.c.b16 %v865, %v861
    %v1098 = vpack.c.b16 %v866, %v862
    %v1099 = vpack.c.b16 %v871, %v867
    %v1100 = vpack.c.b16 %v872, %v868
    %v1101 = vpack.c.b16 %v873, %v869
    %v1102 = vpack.c.b16 %v874, %v870
    %v1103 = vpack.c.b16 %v879, %v875
    %v1104 = vpack.c.b16 %v880, %v876
    %v1105 = vpack.c.b16 %v881, %v877
    %v1106 = vpack.c.b16 %v882, %v878
    %v1107 = vpack.c.b16 %v887, %v883
    %v1108 = vpack.c.b16 %v888, %v884
    %v1109 = vpack.c.b16 %v889, %v885
    %v1110 = vpack.c.b16 %v890, %v886
    %v1111 = vpack.c.b16 %v895, %v891
    %v1112 = vpack.c.b16 %v896, %v892
    %v1113 = vpack.c.b16 %v897, %v893
    %v1114 = vpack.c.b16 %v898, %v894
    %v1115 = vpack.c.b16 %v903, %v899
    %v1116 = vpack.c.b16 %v904, %v900
    %v1117 = vpack.c.b16 %v905, %v901
    %v1118 = vpack.c.b16 %v906, %v902
    %v1119 = vpack.c.b16 %v911, %v907
    %v1120 = vpack.c.b16 %v912, %v908
    %v1121 = vpack.c.b16 %v913, %v909
    %v1122 = vpack.c.b16 %v914, %v910
    %v1123 = vpack.c.b16 %v919, %v915
    %v1124 = vpack.c.b16 %v920, %v916
    %v1125 = vpack.c.b16 %v921, %v917
    %v1126 = vpack.c.b16 %v922, %v918
    %v1127 = vpack.c.b16 %v927, %v923
    %v1128 = vpack.c.b16 %v928, %v924
    %v1129 = vpack.c.b16 %v929, %v925
    %v1130 = vpack.c.b16 %v930, %v926
    %v1131 = vpack.c.b16 %v935, %v931
    %v1132 = vpack.c.b16 %v936, %v932
    %v1133 = vpack.c.b16 %v937, %v933
    %v1134 = vpack.c.b16 %v938, %v934
    %vm1331 = vcmask 130048
    %v1333 = vsel %vm1331, %v344, 0
    %1335 = vmatprep.subr.bf16.mxu0 %v940
    %1336 = vmatpush1.bf16.msra.mxu0 %v939
    %1337 = vmatprep.subr.bf16.mxu0 %v944
    %1338 = vmatpush1.bf16.msra.mxu0 %v943
    %1339 = vmatprep.subr.bf16.mxu0 %v948
    %1340 = vmatpush1.bf16.msra.mxu0 %v947
    %1341 = vmatprep.subr.bf16.mxu0 %v952
    %1342 = vmatpush1.bf16.msra.mxu0 %v951
    %1343 = vmatprep.subr.bf16.mxu0 %v956
    %1344 = vmatpush1.bf16.msra.mxu0 %v955
    %1345 = vmatprep.subr.bf16.mxu0 %v960
    %1346 = vmatpush1.bf16.msra.mxu0 %v959
    %1347 = vmatprep.subr.bf16.mxu0 %v964
    %1348 = vmatpush1.bf16.msra.mxu0 %v963
    %1349 = vmatprep.subr.bf16.mxu0 %v968
    %1350 = vmatpush1.bf16.msra.mxu0 %v967
    %1351 = vmatprep.subr.bf16.mxu0 %v972
    %1352 = vmatpush1.bf16.msra.mxu0 %v971
    %1353 = vmatprep.subr.bf16.mxu0 %v976
    %1354 = vmatpush1.bf16.msra.mxu0 %v975
    %1355 = vmatprep.subr.bf16.mxu0 %v980
    %1356 = vmatpush1.bf16.msra.mxu0 %v979
    %1357 = vmatprep.subr.bf16.mxu0 %v984
    %1358 = vmatpush1.bf16.msra.mxu0 %v983
    %1359 = vmatprep.subr.bf16.mxu0 %v988
    %1360 = vmatpush1.bf16.msra.mxu0 %v987
    %1361 = vmatprep.subr.bf16.mxu0 %v992
    %1362 = vmatpush1.bf16.msra.mxu0 %v991
    %1363 = vmatprep.subr.bf16.mxu0 %v996
    %1364 = vmatpush1.bf16.msra.mxu0 %v995
    %1365 = vmatprep.subr.bf16.mxu0 %v1000
    %1366 = vmatpush1.bf16.msra.mxu0 %v999
    %1367 = vmatprep.mubr.bf16.mxu0 %v339
    %1368 = vmatmul.mubr.bf16.gmra.mrb[0].mxu0 %v338
    %v1369 = vpop.f32.mrb[0].mxu0
    %v1370 = vadd.f32 %v310, %v1369
    %v1371 = vpop.f32.mrb[0].mxu0
    %v1372 = vadd.f32 %v314, %v1371
    %v1373 = vpop.f32.mrb[0].mxu0
    %v1374 = vpop.f32.mrb[0].mxu0
    %1375 = vdwg.mxu0
    %1376 = vmatprep.subr.bf16.mxu0 %v1004
    %1377 = vmatpush1.bf16.msra.mxu0 %v1003
    %1378 = vmatprep.subr.bf16.mxu0 %v1008
    %1379 = vmatpush1.bf16.msra.mxu0 %v1007
    %1380 = vmatprep.subr.bf16.mxu0 %v1012
    %1381 = vmatpush1.bf16.msra.mxu0 %v1011
    %1382 = vmatprep.subr.bf16.mxu0 %v1016
    %1383 = vmatpush1.bf16.msra.mxu0 %v1015
    %1384 = vmatprep.subr.bf16.mxu0 %v1020
    %1385 = vmatpush1.bf16.msra.mxu0 %v1019
    %1386 = vmatprep.subr.bf16.mxu0 %v1024
    %1387 = vmatpush1.bf16.msra.mxu0 %v1023
    %1388 = vmatprep.subr.bf16.mxu0 %v1028
    %1389 = vmatpush1.bf16.msra.mxu0 %v1027
    %1390 = vmatprep.subr.bf16.mxu0 %v1032
    %1391 = vmatpush1.bf16.msra.mxu0 %v1031
    %1392 = vmatprep.subr.bf16.mxu0 %v1036
    %1393 = vmatpush1.bf16.msra.mxu0 %v1035
    %1394 = vmatprep.subr.bf16.mxu0 %v1040
    %1395 = vmatpush1.bf16.msra.mxu0 %v1039
    %1396 = vmatprep.subr.bf16.mxu0 %v1044
    %1397 = vmatpush1.bf16.msra.mxu0 %v1043
    %1398 = vmatprep.subr.bf16.mxu0 %v1048
    %1399 = vmatpush1.bf16.msra.mxu0 %v1047
    %1400 = vmatprep.subr.bf16.mxu0 %v1052
    %1401 = vmatpush1.bf16.msra.mxu0 %v1051
    %1402 = vmatprep.subr.bf16.mxu0 %v1056
    %1403 = vmatpush1.bf16.msra.mxu0 %v1055
    %1404 = vmatprep.subr.bf16.mxu0 %v1060
    %1405 = vmatpush1.bf16.msra.mxu0 %v1059
    %1406 = vmatprep.subr.bf16.mxu0 %v1064
    %1407 = vmatpush1.bf16.msra.mxu0 %v1063
    %1408 = vmatprep.mubr.bf16.mxu0 %v341
    %1409 = vmatmul.mubr.bf16.gmra.mrb[0].mxu0 %v340
    %v1410 = vpop.f32.mrb[0].mxu0
    %v1411 = vadd.f32 %v1370, %v1410
    %v1412 = vpop.f32.mrb[0].mxu0
    %v1413 = vadd.f32 %v1372, %v1412
    %v1414 = vpop.f32.mrb[0].mxu0
    %v1415 = vpop.f32.mrb[0].mxu0
    %1416 = vdwg.mxu0
    %1417 = vmatprep.subr.bf16.mxu0 %v1068
    %1418 = vmatpush1.bf16.msra.mxu0 %v1067
    %1419 = vmatprep.subr.bf16.mxu0 %v1072
    %1420 = vmatpush1.bf16.msra.mxu0 %v1071
    %1421 = vmatprep.subr.bf16.mxu0 %v1076
    %1422 = vmatpush1.bf16.msra.mxu0 %v1075
    %1423 = vmatprep.subr.bf16.mxu0 %v1080
    %1424 = vmatpush1.bf16.msra.mxu0 %v1079
    %1425 = vmatprep.subr.bf16.mxu0 %v1084
    %1426 = vmatpush1.bf16.msra.mxu0 %v1083
    %1427 = vmatprep.subr.bf16.mxu0 %v1088
    %1428 = vmatpush1.bf16.msra.mxu0 %v1087
    %1429 = vmatprep.subr.bf16.mxu0 %v1092
    %1430 = vmatpush1.bf16.msra.mxu0 %v1091
    %1431 = vmatprep.subr.bf16.mxu0 %v1096
    %1432 = vmatpush1.bf16.msra.mxu0 %v1095
    %1433 = vmatprep.subr.bf16.mxu0 %v1100
    %1434 = vmatpush1.bf16.msra.mxu0 %v1099
    %1435 = vmatprep.subr.bf16.mxu0 %v1104
    %1436 = vmatpush1.bf16.msra.mxu0 %v1103
    %1437 = vmatprep.subr.bf16.mxu0 %v1108
    %1438 = vmatpush1.bf16.msra.mxu0 %v1107
    %1439 = vmatprep.subr.bf16.mxu0 %v1112
    %1440 = vmatpush1.bf16.msra.mxu0 %v1111
    %1441 = vmatprep.subr.bf16.mxu0 %v1116
    %1442 = vmatpush1.bf16.msra.mxu0 %v1115
    %1443 = vmatprep.subr.bf16.mxu0 %v1120
    %1444 = vmatpush1.bf16.msra.mxu0 %v1119
    %1445 = vmatprep.subr.bf16.mxu0 %v1124
    %1446 = vmatpush1.bf16.msra.mxu0 %v1123
    %1447 = vmatprep.subr.bf16.mxu0 %v1128
    %1448 = vmatpush1.bf16.msra.mxu0 %v1127
    %1449 = vmatprep.mubr.bf16.mxu0 %v343
    %1450 = vmatmul.mubr.bf16.gmra.mrb[0].mxu0 %v342
    %v1451 = vpop.f32.mrb[0].mxu0
    %v1452 = vadd.f32 %v1411, %v1451
    %v1453 = vpop.f32.mrb[0].mxu0
    %v1454 = vadd.f32 %v1413, %v1453
    %v1455 = vpop.f32.mrb[0].mxu0
    %v1456 = vpop.f32.mrb[0].mxu0
    %1457 = vdwg.mxu0
    %1458 = vmatprep.subr.bf16.mxu0 %v1132
    %1459 = vmatpush1.bf16.msra.mxu0 %v1131
    %1460 = vmatprep.subr.bf16.mxu0 0
    %1461 = vmatpush1.bf16.msra.mxu0 0
    %1462 = vmatprep.subr.bf16.mxu0 0
    %1463 = vmatpush1.bf16.msra.mxu0 0
    %1464 = vmatprep.subr.bf16.mxu0 0
    %1465 = vmatpush1.bf16.msra.mxu0 0
    %1466 = vmatprep.subr.bf16.mxu0 0
    %1467 = vmatpush1.bf16.msra.mxu0 0
    %1468 = vmatprep.subr.bf16.mxu0 0
    %1469 = vmatpush1.bf16.msra.mxu0 0
    %1470 = vmatprep.subr.bf16.mxu0 0
    %1471 = vmatpush1.bf16.msra.mxu0 0
    %1472 = vmatprep.subr.bf16.mxu0 0
    %1473 = vmatpush1.bf16.msra.mxu0 0
    %1474 = vmatprep.subr.bf16.mxu0 0
    %1475 = vmatpush1.bf16.msra.mxu0 0
    %1476 = vmatprep.subr.bf16.mxu0 0
    %1477 = vmatpush1.bf16.msra.mxu0 0
    %1478 = vmatprep.subr.bf16.mxu0 0
    %1479 = vmatpush1.bf16.msra.mxu0 0
    %1480 = vmatprep.subr.bf16.mxu0 0
    %1481 = vmatpush1.bf16.msra.mxu0 0
    %1482 = vmatprep.subr.bf16.mxu0 0
    %1483 = vmatpush1.bf16.msra.mxu0 0
    %1484 = vmatprep.subr.bf16.mxu0 0
    %1485 = vmatpush1.bf16.msra.mxu0 0
    %1486 = vmatprep.subr.bf16.mxu0 0
    %1487 = vmatpush1.bf16.msra.mxu0 0
    %1488 = vmatprep.subr.bf16.mxu0 0
    %1489 = vmatpush1.bf16.msra.mxu0 0
    %1490 = vmatprep.mubr.bf16.mxu0 0
    %1491 = vmatmul.mubr.bf16.gmra.mrb[0].mxu0 %v1333
    %v1492 = vpop.f32.mrb[0].mxu0
    %v1493 = vadd.f32 %v1452, %v1492
    %v1494 = vpop.f32.mrb[0].mxu0
    %v1495 = vadd.f32 %v1454, %v1494
    %v1496 = vpop.f32.mrb[0].mxu0
    %v1497 = vpop.f32.mrb[0].mxu0
    %1498 = vdwg.mxu0
    %1499 = vmatprep.subr.bf16.mxu0 %v942
    %1500 = vmatpush1.bf16.msra.mxu0 %v941
    %1501 = vmatprep.subr.bf16.mxu0 %v946
    %1502 = vmatpush1.bf16.msra.mxu0 %v945
    %1503 = vmatprep.subr.bf16.mxu0 %v950
    %1504 = vmatpush1.bf16.msra.mxu0 %v949
    %1505 = vmatprep.subr.bf16.mxu0 %v954
    %1506 = vmatpush1.bf16.msra.mxu0 %v953
    %1507 = vmatprep.subr.bf16.mxu0 %v958
    %1508 = vmatpush1.bf16.msra.mxu0 %v957
    %1509 = vmatprep.subr.bf16.mxu0 %v962
    %1510 = vmatpush1.bf16.msra.mxu0 %v961
    %1511 = vmatprep.subr.bf16.mxu0 %v966
    %1512 = vmatpush1.bf16.msra.mxu0 %v965
    %1513 = vmatprep.subr.bf16.mxu0 %v970
    %1514 = vmatpush1.bf16.msra.mxu0 %v969
    %1515 = vmatprep.subr.bf16.mxu0 %v974
    %1516 = vmatpush1.bf16.msra.mxu0 %v973
    %1517 = vmatprep.subr.bf16.mxu0 %v978
    %1518 = vmatpush1.bf16.msra.mxu0 %v977
    %1519 = vmatprep.subr.bf16.mxu0 %v982
    %1520 = vmatpush1.bf16.msra.mxu0 %v981
    %1521 = vmatprep.subr.bf16.mxu0 %v986
    %1522 = vmatpush1.bf16.msra.mxu0 %v985
    %1523 = vmatprep.subr.bf16.mxu0 %v990
    %1524 = vmatpush1.bf16.msra.mxu0 %v989
    %1525 = vmatprep.subr.bf16.mxu0 %v994
    %1526 = vmatpush1.bf16.msra.mxu0 %v993
    %1527 = vmatprep.subr.bf16.mxu0 %v998
    %1528 = vmatpush1.bf16.msra.mxu0 %v997
    %1529 = vmatprep.subr.bf16.mxu0 %v1002
    %1530 = vmatpush1.bf16.msra.mxu0 %v1001
    %1531 = vmatprep.mubr.bf16.mxu0 %v339
    %1532 = vmatmul.mubr.bf16.gmra.mrb[0].mxu0 %v338
    %v1533 = vpop.f32.mrb[0].mxu0
    %v1534 = vadd.f32 %v318, %v1533
    %v1535 = vpop.f32.mrb[0].mxu0
    %v1536 = vadd.f32 %v322, %v1535
    %v1537 = vpop.f32.mrb[0].mxu0
    %v1538 = vpop.f32.mrb[0].mxu0
    %1539 = vdwg.mxu0
    %1540 = vmatprep.subr.bf16.mxu0 %v1006
    %1541 = vmatpush1.bf16.msra.mxu0 %v1005
    %1542 = vmatprep.subr.bf16.mxu0 %v1010
    %1543 = vmatpush1.bf16.msra.mxu0 %v1009
    %1544 = vmatprep.subr.bf16.mxu0 %v1014
    %1545 = vmatpush1.bf16.msra.mxu0 %v1013
    %1546 = vmatprep.subr.bf16.mxu0 %v1018
    %1547 = vmatpush1.bf16.msra.mxu0 %v1017
    %1548 = vmatprep.subr.bf16.mxu0 %v1022
    %1549 = vmatpush1.bf16.msra.mxu0 %v1021
    %1550 = vmatprep.subr.bf16.mxu0 %v1026
    %1551 = vmatpush1.bf16.msra.mxu0 %v1025
    %1552 = vmatprep.subr.bf16.mxu0 %v1030
    %1553 = vmatpush1.bf16.msra.mxu0 %v1029
    %1554 = vmatprep.subr.bf16.mxu0 %v1034
    %1555 = vmatpush1.bf16.msra.mxu0 %v1033
    %1556 = vmatprep.subr.bf16.mxu0 %v1038
    %1557 = vmatpush1.bf16.msra.mxu0 %v1037
    %1558 = vmatprep.subr.bf16.mxu0 %v1042
    %1559 = vmatpush1.bf16.msra.mxu0 %v1041
    %1560 = vmatprep.subr.bf16.mxu0 %v1046
    %1561 = vmatpush1.bf16.msra.mxu0 %v1045
    %1562 = vmatprep.subr.bf16.mxu0 %v1050
    %1563 = vmatpush1.bf16.msra.mxu0 %v1049
    %1564 = vmatprep.subr.bf16.mxu0 %v1054
    %1565 = vmatpush1.bf16.msra.mxu0 %v1053
    %1566 = vmatprep.subr.bf16.mxu0 %v1058
    %1567 = vmatpush1.bf16.msra.mxu0 %v1057
    %1568 = vmatprep.subr.bf16.mxu0 %v1062
    %1569 = vmatpush1.bf16.msra.mxu0 %v1061
    %1570 = vmatprep.subr.bf16.mxu0 %v1066
    %1571 = vmatpush1.bf16.msra.mxu0 %v1065
    %1572 = vmatprep.mubr.bf16.mxu0 %v341
    %1573 = vmatmul.mubr.bf16.gmra.mrb[0].mxu0 %v340
    %v1574 = vpop.f32.mrb[0].mxu0
    %v1575 = vadd.f32 %v1534, %v1574
    %v1576 = vpop.f32.mrb[0].mxu0
    %v1577 = vadd.f32 %v1536, %v1576
    %v1578 = vpop.f32.mrb[0].mxu0
    %v1579 = vpop.f32.mrb[0].mxu0
    %1580 = vdwg.mxu0
    %1581 = vmatprep.subr.bf16.mxu0 %v1070
    %1582 = vmatpush1.bf16.msra.mxu0 %v1069
    %1583 = vmatprep.subr.bf16.mxu0 %v1074
    %1584 = vmatpush1.bf16.msra.mxu0 %v1073
    %1585 = vmatprep.subr.bf16.mxu0 %v1078
    %1586 = vmatpush1.bf16.msra.mxu0 %v1077
    %1587 = vmatprep.subr.bf16.mxu0 %v1082
    %1588 = vmatpush1.bf16.msra.mxu0 %v1081
    %1589 = vmatprep.subr.bf16.mxu0 %v1086
    %1590 = vmatpush1.bf16.msra.mxu0 %v1085
    %1591 = vmatprep.subr.bf16.mxu0 %v1090
    %1592 = vmatpush1.bf16.msra.mxu0 %v1089
    %1593 = vmatprep.subr.bf16.mxu0 %v1094
    %1594 = vmatpush1.bf16.msra.mxu0 %v1093
    %1595 = vmatprep.subr.bf16.mxu0 %v1098
    %1596 = vmatpush1.bf16.msra.mxu0 %v1097
    %1597 = vmatprep.subr.bf16.mxu0 %v1102
    %1598 = vmatpush1.bf16.msra.mxu0 %v1101
    %1599 = vmatprep.subr.bf16.mxu0 %v1106
    %1600 = vmatpush1.bf16.msra.mxu0 %v1105
    %1601 = vmatprep.subr.bf16.mxu0 %v1110
    %1602 = vmatpush1.bf16.msra.mxu0 %v1109
    %1603 = vmatprep.subr.bf16.mxu0 %v1114
    %1604 = vmatpush1.bf16.msra.mxu0 %v1113
    %1605 = vmatprep.subr.bf16.mxu0 %v1118
    %1606 = vmatpush1.bf16.msra.mxu0 %v1117
    %1607 = vmatprep.subr.bf16.mxu0 %v1122
    %1608 = vmatpush1.bf16.msra.mxu0 %v1121
    %1609 = vmatprep.subr.bf16.mxu0 %v1126
    %1610 = vmatpush1.bf16.msra.mxu0 %v1125
    %1611 = vmatprep.subr.bf16.mxu0 %v1130
    %1612 = vmatpush1.bf16.msra.mxu0 %v1129
    %1613 = vmatprep.mubr.bf16.mxu0 %v343
    %1614 = vmatmul.mubr.bf16.gmra.mrb[0].mxu0 %v342
    %v1615 = vpop.f32.mrb[0].mxu0
    %v1616 = vadd.f32 %v1575, %v1615
    %v1617 = vpop.f32.mrb[0].mxu0
    %v1618 = vadd.f32 %v1577, %v1617
    %v1619 = vpop.f32.mrb[0].mxu0
    %v1620 = vpop.f32.mrb[0].mxu0
    %1621 = vdwg.mxu0
    %1622 = vmatprep.subr.bf16.mxu0 %v1134
    %1623 = vmatpush1.bf16.msra.mxu0 %v1133
    %1624 = vmatprep.subr.bf16.mxu0 0
    %1625 = vmatpush1.bf16.msra.mxu0 0
    %1626 = vmatprep.subr.bf16.mxu0 0
    %1627 = vmatpush1.bf16.msra.mxu0 0
    %1628 = vmatprep.subr.bf16.mxu0 0
    %1629 = vmatpush1.bf16.msra.mxu0 0
    %1630 = vmatprep.subr.bf16.mxu0 0
    %1631 = vmatpush1.bf16.msra.mxu0 0
    %1632 = vmatprep.subr.bf16.mxu0 0
    %1633 = vmatpush1.bf16.msra.mxu0 0
    %1634 = vmatprep.subr.bf16.mxu0 0
    %1635 = vmatpush1.bf16.msra.mxu0 0
    %1636 = vmatprep.subr.bf16.mxu0 0
    %1637 = vmatpush1.bf16.msra.mxu0 0
    %1638 = vmatprep.subr.bf16.mxu0 0
    %1639 = vmatpush1.bf16.msra.mxu0 0
    %1640 = vmatprep.subr.bf16.mxu0 0
    %1641 = vmatpush1.bf16.msra.mxu0 0
    %1642 = vmatprep.subr.bf16.mxu0 0
    %1643 = vmatpush1.bf16.msra.mxu0 0
    %1644 = vmatprep.subr.bf16.mxu0 0
    %1645 = vmatpush1.bf16.msra.mxu0 0
    %1646 = vmatprep.subr.bf16.mxu0 0
    %1647 = vmatpush1.bf16.msra.mxu0 0
    %1648 = vmatprep.subr.bf16.mxu0 0
    %1649 = vmatpush1.bf16.msra.mxu0 0
    %1650 = vmatprep.subr.bf16.mxu0 0
    %1651 = vmatpush1.bf16.msra.mxu0 0
    %1652 = vmatprep.subr.bf16.mxu0 0
    %1653 = vmatpush1.bf16.msra.mxu0 0
    %1654 = vmatprep.mubr.bf16.mxu0 0
    %1655 = vmatmul.mubr.bf16.gmra.mrb[0].mxu0 %v1333
    %v1656 = vpop.f32.mrb[0].mxu0
    %v1657 = vadd.f32 %v1616, %v1656
    %v1658 = vpop.f32.mrb[0].mxu0
    %v1659 = vadd.f32 %v1618, %v1658
    %v1660 = vpop.f32.mrb[0].mxu0
    %v1661 = vpop.f32.mrb[0].mxu0
    %1662 = vdwg.mxu0
    %v1663 = vmax.f32 %v1493, 0.0
    %v1664 = vmax.f32 %v1495, 0.0
    %v1665 = vmax.f32 %v1657, 0.0
    %v1666 = vmax.f32 %v1659, 0.0
    %v1667 = vpack.c.bf16 %v1663, %v1663
    %v1668 = vpack.c.bf16 %v1664, %v1664
    %v1669 = vpack.c.bf16 %v1665, %v1665
    %v1670 = vpack.c.bf16 %v1666, %v1666
    %v1671 = vld [vmem:[%s4] sm:$0xff]
    %v1672 = vld [vmem:[%s4 + $0x8] sm:$0xff]
    %v1673 = vld [vmem:[%s4 + $0x10] sm:$0xff]
    %v1674 = vld [vmem:[%s4 + $0x18] sm:$0xff]
    %v1675 = vld [vmem:[%s4 + $0x20] sm:$0xff]
    %v1676 = vld [vmem:[%s4 + $0x28] sm:$0xff]
    %v1677 = vld [vmem:[%s4 + $0x30] sm:$0xff]
    %v1678 = vld [vmem:[%s4 + $0x38] sm:$0xff]
    %v1679 = vld [vmem:[%s4 + $0x40] sm:$0xff]
    %v1680 = vld [vmem:[%s4 + $0x48] sm:$0xff]
    %v1681 = vld [vmem:[%s4 + $0x50] sm:$0xff]
    %v1682 = vld [vmem:[%s4 + $0x58] sm:$0xff]
    %v1683 = vld [vmem:[%s4 + $0x60] sm:$0xff]
    %v1684 = vld [vmem:[%s4 + $0x68] sm:$0xff]
    %v1685 = vld [vmem:[%s4 + $0x70] sm:$0xff]
    %v1686 = vld [vmem:[%s4 + $0x78] sm:$0xff]
    %v1687 = vld [vmem:[%s4 + $0x80] sm:$0xff]
    %v1688 = vld [vmem:[%s4 + $0x88] sm:$0xff]
    %v1689 = vld [vmem:[%s4 + $0x90] sm:$0xff]
    %v1690 = vld [vmem:[%s4 + $0x98] sm:$0xff]
    %v1691 = vld [vmem:[%s4 + $0xa0] sm:$0xff]
    %v1692 = vld [vmem:[%s4 + $0xa8] sm:$0xff]
    %v1693 = vld [vmem:[%s4 + $0xb0] sm:$0xff]
    %v1694 = vld [vmem:[%s4 + $0xb8] sm:$0xff]
    %v1695 = vld [vmem:[%s4 + $0xc0] sm:$0xff]
    %v1696 = vld [vmem:[%s4 + $0xc8] sm:$0xff]
    %v1697 = vld [vmem:[%s4 + $0xd0] sm:$0xff]
    %v1698 = vld [vmem:[%s4 + $0xd8] sm:$0xff]
    %v1699 = vld [vmem:[%s4 + $0xe0] sm:$0xff]
    %v1700 = vld [vmem:[%s4 + $0xe8] sm:$0xff]
    %v1701 = vld [vmem:[%s4 + $0xf0] sm:$0xff]
    %v1702 = vld [vmem:[%s4 + $0xf8] sm:$0xff]
    %v1703 = vld [vmem:[%s4 + $0x100] sm:$0xff]
    %v1704 = vld [vmem:[%s4 + $0x108] sm:$0xff]
    %v1705 = vld [vmem:[%s4 + $0x110] sm:$0xff]
    %v1706 = vld [vmem:[%s4 + $0x118] sm:$0xff]
    %v1707 = vld [vmem:[%s4 + $0x120] sm:$0xff]
    %v1708 = vld [vmem:[%s4 + $0x128] sm:$0xff]
    %v1709 = vld [vmem:[%s4 + $0x130] sm:$0xff]
    %v1710 = vld [vmem:[%s4 + $0x138] sm:$0xff]
    %v1711 = vld [vmem:[%s4 + $0x140] sm:$0xff]
    %v1712 = vld [vmem:[%s4 + $0x148] sm:$0xff]
    %v1713 = vld [vmem:[%s4 + $0x150] sm:$0xff]
    %v1714 = vld [vmem:[%s4 + $0x158] sm:$0xff]
    %v1715 = vld [vmem:[%s4 + $0x160] sm:$0xff]
    %v1716 = vld [vmem:[%s4 + $0x168] sm:$0xff]
    %v1717 = vld [vmem:[%s4 + $0x170] sm:$0xff]
    %v1718 = vld [vmem:[%s4 + $0x178] sm:$0xff]
    %v1719 = vld [vmem:[%s4 + $0x180] sm:$0xff]
    %v1720 = vld [vmem:[%s4 + $0x188] sm:$0xff]
    %v1721 = vld [vmem:[%s4 + $0x190] sm:$0xff]
    %v1722 = vld [vmem:[%s4 + $0x198] sm:$0xff]
    %v1723 = vld [vmem:[%s4 + $0x1a0] sm:$0xff]
    %v1724 = vld [vmem:[%s4 + $0x1a8] sm:$0xff]
    %v1725 = vld [vmem:[%s4 + $0x1b0] sm:$0xff]
    %v1726 = vld [vmem:[%s4 + $0x1b8] sm:$0xff]
    %v1727 = vld [vmem:[%s4 + $0x1c0] sm:$0xff]
    %v1728 = vld [vmem:[%s4 + $0x1c8] sm:$0xff]
    %v1729 = vld [vmem:[%s4 + $0x1d0] sm:$0xff]
    %v1730 = vld [vmem:[%s4 + $0x1d8] sm:$0xff]
    %v1731 = vld [vmem:[%s4 + $0x1e0] sm:$0xff]
    %v1732 = vld [vmem:[%s4 + $0x1e8] sm:$0xff]
    %v1733 = vld [vmem:[%s4 + $0x1f0] sm:$0xff]
    %v1734 = vld [vmem:[%s4 + $0x1f8] sm:$0xff]
    %v1735 = vld [vmem:[%s4 + $0x200] sm:$0xff]
    %v1736 = vld [vmem:[%s4 + $0x208] sm:$0xff]
    %v1737 = vld [vmem:[%s4 + $0x210] sm:$0xff]
    %v1738 = vld [vmem:[%s4 + $0x218] sm:$0xff]
    %v1739 = vld [vmem:[%s4 + $0x220] sm:$0xff]
    %v1740 = vld [vmem:[%s4 + $0x228] sm:$0xff]
    %v1741 = vld [vmem:[%s4 + $0x230] sm:$0xff]
    %v1742 = vld [vmem:[%s4 + $0x238] sm:$0xff]
    %v1743 = vld [vmem:[%s4 + $0x240] sm:$0xff]
    %v1744 = vld [vmem:[%s4 + $0x248] sm:$0xff]
    %v1745 = vld [vmem:[%s4 + $0x250] sm:$0xff]
    %v1746 = vld [vmem:[%s4 + $0x258] sm:$0xff]
    %v1747 = vld [vmem:[%s4 + $0x260] sm:$0xff]
    %v1748 = vld [vmem:[%s4 + $0x268] sm:$0xff]
    %v1749 = vld [vmem:[%s4 + $0x270] sm:$0xff]
    %v1750 = vld [vmem:[%s4 + $0x278] sm:$0xff]
    %v1751 = vld [vmem:[%s4 + $0x280] sm:$0xff]
    %v1752 = vld [vmem:[%s4 + $0x288] sm:$0xff]
    %v1753 = vld [vmem:[%s4 + $0x290] sm:$0xff]
    %v1754 = vld [vmem:[%s4 + $0x298] sm:$0xff]
    %v1755 = vld [vmem:[%s4 + $0x2a0] sm:$0xff]
    %v1756 = vld [vmem:[%s4 + $0x2a8] sm:$0xff]
    %v1757 = vld [vmem:[%s4 + $0x2b0] sm:$0xff]
    %v1758 = vld [vmem:[%s4 + $0x2b8] sm:$0xff]
    %v1759 = vld [vmem:[%s4 + $0x2c0] sm:$0xff]
    %v1760 = vld [vmem:[%s4 + $0x2c8] sm:$0xff]
    %v1761 = vld [vmem:[%s4 + $0x2d0] sm:$0xff]
    %v1762 = vld [vmem:[%s4 + $0x2d8] sm:$0xff]
    %v1763 = vld [vmem:[%s4 + $0x2e0] sm:$0xff]
    %v1764 = vld [vmem:[%s4 + $0x2e8] sm:$0xff]
    %v1765 = vld [vmem:[%s4 + $0x2f0] sm:$0xff]
    %v1766 = vld [vmem:[%s4 + $0x2f8] sm:$0xff]
    %v1767 = vld [vmem:[%s4 + $0x300] sm:$0xff]
    %v1768 = vld [vmem:[%s4 + $0x308] sm:$0xff]
    %v1769 = vld [vmem:[%s4 + $0x310] sm:$0xff]
    %v1770 = vld [vmem:[%s4 + $0x318] sm:$0xff]
    %v1771 = vld [vmem:[%s4 + $0x320] sm:$0xff]
    %v1772 = vld [vmem:[%s4 + $0x328] sm:$0xff]
    %v1773 = vld [vmem:[%s4 + $0x330] sm:$0xff]
    %v1774 = vld [vmem:[%s4 + $0x338] sm:$0xff]
    %v1775 = vld [vmem:[%s4 + $0x340] sm:$0xff]
    %v1776 = vld [vmem:[%s4 + $0x348] sm:$0xff]
    %v1777 = vld [vmem:[%s4 + $0x350] sm:$0xff]
    %v1778 = vld [vmem:[%s4 + $0x358] sm:$0xff]
    %v1779 = vld [vmem:[%s4 + $0x360] sm:$0xff]
    %v1780 = vld [vmem:[%s4 + $0x368] sm:$0xff]
    %v1781 = vld [vmem:[%s4 + $0x370] sm:$0xff]
    %v1782 = vld [vmem:[%s4 + $0x378] sm:$0xff]
    %v1783 = vld [vmem:[%s4 + $0x380] sm:$0xff]
    %v1784 = vld [vmem:[%s4 + $0x388] sm:$0xff]
    %v1785 = vld [vmem:[%s4 + $0x390] sm:$0xff]
    %v1786 = vld [vmem:[%s4 + $0x398] sm:$0xff]
    %v1787 = vld [vmem:[%s4 + $0x3a0] sm:$0xff]
    %v1788 = vld [vmem:[%s4 + $0x3a8] sm:$0xff]
    %v1789 = vld [vmem:[%s4 + $0x3b0] sm:$0xff]
    %v1790 = vld [vmem:[%s4 + $0x3b8] sm:$0xff]
    %v1791 = vld [vmem:[%s4 + $0x3c0] sm:$0xff]
    %v1792 = vld [vmem:[%s4 + $0x3c8] sm:$0xff]
    %v1793 = vld [vmem:[%s4 + $0x3d0] sm:$0xff]
    %v1794 = vld [vmem:[%s4 + $0x3d8] sm:$0xff]
    %v1795 = vld [vmem:[%s4 + $0x3e0] sm:$0xff]
    %v1796 = vld [vmem:[%s4 + $0x3e8] sm:$0xff]
    %v1797 = vld [vmem:[%s4 + $0x3f0] sm:$0xff]
    %v1798 = vld [vmem:[%s4 + $0x3f8] sm:$0xff]
    %v1799 = vld [vmem:[%s5] sm:$0xf]
    %v1801 = vlaneseq
    %v1802 = vshrl.u32 %v1801, 7
    %v1803 = vsub.s32 0, %v1802
    %v1804 = vrot.slane %v1799, %v1803
    %v1805 = vlaneseq
    %v1806 = vshrl.u32 %v1805, 7
    %v1807 = vsub.s32 1, %v1806
    %v1808 = vrot.slane %v1799, %v1807
    %v1809 = vlaneseq
    %v1810 = vshrl.u32 %v1809, 7
    %v1811 = vsub.s32 2, %v1810
    %v1812 = vrot.slane %v1799, %v1811
    %v1813 = vlaneseq
    %v1814 = vshrl.u32 %v1813, 7
    %v1815 = vsub.s32 3, %v1814
    %v1816 = vrot.slane %v1799, %v1815
    %v1949 = vunpack.c.l.b16 %v1671
    %v1950 = vunpack.c.h.b16 %v1671
    %v1951 = vunpack.c.l.b16 %v1672
    %v1952 = vunpack.c.h.b16 %v1672
    %v1953 = vunpack.c.l.b16 %v1673
    %v1954 = vunpack.c.h.b16 %v1673
    %v1955 = vunpack.c.l.b16 %v1674
    %v1956 = vunpack.c.h.b16 %v1674
    %v1957 = vunpack.c.l.b16 %v1675
    %v1958 = vunpack.c.h.b16 %v1675
    %v1959 = vunpack.c.l.b16 %v1676
    %v1960 = vunpack.c.h.b16 %v1676
    %v1961 = vunpack.c.l.b16 %v1677
    %v1962 = vunpack.c.h.b16 %v1677
    %v1963 = vunpack.c.l.b16 %v1678
    %v1964 = vunpack.c.h.b16 %v1678
    %v1965 = vunpack.c.l.b16 %v1679
    %v1966 = vunpack.c.h.b16 %v1679
    %v1967 = vunpack.c.l.b16 %v1680
    %v1968 = vunpack.c.h.b16 %v1680
    %v1969 = vunpack.c.l.b16 %v1681
    %v1970 = vunpack.c.h.b16 %v1681
    %v1971 = vunpack.c.l.b16 %v1682
    %v1972 = vunpack.c.h.b16 %v1682
    %v1973 = vunpack.c.l.b16 %v1683
    %v1974 = vunpack.c.h.b16 %v1683
    %v1975 = vunpack.c.l.b16 %v1684
    %v1976 = vunpack.c.h.b16 %v1684
    %v1977 = vunpack.c.l.b16 %v1685
    %v1978 = vunpack.c.h.b16 %v1685
    %v1979 = vunpack.c.l.b16 %v1686
    %v1980 = vunpack.c.h.b16 %v1686
    %v1981 = vunpack.c.l.b16 %v1687
    %v1982 = vunpack.c.h.b16 %v1687
    %v1983 = vunpack.c.l.b16 %v1688
    %v1984 = vunpack.c.h.b16 %v1688
    %v1985 = vunpack.c.l.b16 %v1689
    %v1986 = vunpack.c.h.b16 %v1689
    %v1987 = vunpack.c.l.b16 %v1690
    %v1988 = vunpack.c.h.b16 %v1690
    %v1989 = vunpack.c.l.b16 %v1691
    %v1990 = vunpack.c.h.b16 %v1691
    %v1991 = vunpack.c.l.b16 %v1692
    %v1992 = vunpack.c.h.b16 %v1692
    %v1993 = vunpack.c.l.b16 %v1693
    %v1994 = vunpack.c.h.b16 %v1693
    %v1995 = vunpack.c.l.b16 %v1694
    %v1996 = vunpack.c.h.b16 %v1694
    %v1997 = vunpack.c.l.b16 %v1695
    %v1998 = vunpack.c.h.b16 %v1695
    %v1999 = vunpack.c.l.b16 %v1696
    %v2000 = vunpack.c.h.b16 %v1696
    %v2001 = vunpack.c.l.b16 %v1697
    %v2002 = vunpack.c.h.b16 %v1697
    %v2003 = vunpack.c.l.b16 %v1698
    %v2004 = vunpack.c.h.b16 %v1698
    %v2005 = vunpack.c.l.b16 %v1699
    %v2006 = vunpack.c.h.b16 %v1699
    %v2007 = vunpack.c.l.b16 %v1700
    %v2008 = vunpack.c.h.b16 %v1700
    %v2009 = vunpack.c.l.b16 %v1701
    %v2010 = vunpack.c.h.b16 %v1701
    %v2011 = vunpack.c.l.b16 %v1702
    %v2012 = vunpack.c.h.b16 %v1702
    %v2013 = vunpack.c.l.b16 %v1703
    %v2014 = vunpack.c.h.b16 %v1703
    %v2015 = vunpack.c.l.b16 %v1704
    %v2016 = vunpack.c.h.b16 %v1704
    %v2017 = vunpack.c.l.b16 %v1705
    %v2018 = vunpack.c.h.b16 %v1705
    %v2019 = vunpack.c.l.b16 %v1706
    %v2020 = vunpack.c.h.b16 %v1706
    %v2021 = vunpack.c.l.b16 %v1707
    %v2022 = vunpack.c.h.b16 %v1707
    %v2023 = vunpack.c.l.b16 %v1708
    %v2024 = vunpack.c.h.b16 %v1708
    %v2025 = vunpack.c.l.b16 %v1709
    %v2026 = vunpack.c.h.b16 %v1709
    %v2027 = vunpack.c.l.b16 %v1710
    %v2028 = vunpack.c.h.b16 %v1710
    %v2029 = vunpack.c.l.b16 %v1711
    %v2030 = vunpack.c.h.b16 %v1711
    %v2031 = vunpack.c.l.b16 %v1712
    %v2032 = vunpack.c.h.b16 %v1712
    %v2033 = vunpack.c.l.b16 %v1713
    %v2034 = vunpack.c.h.b16 %v1713
    %v2035 = vunpack.c.l.b16 %v1714
    %v2036 = vunpack.c.h.b16 %v1714
    %v2037 = vunpack.c.l.b16 %v1715
    %v2038 = vunpack.c.h.b16 %v1715
    %v2039 = vunpack.c.l.b16 %v1716
    %v2040 = vunpack.c.h.b16 %v1716
    %v2041 = vunpack.c.l.b16 %v1717
    %v2042 = vunpack.c.h.b16 %v1717
    %v2043 = vunpack.c.l.b16 %v1718
    %v2044 = vunpack.c.h.b16 %v1718
    %v2045 = vunpack.c.l.b16 %v1719
    %v2046 = vunpack.c.h.b16 %v1719
    %v2047 = vunpack.c.l.b16 %v1720
    %v2048 = vunpack.c.h.b16 %v1720
    %v2049 = vunpack.c.l.b16 %v1721
    %v2050 = vunpack.c.h.b16 %v1721
    %v2051 = vunpack.c.l.b16 %v1722
    %v2052 = vunpack.c.h.b16 %v1722
    %v2053 = vunpack.c.l.b16 %v1723
    %v2054 = vunpack.c.h.b16 %v1723
    %v2055 = vunpack.c.l.b16 %v1724
    %v2056 = vunpack.c.h.b16 %v1724
    %v2057 = vunpack.c.l.b16 %v1725
    %v2058 = vunpack.c.h.b16 %v1725
    %v2059 = vunpack.c.l.b16 %v1726
    %v2060 = vunpack.c.h.b16 %v1726
    %v2061 = vunpack.c.l.b16 %v1727
    %v2062 = vunpack.c.h.b16 %v1727
    %v2063 = vunpack.c.l.b16 %v1728
    %v2064 = vunpack.c.h.b16 %v1728
    %v2065 = vunpack.c.l.b16 %v1729
    %v2066 = vunpack.c.h.b16 %v1729
    %v2067 = vunpack.c.l.b16 %v1730
    %v2068 = vunpack.c.h.b16 %v1730
    %v2069 = vunpack.c.l.b16 %v1731
    %v2070 = vunpack.c.h.b16 %v1731
    %v2071 = vunpack.c.l.b16 %v1732
    %v2072 = vunpack.c.h.b16 %v1732
    %v2073 = vunpack.c.l.b16 %v1733
    %v2074 = vunpack.c.h.b16 %v1733
    %v2075 = vunpack.c.l.b16 %v1734
    %v2076 = vunpack.c.h.b16 %v1734
    %v2077 = vunpack.c.l.b16 %v1735
    %v2078 = vunpack.c.h.b16 %v1735
    %v2079 = vunpack.c.l.b16 %v1736
    %v2080 = vunpack.c.h.b16 %v1736
    %v2081 = vunpack.c.l.b16 %v1737
    %v2082 = vunpack.c.h.b16 %v1737
    %v2083 = vunpack.c.l.b16 %v1738
    %v2084 = vunpack.c.h.b16 %v1738
    %v2085 = vunpack.c.l.b16 %v1739
    %v2086 = vunpack.c.h.b16 %v1739
    %v2087 = vunpack.c.l.b16 %v1740
    %v2088 = vunpack.c.h.b16 %v1740
    %v2089 = vunpack.c.l.b16 %v1741
    %v2090 = vunpack.c.h.b16 %v1741
    %v2091 = vunpack.c.l.b16 %v1742
    %v2092 = vunpack.c.h.b16 %v1742
    %v2093 = vunpack.c.l.b16 %v1743
    %v2094 = vunpack.c.h.b16 %v1743
    %v2095 = vunpack.c.l.b16 %v1744
    %v2096 = vunpack.c.h.b16 %v1744
    %v2097 = vunpack.c.l.b16 %v1745
    %v2098 = vunpack.c.h.b16 %v1745
    %v2099 = vunpack.c.l.b16 %v1746
    %v2100 = vunpack.c.h.b16 %v1746
    %v2101 = vunpack.c.l.b16 %v1747
    %v2102 = vunpack.c.h.b16 %v1747
    %v2103 = vunpack.c.l.b16 %v1748
    %v2104 = vunpack.c.h.b16 %v1748
    %v2105 = vunpack.c.l.b16 %v1749
    %v2106 = vunpack.c.h.b16 %v1749
    %v2107 = vunpack.c.l.b16 %v1750
    %v2108 = vunpack.c.h.b16 %v1750
    %v2109 = vunpack.c.l.b16 %v1751
    %v2110 = vunpack.c.h.b16 %v1751
    %v2111 = vunpack.c.l.b16 %v1752
    %v2112 = vunpack.c.h.b16 %v1752
    %v2113 = vunpack.c.l.b16 %v1753
    %v2114 = vunpack.c.h.b16 %v1753
    %v2115 = vunpack.c.l.b16 %v1754
    %v2116 = vunpack.c.h.b16 %v1754
    %v2117 = vunpack.c.l.b16 %v1755
    %v2118 = vunpack.c.h.b16 %v1755
    %v2119 = vunpack.c.l.b16 %v1756
    %v2120 = vunpack.c.h.b16 %v1756
    %v2121 = vunpack.c.l.b16 %v1757
    %v2122 = vunpack.c.h.b16 %v1757
    %v2123 = vunpack.c.l.b16 %v1758
    %v2124 = vunpack.c.h.b16 %v1758
    %v2125 = vunpack.c.l.b16 %v1759
    %v2126 = vunpack.c.h.b16 %v1759
    %v2127 = vunpack.c.l.b16 %v1760
    %v2128 = vunpack.c.h.b16 %v1760
    %v2129 = vunpack.c.l.b16 %v1761
    %v2130 = vunpack.c.h.b16 %v1761
    %v2131 = vunpack.c.l.b16 %v1762
    %v2132 = vunpack.c.h.b16 %v1762
    %v2133 = vunpack.c.l.b16 %v1763
    %v2134 = vunpack.c.h.b16 %v1763
    %v2135 = vunpack.c.l.b16 %v1764
    %v2136 = vunpack.c.h.b16 %v1764
    %v2137 = vunpack.c.l.b16 %v1765
    %v2138 = vunpack.c.h.b16 %v1765
    %v2139 = vunpack.c.l.b16 %v1766
    %v2140 = vunpack.c.h.b16 %v1766
    %v2141 = vunpack.c.l.b16 %v1767
    %v2142 = vunpack.c.h.b16 %v1767
    %v2143 = vunpack.c.l.b16 %v1768
    %v2144 = vunpack.c.h.b16 %v1768
    %v2145 = vunpack.c.l.b16 %v1769
    %v2146 = vunpack.c.h.b16 %v1769
    %v2147 = vunpack.c.l.b16 %v1770
    %v2148 = vunpack.c.h.b16 %v1770
    %v2149 = vunpack.c.l.b16 %v1771
    %v2150 = vunpack.c.h.b16 %v1771
    %v2151 = vunpack.c.l.b16 %v1772
    %v2152 = vunpack.c.h.b16 %v1772
    %v2153 = vunpack.c.l.b16 %v1773
    %v2154 = vunpack.c.h.b16 %v1773
    %v2155 = vunpack.c.l.b16 %v1774
    %v2156 = vunpack.c.h.b16 %v1774
    %v2157 = vunpack.c.l.b16 %v1775
    %v2158 = vunpack.c.h.b16 %v1775
    %v2159 = vunpack.c.l.b16 %v1776
    %v2160 = vunpack.c.h.b16 %v1776
    %v2161 = vunpack.c.l.b16 %v1777
    %v2162 = vunpack.c.h.b16 %v1777
    %v2163 = vunpack.c.l.b16 %v1778
    %v2164 = vunpack.c.h.b16 %v1778
    %v2165 = vunpack.c.l.b16 %v1779
    %v2166 = vunpack.c.h.b16 %v1779
    %v2167 = vunpack.c.l.b16 %v1780
    %v2168 = vunpack.c.h.b16 %v1780
    %v2169 = vunpack.c.l.b16 %v1781
    %v2170 = vunpack.c.h.b16 %v1781
    %v2171 = vunpack.c.l.b16 %v1782
    %v2172 = vunpack.c.h.b16 %v1782
    %v2173 = vunpack.c.l.b16 %v1783
    %v2174 = vunpack.c.h.b16 %v1783
    %v2175 = vunpack.c.l.b16 %v1784
    %v2176 = vunpack.c.h.b16 %v1784
    %v2177 = vunpack.c.l.b16 %v1785
    %v2178 = vunpack.c.h.b16 %v1785
    %v2179 = vunpack.c.l.b16 %v1786
    %v2180 = vunpack.c.h.b16 %v1786
    %v2181 = vunpack.c.l.b16 %v1787
    %v2182 = vunpack.c.h.b16 %v1787
    %v2183 = vunpack.c.l.b16 %v1788
    %v2184 = vunpack.c.h.b16 %v1788
    %v2185 = vunpack.c.l.b16 %v1789
    %v2186 = vunpack.c.h.b16 %v1789
    %v2187 = vunpack.c.l.b16 %v1790
    %v2188 = vunpack.c.h.b16 %v1790
    %v2189 = vunpack.c.l.b16 %v1791
    %v2190 = vunpack.c.h.b16 %v1791
    %v2191 = vunpack.c.l.b16 %v1792
    %v2192 = vunpack.c.h.b16 %v1792
    %v2193 = vunpack.c.l.b16 %v1793
    %v2194 = vunpack.c.h.b16 %v1793
    %v2195 = vunpack.c.l.b16 %v1794
    %v2196 = vunpack.c.h.b16 %v1794
    %v2197 = vunpack.c.l.b16 %v1795
    %v2198 = vunpack.c.h.b16 %v1795
    %v2199 = vunpack.c.l.b16 %v1796
    %v2200 = vunpack.c.h.b16 %v1796
    %v2201 = vunpack.c.l.b16 %v1797
    %v2202 = vunpack.c.h.b16 %v1797
    %v2203 = vunpack.c.l.b16 %v1798
    %v2204 = vunpack.c.h.b16 %v1798
    %v2205 = vpack.c.b16 %v1953, %v1949
    %v2206 = vpack.c.b16 %v1954, %v1950
    %v2207 = vpack.c.b16 %v1955, %v1951
    %v2208 = vpack.c.b16 %v1956, %v1952
    %v2209 = vpack.c.b16 %v1961, %v1957
    %v2210 = vpack.c.b16 %v1962, %v1958
    %v2211 = vpack.c.b16 %v1963, %v1959
    %v2212 = vpack.c.b16 %v1964, %v1960
    %v2213 = vpack.c.b16 %v1969, %v1965
    %v2214 = vpack.c.b16 %v1970, %v1966
    %v2215 = vpack.c.b16 %v1971, %v1967
    %v2216 = vpack.c.b16 %v1972, %v1968
    %v2217 = vpack.c.b16 %v1977, %v1973
    %v2218 = vpack.c.b16 %v1978, %v1974
    %v2219 = vpack.c.b16 %v1979, %v1975
    %v2220 = vpack.c.b16 %v1980, %v1976
    %v2221 = vpack.c.b16 %v1985, %v1981
    %v2222 = vpack.c.b16 %v1986, %v1982
    %v2223 = vpack.c.b16 %v1987, %v1983
    %v2224 = vpack.c.b16 %v1988, %v1984
    %v2225 = vpack.c.b16 %v1993, %v1989
    %v2226 = vpack.c.b16 %v1994, %v1990
    %v2227 = vpack.c.b16 %v1995, %v1991
    %v2228 = vpack.c.b16 %v1996, %v1992
    %v2229 = vpack.c.b16 %v2001, %v1997
    %v2230 = vpack.c.b16 %v2002, %v1998
    %v2231 = vpack.c.b16 %v2003, %v1999
    %v2232 = vpack.c.b16 %v2004, %v2000
    %v2233 = vpack.c.b16 %v2009, %v2005
    %v2234 = vpack.c.b16 %v2010, %v2006
    %v2235 = vpack.c.b16 %v2011, %v2007
    %v2236 = vpack.c.b16 %v2012, %v2008
    %v2237 = vpack.c.b16 %v2017, %v2013
    %v2238 = vpack.c.b16 %v2018, %v2014
    %v2239 = vpack.c.b16 %v2019, %v2015
    %v2240 = vpack.c.b16 %v2020, %v2016
    %v2241 = vpack.c.b16 %v2025, %v2021
    %v2242 = vpack.c.b16 %v2026, %v2022
    %v2243 = vpack.c.b16 %v2027, %v2023
    %v2244 = vpack.c.b16 %v2028, %v2024
    %v2245 = vpack.c.b16 %v2033, %v2029
    %v2246 = vpack.c.b16 %v2034, %v2030
    %v2247 = vpack.c.b16 %v2035, %v2031
    %v2248 = vpack.c.b16 %v2036, %v2032
    %v2249 = vpack.c.b16 %v2041, %v2037
    %v2250 = vpack.c.b16 %v2042, %v2038
    %v2251 = vpack.c.b16 %v2043, %v2039
    %v2252 = vpack.c.b16 %v2044, %v2040
    %v2253 = vpack.c.b16 %v2049, %v2045
    %v2254 = vpack.c.b16 %v2050, %v2046
    %v2255 = vpack.c.b16 %v2051, %v2047
    %v2256 = vpack.c.b16 %v2052, %v2048
    %v2257 = vpack.c.b16 %v2057, %v2053
    %v2258 = vpack.c.b16 %v2058, %v2054
    %v2259 = vpack.c.b16 %v2059, %v2055
    %v2260 = vpack.c.b16 %v2060, %v2056
    %v2261 = vpack.c.b16 %v2065, %v2061
    %v2262 = vpack.c.b16 %v2066, %v2062
    %v2263 = vpack.c.b16 %v2067, %v2063
    %v2264 = vpack.c.b16 %v2068, %v2064
    %v2265 = vpack.c.b16 %v2073, %v2069
    %v2266 = vpack.c.b16 %v2074, %v2070
    %v2267 = vpack.c.b16 %v2075, %v2071
    %v2268 = vpack.c.b16 %v2076, %v2072
    %v2269 = vpack.c.b16 %v2081, %v2077
    %v2270 = vpack.c.b16 %v2082, %v2078
    %v2271 = vpack.c.b16 %v2083, %v2079
    %v2272 = vpack.c.b16 %v2084, %v2080
    %v2273 = vpack.c.b16 %v2089, %v2085
    %v2274 = vpack.c.b16 %v2090, %v2086
    %v2275 = vpack.c.b16 %v2091, %v2087
    %v2276 = vpack.c.b16 %v2092, %v2088
    %v2277 = vpack.c.b16 %v2097, %v2093
    %v2278 = vpack.c.b16 %v2098, %v2094
    %v2279 = vpack.c.b16 %v2099, %v2095
    %v2280 = vpack.c.b16 %v2100, %v2096
    %v2281 = vpack.c.b16 %v2105, %v2101
    %v2282 = vpack.c.b16 %v2106, %v2102
    %v2283 = vpack.c.b16 %v2107, %v2103
    %v2284 = vpack.c.b16 %v2108, %v2104
    %v2285 = vpack.c.b16 %v2113, %v2109
    %v2286 = vpack.c.b16 %v2114, %v2110
    %v2287 = vpack.c.b16 %v2115, %v2111
    %v2288 = vpack.c.b16 %v2116, %v2112
    %v2289 = vpack.c.b16 %v2121, %v2117
    %v2290 = vpack.c.b16 %v2122, %v2118
    %v2291 = vpack.c.b16 %v2123, %v2119
    %v2292 = vpack.c.b16 %v2124, %v2120
    %v2293 = vpack.c.b16 %v2129, %v2125
    %v2294 = vpack.c.b16 %v2130, %v2126
    %v2295 = vpack.c.b16 %v2131, %v2127
    %v2296 = vpack.c.b16 %v2132, %v2128
    %v2297 = vpack.c.b16 %v2137, %v2133
    %v2298 = vpack.c.b16 %v2138, %v2134
    %v2299 = vpack.c.b16 %v2139, %v2135
    %v2300 = vpack.c.b16 %v2140, %v2136
    %v2301 = vpack.c.b16 %v2145, %v2141
    %v2302 = vpack.c.b16 %v2146, %v2142
    %v2303 = vpack.c.b16 %v2147, %v2143
    %v2304 = vpack.c.b16 %v2148, %v2144
    %v2305 = vpack.c.b16 %v2153, %v2149
    %v2306 = vpack.c.b16 %v2154, %v2150
    %v2307 = vpack.c.b16 %v2155, %v2151
    %v2308 = vpack.c.b16 %v2156, %v2152
    %v2309 = vpack.c.b16 %v2161, %v2157
    %v2310 = vpack.c.b16 %v2162, %v2158
    %v2311 = vpack.c.b16 %v2163, %v2159
    %v2312 = vpack.c.b16 %v2164, %v2160
    %v2313 = vpack.c.b16 %v2169, %v2165
    %v2314 = vpack.c.b16 %v2170, %v2166
    %v2315 = vpack.c.b16 %v2171, %v2167
    %v2316 = vpack.c.b16 %v2172, %v2168
    %v2317 = vpack.c.b16 %v2177, %v2173
    %v2318 = vpack.c.b16 %v2178, %v2174
    %v2319 = vpack.c.b16 %v2179, %v2175
    %v2320 = vpack.c.b16 %v2180, %v2176
    %v2321 = vpack.c.b16 %v2185, %v2181
    %v2322 = vpack.c.b16 %v2186, %v2182
    %v2323 = vpack.c.b16 %v2187, %v2183
    %v2324 = vpack.c.b16 %v2188, %v2184
    %v2325 = vpack.c.b16 %v2193, %v2189
    %v2326 = vpack.c.b16 %v2194, %v2190
    %v2327 = vpack.c.b16 %v2195, %v2191
    %v2328 = vpack.c.b16 %v2196, %v2192
    %v2329 = vpack.c.b16 %v2201, %v2197
    %v2330 = vpack.c.b16 %v2202, %v2198
    %v2331 = vpack.c.b16 %v2203, %v2199
    %v2332 = vpack.c.b16 %v2204, %v2200
    %2461 = vmatprep.subr.bf16.mxu0 %v2206
    %2462 = vmatpush1.bf16.msra.mxu0 %v2205
    %2463 = vmatprep.subr.bf16.mxu0 %v2210
    %2464 = vmatpush1.bf16.msra.mxu0 %v2209
    %2465 = vmatprep.subr.bf16.mxu0 %v2214
    %2466 = vmatpush1.bf16.msra.mxu0 %v2213
    %2467 = vmatprep.subr.bf16.mxu0 %v2218
    %2468 = vmatpush1.bf16.msra.mxu0 %v2217
    %2469 = vmatprep.subr.bf16.mxu0 %v2222
    %2470 = vmatpush1.bf16.msra.mxu0 %v2221
    %2471 = vmatprep.subr.bf16.mxu0 %v2226
    %2472 = vmatpush1.bf16.msra.mxu0 %v2225
    %2473 = vmatprep.subr.bf16.mxu0 %v2230
    %2474 = vmatpush1.bf16.msra.mxu0 %v2229
    %2475 = vmatprep.subr.bf16.mxu0 %v2234
    %2476 = vmatpush1.bf16.msra.mxu0 %v2233
    %2477 = vmatprep.subr.bf16.mxu0 %v2238
    %2478 = vmatpush1.bf16.msra.mxu0 %v2237
    %2479 = vmatprep.subr.bf16.mxu0 %v2242
    %2480 = vmatpush1.bf16.msra.mxu0 %v2241
    %2481 = vmatprep.subr.bf16.mxu0 %v2246
    %2482 = vmatpush1.bf16.msra.mxu0 %v2245
    %2483 = vmatprep.subr.bf16.mxu0 %v2250
    %2484 = vmatpush1.bf16.msra.mxu0 %v2249
    %2485 = vmatprep.subr.bf16.mxu0 %v2254
    %2486 = vmatpush1.bf16.msra.mxu0 %v2253
    %2487 = vmatprep.subr.bf16.mxu0 %v2258
    %2488 = vmatpush1.bf16.msra.mxu0 %v2257
    %2489 = vmatprep.subr.bf16.mxu0 %v2262
    %2490 = vmatpush1.bf16.msra.mxu0 %v2261
    %2491 = vmatprep.subr.bf16.mxu0 %v2266
    %2492 = vmatpush1.bf16.msra.mxu0 %v2265
    %2493 = vmatprep.mubr.bf16.mxu0 %v1668
    %2494 = vmatmul.mubr.bf16.gmra.mrb[0].mxu0 %v1667
    %v2495 = vpop.f32.mrb[0].mxu0
    %v2496 = vadd.f32 %v1804, %v2495
    %v2497 = vpop.f32.mrb[0].mxu0
    %v2498 = vadd.f32 %v1808, %v2497
    %v2499 = vpop.f32.mrb[0].mxu0
    %v2500 = vpop.f32.mrb[0].mxu0
    %2501 = vdwg.mxu0
    %2502 = vmatprep.subr.bf16.mxu0 %v2270
    %2503 = vmatpush1.bf16.msra.mxu0 %v2269
    %2504 = vmatprep.subr.bf16.mxu0 %v2274
    %2505 = vmatpush1.bf16.msra.mxu0 %v2273
    %2506 = vmatprep.subr.bf16.mxu0 %v2278
    %2507 = vmatpush1.bf16.msra.mxu0 %v2277
    %2508 = vmatprep.subr.bf16.mxu0 %v2282
    %2509 = vmatpush1.bf16.msra.mxu0 %v2281
    %2510 = vmatprep.subr.bf16.mxu0 %v2286
    %2511 = vmatpush1.bf16.msra.mxu0 %v2285
    %2512 = vmatprep.subr.bf16.mxu0 %v2290
    %2513 = vmatpush1.bf16.msra.mxu0 %v2289
    %2514 = vmatprep.subr.bf16.mxu0 %v2294
    %2515 = vmatpush1.bf16.msra.mxu0 %v2293
    %2516 = vmatprep.subr.bf16.mxu0 %v2298
    %2517 = vmatpush1.bf16.msra.mxu0 %v2297
    %2518 = vmatprep.subr.bf16.mxu0 %v2302
    %2519 = vmatpush1.bf16.msra.mxu0 %v2301
    %2520 = vmatprep.subr.bf16.mxu0 %v2306
    %2521 = vmatpush1.bf16.msra.mxu0 %v2305
    %2522 = vmatprep.subr.bf16.mxu0 %v2310
    %2523 = vmatpush1.bf16.msra.mxu0 %v2309
    %2524 = vmatprep.subr.bf16.mxu0 %v2314
    %2525 = vmatpush1.bf16.msra.mxu0 %v2313
    %2526 = vmatprep.subr.bf16.mxu0 %v2318
    %2527 = vmatpush1.bf16.msra.mxu0 %v2317
    %2528 = vmatprep.subr.bf16.mxu0 %v2322
    %2529 = vmatpush1.bf16.msra.mxu0 %v2321
    %2530 = vmatprep.subr.bf16.mxu0 %v2326
    %2531 = vmatpush1.bf16.msra.mxu0 %v2325
    %2532 = vmatprep.subr.bf16.mxu0 %v2330
    %2533 = vmatpush1.bf16.msra.mxu0 %v2329
    %2534 = vmatprep.mubr.bf16.mxu0 %v1670
    %2535 = vmatmul.mubr.bf16.gmra.mrb[0].mxu0 %v1669
    %v2536 = vpop.f32.mrb[0].mxu0
    %v2537 = vadd.f32 %v2496, %v2536
    %v2538 = vpop.f32.mrb[0].mxu0
    %v2539 = vadd.f32 %v2498, %v2538
    %v2540 = vpop.f32.mrb[0].mxu0
    %v2541 = vpop.f32.mrb[0].mxu0
    %2542 = vdwg.mxu0
    %2543 = vmatprep.subr.bf16.mxu0 %v2208
    %2544 = vmatpush1.bf16.msra.mxu0 %v2207
    %2545 = vmatprep.subr.bf16.mxu0 %v2212
    %2546 = vmatpush1.bf16.msra.mxu0 %v2211
    %2547 = vmatprep.subr.bf16.mxu0 %v2216
    %2548 = vmatpush1.bf16.msra.mxu0 %v2215
    %2549 = vmatprep.subr.bf16.mxu0 %v2220
    %2550 = vmatpush1.bf16.msra.mxu0 %v2219
    %2551 = vmatprep.subr.bf16.mxu0 %v2224
    %2552 = vmatpush1.bf16.msra.mxu0 %v2223
    %2553 = vmatprep.subr.bf16.mxu0 %v2228
    %2554 = vmatpush1.bf16.msra.mxu0 %v2227
    %2555 = vmatprep.subr.bf16.mxu0 %v2232
    %2556 = vmatpush1.bf16.msra.mxu0 %v2231
    %2557 = vmatprep.subr.bf16.mxu0 %v2236
    %2558 = vmatpush1.bf16.msra.mxu0 %v2235
    %2559 = vmatprep.subr.bf16.mxu0 %v2240
    %2560 = vmatpush1.bf16.msra.mxu0 %v2239
    %2561 = vmatprep.subr.bf16.mxu0 %v2244
    %2562 = vmatpush1.bf16.msra.mxu0 %v2243
    %2563 = vmatprep.subr.bf16.mxu0 %v2248
    %2564 = vmatpush1.bf16.msra.mxu0 %v2247
    %2565 = vmatprep.subr.bf16.mxu0 %v2252
    %2566 = vmatpush1.bf16.msra.mxu0 %v2251
    %2567 = vmatprep.subr.bf16.mxu0 %v2256
    %2568 = vmatpush1.bf16.msra.mxu0 %v2255
    %2569 = vmatprep.subr.bf16.mxu0 %v2260
    %2570 = vmatpush1.bf16.msra.mxu0 %v2259
    %2571 = vmatprep.subr.bf16.mxu0 %v2264
    %2572 = vmatpush1.bf16.msra.mxu0 %v2263
    %2573 = vmatprep.subr.bf16.mxu0 %v2268
    %2574 = vmatpush1.bf16.msra.mxu0 %v2267
    %2575 = vmatprep.mubr.bf16.mxu0 %v1668
    %2576 = vmatmul.mubr.bf16.gmra.mrb[0].mxu0 %v1667
    %v2577 = vpop.f32.mrb[0].mxu0
    %v2578 = vadd.f32 %v1812, %v2577
    %v2579 = vpop.f32.mrb[0].mxu0
    %v2580 = vadd.f32 %v1816, %v2579
    %v2581 = vpop.f32.mrb[0].mxu0
    %v2582 = vpop.f32.mrb[0].mxu0
    %2583 = vdwg.mxu0
    %2584 = vmatprep.subr.bf16.mxu0 %v2272
    %2585 = vmatpush1.bf16.msra.mxu0 %v2271
    %2586 = vmatprep.subr.bf16.mxu0 %v2276
    %2587 = vmatpush1.bf16.msra.mxu0 %v2275
    %2588 = vmatprep.subr.bf16.mxu0 %v2280
    %2589 = vmatpush1.bf16.msra.mxu0 %v2279
    %2590 = vmatprep.subr.bf16.mxu0 %v2284
    %2591 = vmatpush1.bf16.msra.mxu0 %v2283
    %2592 = vmatprep.subr.bf16.mxu0 %v2288
    %2593 = vmatpush1.bf16.msra.mxu0 %v2287
    %2594 = vmatprep.subr.bf16.mxu0 %v2292
    %2595 = vmatpush1.bf16.msra.mxu0 %v2291
    %2596 = vmatprep.subr.bf16.mxu0 %v2296
    %2597 = vmatpush1.bf16.msra.mxu0 %v2295
    %2598 = vmatprep.subr.bf16.mxu0 %v2300
    %2599 = vmatpush1.bf16.msra.mxu0 %v2299
    %2600 = vmatprep.subr.bf16.mxu0 %v2304
    %2601 = vmatpush1.bf16.msra.mxu0 %v2303
    %2602 = vmatprep.subr.bf16.mxu0 %v2308
    %2603 = vmatpush1.bf16.msra.mxu0 %v2307
    %2604 = vmatprep.subr.bf16.mxu0 %v2312
    %2605 = vmatpush1.bf16.msra.mxu0 %v2311
    %2606 = vmatprep.subr.bf16.mxu0 %v2316
    %2607 = vmatpush1.bf16.msra.mxu0 %v2315
    %2608 = vmatprep.subr.bf16.mxu0 %v2320
    %2609 = vmatpush1.bf16.msra.mxu0 %v2319
    %2610 = vmatprep.subr.bf16.mxu0 %v2324
    %2611 = vmatpush1.bf16.msra.mxu0 %v2323
    %2612 = vmatprep.subr.bf16.mxu0 %v2328
    %2613 = vmatpush1.bf16.msra.mxu0 %v2327
    %2614 = vmatprep.subr.bf16.mxu0 %v2332
    %2615 = vmatpush1.bf16.msra.mxu0 %v2331
    %2616 = vmatprep.mubr.bf16.mxu0 %v1670
    %2617 = vmatmul.mubr.bf16.gmra.mrb[0].mxu0 %v1669
    %v2618 = vpop.f32.mrb[0].mxu0
    %v2619 = vadd.f32 %v2578, %v2618
    %v2620 = vpop.f32.mrb[0].mxu0
    %v2621 = vadd.f32 %v2580, %v2620
    %v2622 = vpop.f32.mrb[0].mxu0
    %v2623 = vpop.f32.mrb[0].mxu0
    %2624 = vdwg.mxu0
    %v2625 = vmax.f32 %v2537, 0.0
    %v2626 = vmax.f32 %v2539, 0.0
    %v2627 = vmax.f32 %v2619, 0.0
    %v2628 = vmax.f32 %v2621, 0.0
    %v2629 = vpack.c.bf16 %v2625, %v2625
    %v2630 = vpack.c.bf16 %v2626, %v2626
    %v2631 = vpack.c.bf16 %v2627, %v2627
    %v2632 = vpack.c.bf16 %v2628, %v2628
    %v2633 = vld [vmem:[#allocation2] sm:$0xff]
    %v2634 = vld [vmem:[#allocation2 + $0x8] sm:$0xff]
    %v2635 = vld [vmem:[#allocation2 + $0x10] sm:$0xff]
    %v2636 = vld [vmem:[#allocation2 + $0x18] sm:$0xff]
    %v2637 = vld [vmem:[#allocation2 + $0x20] sm:$0xff]
    %v2638 = vld [vmem:[#allocation2 + $0x28] sm:$0xff]
    %v2639 = vld [vmem:[#allocation2 + $0x30] sm:$0xff]
    %v2640 = vld [vmem:[#allocation2 + $0x38] sm:$0xff]
    %v2641 = vld [vmem:[#allocation2 + $0x40] sm:$0xff]
    %v2642 = vld [vmem:[#allocation2 + $0x48] sm:$0xff]
    %v2643 = vld [vmem:[#allocation2 + $0x50] sm:$0xff]
    %v2644 = vld [vmem:[#allocation2 + $0x58] sm:$0xff]
    %v2645 = vld [vmem:[#allocation2 + $0x60] sm:$0xff]
    %v2646 = vld [vmem:[#allocation2 + $0x68] sm:$0xff]
    %v2647 = vld [vmem:[#allocation2 + $0x70] sm:$0xff]
    %v2648 = vld [vmem:[#allocation2 + $0x78] sm:$0xff]
    %v2649 = vld [vmem:[#allocation2 + $0x80] sm:$0xff]
    %v2650 = vld [vmem:[#allocation2 + $0x88] sm:$0xff]
    %v2651 = vld [vmem:[#allocation2 + $0x90] sm:$0xff]
    %v2652 = vld [vmem:[#allocation2 + $0x98] sm:$0xff]
    %v2653 = vld [vmem:[#allocation2 + $0xa0] sm:$0xff]
    %v2654 = vld [vmem:[#allocation2 + $0xa8] sm:$0xff]
    %v2655 = vld [vmem:[#allocation2 + $0xb0] sm:$0xff]
    %v2656 = vld [vmem:[#allocation2 + $0xb8] sm:$0xff]
    %v2657 = vld [vmem:[#allocation2 + $0xc0] sm:$0xff]
    %v2658 = vld [vmem:[#allocation2 + $0xc8] sm:$0xff]
    %v2659 = vld [vmem:[#allocation2 + $0xd0] sm:$0xff]
    %v2660 = vld [vmem:[#allocation2 + $0xd8] sm:$0xff]
    %v2661 = vld [vmem:[#allocation2 + $0xe0] sm:$0xff]
    %v2662 = vld [vmem:[#allocation2 + $0xe8] sm:$0xff]
    %v2663 = vld [vmem:[#allocation2 + $0xf0] sm:$0xff]
    %v2664 = vld [vmem:[#allocation2 + $0xf8] sm:$0xff]
    %v2665 = vld [vmem:[#allocation2 + $0x100] sm:$0xff]
    %v2666 = vld [vmem:[#allocation2 + $0x108] sm:$0xff]
    %v2667 = vld [vmem:[#allocation2 + $0x110] sm:$0xff]
    %v2668 = vld [vmem:[#allocation2 + $0x118] sm:$0xff]
    %v2669 = vld [vmem:[#allocation2 + $0x120] sm:$0xff]
    %v2670 = vld [vmem:[#allocation2 + $0x128] sm:$0xff]
    %v2671 = vld [vmem:[#allocation2 + $0x130] sm:$0xff]
    %v2672 = vld [vmem:[#allocation2 + $0x138] sm:$0xff]
    %v2673 = vld [vmem:[#allocation2 + $0x140] sm:$0xff]
    %v2674 = vld [vmem:[#allocation2 + $0x148] sm:$0xff]
    %v2675 = vld [vmem:[#allocation2 + $0x150] sm:$0xff]
    %v2676 = vld [vmem:[#allocation2 + $0x158] sm:$0xff]
    %v2677 = vld [vmem:[#allocation2 + $0x160] sm:$0xff]
    %v2678 = vld [vmem:[#allocation2 + $0x168] sm:$0xff]
    %v2679 = vld [vmem:[#allocation2 + $0x170] sm:$0xff]
    %v2680 = vld [vmem:[#allocation2 + $0x178] sm:$0xff]
    %v2681 = vld [vmem:[#allocation2 + $0x180] sm:$0xff]
    %v2682 = vld [vmem:[#allocation2 + $0x188] sm:$0xff]
    %v2683 = vld [vmem:[#allocation2 + $0x190] sm:$0xff]
    %v2684 = vld [vmem:[#allocation2 + $0x198] sm:$0xff]
    %v2685 = vld [vmem:[#allocation2 + $0x1a0] sm:$0xff]
    %v2686 = vld [vmem:[#allocation2 + $0x1a8] sm:$0xff]
    %v2687 = vld [vmem:[#allocation2 + $0x1b0] sm:$0xff]
    %v2688 = vld [vmem:[#allocation2 + $0x1b8] sm:$0xff]
    %v2689 = vld [vmem:[#allocation2 + $0x1c0] sm:$0xff]
    %v2690 = vld [vmem:[#allocation2 + $0x1c8] sm:$0xff]
    %v2691 = vld [vmem:[#allocation2 + $0x1d0] sm:$0xff]
    %v2692 = vld [vmem:[#allocation2 + $0x1d8] sm:$0xff]
    %v2693 = vld [vmem:[#allocation2 + $0x1e0] sm:$0xff]
    %v2694 = vld [vmem:[#allocation2 + $0x1e8] sm:$0xff]
    %v2695 = vld [vmem:[#allocation2 + $0x1f0] sm:$0xff]
    %v2696 = vld [vmem:[#allocation2 + $0x1f8] sm:$0xff]
    %v2697 = vld [vmem:[#allocation2 + $0x200] sm:$0xff]
    %v2698 = vld [vmem:[#allocation2 + $0x208] sm:$0xff]
    %v2699 = vld [vmem:[#allocation2 + $0x210] sm:$0xff]
    %v2700 = vld [vmem:[#allocation2 + $0x218] sm:$0xff]
    %v2701 = vld [vmem:[#allocation2 + $0x220] sm:$0xff]
    %v2702 = vld [vmem:[#allocation2 + $0x228] sm:$0xff]
    %v2703 = vld [vmem:[#allocation2 + $0x230] sm:$0xff]
    %v2704 = vld [vmem:[#allocation2 + $0x238] sm:$0xff]
    %v2705 = vld [vmem:[#allocation2 + $0x240] sm:$0xff]
    %v2706 = vld [vmem:[#allocation2 + $0x248] sm:$0xff]
    %v2707 = vld [vmem:[#allocation2 + $0x250] sm:$0xff]
    %v2708 = vld [vmem:[#allocation2 + $0x258] sm:$0xff]
    %v2709 = vld [vmem:[#allocation2 + $0x260] sm:$0xff]
    %v2710 = vld [vmem:[#allocation2 + $0x268] sm:$0xff]
    %v2711 = vld [vmem:[#allocation2 + $0x270] sm:$0xff]
    %v2712 = vld [vmem:[#allocation2 + $0x278] sm:$0xff]
    %v2713 = vld [vmem:[#allocation2 + $0x280] sm:$0xff]
    %v2714 = vld [vmem:[#allocation2 + $0x288] sm:$0xff]
    %v2715 = vld [vmem:[#allocation2 + $0x290] sm:$0xff]
    %v2716 = vld [vmem:[#allocation2 + $0x298] sm:$0xff]
    %v2717 = vld [vmem:[#allocation2 + $0x2a0] sm:$0xff]
    %v2718 = vld [vmem:[#allocation2 + $0x2a8] sm:$0xff]
    %v2719 = vld [vmem:[#allocation2 + $0x2b0] sm:$0xff]
    %v2720 = vld [vmem:[#allocation2 + $0x2b8] sm:$0xff]
    %v2721 = vld [vmem:[#allocation2 + $0x2c0] sm:$0xff]
    %v2722 = vld [vmem:[#allocation2 + $0x2c8] sm:$0xff]
    %v2723 = vld [vmem:[#allocation2 + $0x2d0] sm:$0xff]
    %v2724 = vld [vmem:[#allocation2 + $0x2d8] sm:$0xff]
    %v2725 = vld [vmem:[#allocation2 + $0x2e0] sm:$0xff]
    %v2726 = vld [vmem:[#allocation2 + $0x2e8] sm:$0xff]
    %v2727 = vld [vmem:[#allocation2 + $0x2f0] sm:$0xff]
    %v2728 = vld [vmem:[#allocation2 + $0x2f8] sm:$0xff]
    %v2729 = vld [vmem:[#allocation2 + $0x300] sm:$0xff]
    %v2730 = vld [vmem:[#allocation2 + $0x308] sm:$0xff]
    %v2731 = vld [vmem:[#allocation2 + $0x310] sm:$0xff]
    %v2732 = vld [vmem:[#allocation2 + $0x318] sm:$0xff]
    %v2733 = vld [vmem:[#allocation2 + $0x320] sm:$0xff]
    %v2734 = vld [vmem:[#allocation2 + $0x328] sm:$0xff]
    %v2735 = vld [vmem:[#allocation2 + $0x330] sm:$0xff]
    %v2736 = vld [vmem:[#allocation2 + $0x338] sm:$0xff]
    %v2737 = vld [vmem:[#allocation2 + $0x340] sm:$0xff]
    %v2738 = vld [vmem:[#allocation2 + $0x348] sm:$0xff]
    %v2739 = vld [vmem:[#allocation2 + $0x350] sm:$0xff]
    %v2740 = vld [vmem:[#allocation2 + $0x358] sm:$0xff]
    %v2741 = vld [vmem:[#allocation2 + $0x360] sm:$0xff]
    %v2742 = vld [vmem:[#allocation2 + $0x368] sm:$0xff]
    %v2743 = vld [vmem:[#allocation2 + $0x370] sm:$0xff]
    %v2744 = vld [vmem:[#allocation2 + $0x378] sm:$0xff]
    %v2745 = vld [vmem:[#allocation2 + $0x380] sm:$0xff]
    %v2746 = vld [vmem:[#allocation2 + $0x388] sm:$0xff]
    %v2747 = vld [vmem:[#allocation2 + $0x390] sm:$0xff]
    %v2748 = vld [vmem:[#allocation2 + $0x398] sm:$0xff]
    %v2749 = vld [vmem:[#allocation2 + $0x3a0] sm:$0xff]
    %v2750 = vld [vmem:[#allocation2 + $0x3a8] sm:$0xff]
    %v2751 = vld [vmem:[#allocation2 + $0x3b0] sm:$0xff]
    %v2752 = vld [vmem:[#allocation2 + $0x3b8] sm:$0xff]
    %v2753 = vld [vmem:[#allocation2 + $0x3c0] sm:$0xff]
    %v2754 = vld [vmem:[#allocation2 + $0x3c8] sm:$0xff]
    %v2755 = vld [vmem:[#allocation2 + $0x3d0] sm:$0xff]
    %v2756 = vld [vmem:[#allocation2 + $0x3d8] sm:$0xff]
    %v2757 = vld [vmem:[#allocation2 + $0x3e0] sm:$0xff]
    %v2758 = vld [vmem:[#allocation2 + $0x3e8] sm:$0xff]
    %v2759 = vld [vmem:[#allocation2 + $0x3f0] sm:$0xff]
    %v2760 = vld [vmem:[#allocation2 + $0x3f8] sm:$0xff]
    %v2761 = vld [vmem:[%s7] sm:$0xf]
    %v2763 = vlaneseq
    %v2764 = vshrl.u32 %v2763, 7
    %v2765 = vsub.s32 0, %v2764
    %v2766 = vrot.slane %v2761, %v2765
    %v2767 = vlaneseq
    %v2768 = vshrl.u32 %v2767, 7
    %v2769 = vsub.s32 1, %v2768
    %v2770 = vrot.slane %v2761, %v2769
    %v2771 = vlaneseq
    %v2772 = vshrl.u32 %v2771, 7
    %v2773 = vsub.s32 2, %v2772
    %v2774 = vrot.slane %v2761, %v2773
    %v2775 = vlaneseq
    %v2776 = vshrl.u32 %v2775, 7
    %v2777 = vsub.s32 3, %v2776
    %v2778 = vrot.slane %v2761, %v2777
    %v2911 = vunpack.c.l.b16 %v2633
    %v2912 = vunpack.c.h.b16 %v2633
    %v2913 = vunpack.c.l.b16 %v2634
    %v2914 = vunpack.c.h.b16 %v2634
    %v2915 = vunpack.c.l.b16 %v2635
    %v2916 = vunpack.c.h.b16 %v2635
    %v2917 = vunpack.c.l.b16 %v2636
    %v2918 = vunpack.c.h.b16 %v2636
    %v2919 = vunpack.c.l.b16 %v2637
    %v2920 = vunpack.c.h.b16 %v2637
    %v2921 = vunpack.c.l.b16 %v2638
    %v2922 = vunpack.c.h.b16 %v2638
    %v2923 = vunpack.c.l.b16 %v2639
    %v2924 = vunpack.c.h.b16 %v2639
    %v2925 = vunpack.c.l.b16 %v2640
    %v2926 = vunpack.c.h.b16 %v2640
    %v2927 = vunpack.c.l.b16 %v2641
    %v2928 = vunpack.c.h.b16 %v2641
    %v2929 = vunpack.c.l.b16 %v2642
    %v2930 = vunpack.c.h.b16 %v2642
    %v2931 = vunpack.c.l.b16 %v2643
    %v2932 = vunpack.c.h.b16 %v2643
    %v2933 = vunpack.c.l.b16 %v2644
    %v2934 = vunpack.c.h.b16 %v2644
    %v2935 = vunpack.c.l.b16 %v2645
    %v2936 = vunpack.c.h.b16 %v2645
    %v2937 = vunpack.c.l.b16 %v2646
    %v2938 = vunpack.c.h.b16 %v2646
    %v2939 = vunpack.c.l.b16 %v2647
    %v2940 = vunpack.c.h.b16 %v2647
    %v2941 = vunpack.c.l.b16 %v2648
    %v2942 = vunpack.c.h.b16 %v2648
    %v2943 = vunpack.c.l.b16 %v2649
    %v2944 = vunpack.c.h.b16 %v2649
    %v2945 = vunpack.c.l.b16 %v2650
    %v2946 = vunpack.c.h.b16 %v2650
    %v2947 = vunpack.c.l.b16 %v2651
    %v2948 = vunpack.c.h.b16 %v2651
    %v2949 = vunpack.c.l.b16 %v2652
    %v2950 = vunpack.c.h.b16 %v2652
    %v2951 = vunpack.c.l.b16 %v2653
    %v2952 = vunpack.c.h.b16 %v2653
    %v2953 = vunpack.c.l.b16 %v2654
    %v2954 = vunpack.c.h.b16 %v2654
    %v2955 = vunpack.c.l.b16 %v2655
    %v2956 = vunpack.c.h.b16 %v2655
    %v2957 = vunpack.c.l.b16 %v2656
    %v2958 = vunpack.c.h.b16 %v2656
    %v2959 = vunpack.c.l.b16 %v2657
    %v2960 = vunpack.c.h.b16 %v2657
    %v2961 = vunpack.c.l.b16 %v2658
    %v2962 = vunpack.c.h.b16 %v2658
    %v2963 = vunpack.c.l.b16 %v2659
    %v2964 = vunpack.c.h.b16 %v2659
    %v2965 = vunpack.c.l.b16 %v2660
    %v2966 = vunpack.c.h.b16 %v2660
    %v2967 = vunpack.c.l.b16 %v2661
    %v2968 = vunpack.c.h.b16 %v2661
    %v2969 = vunpack.c.l.b16 %v2662
    %v2970 = vunpack.c.h.b16 %v2662
    %v2971 = vunpack.c.l.b16 %v2663
    %v2972 = vunpack.c.h.b16 %v2663
    %v2973 = vunpack.c.l.b16 %v2664
    %v2974 = vunpack.c.h.b16 %v2664
    %v2975 = vunpack.c.l.b16 %v2665
    %v2976 = vunpack.c.h.b16 %v2665
    %v2977 = vunpack.c.l.b16 %v2666
    %v2978 = vunpack.c.h.b16 %v2666
    %v2979 = vunpack.c.l.b16 %v2667
    %v2980 = vunpack.c.h.b16 %v2667
    %v2981 = vunpack.c.l.b16 %v2668
    %v2982 = vunpack.c.h.b16 %v2668
    %v2983 = vunpack.c.l.b16 %v2669
    %v2984 = vunpack.c.h.b16 %v2669
    %v2985 = vunpack.c.l.b16 %v2670
    %v2986 = vunpack.c.h.b16 %v2670
    %v2987 = vunpack.c.l.b16 %v2671
    %v2988 = vunpack.c.h.b16 %v2671
    %v2989 = vunpack.c.l.b16 %v2672
    %v2990 = vunpack.c.h.b16 %v2672
    %v2991 = vunpack.c.l.b16 %v2673
    %v2992 = vunpack.c.h.b16 %v2673
    %v2993 = vunpack.c.l.b16 %v2674
    %v2994 = vunpack.c.h.b16 %v2674
    %v2995 = vunpack.c.l.b16 %v2675
    %v2996 = vunpack.c.h.b16 %v2675
    %v2997 = vunpack.c.l.b16 %v2676
    %v2998 = vunpack.c.h.b16 %v2676
    %v2999 = vunpack.c.l.b16 %v2677
    %v3000 = vunpack.c.h.b16 %v2677
    %v3001 = vunpack.c.l.b16 %v2678
    %v3002 = vunpack.c.h.b16 %v2678
    %v3003 = vunpack.c.l.b16 %v2679
    %v3004 = vunpack.c.h.b16 %v2679
    %v3005 = vunpack.c.l.b16 %v2680
    %v3006 = vunpack.c.h.b16 %v2680
    %v3007 = vunpack.c.l.b16 %v2681
    %v3008 = vunpack.c.h.b16 %v2681
    %v3009 = vunpack.c.l.b16 %v2682
    %v3010 = vunpack.c.h.b16 %v2682
    %v3011 = vunpack.c.l.b16 %v2683
    %v3012 = vunpack.c.h.b16 %v2683
    %v3013 = vunpack.c.l.b16 %v2684
    %v3014 = vunpack.c.h.b16 %v2684
    %v3015 = vunpack.c.l.b16 %v2685
    %v3016 = vunpack.c.h.b16 %v2685
    %v3017 = vunpack.c.l.b16 %v2686
    %v3018 = vunpack.c.h.b16 %v2686
    %v3019 = vunpack.c.l.b16 %v2687
    %v3020 = vunpack.c.h.b16 %v2687
    %v3021 = vunpack.c.l.b16 %v2688
    %v3022 = vunpack.c.h.b16 %v2688
    %v3023 = vunpack.c.l.b16 %v2689
    %v3024 = vunpack.c.h.b16 %v2689
    %v3025 = vunpack.c.l.b16 %v2690
    %v3026 = vunpack.c.h.b16 %v2690
    %v3027 = vunpack.c.l.b16 %v2691
    %v3028 = vunpack.c.h.b16 %v2691
    %v3029 = vunpack.c.l.b16 %v2692
    %v3030 = vunpack.c.h.b16 %v2692
    %v3031 = vunpack.c.l.b16 %v2693
    %v3032 = vunpack.c.h.b16 %v2693
    %v3033 = vunpack.c.l.b16 %v2694
    %v3034 = vunpack.c.h.b16 %v2694
    %v3035 = vunpack.c.l.b16 %v2695
    %v3036 = vunpack.c.h.b16 %v2695
    %v3037 = vunpack.c.l.b16 %v2696
    %v3038 = vunpack.c.h.b16 %v2696
    %v3039 = vunpack.c.l.b16 %v2697
    %v3040 = vunpack.c.h.b16 %v2697
    %v3041 = vunpack.c.l.b16 %v2698
    %v3042 = vunpack.c.h.b16 %v2698
    %v3043 = vunpack.c.l.b16 %v2699
    %v3044 = vunpack.c.h.b16 %v2699
    %v3045 = vunpack.c.l.b16 %v2700
    %v3046 = vunpack.c.h.b16 %v2700
    %v3047 = vunpack.c.l.b16 %v2701
    %v3048 = vunpack.c.h.b16 %v2701
    %v3049 = vunpack.c.l.b16 %v2702
    %v3050 = vunpack.c.h.b16 %v2702
    %v3051 = vunpack.c.l.b16 %v2703
    %v3052 = vunpack.c.h.b16 %v2703
    %v3053 = vunpack.c.l.b16 %v2704
    %v3054 = vunpack.c.h.b16 %v2704
    %v3055 = vunpack.c.l.b16 %v2705
    %v3056 = vunpack.c.h.b16 %v2705
    %v3057 = vunpack.c.l.b16 %v2706
    %v3058 = vunpack.c.h.b16 %v2706
    %v3059 = vunpack.c.l.b16 %v2707
    %v3060 = vunpack.c.h.b16 %v2707
    %v3061 = vunpack.c.l.b16 %v2708
    %v3062 = vunpack.c.h.b16 %v2708
    %v3063 = vunpack.c.l.b16 %v2709
    %v3064 = vunpack.c.h.b16 %v2709
    %v3065 = vunpack.c.l.b16 %v2710
    %v3066 = vunpack.c.h.b16 %v2710
    %v3067 = vunpack.c.l.b16 %v2711
    %v3068 = vunpack.c.h.b16 %v2711
    %v3069 = vunpack.c.l.b16 %v2712
    %v3070 = vunpack.c.h.b16 %v2712
    %v3071 = vunpack.c.l.b16 %v2713
    %v3072 = vunpack.c.h.b16 %v2713
    %v3073 = vunpack.c.l.b16 %v2714
    %v3074 = vunpack.c.h.b16 %v2714
    %v3075 = vunpack.c.l.b16 %v2715
    %v3076 = vunpack.c.h.b16 %v2715
    %v3077 = vunpack.c.l.b16 %v2716
    %v3078 = vunpack.c.h.b16 %v2716
    %v3079 = vunpack.c.l.b16 %v2717
    %v3080 = vunpack.c.h.b16 %v2717
    %v3081 = vunpack.c.l.b16 %v2718
    %v3082 = vunpack.c.h.b16 %v2718
    %v3083 = vunpack.c.l.b16 %v2719
    %v3084 = vunpack.c.h.b16 %v2719
    %v3085 = vunpack.c.l.b16 %v2720
    %v3086 = vunpack.c.h.b16 %v2720
    %v3087 = vunpack.c.l.b16 %v2721
    %v3088 = vunpack.c.h.b16 %v2721
    %v3089 = vunpack.c.l.b16 %v2722
    %v3090 = vunpack.c.h.b16 %v2722
    %v3091 = vunpack.c.l.b16 %v2723
    %v3092 = vunpack.c.h.b16 %v2723
    %v3093 = vunpack.c.l.b16 %v2724
    %v3094 = vunpack.c.h.b16 %v2724
    %v3095 = vunpack.c.l.b16 %v2725
    %v3096 = vunpack.c.h.b16 %v2725
    %v3097 = vunpack.c.l.b16 %v2726
    %v3098 = vunpack.c.h.b16 %v2726
    %v3099 = vunpack.c.l.b16 %v2727
    %v3100 = vunpack.c.h.b16 %v2727
    %v3101 = vunpack.c.l.b16 %v2728
    %v3102 = vunpack.c.h.b16 %v2728
    %v3103 = vunpack.c.l.b16 %v2729
    %v3104 = vunpack.c.h.b16 %v2729
    %v3105 = vunpack.c.l.b16 %v2730
    %v3106 = vunpack.c.h.b16 %v2730
    %v3107 = vunpack.c.l.b16 %v2731
    %v3108 = vunpack.c.h.b16 %v2731
    %v3109 = vunpack.c.l.b16 %v2732
    %v3110 = vunpack.c.h.b16 %v2732
    %v3111 = vunpack.c.l.b16 %v2733
    %v3112 = vunpack.c.h.b16 %v2733
    %v3113 = vunpack.c.l.b16 %v2734
    %v3114 = vunpack.c.h.b16 %v2734
    %v3115 = vunpack.c.l.b16 %v2735
    %v3116 = vunpack.c.h.b16 %v2735
    %v3117 = vunpack.c.l.b16 %v2736
    %v3118 = vunpack.c.h.b16 %v2736
    %v3119 = vunpack.c.l.b16 %v2737
    %v3120 = vunpack.c.h.b16 %v2737
    %v3121 = vunpack.c.l.b16 %v2738
    %v3122 = vunpack.c.h.b16 %v2738
    %v3123 = vunpack.c.l.b16 %v2739
    %v3124 = vunpack.c.h.b16 %v2739
    %v3125 = vunpack.c.l.b16 %v2740
    %v3126 = vunpack.c.h.b16 %v2740
    %v3127 = vunpack.c.l.b16 %v2741
    %v3128 = vunpack.c.h.b16 %v2741
    %v3129 = vunpack.c.l.b16 %v2742
    %v3130 = vunpack.c.h.b16 %v2742
    %v3131 = vunpack.c.l.b16 %v2743
    %v3132 = vunpack.c.h.b16 %v2743
    %v3133 = vunpack.c.l.b16 %v2744
    %v3134 = vunpack.c.h.b16 %v2744
    %v3135 = vunpack.c.l.b16 %v2745
    %v3136 = vunpack.c.h.b16 %v2745
    %v3137 = vunpack.c.l.b16 %v2746
    %v3138 = vunpack.c.h.b16 %v2746
    %v3139 = vunpack.c.l.b16 %v2747
    %v3140 = vunpack.c.h.b16 %v2747
    %v3141 = vunpack.c.l.b16 %v2748
    %v3142 = vunpack.c.h.b16 %v2748
    %v3143 = vunpack.c.l.b16 %v2749
    %v3144 = vunpack.c.h.b16 %v2749
    %v3145 = vunpack.c.l.b16 %v2750
    %v3146 = vunpack.c.h.b16 %v2750
    %v3147 = vunpack.c.l.b16 %v2751
    %v3148 = vunpack.c.h.b16 %v2751
    %v3149 = vunpack.c.l.b16 %v2752
    %v3150 = vunpack.c.h.b16 %v2752
    %v3151 = vunpack.c.l.b16 %v2753
    %v3152 = vunpack.c.h.b16 %v2753
    %v3153 = vunpack.c.l.b16 %v2754
    %v3154 = vunpack.c.h.b16 %v2754
    %v3155 = vunpack.c.l.b16 %v2755
    %v3156 = vunpack.c.h.b16 %v2755
    %v3157 = vunpack.c.l.b16 %v2756
    %v3158 = vunpack.c.h.b16 %v2756
    %v3159 = vunpack.c.l.b16 %v2757
    %v3160 = vunpack.c.h.b16 %v2757
    %v3161 = vunpack.c.l.b16 %v2758
    %v3162 = vunpack.c.h.b16 %v2758
    %v3163 = vunpack.c.l.b16 %v2759
    %v3164 = vunpack.c.h.b16 %v2759
    %v3165 = vunpack.c.l.b16 %v2760
    %v3166 = vunpack.c.h.b16 %v2760
    %v3167 = vpack.c.b16 %v2915, %v2911
    %v3168 = vpack.c.b16 %v2916, %v2912
    %v3169 = vpack.c.b16 %v2917, %v2913
    %v3170 = vpack.c.b16 %v2918, %v2914
    %v3171 = vpack.c.b16 %v2923, %v2919
    %v3172 = vpack.c.b16 %v2924, %v2920
    %v3173 = vpack.c.b16 %v2925, %v2921
    %v3174 = vpack.c.b16 %v2926, %v2922
    %v3175 = vpack.c.b16 %v2931, %v2927
    %v3176 = vpack.c.b16 %v2932, %v2928
    %v3177 = vpack.c.b16 %v2933, %v2929
    %v3178 = vpack.c.b16 %v2934, %v2930
    %v3179 = vpack.c.b16 %v2939, %v2935
    %v3180 = vpack.c.b16 %v2940, %v2936
    %v3181 = vpack.c.b16 %v2941, %v2937
    %v3182 = vpack.c.b16 %v2942, %v2938
    %v3183 = vpack.c.b16 %v2947, %v2943
    %v3184 = vpack.c.b16 %v2948, %v2944
    %v3185 = vpack.c.b16 %v2949, %v2945
    %v3186 = vpack.c.b16 %v2950, %v2946
    %v3187 = vpack.c.b16 %v2955, %v2951
    %v3188 = vpack.c.b16 %v2956, %v2952
    %v3189 = vpack.c.b16 %v2957, %v2953
    %v3190 = vpack.c.b16 %v2958, %v2954
    %v3191 = vpack.c.b16 %v2963, %v2959
    %v3192 = vpack.c.b16 %v2964, %v2960
    %v3193 = vpack.c.b16 %v2965, %v2961
    %v3194 = vpack.c.b16 %v2966, %v2962
    %v3195 = vpack.c.b16 %v2971, %v2967
    %v3196 = vpack.c.b16 %v2972, %v2968
    %v3197 = vpack.c.b16 %v2973, %v2969
    %v3198 = vpack.c.b16 %v2974, %v2970
    %v3199 = vpack.c.b16 %v2979, %v2975
    %v3200 = vpack.c.b16 %v2980, %v2976
    %v3201 = vpack.c.b16 %v2981, %v2977
    %v3202 = vpack.c.b16 %v2982, %v2978
    %v3203 = vpack.c.b16 %v2987, %v2983
    %v3204 = vpack.c.b16 %v2988, %v2984
    %v3205 = vpack.c.b16 %v2989, %v2985
    %v3206 = vpack.c.b16 %v2990, %v2986
    %v3207 = vpack.c.b16 %v2995, %v2991
    %v3208 = vpack.c.b16 %v2996, %v2992
    %v3209 = vpack.c.b16 %v2997, %v2993
    %v3210 = vpack.c.b16 %v2998, %v2994
    %v3211 = vpack.c.b16 %v3003, %v2999
    %v3212 = vpack.c.b16 %v3004, %v3000
    %v3213 = vpack.c.b16 %v3005, %v3001
    %v3214 = vpack.c.b16 %v3006, %v3002
    %v3215 = vpack.c.b16 %v3011, %v3007
    %v3216 = vpack.c.b16 %v3012, %v3008
    %v3217 = vpack.c.b16 %v3013, %v3009
    %v3218 = vpack.c.b16 %v3014, %v3010
    %v3219 = vpack.c.b16 %v3019, %v3015
    %v3220 = vpack.c.b16 %v3020, %v3016
    %v3221 = vpack.c.b16 %v3021, %v3017
    %v3222 = vpack.c.b16 %v3022, %v3018
    %v3223 = vpack.c.b16 %v3027, %v3023
    %v3224 = vpack.c.b16 %v3028, %v3024
    %v3225 = vpack.c.b16 %v3029, %v3025
    %v3226 = vpack.c.b16 %v3030, %v3026
    %v3227 = vpack.c.b16 %v3035, %v3031
    %v3228 = vpack.c.b16 %v3036, %v3032
    %v3229 = vpack.c.b16 %v3037, %v3033
    %v3230 = vpack.c.b16 %v3038, %v3034
    %v3231 = vpack.c.b16 %v3043, %v3039
    %v3232 = vpack.c.b16 %v3044, %v3040
    %v3233 = vpack.c.b16 %v3045, %v3041
    %v3234 = vpack.c.b16 %v3046, %v3042
    %v3235 = vpack.c.b16 %v3051, %v3047
    %v3236 = vpack.c.b16 %v3052, %v3048
    %v3237 = vpack.c.b16 %v3053, %v3049
    %v3238 = vpack.c.b16 %v3054, %v3050
    %v3239 = vpack.c.b16 %v3059, %v3055
    %v3240 = vpack.c.b16 %v3060, %v3056
    %v3241 = vpack.c.b16 %v3061, %v3057
    %v3242 = vpack.c.b16 %v3062, %v3058
    %v3243 = vpack.c.b16 %v3067, %v3063
    %v3244 = vpack.c.b16 %v3068, %v3064
    %v3245 = vpack.c.b16 %v3069, %v3065
    %v3246 = vpack.c.b16 %v3070, %v3066
    %v3247 = vpack.c.b16 %v3075, %v3071
    %v3248 = vpack.c.b16 %v3076, %v3072
    %v3249 = vpack.c.b16 %v3077, %v3073
    %v3250 = vpack.c.b16 %v3078, %v3074
    %v3251 = vpack.c.b16 %v3083, %v3079
    %v3252 = vpack.c.b16 %v3084, %v3080
    %v3253 = vpack.c.b16 %v3085, %v3081
    %v3254 = vpack.c.b16 %v3086, %v3082
    %v3255 = vpack.c.b16 %v3091, %v3087
    %v3256 = vpack.c.b16 %v3092, %v3088
    %v3257 = vpack.c.b16 %v3093, %v3089
    %v3258 = vpack.c.b16 %v3094, %v3090
    %v3259 = vpack.c.b16 %v3099, %v3095
    %v3260 = vpack.c.b16 %v3100, %v3096
    %v3261 = vpack.c.b16 %v3101, %v3097
    %v3262 = vpack.c.b16 %v3102, %v3098
    %v3263 = vpack.c.b16 %v3107, %v3103
    %v3264 = vpack.c.b16 %v3108, %v3104
    %v3265 = vpack.c.b16 %v3109, %v3105
    %v3266 = vpack.c.b16 %v3110, %v3106
    %v3267 = vpack.c.b16 %v3115, %v3111
    %v3268 = vpack.c.b16 %v3116, %v3112
    %v3269 = vpack.c.b16 %v3117, %v3113
    %v3270 = vpack.c.b16 %v3118, %v3114
    %v3271 = vpack.c.b16 %v3123, %v3119
    %v3272 = vpack.c.b16 %v3124, %v3120
    %v3273 = vpack.c.b16 %v3125, %v3121
    %v3274 = vpack.c.b16 %v3126, %v3122
    %v3275 = vpack.c.b16 %v3131, %v3127
    %v3276 = vpack.c.b16 %v3132, %v3128
    %v3277 = vpack.c.b16 %v3133, %v3129
    %v3278 = vpack.c.b16 %v3134, %v3130
    %v3279 = vpack.c.b16 %v3139, %v3135
    %v3280 = vpack.c.b16 %v3140, %v3136
    %v3281 = vpack.c.b16 %v3141, %v3137
    %v3282 = vpack.c.b16 %v3142, %v3138
    %v3283 = vpack.c.b16 %v3147, %v3143
    %v3284 = vpack.c.b16 %v3148, %v3144
    %v3285 = vpack.c.b16 %v3149, %v3145
    %v3286 = vpack.c.b16 %v3150, %v3146
    %v3287 = vpack.c.b16 %v3155, %v3151
    %v3288 = vpack.c.b16 %v3156, %v3152
    %v3289 = vpack.c.b16 %v3157, %v3153
    %v3290 = vpack.c.b16 %v3158, %v3154
    %v3291 = vpack.c.b16 %v3163, %v3159
    %v3292 = vpack.c.b16 %v3164, %v3160
    %v3293 = vpack.c.b16 %v3165, %v3161
    %v3294 = vpack.c.b16 %v3166, %v3162
    %3423 = vmatprep.subr.bf16.mxu0 %v3168
    %3424 = vmatpush1.bf16.msra.mxu0 %v3167
    %3425 = vmatprep.subr.bf16.mxu0 %v3172
    %3426 = vmatpush1.bf16.msra.mxu0 %v3171
    %3427 = vmatprep.subr.bf16.mxu0 %v3176
    %3428 = vmatpush1.bf16.msra.mxu0 %v3175
    %3429 = vmatprep.subr.bf16.mxu0 %v3180
    %3430 = vmatpush1.bf16.msra.mxu0 %v3179
    %3431 = vmatprep.subr.bf16.mxu0 %v3184
    %3432 = vmatpush1.bf16.msra.mxu0 %v3183
    %3433 = vmatprep.subr.bf16.mxu0 %v3188
    %3434 = vmatpush1.bf16.msra.mxu0 %v3187
    %3435 = vmatprep.subr.bf16.mxu0 %v3192
    %3436 = vmatpush1.bf16.msra.mxu0 %v3191
    %3437 = vmatprep.subr.bf16.mxu0 %v3196
    %3438 = vmatpush1.bf16.msra.mxu0 %v3195
    %3439 = vmatprep.subr.bf16.mxu0 %v3200
    %3440 = vmatpush1.bf16.msra.mxu0 %v3199
    %3441 = vmatprep.subr.bf16.mxu0 %v3204
    %3442 = vmatpush1.bf16.msra.mxu0 %v3203
    %3443 = vmatprep.subr.bf16.mxu0 %v3208
    %3444 = vmatpush1.bf16.msra.mxu0 %v3207
    %3445 = vmatprep.subr.bf16.mxu0 %v3212
    %3446 = vmatpush1.bf16.msra.mxu0 %v3211
    %3447 = vmatprep.subr.bf16.mxu0 %v3216
    %3448 = vmatpush1.bf16.msra.mxu0 %v3215
    %3449 = vmatprep.subr.bf16.mxu0 %v3220
    %3450 = vmatpush1.bf16.msra.mxu0 %v3219
    %3451 = vmatprep.subr.bf16.mxu0 %v3224
    %3452 = vmatpush1.bf16.msra.mxu0 %v3223
    %3453 = vmatprep.subr.bf16.mxu0 %v3228
    %3454 = vmatpush1.bf16.msra.mxu0 %v3227
    %3455 = vmatprep.mubr.bf16.mxu0 %v2630
    %3456 = vmatmul.mubr.bf16.gmra.mrb[0].mxu0 %v2629
    %v3457 = vpop.f32.mrb[0].mxu0
    %v3458 = vadd.f32 %v2766, %v3457
    %v3459 = vpop.f32.mrb[0].mxu0
    %v3460 = vadd.f32 %v2770, %v3459
    %v3461 = vpop.f32.mrb[0].mxu0
    %v3462 = vpop.f32.mrb[0].mxu0
    %3463 = vdwg.mxu0
    %3464 = vmatprep.subr.bf16.mxu0 %v3232
    %3465 = vmatpush1.bf16.msra.mxu0 %v3231
    %3466 = vmatprep.subr.bf16.mxu0 %v3236
    %3467 = vmatpush1.bf16.msra.mxu0 %v3235
    %3468 = vmatprep.subr.bf16.mxu0 %v3240
    %3469 = vmatpush1.bf16.msra.mxu0 %v3239
    %3470 = vmatprep.subr.bf16.mxu0 %v3244
    %3471 = vmatpush1.bf16.msra.mxu0 %v3243
    %3472 = vmatprep.subr.bf16.mxu0 %v3248
    %3473 = vmatpush1.bf16.msra.mxu0 %v3247
    %3474 = vmatprep.subr.bf16.mxu0 %v3252
    %3475 = vmatpush1.bf16.msra.mxu0 %v3251
    %3476 = vmatprep.subr.bf16.mxu0 %v3256
    %3477 = vmatpush1.bf16.msra.mxu0 %v3255
    %3478 = vmatprep.subr.bf16.mxu0 %v3260
    %3479 = vmatpush1.bf16.msra.mxu0 %v3259
    %3480 = vmatprep.subr.bf16.mxu0 %v3264
    %3481 = vmatpush1.bf16.msra.mxu0 %v3263
    %3482 = vmatprep.subr.bf16.mxu0 %v3268
    %3483 = vmatpush1.bf16.msra.mxu0 %v3267
    %3484 = vmatprep.subr.bf16.mxu0 %v3272
    %3485 = vmatpush1.bf16.msra.mxu0 %v3271
    %3486 = vmatprep.subr.bf16.mxu0 %v3276
    %3487 = vmatpush1.bf16.msra.mxu0 %v3275
    %3488 = vmatprep.subr.bf16.mxu0 %v3280
    %3489 = vmatpush1.bf16.msra.mxu0 %v3279
    %3490 = vmatprep.subr.bf16.mxu0 %v3284
    %3491 = vmatpush1.bf16.msra.mxu0 %v3283
    %3492 = vmatprep.subr.bf16.mxu0 %v3288
    %3493 = vmatpush1.bf16.msra.mxu0 %v3287
    %3494 = vmatprep.subr.bf16.mxu0 %v3292
    %3495 = vmatpush1.bf16.msra.mxu0 %v3291
    %3496 = vmatprep.mubr.bf16.mxu0 %v2632
    %3497 = vmatmul.mubr.bf16.gmra.mrb[0].mxu0 %v2631
    %v3498 = vpop.f32.mrb[0].mxu0
    %v3499 = vadd.f32 %v3458, %v3498
    %v3500 = vpop.f32.mrb[0].mxu0
    %v3501 = vadd.f32 %v3460, %v3500
    %v3502 = vpop.f32.mrb[0].mxu0
    %v3503 = vpop.f32.mrb[0].mxu0
    %3504 = vdwg.mxu0
    %3505 = vmatprep.subr.bf16.mxu0 %v3170
    %3506 = vmatpush1.bf16.msra.mxu0 %v3169
    %3507 = vmatprep.subr.bf16.mxu0 %v3174
    %3508 = vmatpush1.bf16.msra.mxu0 %v3173
    %3509 = vmatprep.subr.bf16.mxu0 %v3178
    %3510 = vmatpush1.bf16.msra.mxu0 %v3177
    %3511 = vmatprep.subr.bf16.mxu0 %v3182
    %3512 = vmatpush1.bf16.msra.mxu0 %v3181
    %3513 = vmatprep.subr.bf16.mxu0 %v3186
    %3514 = vmatpush1.bf16.msra.mxu0 %v3185
    %3515 = vmatprep.subr.bf16.mxu0 %v3190
    %3516 = vmatpush1.bf16.msra.mxu0 %v3189
    %3517 = vmatprep.subr.bf16.mxu0 %v3194
    %3518 = vmatpush1.bf16.msra.mxu0 %v3193
    %3519 = vmatprep.subr.bf16.mxu0 %v3198
    %3520 = vmatpush1.bf16.msra.mxu0 %v3197
    %3521 = vmatprep.subr.bf16.mxu0 %v3202
    %3522 = vmatpush1.bf16.msra.mxu0 %v3201
    %3523 = vmatprep.subr.bf16.mxu0 %v3206
    %3524 = vmatpush1.bf16.msra.mxu0 %v3205
    %3525 = vmatprep.subr.bf16.mxu0 %v3210
    %3526 = vmatpush1.bf16.msra.mxu0 %v3209
    %3527 = vmatprep.subr.bf16.mxu0 %v3214
    %3528 = vmatpush1.bf16.msra.mxu0 %v3213
    %3529 = vmatprep.subr.bf16.mxu0 %v3218
    %3530 = vmatpush1.bf16.msra.mxu0 %v3217
    %3531 = vmatprep.subr.bf16.mxu0 %v3222
    %3532 = vmatpush1.bf16.msra.mxu0 %v3221
    %3533 = vmatprep.subr.bf16.mxu0 %v3226
    %3534 = vmatpush1.bf16.msra.mxu0 %v3225
    %3535 = vmatprep.subr.bf16.mxu0 %v3230
    %3536 = vmatpush1.bf16.msra.mxu0 %v3229
    %3537 = vmatprep.mubr.bf16.mxu0 %v2630
    %3538 = vmatmul.mubr.bf16.gmra.mrb[0].mxu0 %v2629
    %v3539 = vpop.f32.mrb[0].mxu0
    %v3540 = vadd.f32 %v2774, %v3539
    %v3541 = vpop.f32.mrb[0].mxu0
    %v3542 = vadd.f32 %v2778, %v3541
    %v3543 = vpop.f32.mrb[0].mxu0
    %v3544 = vpop.f32.mrb[0].mxu0
    %3545 = vdwg.mxu0
    %3546 = vmatprep.subr.bf16.mxu0 %v3234
    %3547 = vmatpush1.bf16.msra.mxu0 %v3233
    %3548 = vmatprep.subr.bf16.mxu0 %v3238
    %3549 = vmatpush1.bf16.msra.mxu0 %v3237
    %3550 = vmatprep.subr.bf16.mxu0 %v3242
    %3551 = vmatpush1.bf16.msra.mxu0 %v3241
    %3552 = vmatprep.subr.bf16.mxu0 %v3246
    %3553 = vmatpush1.bf16.msra.mxu0 %v3245
    %3554 = vmatprep.subr.bf16.mxu0 %v3250
    %3555 = vmatpush1.bf16.msra.mxu0 %v3249
    %3556 = vmatprep.subr.bf16.mxu0 %v3254
    %3557 = vmatpush1.bf16.msra.mxu0 %v3253
    %3558 = vmatprep.subr.bf16.mxu0 %v3258
    %3559 = vmatpush1.bf16.msra.mxu0 %v3257
    %3560 = vmatprep.subr.bf16.mxu0 %v3262
    %3561 = vmatpush1.bf16.msra.mxu0 %v3261
    %3562 = vmatprep.subr.bf16.mxu0 %v3266
    %3563 = vmatpush1.bf16.msra.mxu0 %v3265
    %3564 = vmatprep.subr.bf16.mxu0 %v3270
    %3565 = vmatpush1.bf16.msra.mxu0 %v3269
    %3566 = vmatprep.subr.bf16.mxu0 %v3274
    %3567 = vmatpush1.bf16.msra.mxu0 %v3273
    %3568 = vmatprep.subr.bf16.mxu0 %v3278
    %3569 = vmatpush1.bf16.msra.mxu0 %v3277
    %3570 = vmatprep.subr.bf16.mxu0 %v3282
    %3571 = vmatpush1.bf16.msra.mxu0 %v3281
    %3572 = vmatprep.subr.bf16.mxu0 %v3286
    %3573 = vmatpush1.bf16.msra.mxu0 %v3285
    %3574 = vmatprep.subr.bf16.mxu0 %v3290
    %3575 = vmatpush1.bf16.msra.mxu0 %v3289
    %3576 = vmatprep.subr.bf16.mxu0 %v3294
    %3577 = vmatpush1.bf16.msra.mxu0 %v3293
    %3578 = vmatprep.mubr.bf16.mxu0 %v2632
    %3579 = vmatmul.mubr.bf16.gmra.mrb[0].mxu0 %v2631
    %v3580 = vpop.f32.mrb[0].mxu0
    %v3581 = vadd.f32 %v3540, %v3580
    %v3582 = vpop.f32.mrb[0].mxu0
    %v3583 = vadd.f32 %v3542, %v3582
    %v3584 = vpop.f32.mrb[0].mxu0
    %v3585 = vpop.f32.mrb[0].mxu0
    %3586 = vdwg.mxu0
    %v3587 = vmax.f32 %v3499, 0.0
    %v3588 = vmax.f32 %v3501, 0.0
    %v3589 = vmax.f32 %v3581, 0.0
    %v3590 = vmax.f32 %v3583, 0.0
    %v3591 = vpack.c.bf16 %v3587, %v3587
    %v3592 = vpack.c.bf16 %v3588, %v3588
    %v3593 = vpack.c.bf16 %v3589, %v3589
    %v3594 = vpack.c.bf16 %v3590, %v3590
    %v3595 = vld [vmem:[%s8] sm:$0xf]
    %v3596 = vld [vmem:[%s8 + $0x4] sm:$0xf]
    %v3597 = vld [vmem:[%s8 + $0x8] sm:$0xf]
    %v3598 = vld [vmem:[%s8 + $0xc] sm:$0xf]
    %v3599 = vld [vmem:[%s8 + $0x10] sm:$0xf]
    %v3600 = vld [vmem:[%s8 + $0x14] sm:$0xf]
    %v3601 = vld [vmem:[%s8 + $0x18] sm:$0xf]
    %v3602 = vld [vmem:[%s8 + $0x1c] sm:$0xf]
    %v3603 = vld [vmem:[%s8 + $0x20] sm:$0xf]
    %v3604 = vld [vmem:[%s8 + $0x24] sm:$0xf]
    %v3605 = vld [vmem:[%s8 + $0x28] sm:$0xf]
    %v3606 = vld [vmem:[%s8 + $0x2c] sm:$0xf]
    %v3607 = vld [vmem:[%s8 + $0x30] sm:$0xf]
    %v3608 = vld [vmem:[%s8 + $0x34] sm:$0xf]
    %v3609 = vld [vmem:[%s8 + $0x38] sm:$0xf]
    %v3610 = vld [vmem:[%s8 + $0x3c] sm:$0xf]
    %v3611 = vld [vmem:[%s8 + $0x40] sm:$0xf]
    %v3612 = vld [vmem:[%s8 + $0x44] sm:$0xf]
    %v3613 = vld [vmem:[%s8 + $0x48] sm:$0xf]
    %v3614 = vld [vmem:[%s8 + $0x4c] sm:$0xf]
    %v3615 = vld [vmem:[%s8 + $0x50] sm:$0xf]
    %v3616 = vld [vmem:[%s8 + $0x54] sm:$0xf]
    %v3617 = vld [vmem:[%s8 + $0x58] sm:$0xf]
    %v3618 = vld [vmem:[%s8 + $0x5c] sm:$0xf]
    %v3619 = vld [vmem:[%s8 + $0x60] sm:$0xf]
    %v3620 = vld [vmem:[%s8 + $0x64] sm:$0xf]
    %v3621 = vld [vmem:[%s8 + $0x68] sm:$0xf]
    %v3622 = vld [vmem:[%s8 + $0x6c] sm:$0xf]
    %v3623 = vld [vmem:[%s8 + $0x70] sm:$0xf]
    %v3624 = vld [vmem:[%s8 + $0x74] sm:$0xf]
    %v3625 = vld [vmem:[%s8 + $0x78] sm:$0xf]
    %v3626 = vld [vmem:[%s8 + $0x7c] sm:$0xf]
    %v3627 = vld [vmem:[%s8 + $0x80] sm:$0xf]
    %v3628 = vld [vmem:[%s8 + $0x84] sm:$0xf]
    %v3629 = vld [vmem:[%s8 + $0x88] sm:$0xf]
    %v3630 = vld [vmem:[%s8 + $0x8c] sm:$0xf]
    %v3631 = vld [vmem:[%s8 + $0x90] sm:$0xf]
    %v3632 = vld [vmem:[%s8 + $0x94] sm:$0xf]
    %v3633 = vld [vmem:[%s8 + $0x98] sm:$0xf]
    %v3634 = vld [vmem:[%s8 + $0x9c] sm:$0xf]
    %v3635 = vld [vmem:[%s8 + $0xa0] sm:$0xf]
    %v3636 = vld [vmem:[%s8 + $0xa4] sm:$0xf]
    %v3637 = vld [vmem:[%s8 + $0xa8] sm:$0xf]
    %v3638 = vld [vmem:[%s8 + $0xac] sm:$0xf]
    %v3639 = vld [vmem:[%s8 + $0xb0] sm:$0xf]
    %v3640 = vld [vmem:[%s8 + $0xb4] sm:$0xf]
    %v3641 = vld [vmem:[%s8 + $0xb8] sm:$0xf]
    %v3642 = vld [vmem:[%s8 + $0xbc] sm:$0xf]
    %v3643 = vld [vmem:[%s8 + $0xc0] sm:$0xf]
    %v3644 = vld [vmem:[%s8 + $0xc4] sm:$0xf]
    %v3645 = vld [vmem:[%s8 + $0xc8] sm:$0xf]
    %v3646 = vld [vmem:[%s8 + $0xcc] sm:$0xf]
    %v3647 = vld [vmem:[%s8 + $0xd0] sm:$0xf]
    %v3648 = vld [vmem:[%s8 + $0xd4] sm:$0xf]
    %v3649 = vld [vmem:[%s8 + $0xd8] sm:$0xf]
    %v3650 = vld [vmem:[%s8 + $0xdc] sm:$0xf]
    %v3651 = vld [vmem:[%s8 + $0xe0] sm:$0xf]
    %v3652 = vld [vmem:[%s8 + $0xe4] sm:$0xf]
    %v3653 = vld [vmem:[%s8 + $0xe8] sm:$0xf]
    %v3654 = vld [vmem:[%s8 + $0xec] sm:$0xf]
    %v3655 = vld [vmem:[%s8 + $0xf0] sm:$0xf]
    %v3656 = vld [vmem:[%s8 + $0xf4] sm:$0xf]
    %v3657 = vld [vmem:[%s8 + $0xf8] sm:$0xf]
    %v3658 = vld [vmem:[%s8 + $0xfc] sm:$0xf]
    %v3659 = vld [vmem:[%s9] sm:$0x1]
    %v3661 = vlaneseq
    %v3662 = vshrl.u32 %v3661, 7
    %v3663 = vsub.s32 0, %v3662
    %v3664 = vrot.slane %v3659, %v3663
    %v3730 = vunpack.c.l.b16 %v3595
    %v3731 = vunpack.c.l.b16 %v3596
    %v3732 = vunpack.c.l.b16 %v3597
    %v3733 = vunpack.c.l.b16 %v3598
    %v3734 = vunpack.c.l.b16 %v3599
    %v3735 = vunpack.c.l.b16 %v3600
    %v3736 = vunpack.c.l.b16 %v3601
    %v3737 = vunpack.c.l.b16 %v3602
    %v3738 = vunpack.c.l.b16 %v3603
    %v3739 = vunpack.c.l.b16 %v3604
    %v3740 = vunpack.c.l.b16 %v3605
    %v3741 = vunpack.c.l.b16 %v3606
    %v3742 = vunpack.c.l.b16 %v3607
    %v3743 = vunpack.c.l.b16 %v3608
    %v3744 = vunpack.c.l.b16 %v3609
    %v3745 = vunpack.c.l.b16 %v3610
    %v3746 = vunpack.c.l.b16 %v3611
    %v3747 = vunpack.c.l.b16 %v3612
    %v3748 = vunpack.c.l.b16 %v3613
    %v3749 = vunpack.c.l.b16 %v3614
    %v3750 = vunpack.c.l.b16 %v3615
    %v3751 = vunpack.c.l.b16 %v3616
    %v3752 = vunpack.c.l.b16 %v3617
    %v3753 = vunpack.c.l.b16 %v3618
    %v3754 = vunpack.c.l.b16 %v3619
    %v3755 = vunpack.c.l.b16 %v3620
    %v3756 = vunpack.c.l.b16 %v3621
    %v3757 = vunpack.c.l.b16 %v3622
    %v3758 = vunpack.c.l.b16 %v3623
    %v3759 = vunpack.c.l.b16 %v3624
    %v3760 = vunpack.c.l.b16 %v3625
    %v3761 = vunpack.c.l.b16 %v3626
    %v3762 = vunpack.c.l.b16 %v3627
    %v3763 = vunpack.c.l.b16 %v3628
    %v3764 = vunpack.c.l.b16 %v3629
    %v3765 = vunpack.c.l.b16 %v3630
    %v3766 = vunpack.c.l.b16 %v3631
    %v3767 = vunpack.c.l.b16 %v3632
    %v3768 = vunpack.c.l.b16 %v3633
    %v3769 = vunpack.c.l.b16 %v3634
    %v3770 = vunpack.c.l.b16 %v3635
    %v3771 = vunpack.c.l.b16 %v3636
    %v3772 = vunpack.c.l.b16 %v3637
    %v3773 = vunpack.c.l.b16 %v3638
    %v3774 = vunpack.c.l.b16 %v3639
    %v3775 = vunpack.c.l.b16 %v3640
    %v3776 = vunpack.c.l.b16 %v3641
    %v3777 = vunpack.c.l.b16 %v3642
    %v3778 = vunpack.c.l.b16 %v3643
    %v3779 = vunpack.c.l.b16 %v3644
    %v3780 = vunpack.c.l.b16 %v3645
    %v3781 = vunpack.c.l.b16 %v3646
    %v3782 = vunpack.c.l.b16 %v3647
    %v3783 = vunpack.c.l.b16 %v3648
    %v3784 = vunpack.c.l.b16 %v3649
    %v3785 = vunpack.c.l.b16 %v3650
    %v3786 = vunpack.c.l.b16 %v3651
    %v3787 = vunpack.c.l.b16 %v3652
    %v3788 = vunpack.c.l.b16 %v3653
    %v3789 = vunpack.c.l.b16 %v3654
    %v3790 = vunpack.c.l.b16 %v3655
    %v3791 = vunpack.c.l.b16 %v3656
    %v3792 = vunpack.c.l.b16 %v3657
    %v3793 = vunpack.c.l.b16 %v3658
    %v3794 = vpack.c.b16 %v3731, %v3730
    %v3795 = vpack.c.b16 %v3733, %v3732
    %v3796 = vpack.c.b16 %v3735, %v3734
    %v3797 = vpack.c.b16 %v3737, %v3736
    %v3798 = vpack.c.b16 %v3739, %v3738
    %v3799 = vpack.c.b16 %v3741, %v3740
    %v3800 = vpack.c.b16 %v3743, %v3742
    %v3801 = vpack.c.b16 %v3745, %v3744
    %v3802 = vpack.c.b16 %v3747, %v3746
    %v3803 = vpack.c.b16 %v3749, %v3748
    %v3804 = vpack.c.b16 %v3751, %v3750
    %v3805 = vpack.c.b16 %v3753, %v3752
    %v3806 = vpack.c.b16 %v3755, %v3754
    %v3807 = vpack.c.b16 %v3757, %v3756
    %v3808 = vpack.c.b16 %v3759, %v3758
    %v3809 = vpack.c.b16 %v3761, %v3760
    %v3810 = vpack.c.b16 %v3763, %v3762
    %v3811 = vpack.c.b16 %v3765, %v3764
    %v3812 = vpack.c.b16 %v3767, %v3766
    %v3813 = vpack.c.b16 %v3769, %v3768
    %v3814 = vpack.c.b16 %v3771, %v3770
    %v3815 = vpack.c.b16 %v3773, %v3772
    %v3816 = vpack.c.b16 %v3775, %v3774
    %v3817 = vpack.c.b16 %v3777, %v3776
    %v3818 = vpack.c.b16 %v3779, %v3778
    %v3819 = vpack.c.b16 %v3781, %v3780
    %v3820 = vpack.c.b16 %v3783, %v3782
    %v3821 = vpack.c.b16 %v3785, %v3784
    %v3822 = vpack.c.b16 %v3787, %v3786
    %v3823 = vpack.c.b16 %v3789, %v3788
    %v3824 = vpack.c.b16 %v3791, %v3790
    %v3825 = vpack.c.b16 %v3793, %v3792
    %3858 = vmatprep.subr.bf16.mxu0 0
    %3859 = vmatpush1.bf16.msra.mxu0 %v3794
    %3860 = vmatprep.subr.bf16.mxu0 0
    %3861 = vmatpush1.bf16.msra.mxu0 %v3795
    %3862 = vmatprep.subr.bf16.mxu0 0
    %3863 = vmatpush1.bf16.msra.mxu0 %v3796
    %3864 = vmatprep.subr.bf16.mxu0 0
    %3865 = vmatpush1.bf16.msra.mxu0 %v3797
    %3866 = vmatprep.subr.bf16.mxu0 0
    %3867 = vmatpush1.bf16.msra.mxu0 %v3798
    %3868 = vmatprep.subr.bf16.mxu0 0
    %3869 = vmatpush1.bf16.msra.mxu0 %v3799
    %3870 = vmatprep.subr.bf16.mxu0 0
    %3871 = vmatpush1.bf16.msra.mxu0 %v3800
    %3872 = vmatprep.subr.bf16.mxu0 0
    %3873 = vmatpush1.bf16.msra.mxu0 %v3801
    %3874 = vmatprep.subr.bf16.mxu0 0
    %3875 = vmatpush1.bf16.msra.mxu0 %v3802
    %3876 = vmatprep.subr.bf16.mxu0 0
    %3877 = vmatpush1.bf16.msra.mxu0 %v3803
    %3878 = vmatprep.subr.bf16.mxu0 0
    %3879 = vmatpush1.bf16.msra.mxu0 %v3804
    %3880 = vmatprep.subr.bf16.mxu0 0
    %3881 = vmatpush1.bf16.msra.mxu0 %v3805
    %3882 = vmatprep.subr.bf16.mxu0 0
    %3883 = vmatpush1.bf16.msra.mxu0 %v3806
    %3884 = vmatprep.subr.bf16.mxu0 0
    %3885 = vmatpush1.bf16.msra.mxu0 %v3807
    %3886 = vmatprep.subr.bf16.mxu0 0
    %3887 = vmatpush1.bf16.msra.mxu0 %v3808
    %3888 = vmatprep.subr.bf16.mxu0 0
    %3889 = vmatpush1.bf16.msra.mxu0 %v3809
    %3890 = vmatprep.mubr.bf16.mxu0 %v3592
    %3891 = vmatmul.mubr.bf16.gmra.mrb[0].mxu0 %v3591
    %v3892 = vpop.f32.mrb[0].mxu0
    %v3893 = vadd.f32 %v3664, %v3892
    %v3894 = vpop.f32.mrb[0].mxu0
    %v3895 = vpop.f32.mrb[0].mxu0
    %v3896 = vpop.f32.mrb[0].mxu0
    %3897 = vdwg.mxu0
    %3898 = vmatprep.subr.bf16.mxu0 0
    %3899 = vmatpush1.bf16.msra.mxu0 %v3810
    %3900 = vmatprep.subr.bf16.mxu0 0
    %3901 = vmatpush1.bf16.msra.mxu0 %v3811
    %3902 = vmatprep.subr.bf16.mxu0 0
    %3903 = vmatpush1.bf16.msra.mxu0 %v3812
    %3904 = vmatprep.subr.bf16.mxu0 0
    %3905 = vmatpush1.bf16.msra.mxu0 %v3813
    %3906 = vmatprep.subr.bf16.mxu0 0
    %3907 = vmatpush1.bf16.msra.mxu0 %v3814
    %3908 = vmatprep.subr.bf16.mxu0 0
    %3909 = vmatpush1.bf16.msra.mxu0 %v3815
    %3910 = vmatprep.subr.bf16.mxu0 0
    %3911 = vmatpush1.bf16.msra.mxu0 %v3816
    %3912 = vmatprep.subr.bf16.mxu0 0
    %3913 = vmatpush1.bf16.msra.mxu0 %v3817
    %3914 = vmatprep.subr.bf16.mxu0 0
    %3915 = vmatpush1.bf16.msra.mxu0 %v3818
    %3916 = vmatprep.subr.bf16.mxu0 0
    %3917 = vmatpush1.bf16.msra.mxu0 %v3819
    %3918 = vmatprep.subr.bf16.mxu0 0
    %3919 = vmatpush1.bf16.msra.mxu0 %v3820
    %3920 = vmatprep.subr.bf16.mxu0 0
    %3921 = vmatpush1.bf16.msra.mxu0 %v3821
    %3922 = vmatprep.subr.bf16.mxu0 0
    %3923 = vmatpush1.bf16.msra.mxu0 %v3822
    %3924 = vmatprep.subr.bf16.mxu0 0
    %3925 = vmatpush1.bf16.msra.mxu0 %v3823
    %3926 = vmatprep.subr.bf16.mxu0 0
    %3927 = vmatpush1.bf16.msra.mxu0 %v3824
    %3928 = vmatprep.subr.bf16.mxu0 0
    %3929 = vmatpush1.bf16.msra.mxu0 %v3825
    %3930 = vmatprep.mubr.bf16.mxu0 %v3594
    %3931 = vmatmul.mubr.bf16.gmra.mrb[0].mxu0 %v3593
    %v3932 = vpop.f32.mrb[0].mxu0
    %v3933 = vadd.f32 %v3893, %v3932
    %v3934 = vpop.f32.mrb[0].mxu0
    %v3935 = vpop.f32.mrb[0].mxu0
    %v3936 = vpop.f32.mrb[0].mxu0
    %3937 = vdwg.mxu0
    %3938 = vst [vmem:[#allocation9] sm:$0xff] %v3933
    %3939 = vrot.lane.b32.xlu0 %v3933, 64
    %v3940 = vpop.permute.xlu0 %3939
    %v3941 = vld [vmem:[%s1] sm:$0xff]
    %v3942 = vmul.f32 %v3940, 0.5
    %v3943 = vmul.f32 %v3942, 1.442695
    %v3944 = vpow.pop %v3943
    %v3945 = vmul.f32 %v3941, %v3944
    %v3946 = vadd.f32 %v3945, %v3933
    %v3947 = vlaneseq
    %v3948 = vand.u32 %v3947, 127
    %vm3949 = vcmp.lt.s32.totalorder %v3948, 15
    %v3950 = vsel %vm3949, %v3946, 0.0
    %v3951 = vpack.c.bf16 %v3950, %v3950
    %v3952 = vld [vmem:[%s10] sm:$0xff]
    %v3953 = vld [vmem:[%s10 + $0x8] sm:$0xff]
    %v3954 = vld [vmem:[%s10 + $0x10] sm:$0xff]
    %v3955 = vld [vmem:[%s10 + $0x18] sm:$0xff]
    %v3956 = vld [vmem:[%s10 + $0x20] sm:$0xff]
    %v3957 = vld [vmem:[%s10 + $0x28] sm:$0xff]
    %v3958 = vld [vmem:[%s10 + $0x30] sm:$0xff]
    %v3959 = vld [vmem:[%s10 + $0x38] sm:$0xff]
    %v3960 = vld [vmem:[%s10 + $0x40] sm:$0xff]
    %v3961 = vld [vmem:[%s10 + $0x48] sm:$0xff]
    %v3962 = vld [vmem:[%s10 + $0x50] sm:$0xff]
    %v3963 = vld [vmem:[%s10 + $0x58] sm:$0xff]
    %v3964 = vld [vmem:[%s10 + $0x60] sm:$0xff]
    %v3965 = vld [vmem:[%s10 + $0x68] sm:$0xff]
    %v3966 = vld [vmem:[%s10 + $0x70] sm:$0xff]
    %v3967 = vld [vmem:[%s10 + $0x78] sm:$0xff]
    %v3968 = vld [vmem:[%s10 + $0x80] sm:$0xff]
    %v3969 = vld [vmem:[%s10 + $0x88] sm:$0xff]
    %v3970 = vld [vmem:[%s10 + $0x90] sm:$0xff]
    %v3971 = vld [vmem:[%s10 + $0x98] sm:$0xff]
    %v3972 = vld [vmem:[%s10 + $0xa0] sm:$0xff]
    %v3973 = vld [vmem:[%s10 + $0xa8] sm:$0xff]
    %v3974 = vld [vmem:[%s10 + $0xb0] sm:$0xff]
    %v3975 = vld [vmem:[%s10 + $0xb8] sm:$0xff]
    %v3976 = vld [vmem:[%s10 + $0xc0] sm:$0xff]
    %v3977 = vld [vmem:[%s10 + $0xc8] sm:$0xff]
    %v3978 = vld [vmem:[%s10 + $0xd0] sm:$0xff]
    %v3979 = vld [vmem:[%s10 + $0xd8] sm:$0xff]
    %v3980 = vld [vmem:[%s10 + $0xe0] sm:$0xff]
    %v3981 = vld [vmem:[%s10 + $0xe8] sm:$0xff]
    %v3982 = vld [vmem:[%s10 + $0xf0] sm:$0xff]
    %v3983 = vld [vmem:[%s10 + $0xf8] sm:$0xff]
    %v3984 = vld [vmem:[%s11] sm:$0xf]
    %v3986 = vlaneseq
    %v3987 = vshrl.u32 %v3986, 7
    %v3988 = vsub.s32 0, %v3987
    %v3989 = vrot.slane %v3984, %v3988
    %v3990 = vlaneseq
    %v3991 = vshrl.u32 %v3990, 7
    %v3992 = vsub.s32 1, %v3991
    %v3993 = vrot.slane %v3984, %v3992
    %v3994 = vlaneseq
    %v3995 = vshrl.u32 %v3994, 7
    %v3996 = vsub.s32 2, %v3995
    %v3997 = vrot.slane %v3984, %v3996
    %v3998 = vlaneseq
    %v3999 = vshrl.u32 %v3998, 7
    %v4000 = vsub.s32 3, %v3999
    %v4001 = vrot.slane %v3984, %v4000
    %v4038 = vunpack.c.l.b16 %v3952
    %v4039 = vunpack.c.h.b16 %v3952
    %v4040 = vunpack.c.l.b16 %v3953
    %v4041 = vunpack.c.h.b16 %v3953
    %v4042 = vunpack.c.l.b16 %v3954
    %v4043 = vunpack.c.h.b16 %v3954
    %v4044 = vunpack.c.l.b16 %v3955
    %v4045 = vunpack.c.h.b16 %v3955
    %v4046 = vunpack.c.l.b16 %v3956
    %v4047 = vunpack.c.h.b16 %v3956
    %v4048 = vunpack.c.l.b16 %v3957
    %v4049 = vunpack.c.h.b16 %v3957
    %v4050 = vunpack.c.l.b16 %v3958
    %v4051 = vunpack.c.h.b16 %v3958
    %v4052 = vunpack.c.l.b16 %v3959
    %v4053 = vunpack.c.h.b16 %v3959
    %v4054 = vunpack.c.l.b16 %v3960
    %v4055 = vunpack.c.h.b16 %v3960
    %v4056 = vunpack.c.l.b16 %v3961
    %v4057 = vunpack.c.h.b16 %v3961
    %v4058 = vunpack.c.l.b16 %v3962
    %v4059 = vunpack.c.h.b16 %v3962
    %v4060 = vunpack.c.l.b16 %v3963
    %v4061 = vunpack.c.h.b16 %v3963
    %v4062 = vunpack.c.l.b16 %v3964
    %v4063 = vunpack.c.h.b16 %v3964
    %v4064 = vunpack.c.l.b16 %v3965
    %v4065 = vunpack.c.h.b16 %v3965
    %v4066 = vunpack.c.l.b16 %v3966
    %v4067 = vunpack.c.h.b16 %v3966
    %v4068 = vunpack.c.l.b16 %v3967
    %v4069 = vunpack.c.h.b16 %v3967
    %v4070 = vunpack.c.l.b16 %v3968
    %v4071 = vunpack.c.h.b16 %v3968
    %v4072 = vunpack.c.l.b16 %v3969
    %v4073 = vunpack.c.h.b16 %v3969
    %v4074 = vunpack.c.l.b16 %v3970
    %v4075 = vunpack.c.h.b16 %v3970
    %v4076 = vunpack.c.l.b16 %v3971
    %v4077 = vunpack.c.h.b16 %v3971
    %v4078 = vunpack.c.l.b16 %v3972
    %v4079 = vunpack.c.h.b16 %v3972
    %v4080 = vunpack.c.l.b16 %v3973
    %v4081 = vunpack.c.h.b16 %v3973
    %v4082 = vunpack.c.l.b16 %v3974
    %v4083 = vunpack.c.h.b16 %v3974
    %v4084 = vunpack.c.l.b16 %v3975
    %v4085 = vunpack.c.h.b16 %v3975
    %v4086 = vunpack.c.l.b16 %v3976
    %v4087 = vunpack.c.h.b16 %v3976
    %v4088 = vunpack.c.l.b16 %v3977
    %v4089 = vunpack.c.h.b16 %v3977
    %v4090 = vunpack.c.l.b16 %v3978
    %v4091 = vunpack.c.h.b16 %v3978
    %v4092 = vunpack.c.l.b16 %v3979
    %v4093 = vunpack.c.h.b16 %v3979
    %v4094 = vunpack.c.l.b16 %v3980
    %v4095 = vunpack.c.h.b16 %v3980
    %v4096 = vunpack.c.l.b16 %v3981
    %v4097 = vunpack.c.h.b16 %v3981
    %v4098 = vunpack.c.l.b16 %v3982
    %v4099 = vunpack.c.h.b16 %v3982
    %v4100 = vunpack.c.l.b16 %v3983
    %v4101 = vunpack.c.h.b16 %v3983
    %v4102 = vpack.c.b16 %v4042, %v4038
    %v4103 = vpack.c.b16 %v4043, %v4039
    %v4104 = vpack.c.b16 %v4044, %v4040
    %v4105 = vpack.c.b16 %v4045, %v4041
    %v4106 = vpack.c.b16 %v4050, %v4046
    %v4107 = vpack.c.b16 %v4051, %v4047
    %v4108 = vpack.c.b16 %v4052, %v4048
    %v4109 = vpack.c.b16 %v4053, %v4049
    %v4110 = vpack.c.b16 %v4058, %v4054
    %v4111 = vpack.c.b16 %v4059, %v4055
    %v4112 = vpack.c.b16 %v4060, %v4056
    %v4113 = vpack.c.b16 %v4061, %v4057
    %v4114 = vpack.c.b16 %v4066, %v4062
    %v4115 = vpack.c.b16 %v4067, %v4063
    %v4116 = vpack.c.b16 %v4068, %v4064
    %v4117 = vpack.c.b16 %v4069, %v4065
    %v4118 = vpack.c.b16 %v4074, %v4070
    %v4119 = vpack.c.b16 %v4075, %v4071
    %v4120 = vpack.c.b16 %v4076, %v4072
    %v4121 = vpack.c.b16 %v4077, %v4073
    %v4122 = vpack.c.b16 %v4082, %v4078
    %v4123 = vpack.c.b16 %v4083, %v4079
    %v4124 = vpack.c.b16 %v4084, %v4080
    %v4125 = vpack.c.b16 %v4085, %v4081
    %v4126 = vpack.c.b16 %v4090, %v4086
    %v4127 = vpack.c.b16 %v4091, %v4087
    %v4128 = vpack.c.b16 %v4092, %v4088
    %v4129 = vpack.c.b16 %v4093, %v4089
    %v4130 = vpack.c.b16 %v4098, %v4094
    %v4131 = vpack.c.b16 %v4099, %v4095
    %v4132 = vpack.c.b16 %v4100, %v4096
    %v4133 = vpack.c.b16 %v4101, %v4097
    %4166 = vmatprep.subr.bf16.mxu0 %v4103
    %4167 = vmatpush1.bf16.msra.mxu0 %v4102
    %4168 = vmatprep.subr.bf16.mxu0 %v4107
    %4169 = vmatpush1.bf16.msra.mxu0 %v4106
    %4170 = vmatprep.subr.bf16.mxu0 %v4111
    %4171 = vmatpush1.bf16.msra.mxu0 %v4110
    %4172 = vmatprep.subr.bf16.mxu0 %v4115
    %4173 = vmatpush1.bf16.msra.mxu0 %v4114
    %4174 = vmatprep.subr.bf16.mxu0 %v4119
    %4175 = vmatpush1.bf16.msra.mxu0 %v4118
    %4176 = vmatprep.subr.bf16.mxu0 %v4123
    %4177 = vmatpush1.bf16.msra.mxu0 %v4122
    %4178 = vmatprep.subr.bf16.mxu0 %v4127
    %4179 = vmatpush1.bf16.msra.mxu0 %v4126
    %4180 = vmatprep.subr.bf16.mxu0 %v4131
    %4181 = vmatpush1.bf16.msra.mxu0 %v4130
    %4182 = vmatprep.subr.bf16.mxu0 0
    %4183 = vmatpush1.bf16.msra.mxu0 0
    %4184 = vmatprep.subr.bf16.mxu0 0
    %4185 = vmatpush1.bf16.msra.mxu0 0
    %4186 = vmatprep.subr.bf16.mxu0 0
    %4187 = vmatpush1.bf16.msra.mxu0 0
    %4188 = vmatprep.subr.bf16.mxu0 0
    %4189 = vmatpush1.bf16.msra.mxu0 0
    %4190 = vmatprep.subr.bf16.mxu0 0
    %4191 = vmatpush1.bf16.msra.mxu0 0
    %4192 = vmatprep.subr.bf16.mxu0 0
    %4193 = vmatpush1.bf16.msra.mxu0 0
    %4194 = vmatprep.subr.bf16.mxu0 0
    %4195 = vmatpush1.bf16.msra.mxu0 0
    %4196 = vmatprep.subr.bf16.mxu0 0
    %4197 = vmatpush1.bf16.msra.mxu0 0
    %4198 = vmatprep.mubr.bf16.mxu0 0
    %4199 = vmatmul.mubr.bf16.gmra.mrb[0].mxu0 %v3951
    %v4200 = vpop.f32.mrb[0].mxu0
    %v4201 = vadd.f32 %v3989, %v4200
    %v4202 = vpop.f32.mrb[0].mxu0
    %v4203 = vadd.f32 %v3993, %v4202
    %v4204 = vpop.f32.mrb[0].mxu0
    %v4205 = vpop.f32.mrb[0].mxu0
    %4206 = vdwg.mxu0
    %4207 = vmatprep.subr.bf16.mxu0 %v4105
    %4208 = vmatpush1.bf16.msra.mxu0 %v4104
    %4209 = vmatprep.subr.bf16.mxu0 %v4109
    %4210 = vmatpush1.bf16.msra.mxu0 %v4108
    %4211 = vmatprep.subr.bf16.mxu0 %v4113
    %4212 = vmatpush1.bf16.msra.mxu0 %v4112
    %4213 = vmatprep.subr.bf16.mxu0 %v4117
    %4214 = vmatpush1.bf16.msra.mxu0 %v4116
    %4215 = vmatprep.subr.bf16.mxu0 %v4121
    %4216 = vmatpush1.bf16.msra.mxu0 %v4120
    %4217 = vmatprep.subr.bf16.mxu0 %v4125
    %4218 = vmatpush1.bf16.msra.mxu0 %v4124
    %4219 = vmatprep.subr.bf16.mxu0 %v4129
    %4220 = vmatpush1.bf16.msra.mxu0 %v4128
    %4221 = vmatprep.subr.bf16.mxu0 %v4133
    %4222 = vmatpush1.bf16.msra.mxu0 %v4132
    %4223 = vmatprep.subr.bf16.mxu0 0
    %4224 = vmatpush1.bf16.msra.mxu0 0
    %4225 = vmatprep.subr.bf16.mxu0 0
    %4226 = vmatpush1.bf16.msra.mxu0 0
    %4227 = vmatprep.subr.bf16.mxu0 0
    %4228 = vmatpush1.bf16.msra.mxu0 0
    %4229 = vmatprep.subr.bf16.mxu0 0
    %4230 = vmatpush1.bf16.msra.mxu0 0
    %4231 = vmatprep.subr.bf16.mxu0 0
    %4232 = vmatpush1.bf16.msra.mxu0 0
    %4233 = vmatprep.subr.bf16.mxu0 0
    %4234 = vmatpush1.bf16.msra.mxu0 0
    %4235 = vmatprep.subr.bf16.mxu0 0
    %4236 = vmatpush1.bf16.msra.mxu0 0
    %4237 = vmatprep.subr.bf16.mxu0 0
    %4238 = vmatpush1.bf16.msra.mxu0 0
    %4239 = vmatprep.mubr.bf16.mxu0 0
    %4240 = vmatmul.mubr.bf16.gmra.mrb[0].mxu0 %v3951
    %v4241 = vpop.f32.mrb[0].mxu0
    %v4242 = vadd.f32 %v3997, %v4241
    %v4243 = vpop.f32.mrb[0].mxu0
    %v4244 = vadd.f32 %v4001, %v4243
    %v4245 = vpop.f32.mrb[0].mxu0
    %v4246 = vpop.f32.mrb[0].mxu0
    %4247 = vdwg.mxu0
    %v4248 = vmax.f32 %v4201, 0.0
    %v4249 = vmax.f32 %v4203, 0.0
    %v4250 = vmax.f32 %v4242, 0.0
    %v4251 = vmax.f32 %v4244, 0.0
    %v4252 = vpack.c.bf16 %v4248, %v4248
    %v4253 = vpack.c.bf16 %v4249, %v4249
    %v4254 = vpack.c.bf16 %v4250, %v4250
    %v4255 = vpack.c.bf16 %v4251, %v4251
    %v4256 = vld [vmem:[#allocation5] sm:$0xff]
    %v4257 = vld [vmem:[#allocation5 + $0x8] sm:$0xff]
    %v4258 = vld [vmem:[#allocation5 + $0x10] sm:$0xff]
    %v4259 = vld [vmem:[#allocation5 + $0x18] sm:$0xff]
    %v4260 = vld [vmem:[#allocation5 + $0x20] sm:$0xff]
    %v4261 = vld [vmem:[#allocation5 + $0x28] sm:$0xff]
    %v4262 = vld [vmem:[#allocation5 + $0x30] sm:$0xff]
    %v4263 = vld [vmem:[#allocation5 + $0x38] sm:$0xff]
    %v4264 = vld [vmem:[#allocation5 + $0x40] sm:$0xff]
    %v4265 = vld [vmem:[#allocation5 + $0x48] sm:$0xff]
    %v4266 = vld [vmem:[#allocation5 + $0x50] sm:$0xff]
    %v4267 = vld [vmem:[#allocation5 + $0x58] sm:$0xff]
    %v4268 = vld [vmem:[#allocation5 + $0x60] sm:$0xff]
    %v4269 = vld [vmem:[#allocation5 + $0x68] sm:$0xff]
    %v4270 = vld [vmem:[#allocation5 + $0x70] sm:$0xff]
    %v4271 = vld [vmem:[#allocation5 + $0x78] sm:$0xff]
    %v4272 = vld [vmem:[#allocation5 + $0x80] sm:$0xff]
    %v4273 = vld [vmem:[#allocation5 + $0x88] sm:$0xff]
    %v4274 = vld [vmem:[#allocation5 + $0x90] sm:$0xff]
    %v4275 = vld [vmem:[#allocation5 + $0x98] sm:$0xff]
    %v4276 = vld [vmem:[#allocation5 + $0xa0] sm:$0xff]
    %v4277 = vld [vmem:[#allocation5 + $0xa8] sm:$0xff]
    %v4278 = vld [vmem:[#allocation5 + $0xb0] sm:$0xff]
    %v4279 = vld [vmem:[#allocation5 + $0xb8] sm:$0xff]
    %v4280 = vld [vmem:[#allocation5 + $0xc0] sm:$0xff]
    %v4281 = vld [vmem:[#allocation5 + $0xc8] sm:$0xff]
    %v4282 = vld [vmem:[#allocation5 + $0xd0] sm:$0xff]
    %v4283 = vld [vmem:[#allocation5 + $0xd8] sm:$0xff]
    %v4284 = vld [vmem:[#allocation5 + $0xe0] sm:$0xff]
    %v4285 = vld [vmem:[#allocation5 + $0xe8] sm:$0xff]
    %v4286 = vld [vmem:[#allocation5 + $0xf0] sm:$0xff]
    %v4287 = vld [vmem:[#allocation5 + $0xf8] sm:$0xff]
    %v4288 = vld [vmem:[#allocation5 + $0x100] sm:$0xff]
    %v4289 = vld [vmem:[#allocation5 + $0x108] sm:$0xff]
    %v4290 = vld [vmem:[#allocation5 + $0x110] sm:$0xff]
    %v4291 = vld [vmem:[#allocation5 + $0x118] sm:$0xff]
    %v4292 = vld [vmem:[#allocation5 + $0x120] sm:$0xff]
    %v4293 = vld [vmem:[#allocation5 + $0x128] sm:$0xff]
    %v4294 = vld [vmem:[#allocation5 + $0x130] sm:$0xff]
    %v4295 = vld [vmem:[#allocation5 + $0x138] sm:$0xff]
    %v4296 = vld [vmem:[#allocation5 + $0x140] sm:$0xff]
    %v4297 = vld [vmem:[#allocation5 + $0x148] sm:$0xff]
    %v4298 = vld [vmem:[#allocation5 + $0x150] sm:$0xff]
    %v4299 = vld [vmem:[#allocation5 + $0x158] sm:$0xff]
    %v4300 = vld [vmem:[#allocation5 + $0x160] sm:$0xff]
    %v4301 = vld [vmem:[#allocation5 + $0x168] sm:$0xff]
    %v4302 = vld [vmem:[#allocation5 + $0x170] sm:$0xff]
    %v4303 = vld [vmem:[#allocation5 + $0x178] sm:$0xff]
    %v4304 = vld [vmem:[#allocation5 + $0x180] sm:$0xff]
    %v4305 = vld [vmem:[#allocation5 + $0x188] sm:$0xff]
    %v4306 = vld [vmem:[#allocation5 + $0x190] sm:$0xff]
    %v4307 = vld [vmem:[#allocation5 + $0x198] sm:$0xff]
    %v4308 = vld [vmem:[#allocation5 + $0x1a0] sm:$0xff]
    %v4309 = vld [vmem:[#allocation5 + $0x1a8] sm:$0xff]
    %v4310 = vld [vmem:[#allocation5 + $0x1b0] sm:$0xff]
    %v4311 = vld [vmem:[#allocation5 + $0x1b8] sm:$0xff]
    %v4312 = vld [vmem:[#allocation5 + $0x1c0] sm:$0xff]
    %v4313 = vld [vmem:[#allocation5 + $0x1c8] sm:$0xff]
    %v4314 = vld [vmem:[#allocation5 + $0x1d0] sm:$0xff]
    %v4315 = vld [vmem:[#allocation5 + $0x1d8] sm:$0xff]
    %v4316 = vld [vmem:[#allocation5 + $0x1e0] sm:$0xff]
    %v4317 = vld [vmem:[#allocation5 + $0x1e8] sm:$0xff]
    %v4318 = vld [vmem:[#allocation5 + $0x1f0] sm:$0xff]
    %v4319 = vld [vmem:[#allocation5 + $0x1f8] sm:$0xff]
    %v4320 = vld [vmem:[#allocation5 + $0x200] sm:$0xff]
    %v4321 = vld [vmem:[#allocation5 + $0x208] sm:$0xff]
    %v4322 = vld [vmem:[#allocation5 + $0x210] sm:$0xff]
    %v4323 = vld [vmem:[#allocation5 + $0x218] sm:$0xff]
    %v4324 = vld [vmem:[#allocation5 + $0x220] sm:$0xff]
    %v4325 = vld [vmem:[#allocation5 + $0x228] sm:$0xff]
    %v4326 = vld [vmem:[#allocation5 + $0x230] sm:$0xff]
    %v4327 = vld [vmem:[#allocation5 + $0x238] sm:$0xff]
    %v4328 = vld [vmem:[#allocation5 + $0x240] sm:$0xff]
    %v4329 = vld [vmem:[#allocation5 + $0x248] sm:$0xff]
    %v4330 = vld [vmem:[#allocation5 + $0x250] sm:$0xff]
    %v4331 = vld [vmem:[#allocation5 + $0x258] sm:$0xff]
    %v4332 = vld [vmem:[#allocation5 + $0x260] sm:$0xff]
    %v4333 = vld [vmem:[#allocation5 + $0x268] sm:$0xff]
    %v4334 = vld [vmem:[#allocation5 + $0x270] sm:$0xff]
    %v4335 = vld [vmem:[#allocation5 + $0x278] sm:$0xff]
    %v4336 = vld [vmem:[#allocation5 + $0x280] sm:$0xff]
    %v4337 = vld [vmem:[#allocation5 + $0x288] sm:$0xff]
    %v4338 = vld [vmem:[#allocation5 + $0x290] sm:$0xff]
    %v4339 = vld [vmem:[#allocation5 + $0x298] sm:$0xff]
    %v4340 = vld [vmem:[#allocation5 + $0x2a0] sm:$0xff]
    %v4341 = vld [vmem:[#allocation5 + $0x2a8] sm:$0xff]
    %v4342 = vld [vmem:[#allocation5 + $0x2b0] sm:$0xff]
    %v4343 = vld [vmem:[#allocation5 + $0x2b8] sm:$0xff]
    %v4344 = vld [vmem:[#allocation5 + $0x2c0] sm:$0xff]
    %v4345 = vld [vmem:[#allocation5 + $0x2c8] sm:$0xff]
    %v4346 = vld [vmem:[#allocation5 + $0x2d0] sm:$0xff]
    %v4347 = vld [vmem:[#allocation5 + $0x2d8] sm:$0xff]
    %v4348 = vld [vmem:[#allocation5 + $0x2e0] sm:$0xff]
    %v4349 = vld [vmem:[#allocation5 + $0x2e8] sm:$0xff]
    %v4350 = vld [vmem:[#allocation5 + $0x2f0] sm:$0xff]
    %v4351 = vld [vmem:[#allocation5 + $0x2f8] sm:$0xff]
    %v4352 = vld [vmem:[#allocation5 + $0x300] sm:$0xff]
    %v4353 = vld [vmem:[#allocation5 + $0x308] sm:$0xff]
    %v4354 = vld [vmem:[#allocation5 + $0x310] sm:$0xff]
    %v4355 = vld [vmem:[#allocation5 + $0x318] sm:$0xff]
    %v4356 = vld [vmem:[#allocation5 + $0x320] sm:$0xff]
    %v4357 = vld [vmem:[#allocation5 + $0x328] sm:$0xff]
    %v4358 = vld [vmem:[#allocation5 + $0x330] sm:$0xff]
    %v4359 = vld [vmem:[#allocation5 + $0x338] sm:$0xff]
    %v4360 = vld [vmem:[#allocation5 + $0x340] sm:$0xff]
    %v4361 = vld [vmem:[#allocation5 + $0x348] sm:$0xff]
    %v4362 = vld [vmem:[#allocation5 + $0x350] sm:$0xff]
    %v4363 = vld [vmem:[#allocation5 + $0x358] sm:$0xff]
    %v4364 = vld [vmem:[#allocation5 + $0x360] sm:$0xff]
    %v4365 = vld [vmem:[#allocation5 + $0x368] sm:$0xff]
    %v4366 = vld [vmem:[#allocation5 + $0x370] sm:$0xff]
    %v4367 = vld [vmem:[#allocation5 + $0x378] sm:$0xff]
    %v4368 = vld [vmem:[#allocation5 + $0x380] sm:$0xff]
    %v4369 = vld [vmem:[#allocation5 + $0x388] sm:$0xff]
    %v4370 = vld [vmem:[#allocation5 + $0x390] sm:$0xff]
    %v4371 = vld [vmem:[#allocation5 + $0x398] sm:$0xff]
    %v4372 = vld [vmem:[#allocation5 + $0x3a0] sm:$0xff]
    %v4373 = vld [vmem:[#allocation5 + $0x3a8] sm:$0xff]
    %v4374 = vld [vmem:[#allocation5 + $0x3b0] sm:$0xff]
    %v4375 = vld [vmem:[#allocation5 + $0x3b8] sm:$0xff]
    %v4376 = vld [vmem:[#allocation5 + $0x3c0] sm:$0xff]
    %v4377 = vld [vmem:[#allocation5 + $0x3c8] sm:$0xff]
    %v4378 = vld [vmem:[#allocation5 + $0x3d0] sm:$0xff]
    %v4379 = vld [vmem:[#allocation5 + $0x3d8] sm:$0xff]
    %v4380 = vld [vmem:[#allocation5 + $0x3e0] sm:$0xff]
    %v4381 = vld [vmem:[#allocation5 + $0x3e8] sm:$0xff]
    %v4382 = vld [vmem:[#allocation5 + $0x3f0] sm:$0xff]
    %v4383 = vld [vmem:[#allocation5 + $0x3f8] sm:$0xff]
    %v4384 = vld [vmem:[%s13] sm:$0xf]
    %v4386 = vlaneseq
    %v4387 = vshrl.u32 %v4386, 7
    %v4388 = vsub.s32 0, %v4387
    %v4389 = vrot.slane %v4384, %v4388
    %v4390 = vlaneseq
    %v4391 = vshrl.u32 %v4390, 7
    %v4392 = vsub.s32 1, %v4391
    %v4393 = vrot.slane %v4384, %v4392
    %v4394 = vlaneseq
    %v4395 = vshrl.u32 %v4394, 7
    %v4396 = vsub.s32 2, %v4395
    %v4397 = vrot.slane %v4384, %v4396
    %v4398 = vlaneseq
    %v4399 = vshrl.u32 %v4398, 7
    %v4400 = vsub.s32 3, %v4399
    %v4401 = vrot.slane %v4384, %v4400
    %v4534 = vunpack.c.l.b16 %v4256
    %v4535 = vunpack.c.h.b16 %v4256
    %v4536 = vunpack.c.l.b16 %v4257
    %v4537 = vunpack.c.h.b16 %v4257
    %v4538 = vunpack.c.l.b16 %v4258
    %v4539 = vunpack.c.h.b16 %v4258
    %v4540 = vunpack.c.l.b16 %v4259
    %v4541 = vunpack.c.h.b16 %v4259
    %v4542 = vunpack.c.l.b16 %v4260
    %v4543 = vunpack.c.h.b16 %v4260
    %v4544 = vunpack.c.l.b16 %v4261
    %v4545 = vunpack.c.h.b16 %v4261
    %v4546 = vunpack.c.l.b16 %v4262
    %v4547 = vunpack.c.h.b16 %v4262
    %v4548 = vunpack.c.l.b16 %v4263
    %v4549 = vunpack.c.h.b16 %v4263
    %v4550 = vunpack.c.l.b16 %v4264
    %v4551 = vunpack.c.h.b16 %v4264
    %v4552 = vunpack.c.l.b16 %v4265
    %v4553 = vunpack.c.h.b16 %v4265
    %v4554 = vunpack.c.l.b16 %v4266
    %v4555 = vunpack.c.h.b16 %v4266
    %v4556 = vunpack.c.l.b16 %v4267
    %v4557 = vunpack.c.h.b16 %v4267
    %v4558 = vunpack.c.l.b16 %v4268
    %v4559 = vunpack.c.h.b16 %v4268
    %v4560 = vunpack.c.l.b16 %v4269
    %v4561 = vunpack.c.h.b16 %v4269
    %v4562 = vunpack.c.l.b16 %v4270
    %v4563 = vunpack.c.h.b16 %v4270
    %v4564 = vunpack.c.l.b16 %v4271
    %v4565 = vunpack.c.h.b16 %v4271
    %v4566 = vunpack.c.l.b16 %v4272
    %v4567 = vunpack.c.h.b16 %v4272
    %v4568 = vunpack.c.l.b16 %v4273
    %v4569 = vunpack.c.h.b16 %v4273
    %v4570 = vunpack.c.l.b16 %v4274
    %v4571 = vunpack.c.h.b16 %v4274
    %v4572 = vunpack.c.l.b16 %v4275
    %v4573 = vunpack.c.h.b16 %v4275
    %v4574 = vunpack.c.l.b16 %v4276
    %v4575 = vunpack.c.h.b16 %v4276
    %v4576 = vunpack.c.l.b16 %v4277
    %v4577 = vunpack.c.h.b16 %v4277
    %v4578 = vunpack.c.l.b16 %v4278
    %v4579 = vunpack.c.h.b16 %v4278
    %v4580 = vunpack.c.l.b16 %v4279
    %v4581 = vunpack.c.h.b16 %v4279
    %v4582 = vunpack.c.l.b16 %v4280
    %v4583 = vunpack.c.h.b16 %v4280
    %v4584 = vunpack.c.l.b16 %v4281
    %v4585 = vunpack.c.h.b16 %v4281
    %v4586 = vunpack.c.l.b16 %v4282
    %v4587 = vunpack.c.h.b16 %v4282
    %v4588 = vunpack.c.l.b16 %v4283
    %v4589 = vunpack.c.h.b16 %v4283
    %v4590 = vunpack.c.l.b16 %v4284
    %v4591 = vunpack.c.h.b16 %v4284
    %v4592 = vunpack.c.l.b16 %v4285
    %v4593 = vunpack.c.h.b16 %v4285
    %v4594 = vunpack.c.l.b16 %v4286
    %v4595 = vunpack.c.h.b16 %v4286
    %v4596 = vunpack.c.l.b16 %v4287
    %v4597 = vunpack.c.h.b16 %v4287
    %v4598 = vunpack.c.l.b16 %v4288
    %v4599 = vunpack.c.h.b16 %v4288
    %v4600 = vunpack.c.l.b16 %v4289
    %v4601 = vunpack.c.h.b16 %v4289
    %v4602 = vunpack.c.l.b16 %v4290
    %v4603 = vunpack.c.h.b16 %v4290
    %v4604 = vunpack.c.l.b16 %v4291
    %v4605 = vunpack.c.h.b16 %v4291
    %v4606 = vunpack.c.l.b16 %v4292
    %v4607 = vunpack.c.h.b16 %v4292
    %v4608 = vunpack.c.l.b16 %v4293
    %v4609 = vunpack.c.h.b16 %v4293
    %v4610 = vunpack.c.l.b16 %v4294
    %v4611 = vunpack.c.h.b16 %v4294
    %v4612 = vunpack.c.l.b16 %v4295
    %v4613 = vunpack.c.h.b16 %v4295
    %v4614 = vunpack.c.l.b16 %v4296
    %v4615 = vunpack.c.h.b16 %v4296
    %v4616 = vunpack.c.l.b16 %v4297
    %v4617 = vunpack.c.h.b16 %v4297
    %v4618 = vunpack.c.l.b16 %v4298
    %v4619 = vunpack.c.h.b16 %v4298
    %v4620 = vunpack.c.l.b16 %v4299
    %v4621 = vunpack.c.h.b16 %v4299
    %v4622 = vunpack.c.l.b16 %v4300
    %v4623 = vunpack.c.h.b16 %v4300
    %v4624 = vunpack.c.l.b16 %v4301
    %v4625 = vunpack.c.h.b16 %v4301
    %v4626 = vunpack.c.l.b16 %v4302
    %v4627 = vunpack.c.h.b16 %v4302
    %v4628 = vunpack.c.l.b16 %v4303
    %v4629 = vunpack.c.h.b16 %v4303
    %v4630 = vunpack.c.l.b16 %v4304
    %v4631 = vunpack.c.h.b16 %v4304
    %v4632 = vunpack.c.l.b16 %v4305
    %v4633 = vunpack.c.h.b16 %v4305
    %v4634 = vunpack.c.l.b16 %v4306
    %v4635 = vunpack.c.h.b16 %v4306
    %v4636 = vunpack.c.l.b16 %v4307
    %v4637 = vunpack.c.h.b16 %v4307
    %v4638 = vunpack.c.l.b16 %v4308
    %v4639 = vunpack.c.h.b16 %v4308
    %v4640 = vunpack.c.l.b16 %v4309
    %v4641 = vunpack.c.h.b16 %v4309
    %v4642 = vunpack.c.l.b16 %v4310
    %v4643 = vunpack.c.h.b16 %v4310
    %v4644 = vunpack.c.l.b16 %v4311
    %v4645 = vunpack.c.h.b16 %v4311
    %v4646 = vunpack.c.l.b16 %v4312
    %v4647 = vunpack.c.h.b16 %v4312
    %v4648 = vunpack.c.l.b16 %v4313
    %v4649 = vunpack.c.h.b16 %v4313
    %v4650 = vunpack.c.l.b16 %v4314
    %v4651 = vunpack.c.h.b16 %v4314
    %v4652 = vunpack.c.l.b16 %v4315
    %v4653 = vunpack.c.h.b16 %v4315
    %v4654 = vunpack.c.l.b16 %v4316
    %v4655 = vunpack.c.h.b16 %v4316
    %v4656 = vunpack.c.l.b16 %v4317
    %v4657 = vunpack.c.h.b16 %v4317
    %v4658 = vunpack.c.l.b16 %v4318
    %v4659 = vunpack.c.h.b16 %v4318
    %v4660 = vunpack.c.l.b16 %v4319
    %v4661 = vunpack.c.h.b16 %v4319
    %v4662 = vunpack.c.l.b16 %v4320
    %v4663 = vunpack.c.h.b16 %v4320
    %v4664 = vunpack.c.l.b16 %v4321
    %v4665 = vunpack.c.h.b16 %v4321
    %v4666 = vunpack.c.l.b16 %v4322
    %v4667 = vunpack.c.h.b16 %v4322
    %v4668 = vunpack.c.l.b16 %v4323
    %v4669 = vunpack.c.h.b16 %v4323
    %v4670 = vunpack.c.l.b16 %v4324
    %v4671 = vunpack.c.h.b16 %v4324
    %v4672 = vunpack.c.l.b16 %v4325
    %v4673 = vunpack.c.h.b16 %v4325
    %v4674 = vunpack.c.l.b16 %v4326
    %v4675 = vunpack.c.h.b16 %v4326
    %v4676 = vunpack.c.l.b16 %v4327
    %v4677 = vunpack.c.h.b16 %v4327
    %v4678 = vunpack.c.l.b16 %v4328
    %v4679 = vunpack.c.h.b16 %v4328
    %v4680 = vunpack.c.l.b16 %v4329
    %v4681 = vunpack.c.h.b16 %v4329
    %v4682 = vunpack.c.l.b16 %v4330
    %v4683 = vunpack.c.h.b16 %v4330
    %v4684 = vunpack.c.l.b16 %v4331
    %v4685 = vunpack.c.h.b16 %v4331
    %v4686 = vunpack.c.l.b16 %v4332
    %v4687 = vunpack.c.h.b16 %v4332
    %v4688 = vunpack.c.l.b16 %v4333
    %v4689 = vunpack.c.h.b16 %v4333
    %v4690 = vunpack.c.l.b16 %v4334
    %v4691 = vunpack.c.h.b16 %v4334
    %v4692 = vunpack.c.l.b16 %v4335
    %v4693 = vunpack.c.h.b16 %v4335
    %v4694 = vunpack.c.l.b16 %v4336
    %v4695 = vunpack.c.h.b16 %v4336
    %v4696 = vunpack.c.l.b16 %v4337
    %v4697 = vunpack.c.h.b16 %v4337
    %v4698 = vunpack.c.l.b16 %v4338
    %v4699 = vunpack.c.h.b16 %v4338
    %v4700 = vunpack.c.l.b16 %v4339
    %v4701 = vunpack.c.h.b16 %v4339
    %v4702 = vunpack.c.l.b16 %v4340
    %v4703 = vunpack.c.h.b16 %v4340
    %v4704 = vunpack.c.l.b16 %v4341
    %v4705 = vunpack.c.h.b16 %v4341
    %v4706 = vunpack.c.l.b16 %v4342
    %v4707 = vunpack.c.h.b16 %v4342
    %v4708 = vunpack.c.l.b16 %v4343
    %v4709 = vunpack.c.h.b16 %v4343
    %v4710 = vunpack.c.l.b16 %v4344
    %v4711 = vunpack.c.h.b16 %v4344
    %v4712 = vunpack.c.l.b16 %v4345
    %v4713 = vunpack.c.h.b16 %v4345
    %v4714 = vunpack.c.l.b16 %v4346
    %v4715 = vunpack.c.h.b16 %v4346
    %v4716 = vunpack.c.l.b16 %v4347
    %v4717 = vunpack.c.h.b16 %v4347
    %v4718 = vunpack.c.l.b16 %v4348
    %v4719 = vunpack.c.h.b16 %v4348
    %v4720 = vunpack.c.l.b16 %v4349
    %v4721 = vunpack.c.h.b16 %v4349
    %v4722 = vunpack.c.l.b16 %v4350
    %v4723 = vunpack.c.h.b16 %v4350
    %v4724 = vunpack.c.l.b16 %v4351
    %v4725 = vunpack.c.h.b16 %v4351
    %v4726 = vunpack.c.l.b16 %v4352
    %v4727 = vunpack.c.h.b16 %v4352
    %v4728 = vunpack.c.l.b16 %v4353
    %v4729 = vunpack.c.h.b16 %v4353
    %v4730 = vunpack.c.l.b16 %v4354
    %v4731 = vunpack.c.h.b16 %v4354
    %v4732 = vunpack.c.l.b16 %v4355
    %v4733 = vunpack.c.h.b16 %v4355
    %v4734 = vunpack.c.l.b16 %v4356
    %v4735 = vunpack.c.h.b16 %v4356
    %v4736 = vunpack.c.l.b16 %v4357
    %v4737 = vunpack.c.h.b16 %v4357
    %v4738 = vunpack.c.l.b16 %v4358
    %v4739 = vunpack.c.h.b16 %v4358
    %v4740 = vunpack.c.l.b16 %v4359
    %v4741 = vunpack.c.h.b16 %v4359
    %v4742 = vunpack.c.l.b16 %v4360
    %v4743 = vunpack.c.h.b16 %v4360
    %v4744 = vunpack.c.l.b16 %v4361
    %v4745 = vunpack.c.h.b16 %v4361
    %v4746 = vunpack.c.l.b16 %v4362
    %v4747 = vunpack.c.h.b16 %v4362
    %v4748 = vunpack.c.l.b16 %v4363
    %v4749 = vunpack.c.h.b16 %v4363
    %v4750 = vunpack.c.l.b16 %v4364
    %v4751 = vunpack.c.h.b16 %v4364
    %v4752 = vunpack.c.l.b16 %v4365
    %v4753 = vunpack.c.h.b16 %v4365
    %v4754 = vunpack.c.l.b16 %v4366
    %v4755 = vunpack.c.h.b16 %v4366
    %v4756 = vunpack.c.l.b16 %v4367
    %v4757 = vunpack.c.h.b16 %v4367
    %v4758 = vunpack.c.l.b16 %v4368
    %v4759 = vunpack.c.h.b16 %v4368
    %v4760 = vunpack.c.l.b16 %v4369
    %v4761 = vunpack.c.h.b16 %v4369
    %v4762 = vunpack.c.l.b16 %v4370
    %v4763 = vunpack.c.h.b16 %v4370
    %v4764 = vunpack.c.l.b16 %v4371
    %v4765 = vunpack.c.h.b16 %v4371
    %v4766 = vunpack.c.l.b16 %v4372
    %v4767 = vunpack.c.h.b16 %v4372
    %v4768 = vunpack.c.l.b16 %v4373
    %v4769 = vunpack.c.h.b16 %v4373
    %v4770 = vunpack.c.l.b16 %v4374
    %v4771 = vunpack.c.h.b16 %v4374
    %v4772 = vunpack.c.l.b16 %v4375
    %v4773 = vunpack.c.h.b16 %v4375
    %v4774 = vunpack.c.l.b16 %v4376
    %v4775 = vunpack.c.h.b16 %v4376
    %v4776 = vunpack.c.l.b16 %v4377
    %v4777 = vunpack.c.h.b16 %v4377
    %v4778 = vunpack.c.l.b16 %v4378
    %v4779 = vunpack.c.h.b16 %v4378
    %v4780 = vunpack.c.l.b16 %v4379
    %v4781 = vunpack.c.h.b16 %v4379
    %v4782 = vunpack.c.l.b16 %v4380
    %v4783 = vunpack.c.h.b16 %v4380
    %v4784 = vunpack.c.l.b16 %v4381
    %v4785 = vunpack.c.h.b16 %v4381
    %v4786 = vunpack.c.l.b16 %v4382
    %v4787 = vunpack.c.h.b16 %v4382
    %v4788 = vunpack.c.l.b16 %v4383
    %v4789 = vunpack.c.h.b16 %v4383
    %v4790 = vpack.c.b16 %v4538, %v4534
    %v4791 = vpack.c.b16 %v4539, %v4535
    %v4792 = vpack.c.b16 %v4540, %v4536
    %v4793 = vpack.c.b16 %v4541, %v4537
    %v4794 = vpack.c.b16 %v4546, %v4542
    %v4795 = vpack.c.b16 %v4547, %v4543
    %v4796 = vpack.c.b16 %v4548, %v4544
    %v4797 = vpack.c.b16 %v4549, %v4545
    %v4798 = vpack.c.b16 %v4554, %v4550
    %v4799 = vpack.c.b16 %v4555, %v4551
    %v4800 = vpack.c.b16 %v4556, %v4552
    %v4801 = vpack.c.b16 %v4557, %v4553
    %v4802 = vpack.c.b16 %v4562, %v4558
    %v4803 = vpack.c.b16 %v4563, %v4559
    %v4804 = vpack.c.b16 %v4564, %v4560
    %v4805 = vpack.c.b16 %v4565, %v4561
    %v4806 = vpack.c.b16 %v4570, %v4566
    %v4807 = vpack.c.b16 %v4571, %v4567
    %v4808 = vpack.c.b16 %v4572, %v4568
    %v4809 = vpack.c.b16 %v4573, %v4569
    %v4810 = vpack.c.b16 %v4578, %v4574
    %v4811 = vpack.c.b16 %v4579, %v4575
    %v4812 = vpack.c.b16 %v4580, %v4576
    %v4813 = vpack.c.b16 %v4581, %v4577
    %v4814 = vpack.c.b16 %v4586, %v4582
    %v4815 = vpack.c.b16 %v4587, %v4583
    %v4816 = vpack.c.b16 %v4588, %v4584
    %v4817 = vpack.c.b16 %v4589, %v4585
    %v4818 = vpack.c.b16 %v4594, %v4590
    %v4819 = vpack.c.b16 %v4595, %v4591
    %v4820 = vpack.c.b16 %v4596, %v4592
    %v4821 = vpack.c.b16 %v4597, %v4593
    %v4822 = vpack.c.b16 %v4602, %v4598
    %v4823 = vpack.c.b16 %v4603, %v4599
    %v4824 = vpack.c.b16 %v4604, %v4600
    %v4825 = vpack.c.b16 %v4605, %v4601
    %v4826 = vpack.c.b16 %v4610, %v4606
    %v4827 = vpack.c.b16 %v4611, %v4607
    %v4828 = vpack.c.b16 %v4612, %v4608
    %v4829 = vpack.c.b16 %v4613, %v4609
    %v4830 = vpack.c.b16 %v4618, %v4614
    %v4831 = vpack.c.b16 %v4619, %v4615
    %v4832 = vpack.c.b16 %v4620, %v4616
    %v4833 = vpack.c.b16 %v4621, %v4617
    %v4834 = vpack.c.b16 %v4626, %v4622
    %v4835 = vpack.c.b16 %v4627, %v4623
    %v4836 = vpack.c.b16 %v4628, %v4624
    %v4837 = vpack.c.b16 %v4629, %v4625
    %v4838 = vpack.c.b16 %v4634, %v4630
    %v4839 = vpack.c.b16 %v4635, %v4631
    %v4840 = vpack.c.b16 %v4636, %v4632
    %v4841 = vpack.c.b16 %v4637, %v4633
    %v4842 = vpack.c.b16 %v4642, %v4638
    %v4843 = vpack.c.b16 %v4643, %v4639
    %v4844 = vpack.c.b16 %v4644, %v4640
    %v4845 = vpack.c.b16 %v4645, %v4641
    %v4846 = vpack.c.b16 %v4650, %v4646
    %v4847 = vpack.c.b16 %v4651, %v4647
    %v4848 = vpack.c.b16 %v4652, %v4648
    %v4849 = vpack.c.b16 %v4653, %v4649
    %v4850 = vpack.c.b16 %v4658, %v4654
    %v4851 = vpack.c.b16 %v4659, %v4655
    %v4852 = vpack.c.b16 %v4660, %v4656
    %v4853 = vpack.c.b16 %v4661, %v4657
    %v4854 = vpack.c.b16 %v4666, %v4662
    %v4855 = vpack.c.b16 %v4667, %v4663
    %v4856 = vpack.c.b16 %v4668, %v4664
    %v4857 = vpack.c.b16 %v4669, %v4665
    %v4858 = vpack.c.b16 %v4674, %v4670
    %v4859 = vpack.c.b16 %v4675, %v4671
    %v4860 = vpack.c.b16 %v4676, %v4672
    %v4861 = vpack.c.b16 %v4677, %v4673
    %v4862 = vpack.c.b16 %v4682, %v4678
    %v4863 = vpack.c.b16 %v4683, %v4679
    %v4864 = vpack.c.b16 %v4684, %v4680
    %v4865 = vpack.c.b16 %v4685, %v4681
    %v4866 = vpack.c.b16 %v4690, %v4686
    %v4867 = vpack.c.b16 %v4691, %v4687
    %v4868 = vpack.c.b16 %v4692, %v4688
    %v4869 = vpack.c.b16 %v4693, %v4689
    %v4870 = vpack.c.b16 %v4698, %v4694
    %v4871 = vpack.c.b16 %v4699, %v4695
    %v4872 = vpack.c.b16 %v4700, %v4696
    %v4873 = vpack.c.b16 %v4701, %v4697
    %v4874 = vpack.c.b16 %v4706, %v4702
    %v4875 = vpack.c.b16 %v4707, %v4703
    %v4876 = vpack.c.b16 %v4708, %v4704
    %v4877 = vpack.c.b16 %v4709, %v4705
    %v4878 = vpack.c.b16 %v4714, %v4710
    %v4879 = vpack.c.b16 %v4715, %v4711
    %v4880 = vpack.c.b16 %v4716, %v4712
    %v4881 = vpack.c.b16 %v4717, %v4713
    %v4882 = vpack.c.b16 %v4722, %v4718
    %v4883 = vpack.c.b16 %v4723, %v4719
    %v4884 = vpack.c.b16 %v4724, %v4720
    %v4885 = vpack.c.b16 %v4725, %v4721
    %v4886 = vpack.c.b16 %v4730, %v4726
    %v4887 = vpack.c.b16 %v4731, %v4727
    %v4888 = vpack.c.b16 %v4732, %v4728
    %v4889 = vpack.c.b16 %v4733, %v4729
    %v4890 = vpack.c.b16 %v4738, %v4734
    %v4891 = vpack.c.b16 %v4739, %v4735
    %v4892 = vpack.c.b16 %v4740, %v4736
    %v4893 = vpack.c.b16 %v4741, %v4737
    %v4894 = vpack.c.b16 %v4746, %v4742
    %v4895 = vpack.c.b16 %v4747, %v4743
    %v4896 = vpack.c.b16 %v4748, %v4744
    %v4897 = vpack.c.b16 %v4749, %v4745
    %v4898 = vpack.c.b16 %v4754, %v4750
    %v4899 = vpack.c.b16 %v4755, %v4751
    %v4900 = vpack.c.b16 %v4756, %v4752
    %v4901 = vpack.c.b16 %v4757, %v4753
    %v4902 = vpack.c.b16 %v4762, %v4758
    %v4903 = vpack.c.b16 %v4763, %v4759
    %v4904 = vpack.c.b16 %v4764, %v4760
    %v4905 = vpack.c.b16 %v4765, %v4761
    %v4906 = vpack.c.b16 %v4770, %v4766
    %v4907 = vpack.c.b16 %v4771, %v4767
    %v4908 = vpack.c.b16 %v4772, %v4768
    %v4909 = vpack.c.b16 %v4773, %v4769
    %v4910 = vpack.c.b16 %v4778, %v4774
    %v4911 = vpack.c.b16 %v4779, %v4775
    %v4912 = vpack.c.b16 %v4780, %v4776
    %v4913 = vpack.c.b16 %v4781, %v4777
    %v4914 = vpack.c.b16 %v4786, %v4782
    %v4915 = vpack.c.b16 %v4787, %v4783
    %v4916 = vpack.c.b16 %v4788, %v4784
    %v4917 = vpack.c.b16 %v4789, %v4785
    %5046 = vmatprep.subr.bf16.mxu0 %v4791
    %5047 = vmatpush1.bf16.msra.mxu0 %v4790
    %5048 = vmatprep.subr.bf16.mxu0 %v4795
    %5049 = vmatpush1.bf16.msra.mxu0 %v4794
    %5050 = vmatprep.subr.bf16.mxu0 %v4799
    %5051 = vmatpush1.bf16.msra.mxu0 %v4798
    %5052 = vmatprep.subr.bf16.mxu0 %v4803
    %5053 = vmatpush1.bf16.msra.mxu0 %v4802
    %5054 = vmatprep.subr.bf16.mxu0 %v4807
    %5055 = vmatpush1.bf16.msra.mxu0 %v4806
    %5056 = vmatprep.subr.bf16.mxu0 %v4811
    %5057 = vmatpush1.bf16.msra.mxu0 %v4810
    %5058 = vmatprep.subr.bf16.mxu0 %v4815
    %5059 = vmatpush1.bf16.msra.mxu0 %v4814
    %5060 = vmatprep.subr.bf16.mxu0 %v4819
    %5061 = vmatpush1.bf16.msra.mxu0 %v4818
    %5062 = vmatprep.subr.bf16.mxu0 %v4823
    %5063 = vmatpush1.bf16.msra.mxu0 %v4822
    %5064 = vmatprep.subr.bf16.mxu0 %v4827
    %5065 = vmatpush1.bf16.msra.mxu0 %v4826
    %5066 = vmatprep.subr.bf16.mxu0 %v4831
    %5067 = vmatpush1.bf16.msra.mxu0 %v4830
    %5068 = vmatprep.subr.bf16.mxu0 %v4835
    %5069 = vmatpush1.bf16.msra.mxu0 %v4834
    %5070 = vmatprep.subr.bf16.mxu0 %v4839
    %5071 = vmatpush1.bf16.msra.mxu0 %v4838
    %5072 = vmatprep.subr.bf16.mxu0 %v4843
    %5073 = vmatpush1.bf16.msra.mxu0 %v4842
    %5074 = vmatprep.subr.bf16.mxu0 %v4847
    %5075 = vmatpush1.bf16.msra.mxu0 %v4846
    %5076 = vmatprep.subr.bf16.mxu0 %v4851
    %5077 = vmatpush1.bf16.msra.mxu0 %v4850
    %5078 = vmatprep.mubr.bf16.mxu0 %v4253
    %5079 = vmatmul.mubr.bf16.gmra.mrb[0].mxu0 %v4252
    %v5080 = vpop.f32.mrb[0].mxu0
    %v5081 = vadd.f32 %v4389, %v5080
    %v5082 = vpop.f32.mrb[0].mxu0
    %v5083 = vadd.f32 %v4393, %v5082
    %v5084 = vpop.f32.mrb[0].mxu0
    %v5085 = vpop.f32.mrb[0].mxu0
    %5086 = vdwg.mxu0
    %5087 = vmatprep.subr.bf16.mxu0 %v4855
    %5088 = vmatpush1.bf16.msra.mxu0 %v4854
    %5089 = vmatprep.subr.bf16.mxu0 %v4859
    %5090 = vmatpush1.bf16.msra.mxu0 %v4858
    %5091 = vmatprep.subr.bf16.mxu0 %v4863
    %5092 = vmatpush1.bf16.msra.mxu0 %v4862
    %5093 = vmatprep.subr.bf16.mxu0 %v4867
    %5094 = vmatpush1.bf16.msra.mxu0 %v4866
    %5095 = vmatprep.subr.bf16.mxu0 %v4871
    %5096 = vmatpush1.bf16.msra.mxu0 %v4870
    %5097 = vmatprep.subr.bf16.mxu0 %v4875
    %5098 = vmatpush1.bf16.msra.mxu0 %v4874
    %5099 = vmatprep.subr.bf16.mxu0 %v4879
    %5100 = vmatpush1.bf16.msra.mxu0 %v4878
    %5101 = vmatprep.subr.bf16.mxu0 %v4883
    %5102 = vmatpush1.bf16.msra.mxu0 %v4882
    %5103 = vmatprep.subr.bf16.mxu0 %v4887
    %5104 = vmatpush1.bf16.msra.mxu0 %v4886
    %5105 = vmatprep.subr.bf16.mxu0 %v4891
    %5106 = vmatpush1.bf16.msra.mxu0 %v4890
    %5107 = vmatprep.subr.bf16.mxu0 %v4895
    %5108 = vmatpush1.bf16.msra.mxu0 %v4894
    %5109 = vmatprep.subr.bf16.mxu0 %v4899
    %5110 = vmatpush1.bf16.msra.mxu0 %v4898
    %5111 = vmatprep.subr.bf16.mxu0 %v4903
    %5112 = vmatpush1.bf16.msra.mxu0 %v4902
    %5113 = vmatprep.subr.bf16.mxu0 %v4907
    %5114 = vmatpush1.bf16.msra.mxu0 %v4906
    %5115 = vmatprep.subr.bf16.mxu0 %v4911
    %5116 = vmatpush1.bf16.msra.mxu0 %v4910
    %5117 = vmatprep.subr.bf16.mxu0 %v4915
    %5118 = vmatpush1.bf16.msra.mxu0 %v4914
    %5119 = vmatprep.mubr.bf16.mxu0 %v4255
    %5120 = vmatmul.mubr.bf16.gmra.mrb[0].mxu0 %v4254
    %v5121 = vpop.f32.mrb[0].mxu0
    %v5122 = vadd.f32 %v5081, %v5121
    %v5123 = vpop.f32.mrb[0].mxu0
    %v5124 = vadd.f32 %v5083, %v5123
    %v5125 = vpop.f32.mrb[0].mxu0
    %v5126 = vpop.f32.mrb[0].mxu0
    %5127 = vdwg.mxu0
    %5128 = vmatprep.subr.bf16.mxu0 %v4793
    %5129 = vmatpush1.bf16.msra.mxu0 %v4792
    %5130 = vmatprep.subr.bf16.mxu0 %v4797
    %5131 = vmatpush1.bf16.msra.mxu0 %v4796
    %5132 = vmatprep.subr.bf16.mxu0 %v4801
    %5133 = vmatpush1.bf16.msra.mxu0 %v4800
    %5134 = vmatprep.subr.bf16.mxu0 %v4805
    %5135 = vmatpush1.bf16.msra.mxu0 %v4804
    %5136 = vmatprep.subr.bf16.mxu0 %v4809
    %5137 = vmatpush1.bf16.msra.mxu0 %v4808
    %5138 = vmatprep.subr.bf16.mxu0 %v4813
    %5139 = vmatpush1.bf16.msra.mxu0 %v4812
    %5140 = vmatprep.subr.bf16.mxu0 %v4817
    %5141 = vmatpush1.bf16.msra.mxu0 %v4816
    %5142 = vmatprep.subr.bf16.mxu0 %v4821
    %5143 = vmatpush1.bf16.msra.mxu0 %v4820
    %5144 = vmatprep.subr.bf16.mxu0 %v4825
    %5145 = vmatpush1.bf16.msra.mxu0 %v4824
    %5146 = vmatprep.subr.bf16.mxu0 %v4829
    %5147 = vmatpush1.bf16.msra.mxu0 %v4828
    %5148 = vmatprep.subr.bf16.mxu0 %v4833
    %5149 = vmatpush1.bf16.msra.mxu0 %v4832
    %5150 = vmatprep.subr.bf16.mxu0 %v4837
    %5151 = vmatpush1.bf16.msra.mxu0 %v4836
    %5152 = vmatprep.subr.bf16.mxu0 %v4841
    %5153 = vmatpush1.bf16.msra.mxu0 %v4840
    %5154 = vmatprep.subr.bf16.mxu0 %v4845
    %5155 = vmatpush1.bf16.msra.mxu0 %v4844
    %5156 = vmatprep.subr.bf16.mxu0 %v4849
    %5157 = vmatpush1.bf16.msra.mxu0 %v4848
    %5158 = vmatprep.subr.bf16.mxu0 %v4853
    %5159 = vmatpush1.bf16.msra.mxu0 %v4852
    %5160 = vmatprep.mubr.bf16.mxu0 %v4253
    %5161 = vmatmul.mubr.bf16.gmra.mrb[0].mxu0 %v4252
    %v5162 = vpop.f32.mrb[0].mxu0
    %v5163 = vadd.f32 %v4397, %v5162
    %v5164 = vpop.f32.mrb[0].mxu0
    %v5165 = vadd.f32 %v4401, %v5164
    %v5166 = vpop.f32.mrb[0].mxu0
    %v5167 = vpop.f32.mrb[0].mxu0
    %5168 = vdwg.mxu0
    %5169 = vmatprep.subr.bf16.mxu0 %v4857
    %5170 = vmatpush1.bf16.msra.mxu0 %v4856
    %5171 = vmatprep.subr.bf16.mxu0 %v4861
    %5172 = vmatpush1.bf16.msra.mxu0 %v4860
    %5173 = vmatprep.subr.bf16.mxu0 %v4865
    %5174 = vmatpush1.bf16.msra.mxu0 %v4864
    %5175 = vmatprep.subr.bf16.mxu0 %v4869
    %5176 = vmatpush1.bf16.msra.mxu0 %v4868
    %5177 = vmatprep.subr.bf16.mxu0 %v4873
    %5178 = vmatpush1.bf16.msra.mxu0 %v4872
    %5179 = vmatprep.subr.bf16.mxu0 %v4877
    %5180 = vmatpush1.bf16.msra.mxu0 %v4876
    %5181 = vmatprep.subr.bf16.mxu0 %v4881
    %5182 = vmatpush1.bf16.msra.mxu0 %v4880
    %5183 = vmatprep.subr.bf16.mxu0 %v4885
    %5184 = vmatpush1.bf16.msra.mxu0 %v4884
    %5185 = vmatprep.subr.bf16.mxu0 %v4889
    %5186 = vmatpush1.bf16.msra.mxu0 %v4888
    %5187 = vmatprep.subr.bf16.mxu0 %v4893
    %5188 = vmatpush1.bf16.msra.mxu0 %v4892
    %5189 = vmatprep.subr.bf16.mxu0 %v4897
    %5190 = vmatpush1.bf16.msra.mxu0 %v4896
    %5191 = vmatprep.subr.bf16.mxu0 %v4901
    %5192 = vmatpush1.bf16.msra.mxu0 %v4900
    %5193 = vmatprep.subr.bf16.mxu0 %v4905
    %5194 = vmatpush1.bf16.msra.mxu0 %v4904
    %5195 = vmatprep.subr.bf16.mxu0 %v4909
    %5196 = vmatpush1.bf16.msra.mxu0 %v4908
    %5197 = vmatprep.subr.bf16.mxu0 %v4913
    %5198 = vmatpush1.bf16.msra.mxu0 %v4912
    %5199 = vmatprep.subr.bf16.mxu0 %v4917
    %5200 = vmatpush1.bf16.msra.mxu0 %v4916
    %5201 = vmatprep.mubr.bf16.mxu0 %v4255
    %5202 = vmatmul.mubr.bf16.gmra.mrb[0].mxu0 %v4254
    %v5203 = vpop.f32.mrb[0].mxu0
    %v5204 = vadd.f32 %v5163, %v5203
    %v5205 = vpop.f32.mrb[0].mxu0
    %v5206 = vadd.f32 %v5165, %v5205
    %v5207 = vpop.f32.mrb[0].mxu0
    %v5208 = vpop.f32.mrb[0].mxu0
    %5209 = vdwg.mxu0
    %v5210 = vmax.f32 %v5122, 0.0
    %v5211 = vmax.f32 %v5124, 0.0
    %v5212 = vmax.f32 %v5204, 0.0
    %v5213 = vmax.f32 %v5206, 0.0
    %v5214 = vpack.c.bf16 %v5210, %v5210
    %v5215 = vpack.c.bf16 %v5211, %v5211
    %v5216 = vpack.c.bf16 %v5212, %v5212
    %v5217 = vpack.c.bf16 %v5213, %v5213
    %v5218 = vld [vmem:[#allocation7] sm:$0xff]
    %v5219 = vld [vmem:[#allocation7 + $0x8] sm:$0xff]
    %v5220 = vld [vmem:[#allocation7 + $0x10] sm:$0xff]
    %v5221 = vld [vmem:[#allocation7 + $0x18] sm:$0xff]
    %v5222 = vld [vmem:[#allocation7 + $0x20] sm:$0xff]
    %v5223 = vld [vmem:[#allocation7 + $0x28] sm:$0xff]
    %v5224 = vld [vmem:[#allocation7 + $0x30] sm:$0xff]
    %v5225 = vld [vmem:[#allocation7 + $0x38] sm:$0xff]
    %v5226 = vld [vmem:[#allocation7 + $0x40] sm:$0xff]
    %v5227 = vld [vmem:[#allocation7 + $0x48] sm:$0xff]
    %v5228 = vld [vmem:[#allocation7 + $0x50] sm:$0xff]
    %v5229 = vld [vmem:[#allocation7 + $0x58] sm:$0xff]
    %v5230 = vld [vmem:[#allocation7 + $0x60] sm:$0xff]
    %v5231 = vld [vmem:[#allocation7 + $0x68] sm:$0xff]
    %v5232 = vld [vmem:[#allocation7 + $0x70] sm:$0xff]
    %v5233 = vld [vmem:[#allocation7 + $0x78] sm:$0xff]
    %v5234 = vld [vmem:[#allocation7 + $0x80] sm:$0xff]
    %v5235 = vld [vmem:[#allocation7 + $0x88] sm:$0xff]
    %v5236 = vld [vmem:[#allocation7 + $0x90] sm:$0xff]
    %v5237 = vld [vmem:[#allocation7 + $0x98] sm:$0xff]
    %v5238 = vld [vmem:[#allocation7 + $0xa0] sm:$0xff]
    %v5239 = vld [vmem:[#allocation7 + $0xa8] sm:$0xff]
    %v5240 = vld [vmem:[#allocation7 + $0xb0] sm:$0xff]
    %v5241 = vld [vmem:[#allocation7 + $0xb8] sm:$0xff]
    %v5242 = vld [vmem:[#allocation7 + $0xc0] sm:$0xff]
    %v5243 = vld [vmem:[#allocation7 + $0xc8] sm:$0xff]
    %v5244 = vld [vmem:[#allocation7 + $0xd0] sm:$0xff]
    %v5245 = vld [vmem:[#allocation7 + $0xd8] sm:$0xff]
    %v5246 = vld [vmem:[#allocation7 + $0xe0] sm:$0xff]
    %v5247 = vld [vmem:[#allocation7 + $0xe8] sm:$0xff]
    %v5248 = vld [vmem:[#allocation7 + $0xf0] sm:$0xff]
    %v5249 = vld [vmem:[#allocation7 + $0xf8] sm:$0xff]
    %v5250 = vld [vmem:[#allocation7 + $0x100] sm:$0xff]
    %v5251 = vld [vmem:[#allocation7 + $0x108] sm:$0xff]
    %v5252 = vld [vmem:[#allocation7 + $0x110] sm:$0xff]
    %v5253 = vld [vmem:[#allocation7 + $0x118] sm:$0xff]
    %v5254 = vld [vmem:[#allocation7 + $0x120] sm:$0xff]
    %v5255 = vld [vmem:[#allocation7 + $0x128] sm:$0xff]
    %v5256 = vld [vmem:[#allocation7 + $0x130] sm:$0xff]
    %v5257 = vld [vmem:[#allocation7 + $0x138] sm:$0xff]
    %v5258 = vld [vmem:[#allocation7 + $0x140] sm:$0xff]
    %v5259 = vld [vmem:[#allocation7 + $0x148] sm:$0xff]
    %v5260 = vld [vmem:[#allocation7 + $0x150] sm:$0xff]
    %v5261 = vld [vmem:[#allocation7 + $0x158] sm:$0xff]
    %v5262 = vld [vmem:[#allocation7 + $0x160] sm:$0xff]
    %v5263 = vld [vmem:[#allocation7 + $0x168] sm:$0xff]
    %v5264 = vld [vmem:[#allocation7 + $0x170] sm:$0xff]
    %v5265 = vld [vmem:[#allocation7 + $0x178] sm:$0xff]
    %v5266 = vld [vmem:[#allocation7 + $0x180] sm:$0xff]
    %v5267 = vld [vmem:[#allocation7 + $0x188] sm:$0xff]
    %v5268 = vld [vmem:[#allocation7 + $0x190] sm:$0xff]
    %v5269 = vld [vmem:[#allocation7 + $0x198] sm:$0xff]
    %v5270 = vld [vmem:[#allocation7 + $0x1a0] sm:$0xff]
    %v5271 = vld [vmem:[#allocation7 + $0x1a8] sm:$0xff]
    %v5272 = vld [vmem:[#allocation7 + $0x1b0] sm:$0xff]
    %v5273 = vld [vmem:[#allocation7 + $0x1b8] sm:$0xff]
    %v5274 = vld [vmem:[#allocation7 + $0x1c0] sm:$0xff]
    %v5275 = vld [vmem:[#allocation7 + $0x1c8] sm:$0xff]
    %v5276 = vld [vmem:[#allocation7 + $0x1d0] sm:$0xff]
    %v5277 = vld [vmem:[#allocation7 + $0x1d8] sm:$0xff]
    %v5278 = vld [vmem:[#allocation7 + $0x1e0] sm:$0xff]
    %v5279 = vld [vmem:[#allocation7 + $0x1e8] sm:$0xff]
    %v5280 = vld [vmem:[#allocation7 + $0x1f0] sm:$0xff]
    %v5281 = vld [vmem:[#allocation7 + $0x1f8] sm:$0xff]
    %v5282 = vld [vmem:[#allocation7 + $0x200] sm:$0xff]
    %v5283 = vld [vmem:[#allocation7 + $0x208] sm:$0xff]
    %v5284 = vld [vmem:[#allocation7 + $0x210] sm:$0xff]
    %v5285 = vld [vmem:[#allocation7 + $0x218] sm:$0xff]
    %v5286 = vld [vmem:[#allocation7 + $0x220] sm:$0xff]
    %v5287 = vld [vmem:[#allocation7 + $0x228] sm:$0xff]
    %v5288 = vld [vmem:[#allocation7 + $0x230] sm:$0xff]
    %v5289 = vld [vmem:[#allocation7 + $0x238] sm:$0xff]
    %v5290 = vld [vmem:[#allocation7 + $0x240] sm:$0xff]
    %v5291 = vld [vmem:[#allocation7 + $0x248] sm:$0xff]
    %v5292 = vld [vmem:[#allocation7 + $0x250] sm:$0xff]
    %v5293 = vld [vmem:[#allocation7 + $0x258] sm:$0xff]
    %v5294 = vld [vmem:[#allocation7 + $0x260] sm:$0xff]
    %v5295 = vld [vmem:[#allocation7 + $0x268] sm:$0xff]
    %v5296 = vld [vmem:[#allocation7 + $0x270] sm:$0xff]
    %v5297 = vld [vmem:[#allocation7 + $0x278] sm:$0xff]
    %v5298 = vld [vmem:[#allocation7 + $0x280] sm:$0xff]
    %v5299 = vld [vmem:[#allocation7 + $0x288] sm:$0xff]
    %v5300 = vld [vmem:[#allocation7 + $0x290] sm:$0xff]
    %v5301 = vld [vmem:[#allocation7 + $0x298] sm:$0xff]
    %v5302 = vld [vmem:[#allocation7 + $0x2a0] sm:$0xff]
    %v5303 = vld [vmem:[#allocation7 + $0x2a8] sm:$0xff]
    %v5304 = vld [vmem:[#allocation7 + $0x2b0] sm:$0xff]
    %v5305 = vld [vmem:[#allocation7 + $0x2b8] sm:$0xff]
    %v5306 = vld [vmem:[#allocation7 + $0x2c0] sm:$0xff]
    %v5307 = vld [vmem:[#allocation7 + $0x2c8] sm:$0xff]
    %v5308 = vld [vmem:[#allocation7 + $0x2d0] sm:$0xff]
    %v5309 = vld [vmem:[#allocation7 + $0x2d8] sm:$0xff]
    %v5310 = vld [vmem:[#allocation7 + $0x2e0] sm:$0xff]
    %v5311 = vld [vmem:[#allocation7 + $0x2e8] sm:$0xff]
    %v5312 = vld [vmem:[#allocation7 + $0x2f0] sm:$0xff]
    %v5313 = vld [vmem:[#allocation7 + $0x2f8] sm:$0xff]
    %v5314 = vld [vmem:[#allocation7 + $0x300] sm:$0xff]
    %v5315 = vld [vmem:[#allocation7 + $0x308] sm:$0xff]
    %v5316 = vld [vmem:[#allocation7 + $0x310] sm:$0xff]
    %v5317 = vld [vmem:[#allocation7 + $0x318] sm:$0xff]
    %v5318 = vld [vmem:[#allocation7 + $0x320] sm:$0xff]
    %v5319 = vld [vmem:[#allocation7 + $0x328] sm:$0xff]
    %v5320 = vld [vmem:[#allocation7 + $0x330] sm:$0xff]
    %v5321 = vld [vmem:[#allocation7 + $0x338] sm:$0xff]
    %v5322 = vld [vmem:[#allocation7 + $0x340] sm:$0xff]
    %v5323 = vld [vmem:[#allocation7 + $0x348] sm:$0xff]
    %v5324 = vld [vmem:[#allocation7 + $0x350] sm:$0xff]
    %v5325 = vld [vmem:[#allocation7 + $0x358] sm:$0xff]
    %v5326 = vld [vmem:[#allocation7 + $0x360] sm:$0xff]
    %v5327 = vld [vmem:[#allocation7 + $0x368] sm:$0xff]
    %v5328 = vld [vmem:[#allocation7 + $0x370] sm:$0xff]
    %v5329 = vld [vmem:[#allocation7 + $0x378] sm:$0xff]
    %v5330 = vld [vmem:[#allocation7 + $0x380] sm:$0xff]
    %v5331 = vld [vmem:[#allocation7 + $0x388] sm:$0xff]
    %v5332 = vld [vmem:[#allocation7 + $0x390] sm:$0xff]
    %v5333 = vld [vmem:[#allocation7 + $0x398] sm:$0xff]
    %v5334 = vld [vmem:[#allocation7 + $0x3a0] sm:$0xff]
    %v5335 = vld [vmem:[#allocation7 + $0x3a8] sm:$0xff]
    %v5336 = vld [vmem:[#allocation7 + $0x3b0] sm:$0xff]
    %v5337 = vld [vmem:[#allocation7 + $0x3b8] sm:$0xff]
    %v5338 = vld [vmem:[#allocation7 + $0x3c0] sm:$0xff]
    %v5339 = vld [vmem:[#allocation7 + $0x3c8] sm:$0xff]
    %v5340 = vld [vmem:[#allocation7 + $0x3d0] sm:$0xff]
    %v5341 = vld [vmem:[#allocation7 + $0x3d8] sm:$0xff]
    %v5342 = vld [vmem:[#allocation7 + $0x3e0] sm:$0xff]
    %v5343 = vld [vmem:[#allocation7 + $0x3e8] sm:$0xff]
    %v5344 = vld [vmem:[#allocation7 + $0x3f0] sm:$0xff]
    %v5345 = vld [vmem:[#allocation7 + $0x3f8] sm:$0xff]
    %v5346 = vld [vmem:[%s15] sm:$0xf]
    %v5348 = vlaneseq
    %v5349 = vshrl.u32 %v5348, 7
    %v5350 = vsub.s32 0, %v5349
    %v5351 = vrot.slane %v5346, %v5350
    %v5352 = vlaneseq
    %v5353 = vshrl.u32 %v5352, 7
    %v5354 = vsub.s32 1, %v5353
    %v5355 = vrot.slane %v5346, %v5354
    %v5356 = vlaneseq
    %v5357 = vshrl.u32 %v5356, 7
    %v5358 = vsub.s32 2, %v5357
    %v5359 = vrot.slane %v5346, %v5358
    %v5360 = vlaneseq
    %v5361 = vshrl.u32 %v5360, 7
    %v5362 = vsub.s32 3, %v5361
    %v5363 = vrot.slane %v5346, %v5362
    %v5496 = vunpack.c.l.b16 %v5218
    %v5497 = vunpack.c.h.b16 %v5218
    %v5498 = vunpack.c.l.b16 %v5219
    %v5499 = vunpack.c.h.b16 %v5219
    %v5500 = vunpack.c.l.b16 %v5220
    %v5501 = vunpack.c.h.b16 %v5220
    %v5502 = vunpack.c.l.b16 %v5221
    %v5503 = vunpack.c.h.b16 %v5221
    %v5504 = vunpack.c.l.b16 %v5222
    %v5505 = vunpack.c.h.b16 %v5222
    %v5506 = vunpack.c.l.b16 %v5223
    %v5507 = vunpack.c.h.b16 %v5223
    %v5508 = vunpack.c.l.b16 %v5224
    %v5509 = vunpack.c.h.b16 %v5224
    %v5510 = vunpack.c.l.b16 %v5225
    %v5511 = vunpack.c.h.b16 %v5225
    %v5512 = vunpack.c.l.b16 %v5226
    %v5513 = vunpack.c.h.b16 %v5226
    %v5514 = vunpack.c.l.b16 %v5227
    %v5515 = vunpack.c.h.b16 %v5227
    %v5516 = vunpack.c.l.b16 %v5228
    %v5517 = vunpack.c.h.b16 %v5228
    %v5518 = vunpack.c.l.b16 %v5229
    %v5519 = vunpack.c.h.b16 %v5229
    %v5520 = vunpack.c.l.b16 %v5230
    %v5521 = vunpack.c.h.b16 %v5230
    %v5522 = vunpack.c.l.b16 %v5231
    %v5523 = vunpack.c.h.b16 %v5231
    %v5524 = vunpack.c.l.b16 %v5232
    %v5525 = vunpack.c.h.b16 %v5232
    %v5526 = vunpack.c.l.b16 %v5233
    %v5527 = vunpack.c.h.b16 %v5233
    %v5528 = vunpack.c.l.b16 %v5234
    %v5529 = vunpack.c.h.b16 %v5234
    %v5530 = vunpack.c.l.b16 %v5235
    %v5531 = vunpack.c.h.b16 %v5235
    %v5532 = vunpack.c.l.b16 %v5236
    %v5533 = vunpack.c.h.b16 %v5236
    %v5534 = vunpack.c.l.b16 %v5237
    %v5535 = vunpack.c.h.b16 %v5237
    %v5536 = vunpack.c.l.b16 %v5238
    %v5537 = vunpack.c.h.b16 %v5238
    %v5538 = vunpack.c.l.b16 %v5239
    %v5539 = vunpack.c.h.b16 %v5239
    %v5540 = vunpack.c.l.b16 %v5240
    %v5541 = vunpack.c.h.b16 %v5240
    %v5542 = vunpack.c.l.b16 %v5241
    %v5543 = vunpack.c.h.b16 %v5241
    %v5544 = vunpack.c.l.b16 %v5242
    %v5545 = vunpack.c.h.b16 %v5242
    %v5546 = vunpack.c.l.b16 %v5243
    %v5547 = vunpack.c.h.b16 %v5243
    %v5548 = vunpack.c.l.b16 %v5244
    %v5549 = vunpack.c.h.b16 %v5244
    %v5550 = vunpack.c.l.b16 %v5245
    %v5551 = vunpack.c.h.b16 %v5245
    %v5552 = vunpack.c.l.b16 %v5246
    %v5553 = vunpack.c.h.b16 %v5246
    %v5554 = vunpack.c.l.b16 %v5247
    %v5555 = vunpack.c.h.b16 %v5247
    %v5556 = vunpack.c.l.b16 %v5248
    %v5557 = vunpack.c.h.b16 %v5248
    %v5558 = vunpack.c.l.b16 %v5249
    %v5559 = vunpack.c.h.b16 %v5249
    %v5560 = vunpack.c.l.b16 %v5250
    %v5561 = vunpack.c.h.b16 %v5250
    %v5562 = vunpack.c.l.b16 %v5251
    %v5563 = vunpack.c.h.b16 %v5251
    %v5564 = vunpack.c.l.b16 %v5252
    %v5565 = vunpack.c.h.b16 %v5252
    %v5566 = vunpack.c.l.b16 %v5253
    %v5567 = vunpack.c.h.b16 %v5253
    %v5568 = vunpack.c.l.b16 %v5254
    %v5569 = vunpack.c.h.b16 %v5254
    %v5570 = vunpack.c.l.b16 %v5255
    %v5571 = vunpack.c.h.b16 %v5255
    %v5572 = vunpack.c.l.b16 %v5256
    %v5573 = vunpack.c.h.b16 %v5256
    %v5574 = vunpack.c.l.b16 %v5257
    %v5575 = vunpack.c.h.b16 %v5257
    %v5576 = vunpack.c.l.b16 %v5258
    %v5577 = vunpack.c.h.b16 %v5258
    %v5578 = vunpack.c.l.b16 %v5259
    %v5579 = vunpack.c.h.b16 %v5259
    %v5580 = vunpack.c.l.b16 %v5260
    %v5581 = vunpack.c.h.b16 %v5260
    %v5582 = vunpack.c.l.b16 %v5261
    %v5583 = vunpack.c.h.b16 %v5261
    %v5584 = vunpack.c.l.b16 %v5262
    %v5585 = vunpack.c.h.b16 %v5262
    %v5586 = vunpack.c.l.b16 %v5263
    %v5587 = vunpack.c.h.b16 %v5263
    %v5588 = vunpack.c.l.b16 %v5264
    %v5589 = vunpack.c.h.b16 %v5264
    %v5590 = vunpack.c.l.b16 %v5265
    %v5591 = vunpack.c.h.b16 %v5265
    %v5592 = vunpack.c.l.b16 %v5266
    %v5593 = vunpack.c.h.b16 %v5266
    %v5594 = vunpack.c.l.b16 %v5267
    %v5595 = vunpack.c.h.b16 %v5267
    %v5596 = vunpack.c.l.b16 %v5268
    %v5597 = vunpack.c.h.b16 %v5268
    %v5598 = vunpack.c.l.b16 %v5269
    %v5599 = vunpack.c.h.b16 %v5269
    %v5600 = vunpack.c.l.b16 %v5270
    %v5601 = vunpack.c.h.b16 %v5270
    %v5602 = vunpack.c.l.b16 %v5271
    %v5603 = vunpack.c.h.b16 %v5271
    %v5604 = vunpack.c.l.b16 %v5272
    %v5605 = vunpack.c.h.b16 %v5272
    %v5606 = vunpack.c.l.b16 %v5273
    %v5607 = vunpack.c.h.b16 %v5273
    %v5608 = vunpack.c.l.b16 %v5274
    %v5609 = vunpack.c.h.b16 %v5274
    %v5610 = vunpack.c.l.b16 %v5275
    %v5611 = vunpack.c.h.b16 %v5275
    %v5612 = vunpack.c.l.b16 %v5276
    %v5613 = vunpack.c.h.b16 %v5276
    %v5614 = vunpack.c.l.b16 %v5277
    %v5615 = vunpack.c.h.b16 %v5277
    %v5616 = vunpack.c.l.b16 %v5278
    %v5617 = vunpack.c.h.b16 %v5278
    %v5618 = vunpack.c.l.b16 %v5279
    %v5619 = vunpack.c.h.b16 %v5279
    %v5620 = vunpack.c.l.b16 %v5280
    %v5621 = vunpack.c.h.b16 %v5280
    %v5622 = vunpack.c.l.b16 %v5281
    %v5623 = vunpack.c.h.b16 %v5281
    %v5624 = vunpack.c.l.b16 %v5282
    %v5625 = vunpack.c.h.b16 %v5282
    %v5626 = vunpack.c.l.b16 %v5283
    %v5627 = vunpack.c.h.b16 %v5283
    %v5628 = vunpack.c.l.b16 %v5284
    %v5629 = vunpack.c.h.b16 %v5284
    %v5630 = vunpack.c.l.b16 %v5285
    %v5631 = vunpack.c.h.b16 %v5285
    %v5632 = vunpack.c.l.b16 %v5286
    %v5633 = vunpack.c.h.b16 %v5286
    %v5634 = vunpack.c.l.b16 %v5287
    %v5635 = vunpack.c.h.b16 %v5287
    %v5636 = vunpack.c.l.b16 %v5288
    %v5637 = vunpack.c.h.b16 %v5288
    %v5638 = vunpack.c.l.b16 %v5289
    %v5639 = vunpack.c.h.b16 %v5289
    %v5640 = vunpack.c.l.b16 %v5290
    %v5641 = vunpack.c.h.b16 %v5290
    %v5642 = vunpack.c.l.b16 %v5291
    %v5643 = vunpack.c.h.b16 %v5291
    %v5644 = vunpack.c.l.b16 %v5292
    %v5645 = vunpack.c.h.b16 %v5292
    %v5646 = vunpack.c.l.b16 %v5293
    %v5647 = vunpack.c.h.b16 %v5293
    %v5648 = vunpack.c.l.b16 %v5294
    %v5649 = vunpack.c.h.b16 %v5294
    %v5650 = vunpack.c.l.b16 %v5295
    %v5651 = vunpack.c.h.b16 %v5295
    %v5652 = vunpack.c.l.b16 %v5296
    %v5653 = vunpack.c.h.b16 %v5296
    %v5654 = vunpack.c.l.b16 %v5297
    %v5655 = vunpack.c.h.b16 %v5297
    %v5656 = vunpack.c.l.b16 %v5298
    %v5657 = vunpack.c.h.b16 %v5298
    %v5658 = vunpack.c.l.b16 %v5299
    %v5659 = vunpack.c.h.b16 %v5299
    %v5660 = vunpack.c.l.b16 %v5300
    %v5661 = vunpack.c.h.b16 %v5300
    %v5662 = vunpack.c.l.b16 %v5301
    %v5663 = vunpack.c.h.b16 %v5301
    %v5664 = vunpack.c.l.b16 %v5302
    %v5665 = vunpack.c.h.b16 %v5302
    %v5666 = vunpack.c.l.b16 %v5303
    %v5667 = vunpack.c.h.b16 %v5303
    %v5668 = vunpack.c.l.b16 %v5304
    %v5669 = vunpack.c.h.b16 %v5304
    %v5670 = vunpack.c.l.b16 %v5305
    %v5671 = vunpack.c.h.b16 %v5305
    %v5672 = vunpack.c.l.b16 %v5306
    %v5673 = vunpack.c.h.b16 %v5306
    %v5674 = vunpack.c.l.b16 %v5307
    %v5675 = vunpack.c.h.b16 %v5307
    %v5676 = vunpack.c.l.b16 %v5308
    %v5677 = vunpack.c.h.b16 %v5308
    %v5678 = vunpack.c.l.b16 %v5309
    %v5679 = vunpack.c.h.b16 %v5309
    %v5680 = vunpack.c.l.b16 %v5310
    %v5681 = vunpack.c.h.b16 %v5310
    %v5682 = vunpack.c.l.b16 %v5311
    %v5683 = vunpack.c.h.b16 %v5311
    %v5684 = vunpack.c.l.b16 %v5312
    %v5685 = vunpack.c.h.b16 %v5312
    %v5686 = vunpack.c.l.b16 %v5313
    %v5687 = vunpack.c.h.b16 %v5313
    %v5688 = vunpack.c.l.b16 %v5314
    %v5689 = vunpack.c.h.b16 %v5314
    %v5690 = vunpack.c.l.b16 %v5315
    %v5691 = vunpack.c.h.b16 %v5315
    %v5692 = vunpack.c.l.b16 %v5316
    %v5693 = vunpack.c.h.b16 %v5316
    %v5694 = vunpack.c.l.b16 %v5317
    %v5695 = vunpack.c.h.b16 %v5317
    %v5696 = vunpack.c.l.b16 %v5318
    %v5697 = vunpack.c.h.b16 %v5318
    %v5698 = vunpack.c.l.b16 %v5319
    %v5699 = vunpack.c.h.b16 %v5319
    %v5700 = vunpack.c.l.b16 %v5320
    %v5701 = vunpack.c.h.b16 %v5320
    %v5702 = vunpack.c.l.b16 %v5321
    %v5703 = vunpack.c.h.b16 %v5321
    %v5704 = vunpack.c.l.b16 %v5322
    %v5705 = vunpack.c.h.b16 %v5322
    %v5706 = vunpack.c.l.b16 %v5323
    %v5707 = vunpack.c.h.b16 %v5323
    %v5708 = vunpack.c.l.b16 %v5324
    %v5709 = vunpack.c.h.b16 %v5324
    %v5710 = vunpack.c.l.b16 %v5325
    %v5711 = vunpack.c.h.b16 %v5325
    %v5712 = vunpack.c.l.b16 %v5326
    %v5713 = vunpack.c.h.b16 %v5326
    %v5714 = vunpack.c.l.b16 %v5327
    %v5715 = vunpack.c.h.b16 %v5327
    %v5716 = vunpack.c.l.b16 %v5328
    %v5717 = vunpack.c.h.b16 %v5328
    %v5718 = vunpack.c.l.b16 %v5329
    %v5719 = vunpack.c.h.b16 %v5329
    %v5720 = vunpack.c.l.b16 %v5330
    %v5721 = vunpack.c.h.b16 %v5330
    %v5722 = vunpack.c.l.b16 %v5331
    %v5723 = vunpack.c.h.b16 %v5331
    %v5724 = vunpack.c.l.b16 %v5332
    %v5725 = vunpack.c.h.b16 %v5332
    %v5726 = vunpack.c.l.b16 %v5333
    %v5727 = vunpack.c.h.b16 %v5333
    %v5728 = vunpack.c.l.b16 %v5334
    %v5729 = vunpack.c.h.b16 %v5334
    %v5730 = vunpack.c.l.b16 %v5335
    %v5731 = vunpack.c.h.b16 %v5335
    %v5732 = vunpack.c.l.b16 %v5336
    %v5733 = vunpack.c.h.b16 %v5336
    %v5734 = vunpack.c.l.b16 %v5337
    %v5735 = vunpack.c.h.b16 %v5337
    %v5736 = vunpack.c.l.b16 %v5338
    %v5737 = vunpack.c.h.b16 %v5338
    %v5738 = vunpack.c.l.b16 %v5339
    %v5739 = vunpack.c.h.b16 %v5339
    %v5740 = vunpack.c.l.b16 %v5340
    %v5741 = vunpack.c.h.b16 %v5340
    %v5742 = vunpack.c.l.b16 %v5341
    %v5743 = vunpack.c.h.b16 %v5341
    %v5744 = vunpack.c.l.b16 %v5342
    %v5745 = vunpack.c.h.b16 %v5342
    %v5746 = vunpack.c.l.b16 %v5343
    %v5747 = vunpack.c.h.b16 %v5343
    %v5748 = vunpack.c.l.b16 %v5344
    %v5749 = vunpack.c.h.b16 %v5344
    %v5750 = vunpack.c.l.b16 %v5345
    %v5751 = vunpack.c.h.b16 %v5345
    %v5752 = vpack.c.b16 %v5500, %v5496
    %v5753 = vpack.c.b16 %v5501, %v5497
    %v5754 = vpack.c.b16 %v5502, %v5498
    %v5755 = vpack.c.b16 %v5503, %v5499
    %v5756 = vpack.c.b16 %v5508, %v5504
    %v5757 = vpack.c.b16 %v5509, %v5505
    %v5758 = vpack.c.b16 %v5510, %v5506
    %v5759 = vpack.c.b16 %v5511, %v5507
    %v5760 = vpack.c.b16 %v5516, %v5512
    %v5761 = vpack.c.b16 %v5517, %v5513
    %v5762 = vpack.c.b16 %v5518, %v5514
    %v5763 = vpack.c.b16 %v5519, %v5515
    %v5764 = vpack.c.b16 %v5524, %v5520
    %v5765 = vpack.c.b16 %v5525, %v5521
    %v5766 = vpack.c.b16 %v5526, %v5522
    %v5767 = vpack.c.b16 %v5527, %v5523
    %v5768 = vpack.c.b16 %v5532, %v5528
    %v5769 = vpack.c.b16 %v5533, %v5529
    %v5770 = vpack.c.b16 %v5534, %v5530
    %v5771 = vpack.c.b16 %v5535, %v5531
    %v5772 = vpack.c.b16 %v5540, %v5536
    %v5773 = vpack.c.b16 %v5541, %v5537
    %v5774 = vpack.c.b16 %v5542, %v5538
    %v5775 = vpack.c.b16 %v5543, %v5539
    %v5776 = vpack.c.b16 %v5548, %v5544
    %v5777 = vpack.c.b16 %v5549, %v5545
    %v5778 = vpack.c.b16 %v5550, %v5546
    %v5779 = vpack.c.b16 %v5551, %v5547
    %v5780 = vpack.c.b16 %v5556, %v5552
    %v5781 = vpack.c.b16 %v5557, %v5553
    %v5782 = vpack.c.b16 %v5558, %v5554
    %v5783 = vpack.c.b16 %v5559, %v5555
    %v5784 = vpack.c.b16 %v5564, %v5560
    %v5785 = vpack.c.b16 %v5565, %v5561
    %v5786 = vpack.c.b16 %v5566, %v5562
    %v5787 = vpack.c.b16 %v5567, %v5563
    %v5788 = vpack.c.b16 %v5572, %v5568
    %v5789 = vpack.c.b16 %v5573, %v5569
    %v5790 = vpack.c.b16 %v5574, %v5570
    %v5791 = vpack.c.b16 %v5575, %v5571
    %v5792 = vpack.c.b16 %v5580, %v5576
    %v5793 = vpack.c.b16 %v5581, %v5577
    %v5794 = vpack.c.b16 %v5582, %v5578
    %v5795 = vpack.c.b16 %v5583, %v5579
    %v5796 = vpack.c.b16 %v5588, %v5584
    %v5797 = vpack.c.b16 %v5589, %v5585
    %v5798 = vpack.c.b16 %v5590, %v5586
    %v5799 = vpack.c.b16 %v5591, %v5587
    %v5800 = vpack.c.b16 %v5596, %v5592
    %v5801 = vpack.c.b16 %v5597, %v5593
    %v5802 = vpack.c.b16 %v5598, %v5594
    %v5803 = vpack.c.b16 %v5599, %v5595
    %v5804 = vpack.c.b16 %v5604, %v5600
    %v5805 = vpack.c.b16 %v5605, %v5601
    %v5806 = vpack.c.b16 %v5606, %v5602
    %v5807 = vpack.c.b16 %v5607, %v5603
    %v5808 = vpack.c.b16 %v5612, %v5608
    %v5809 = vpack.c.b16 %v5613, %v5609
    %v5810 = vpack.c.b16 %v5614, %v5610
    %v5811 = vpack.c.b16 %v5615, %v5611
    %v5812 = vpack.c.b16 %v5620, %v5616
    %v5813 = vpack.c.b16 %v5621, %v5617
    %v5814 = vpack.c.b16 %v5622, %v5618
    %v5815 = vpack.c.b16 %v5623, %v5619
    %v5816 = vpack.c.b16 %v5628, %v5624
    %v5817 = vpack.c.b16 %v5629, %v5625
    %v5818 = vpack.c.b16 %v5630, %v5626
    %v5819 = vpack.c.b16 %v5631, %v5627
    %v5820 = vpack.c.b16 %v5636, %v5632
    %v5821 = vpack.c.b16 %v5637, %v5633
    %v5822 = vpack.c.b16 %v5638, %v5634
    %v5823 = vpack.c.b16 %v5639, %v5635
    %v5824 = vpack.c.b16 %v5644, %v5640
    %v5825 = vpack.c.b16 %v5645, %v5641
    %v5826 = vpack.c.b16 %v5646, %v5642
    %v5827 = vpack.c.b16 %v5647, %v5643
    %v5828 = vpack.c.b16 %v5652, %v5648
    %v5829 = vpack.c.b16 %v5653, %v5649
    %v5830 = vpack.c.b16 %v5654, %v5650
    %v5831 = vpack.c.b16 %v5655, %v5651
    %v5832 = vpack.c.b16 %v5660, %v5656
    %v5833 = vpack.c.b16 %v5661, %v5657
    %v5834 = vpack.c.b16 %v5662, %v5658
    %v5835 = vpack.c.b16 %v5663, %v5659
    %v5836 = vpack.c.b16 %v5668, %v5664
    %v5837 = vpack.c.b16 %v5669, %v5665
    %v5838 = vpack.c.b16 %v5670, %v5666
    %v5839 = vpack.c.b16 %v5671, %v5667
    %v5840 = vpack.c.b16 %v5676, %v5672
    %v5841 = vpack.c.b16 %v5677, %v5673
    %v5842 = vpack.c.b16 %v5678, %v5674
    %v5843 = vpack.c.b16 %v5679, %v5675
    %v5844 = vpack.c.b16 %v5684, %v5680
    %v5845 = vpack.c.b16 %v5685, %v5681
    %v5846 = vpack.c.b16 %v5686, %v5682
    %v5847 = vpack.c.b16 %v5687, %v5683
    %v5848 = vpack.c.b16 %v5692, %v5688
    %v5849 = vpack.c.b16 %v5693, %v5689
    %v5850 = vpack.c.b16 %v5694, %v5690
    %v5851 = vpack.c.b16 %v5695, %v5691
    %v5852 = vpack.c.b16 %v5700, %v5696
    %v5853 = vpack.c.b16 %v5701, %v5697
    %v5854 = vpack.c.b16 %v5702, %v5698
    %v5855 = vpack.c.b16 %v5703, %v5699
    %v5856 = vpack.c.b16 %v5708, %v5704
    %v5857 = vpack.c.b16 %v5709, %v5705
    %v5858 = vpack.c.b16 %v5710, %v5706
    %v5859 = vpack.c.b16 %v5711, %v5707
    %v5860 = vpack.c.b16 %v5716, %v5712
    %v5861 = vpack.c.b16 %v5717, %v5713
    %v5862 = vpack.c.b16 %v5718, %v5714
    %v5863 = vpack.c.b16 %v5719, %v5715
    %v5864 = vpack.c.b16 %v5724, %v5720
    %v5865 = vpack.c.b16 %v5725, %v5721
    %v5866 = vpack.c.b16 %v5726, %v5722
    %v5867 = vpack.c.b16 %v5727, %v5723
    %v5868 = vpack.c.b16 %v5732, %v5728
    %v5869 = vpack.c.b16 %v5733, %v5729
    %v5870 = vpack.c.b16 %v5734, %v5730
    %v5871 = vpack.c.b16 %v5735, %v5731
    %v5872 = vpack.c.b16 %v5740, %v5736
    %v5873 = vpack.c.b16 %v5741, %v5737
    %v5874 = vpack.c.b16 %v5742, %v5738
    %v5875 = vpack.c.b16 %v5743, %v5739
    %v5876 = vpack.c.b16 %v5748, %v5744
    %v5877 = vpack.c.b16 %v5749, %v5745
    %v5878 = vpack.c.b16 %v5750, %v5746
    %v5879 = vpack.c.b16 %v5751, %v5747
    %6008 = vmatprep.subr.bf16.mxu0 %v5753
    %6009 = vmatpush1.bf16.msra.mxu0 %v5752
    %6010 = vmatprep.subr.bf16.mxu0 %v5757
    %6011 = vmatpush1.bf16.msra.mxu0 %v5756
    %6012 = vmatprep.subr.bf16.mxu0 %v5761
    %6013 = vmatpush1.bf16.msra.mxu0 %v5760
    %6014 = vmatprep.subr.bf16.mxu0 %v5765
    %6015 = vmatpush1.bf16.msra.mxu0 %v5764
    %6016 = vmatprep.subr.bf16.mxu0 %v5769
    %6017 = vmatpush1.bf16.msra.mxu0 %v5768
    %6018 = vmatprep.subr.bf16.mxu0 %v5773
    %6019 = vmatpush1.bf16.msra.mxu0 %v5772
    %6020 = vmatprep.subr.bf16.mxu0 %v5777
    %6021 = vmatpush1.bf16.msra.mxu0 %v5776
    %6022 = vmatprep.subr.bf16.mxu0 %v5781
    %6023 = vmatpush1.bf16.msra.mxu0 %v5780
    %6024 = vmatprep.subr.bf16.mxu0 %v5785
    %6025 = vmatpush1.bf16.msra.mxu0 %v5784
    %6026 = vmatprep.subr.bf16.mxu0 %v5789
    %6027 = vmatpush1.bf16.msra.mxu0 %v5788
    %6028 = vmatprep.subr.bf16.mxu0 %v5793
    %6029 = vmatpush1.bf16.msra.mxu0 %v5792
    %6030 = vmatprep.subr.bf16.mxu0 %v5797
    %6031 = vmatpush1.bf16.msra.mxu0 %v5796
    %6032 = vmatprep.subr.bf16.mxu0 %v5801
    %6033 = vmatpush1.bf16.msra.mxu0 %v5800
    %6034 = vmatprep.subr.bf16.mxu0 %v5805
    %6035 = vmatpush1.bf16.msra.mxu0 %v5804
    %6036 = vmatprep.subr.bf16.mxu0 %v5809
    %6037 = vmatpush1.bf16.msra.mxu0 %v5808
    %6038 = vmatprep.subr.bf16.mxu0 %v5813
    %6039 = vmatpush1.bf16.msra.mxu0 %v5812
    %6040 = vmatprep.mubr.bf16.mxu0 %v5215
    %6041 = vmatmul.mubr.bf16.gmra.mrb[0].mxu0 %v5214
    %v6042 = vpop.f32.mrb[0].mxu0
    %v6043 = vadd.f32 %v5351, %v6042
    %v6044 = vpop.f32.mrb[0].mxu0
    %v6045 = vadd.f32 %v5355, %v6044
    %v6046 = vpop.f32.mrb[0].mxu0
    %v6047 = vpop.f32.mrb[0].mxu0
    %6048 = vdwg.mxu0
    %6049 = vmatprep.subr.bf16.mxu0 %v5817
    %6050 = vmatpush1.bf16.msra.mxu0 %v5816
    %6051 = vmatprep.subr.bf16.mxu0 %v5821
    %6052 = vmatpush1.bf16.msra.mxu0 %v5820
    %6053 = vmatprep.subr.bf16.mxu0 %v5825
    %6054 = vmatpush1.bf16.msra.mxu0 %v5824
    %6055 = vmatprep.subr.bf16.mxu0 %v5829
    %6056 = vmatpush1.bf16.msra.mxu0 %v5828
    %6057 = vmatprep.subr.bf16.mxu0 %v5833
    %6058 = vmatpush1.bf16.msra.mxu0 %v5832
    %6059 = vmatprep.subr.bf16.mxu0 %v5837
    %6060 = vmatpush1.bf16.msra.mxu0 %v5836
    %6061 = vmatprep.subr.bf16.mxu0 %v5841
    %6062 = vmatpush1.bf16.msra.mxu0 %v5840
    %6063 = vmatprep.subr.bf16.mxu0 %v5845
    %6064 = vmatpush1.bf16.msra.mxu0 %v5844
    %6065 = vmatprep.subr.bf16.mxu0 %v5849
    %6066 = vmatpush1.bf16.msra.mxu0 %v5848
    %6067 = vmatprep.subr.bf16.mxu0 %v5853
    %6068 = vmatpush1.bf16.msra.mxu0 %v5852
    %6069 = vmatprep.subr.bf16.mxu0 %v5857
    %6070 = vmatpush1.bf16.msra.mxu0 %v5856
    %6071 = vmatprep.subr.bf16.mxu0 %v5861
    %6072 = vmatpush1.bf16.msra.mxu0 %v5860
    %6073 = vmatprep.subr.bf16.mxu0 %v5865
    %6074 = vmatpush1.bf16.msra.mxu0 %v5864
    %6075 = vmatprep.subr.bf16.mxu0 %v5869
    %6076 = vmatpush1.bf16.msra.mxu0 %v5868
    %6077 = vmatprep.subr.bf16.mxu0 %v5873
    %6078 = vmatpush1.bf16.msra.mxu0 %v5872
    %6079 = vmatprep.subr.bf16.mxu0 %v5877
    %6080 = vmatpush1.bf16.msra.mxu0 %v5876
    %6081 = vmatprep.mubr.bf16.mxu0 %v5217
    %6082 = vmatmul.mubr.bf16.gmra.mrb[0].mxu0 %v5216
    %v6083 = vpop.f32.mrb[0].mxu0
    %v6084 = vadd.f32 %v6043, %v6083
    %v6085 = vpop.f32.mrb[0].mxu0
    %v6086 = vadd.f32 %v6045, %v6085
    %v6087 = vpop.f32.mrb[0].mxu0
    %v6088 = vpop.f32.mrb[0].mxu0
    %6089 = vdwg.mxu0
    %6090 = vmatprep.subr.bf16.mxu0 %v5755
    %6091 = vmatpush1.bf16.msra.mxu0 %v5754
    %6092 = vmatprep.subr.bf16.mxu0 %v5759
    %6093 = vmatpush1.bf16.msra.mxu0 %v5758
    %6094 = vmatprep.subr.bf16.mxu0 %v5763
    %6095 = vmatpush1.bf16.msra.mxu0 %v5762
    %6096 = vmatprep.subr.bf16.mxu0 %v5767
    %6097 = vmatpush1.bf16.msra.mxu0 %v5766
    %6098 = vmatprep.subr.bf16.mxu0 %v5771
    %6099 = vmatpush1.bf16.msra.mxu0 %v5770
    %6100 = vmatprep.subr.bf16.mxu0 %v5775
    %6101 = vmatpush1.bf16.msra.mxu0 %v5774
    %6102 = vmatprep.subr.bf16.mxu0 %v5779
    %6103 = vmatpush1.bf16.msra.mxu0 %v5778
    %6104 = vmatprep.subr.bf16.mxu0 %v5783
    %6105 = vmatpush1.bf16.msra.mxu0 %v5782
    %6106 = vmatprep.subr.bf16.mxu0 %v5787
    %6107 = vmatpush1.bf16.msra.mxu0 %v5786
    %6108 = vmatprep.subr.bf16.mxu0 %v5791
    %6109 = vmatpush1.bf16.msra.mxu0 %v5790
    %6110 = vmatprep.subr.bf16.mxu0 %v5795
    %6111 = vmatpush1.bf16.msra.mxu0 %v5794
    %6112 = vmatprep.subr.bf16.mxu0 %v5799
    %6113 = vmatpush1.bf16.msra.mxu0 %v5798
    %6114 = vmatprep.subr.bf16.mxu0 %v5803
    %6115 = vmatpush1.bf16.msra.mxu0 %v5802
    %6116 = vmatprep.subr.bf16.mxu0 %v5807
    %6117 = vmatpush1.bf16.msra.mxu0 %v5806
    %6118 = vmatprep.subr.bf16.mxu0 %v5811
    %6119 = vmatpush1.bf16.msra.mxu0 %v5810
    %6120 = vmatprep.subr.bf16.mxu0 %v5815
    %6121 = vmatpush1.bf16.msra.mxu0 %v5814
    %6122 = vmatprep.mubr.bf16.mxu0 %v5215
    %6123 = vmatmul.mubr.bf16.gmra.mrb[0].mxu0 %v5214
    %v6124 = vpop.f32.mrb[0].mxu0
    %v6125 = vadd.f32 %v5359, %v6124
    %v6126 = vpop.f32.mrb[0].mxu0
    %v6127 = vadd.f32 %v5363, %v6126
    %v6128 = vpop.f32.mrb[0].mxu0
    %v6129 = vpop.f32.mrb[0].mxu0
    %6130 = vdwg.mxu0
    %6131 = vmatprep.subr.bf16.mxu0 %v5819
    %6132 = vmatpush1.bf16.msra.mxu0 %v5818
    %6133 = vmatprep.subr.bf16.mxu0 %v5823
    %6134 = vmatpush1.bf16.msra.mxu0 %v5822
    %6135 = vmatprep.subr.bf16.mxu0 %v5827
    %6136 = vmatpush1.bf16.msra.mxu0 %v5826
    %6137 = vmatprep.subr.bf16.mxu0 %v5831
    %6138 = vmatpush1.bf16.msra.mxu0 %v5830
    %6139 = vmatprep.subr.bf16.mxu0 %v5835
    %6140 = vmatpush1.bf16.msra.mxu0 %v5834
    %6141 = vmatprep.subr.bf16.mxu0 %v5839
    %6142 = vmatpush1.bf16.msra.mxu0 %v5838
    %6143 = vmatprep.subr.bf16.mxu0 %v5843
    %6144 = vmatpush1.bf16.msra.mxu0 %v5842
    %6145 = vmatprep.subr.bf16.mxu0 %v5847
    %6146 = vmatpush1.bf16.msra.mxu0 %v5846
    %6147 = vmatprep.subr.bf16.mxu0 %v5851
    %6148 = vmatpush1.bf16.msra.mxu0 %v5850
    %6149 = vmatprep.subr.bf16.mxu0 %v5855
    %6150 = vmatpush1.bf16.msra.mxu0 %v5854
    %6151 = vmatprep.subr.bf16.mxu0 %v5859
    %6152 = vmatpush1.bf16.msra.mxu0 %v5858
    %6153 = vmatprep.subr.bf16.mxu0 %v5863
    %6154 = vmatpush1.bf16.msra.mxu0 %v5862
    %6155 = vmatprep.subr.bf16.mxu0 %v5867
    %6156 = vmatpush1.bf16.msra.mxu0 %v5866
    %6157 = vmatprep.subr.bf16.mxu0 %v5871
    %6158 = vmatpush1.bf16.msra.mxu0 %v5870
    %6159 = vmatprep.subr.bf16.mxu0 %v5875
    %6160 = vmatpush1.bf16.msra.mxu0 %v5874
    %6161 = vmatprep.subr.bf16.mxu0 %v5879
    %6162 = vmatpush1.bf16.msra.mxu0 %v5878
    %6163 = vmatprep.mubr.bf16.mxu0 %v5217
    %6164 = vmatmul.mubr.bf16.gmra.mrb[0].mxu0 %v5216
    %v6165 = vpop.f32.mrb[0].mxu0
    %v6166 = vadd.f32 %v6125, %v6165
    %v6167 = vpop.f32.mrb[0].mxu0
    %v6168 = vadd.f32 %v6127, %v6167
    %v6169 = vpop.f32.mrb[0].mxu0
    %v6170 = vpop.f32.mrb[0].mxu0
    %6171 = vdwg.mxu0
    %v6172 = vmax.f32 %v6084, 0.0
    %v6173 = vmax.f32 %v6086, 0.0
    %v6174 = vmax.f32 %v6166, 0.0
    %v6175 = vmax.f32 %v6168, 0.0
    %v6176 = vpack.c.bf16 %v6172, %v6172
    %v6177 = vpack.c.bf16 %v6173, %v6173
    %v6178 = vpack.c.bf16 %v6174, %v6174
    %v6179 = vpack.c.bf16 %v6175, %v6175
    %v6180 = vld [vmem:[%s16] sm:$0xff]
    %v6181 = vld [vmem:[%s16 + $0x8] sm:$0xff]
    %v6182 = vld [vmem:[%s16 + $0x10] sm:$0xff]
    %v6183 = vld [vmem:[%s16 + $0x18] sm:$0xf]
    %v6184 = vld [vmem:[%s16 + $0x1c] sm:$0xff]
    %v6185 = vld [vmem:[%s16 + $0x24] sm:$0xff]
    %v6186 = vld [vmem:[%s16 + $0x2c] sm:$0xff]
    %v6187 = vld [vmem:[%s16 + $0x34] sm:$0xf]
    %v6188 = vld [vmem:[%s16 + $0x38] sm:$0xff]
    %v6189 = vld [vmem:[%s16 + $0x40] sm:$0xff]
    %v6190 = vld [vmem:[%s16 + $0x48] sm:$0xff]
    %v6191 = vld [vmem:[%s16 + $0x50] sm:$0xf]
    %v6192 = vld [vmem:[%s16 + $0x54] sm:$0xff]
    %v6193 = vld [vmem:[%s16 + $0x5c] sm:$0xff]
    %v6194 = vld [vmem:[%s16 + $0x64] sm:$0xff]
    %v6195 = vld [vmem:[%s16 + $0x6c] sm:$0xf]
    %v6196 = vld [vmem:[%s16 + $0x70] sm:$0xff]
    %v6197 = vld [vmem:[%s16 + $0x78] sm:$0xff]
    %v6198 = vld [vmem:[%s16 + $0x80] sm:$0xff]
    %v6199 = vld [vmem:[%s16 + $0x88] sm:$0xf]
    %v6200 = vld [vmem:[%s16 + $0x8c] sm:$0xff]
    %v6201 = vld [vmem:[%s16 + $0x94] sm:$0xff]
    %v6202 = vld [vmem:[%s16 + $0x9c] sm:$0xff]
    %v6203 = vld [vmem:[%s16 + $0xa4] sm:$0xf]
    %v6204 = vld [vmem:[%s16 + $0xa8] sm:$0xff]
    %v6205 = vld [vmem:[%s16 + $0xb0] sm:$0xff]
    %v6206 = vld [vmem:[%s16 + $0xb8] sm:$0xff]
    %v6207 = vld [vmem:[%s16 + $0xc0] sm:$0xf]
    %v6208 = vld [vmem:[%s16 + $0xc4] sm:$0xff]
    %v6209 = vld [vmem:[%s16 + $0xcc] sm:$0xff]
    %v6210 = vld [vmem:[%s16 + $0xd4] sm:$0xff]
    %v6211 = vld [vmem:[%s16 + $0xdc] sm:$0xf]
    %v6212 = vld [vmem:[%s16 + $0xe0] sm:$0xff]
    %v6213 = vld [vmem:[%s16 + $0xe8] sm:$0xff]
    %v6214 = vld [vmem:[%s16 + $0xf0] sm:$0xff]
    %v6215 = vld [vmem:[%s16 + $0xf8] sm:$0xf]
    %v6216 = vld [vmem:[%s16 + $0xfc] sm:$0xff]
    %v6217 = vld [vmem:[%s16 + $0x104] sm:$0xff]
    %v6218 = vld [vmem:[%s16 + $0x10c] sm:$0xff]
    %v6219 = vld [vmem:[%s16 + $0x114] sm:$0xf]
    %v6220 = vld [vmem:[%s16 + $0x118] sm:$0xff]
    %v6221 = vld [vmem:[%s16 + $0x120] sm:$0xff]
    %v6222 = vld [vmem:[%s16 + $0x128] sm:$0xff]
    %v6223 = vld [vmem:[%s16 + $0x130] sm:$0xf]
    %v6224 = vld [vmem:[%s16 + $0x134] sm:$0xff]
    %v6225 = vld [vmem:[%s16 + $0x13c] sm:$0xff]
    %v6226 = vld [vmem:[%s16 + $0x144] sm:$0xff]
    %v6227 = vld [vmem:[%s16 + $0x14c] sm:$0xf]
    %v6228 = vld [vmem:[%s16 + $0x150] sm:$0xff]
    %v6229 = vld [vmem:[%s16 + $0x158] sm:$0xff]
    %v6230 = vld [vmem:[%s16 + $0x160] sm:$0xff]
    %v6231 = vld [vmem:[%s16 + $0x168] sm:$0xf]
    %v6232 = vld [vmem:[%s16 + $0x16c] sm:$0xff]
    %v6233 = vld [vmem:[%s16 + $0x174] sm:$0xff]
    %v6234 = vld [vmem:[%s16 + $0x17c] sm:$0xff]
    %v6235 = vld [vmem:[%s16 + $0x184] sm:$0xf]
    %v6236 = vld [vmem:[%s16 + $0x188] sm:$0xff]
    %v6237 = vld [vmem:[%s16 + $0x190] sm:$0xff]
    %v6238 = vld [vmem:[%s16 + $0x198] sm:$0xff]
    %v6239 = vld [vmem:[%s16 + $0x1a0] sm:$0xf]
    %v6240 = vld [vmem:[%s16 + $0x1a4] sm:$0xff]
    %v6241 = vld [vmem:[%s16 + $0x1ac] sm:$0xff]
    %v6242 = vld [vmem:[%s16 + $0x1b4] sm:$0xff]
    %v6243 = vld [vmem:[%s16 + $0x1bc] sm:$0xf]
    %v6244 = vld [vmem:[%s16 + $0x1c0] sm:$0xff]
    %v6245 = vld [vmem:[%s16 + $0x1c8] sm:$0xff]
    %v6246 = vld [vmem:[%s16 + $0x1d0] sm:$0xff]
    %v6247 = vld [vmem:[%s16 + $0x1d8] sm:$0xf]
    %v6248 = vld [vmem:[%s16 + $0x1dc] sm:$0xff]
    %v6249 = vld [vmem:[%s16 + $0x1e4] sm:$0xff]
    %v6250 = vld [vmem:[%s16 + $0x1ec] sm:$0xff]
    %v6251 = vld [vmem:[%s16 + $0x1f4] sm:$0xf]
    %v6252 = vld [vmem:[%s16 + $0x1f8] sm:$0xff]
    %v6253 = vld [vmem:[%s16 + $0x200] sm:$0xff]
    %v6254 = vld [vmem:[%s16 + $0x208] sm:$0xff]
    %v6255 = vld [vmem:[%s16 + $0x210] sm:$0xf]
    %v6256 = vld [vmem:[%s16 + $0x214] sm:$0xff]
    %v6257 = vld [vmem:[%s16 + $0x21c] sm:$0xff]
    %v6258 = vld [vmem:[%s16 + $0x224] sm:$0xff]
    %v6259 = vld [vmem:[%s16 + $0x22c] sm:$0xf]
    %v6260 = vld [vmem:[%s16 + $0x230] sm:$0xff]
    %v6261 = vld [vmem:[%s16 + $0x238] sm:$0xff]
    %v6262 = vld [vmem:[%s16 + $0x240] sm:$0xff]
    %v6263 = vld [vmem:[%s16 + $0x248] sm:$0xf]
    %v6264 = vld [vmem:[%s16 + $0x24c] sm:$0xff]
    %v6265 = vld [vmem:[%s16 + $0x254] sm:$0xff]
    %v6266 = vld [vmem:[%s16 + $0x25c] sm:$0xff]
    %v6267 = vld [vmem:[%s16 + $0x264] sm:$0xf]
    %v6268 = vld [vmem:[%s16 + $0x268] sm:$0xff]
    %v6269 = vld [vmem:[%s16 + $0x270] sm:$0xff]
    %v6270 = vld [vmem:[%s16 + $0x278] sm:$0xff]
    %v6271 = vld [vmem:[%s16 + $0x280] sm:$0xf]
    %v6272 = vld [vmem:[%s16 + $0x284] sm:$0xff]
    %v6273 = vld [vmem:[%s16 + $0x28c] sm:$0xff]
    %v6274 = vld [vmem:[%s16 + $0x294] sm:$0xff]
    %v6275 = vld [vmem:[%s16 + $0x29c] sm:$0xf]
    %v6276 = vld [vmem:[%s16 + $0x2a0] sm:$0xff]
    %v6277 = vld [vmem:[%s16 + $0x2a8] sm:$0xff]
    %v6278 = vld [vmem:[%s16 + $0x2b0] sm:$0xff]
    %v6279 = vld [vmem:[%s16 + $0x2b8] sm:$0xf]
    %v6280 = vld [vmem:[%s16 + $0x2bc] sm:$0xff]
    %v6281 = vld [vmem:[%s16 + $0x2c4] sm:$0xff]
    %v6282 = vld [vmem:[%s16 + $0x2cc] sm:$0xff]
    %v6283 = vld [vmem:[%s16 + $0x2d4] sm:$0xf]
    %v6284 = vld [vmem:[%s16 + $0x2d8] sm:$0xff]
    %v6285 = vld [vmem:[%s16 + $0x2e0] sm:$0xff]
    %v6286 = vld [vmem:[%s16 + $0x2e8] sm:$0xff]
    %v6287 = vld [vmem:[%s16 + $0x2f0] sm:$0xf]
    %v6288 = vld [vmem:[%s16 + $0x2f4] sm:$0xff]
    %v6289 = vld [vmem:[%s16 + $0x2fc] sm:$0xff]
    %v6290 = vld [vmem:[%s16 + $0x304] sm:$0xff]
    %v6291 = vld [vmem:[%s16 + $0x30c] sm:$0xf]
    %v6292 = vld [vmem:[%s16 + $0x310] sm:$0xff]
    %v6293 = vld [vmem:[%s16 + $0x318] sm:$0xff]
    %v6294 = vld [vmem:[%s16 + $0x320] sm:$0xff]
    %v6295 = vld [vmem:[%s16 + $0x328] sm:$0xf]
    %v6296 = vld [vmem:[%s16 + $0x32c] sm:$0xff]
    %v6297 = vld [vmem:[%s16 + $0x334] sm:$0xff]
    %v6298 = vld [vmem:[%s16 + $0x33c] sm:$0xff]
    %v6299 = vld [vmem:[%s16 + $0x344] sm:$0xf]
    %v6300 = vld [vmem:[%s16 + $0x348] sm:$0xff]
    %v6301 = vld [vmem:[%s16 + $0x350] sm:$0xff]
    %v6302 = vld [vmem:[%s16 + $0x358] sm:$0xff]
    %v6303 = vld [vmem:[%s16 + $0x360] sm:$0xf]
    %v6304 = vld [vmem:[%s16 + $0x364] sm:$0xff]
    %v6305 = vld [vmem:[%s16 + $0x36c] sm:$0xff]
    %v6306 = vld [vmem:[%s16 + $0x374] sm:$0xff]
    %v6307 = vld [vmem:[%s16 + $0x37c] sm:$0xf]
    %v6308 = vld [vmem:[%s16 + $0x380] sm:$0xff]
    %v6309 = vld [vmem:[%s16 + $0x388] sm:$0xff]
    %v6310 = vld [vmem:[%s16 + $0x390] sm:$0xff]
    %v6311 = vld [vmem:[%s16 + $0x398] sm:$0xf]
    %v6312 = vld [vmem:[%s16 + $0x39c] sm:$0xff]
    %v6313 = vld [vmem:[%s16 + $0x3a4] sm:$0xff]
    %v6314 = vld [vmem:[%s16 + $0x3ac] sm:$0xff]
    %v6315 = vld [vmem:[%s16 + $0x3b4] sm:$0xf]
    %v6316 = vld [vmem:[%s16 + $0x3b8] sm:$0xff]
    %v6317 = vld [vmem:[%s16 + $0x3c0] sm:$0xff]
    %v6318 = vld [vmem:[%s16 + $0x3c8] sm:$0xff]
    %v6319 = vld [vmem:[%s16 + $0x3d0] sm:$0xf]
    %v6320 = vld [vmem:[%s16 + $0x3d4] sm:$0xff]
    %v6321 = vld [vmem:[%s16 + $0x3dc] sm:$0xff]
    %v6322 = vld [vmem:[%s16 + $0x3e4] sm:$0xff]
    %v6323 = vld [vmem:[%s16 + $0x3ec] sm:$0xf]
    %v6324 = vld [vmem:[%s16 + $0x3f0] sm:$0xff]
    %v6325 = vld [vmem:[%s16 + $0x3f8] sm:$0xff]
    %v6326 = vld [vmem:[%s16 + $0x400] sm:$0xff]
    %v6327 = vld [vmem:[%s16 + $0x408] sm:$0xf]
    %v6328 = vld [vmem:[%s16 + $0x40c] sm:$0xff]
    %v6329 = vld [vmem:[%s16 + $0x414] sm:$0xff]
    %v6330 = vld [vmem:[%s16 + $0x41c] sm:$0xff]
    %v6331 = vld [vmem:[%s16 + $0x424] sm:$0xf]
    %v6332 = vld [vmem:[%s16 + $0x428] sm:$0xff]
    %v6333 = vld [vmem:[%s16 + $0x430] sm:$0xff]
    %v6334 = vld [vmem:[%s16 + $0x438] sm:$0xff]
    %v6335 = vld [vmem:[%s16 + $0x440] sm:$0xf]
    %v6336 = vld [vmem:[%s16 + $0x444] sm:$0xff]
    %v6337 = vld [vmem:[%s16 + $0x44c] sm:$0xff]
    %v6338 = vld [vmem:[%s16 + $0x454] sm:$0xff]
    %v6339 = vld [vmem:[%s16 + $0x45c] sm:$0xf]
    %v6340 = vld [vmem:[%s16 + $0x460] sm:$0xff]
    %v6341 = vld [vmem:[%s16 + $0x468] sm:$0xff]
    %v6342 = vld [vmem:[%s16 + $0x470] sm:$0xff]
    %v6343 = vld [vmem:[%s16 + $0x478] sm:$0xf]
    %v6344 = vld [vmem:[%s16 + $0x47c] sm:$0xff]
    %v6345 = vld [vmem:[%s16 + $0x484] sm:$0xff]
    %v6346 = vld [vmem:[%s16 + $0x48c] sm:$0xff]
    %v6347 = vld [vmem:[%s16 + $0x494] sm:$0xf]
    %v6348 = vld [vmem:[%s16 + $0x498] sm:$0xff]
    %v6349 = vld [vmem:[%s16 + $0x4a0] sm:$0xff]
    %v6350 = vld [vmem:[%s16 + $0x4a8] sm:$0xff]
    %v6351 = vld [vmem:[%s16 + $0x4b0] sm:$0xf]
    %v6352 = vld [vmem:[%s16 + $0x4b4] sm:$0xff]
    %v6353 = vld [vmem:[%s16 + $0x4bc] sm:$0xff]
    %v6354 = vld [vmem:[%s16 + $0x4c4] sm:$0xff]
    %v6355 = vld [vmem:[%s16 + $0x4cc] sm:$0xf]
    %v6356 = vld [vmem:[%s16 + $0x4d0] sm:$0xff]
    %v6357 = vld [vmem:[%s16 + $0x4d8] sm:$0xff]
    %v6358 = vld [vmem:[%s16 + $0x4e0] sm:$0xff]
    %v6359 = vld [vmem:[%s16 + $0x4e8] sm:$0xf]
    %v6360 = vld [vmem:[%s16 + $0x4ec] sm:$0xff]
    %v6361 = vld [vmem:[%s16 + $0x4f4] sm:$0xff]
    %v6362 = vld [vmem:[%s16 + $0x4fc] sm:$0xff]
    %v6363 = vld [vmem:[%s16 + $0x504] sm:$0xf]
    %v6364 = vld [vmem:[%s16 + $0x508] sm:$0xff]
    %v6365 = vld [vmem:[%s16 + $0x510] sm:$0xff]
    %v6366 = vld [vmem:[%s16 + $0x518] sm:$0xff]
    %v6367 = vld [vmem:[%s16 + $0x520] sm:$0xf]
    %v6368 = vld [vmem:[%s16 + $0x524] sm:$0xff]
    %v6369 = vld [vmem:[%s16 + $0x52c] sm:$0xff]
    %v6370 = vld [vmem:[%s16 + $0x534] sm:$0xff]
    %v6371 = vld [vmem:[%s16 + $0x53c] sm:$0xf]
    %v6372 = vld [vmem:[%s16 + $0x540] sm:$0xff]
    %v6373 = vld [vmem:[%s16 + $0x548] sm:$0xff]
    %v6374 = vld [vmem:[%s16 + $0x550] sm:$0xff]
    %v6375 = vld [vmem:[%s16 + $0x558] sm:$0xf]
    %v6376 = vld [vmem:[%s16 + $0x55c] sm:$0xff]
    %v6377 = vld [vmem:[%s16 + $0x564] sm:$0xff]
    %v6378 = vld [vmem:[%s16 + $0x56c] sm:$0xff]
    %v6379 = vld [vmem:[%s16 + $0x574] sm:$0xf]
    %v6380 = vld [vmem:[%s16 + $0x578] sm:$0xff]
    %v6381 = vld [vmem:[%s16 + $0x580] sm:$0xff]
    %v6382 = vld [vmem:[%s16 + $0x588] sm:$0xff]
    %v6383 = vld [vmem:[%s16 + $0x590] sm:$0xf]
    %v6384 = vld [vmem:[%s16 + $0x594] sm:$0xff]
    %v6385 = vld [vmem:[%s16 + $0x59c] sm:$0xff]
    %v6386 = vld [vmem:[%s16 + $0x5a4] sm:$0xff]
    %v6387 = vld [vmem:[%s16 + $0x5ac] sm:$0xf]
    %v6388 = vld [vmem:[%s16 + $0x5b0] sm:$0xff]
    %v6389 = vld [vmem:[%s16 + $0x5b8] sm:$0xff]
    %v6390 = vld [vmem:[%s16 + $0x5c0] sm:$0xff]
    %v6391 = vld [vmem:[%s16 + $0x5c8] sm:$0xf]
    %v6392 = vld [vmem:[%s16 + $0x5cc] sm:$0xff]
    %v6393 = vld [vmem:[%s16 + $0x5d4] sm:$0xff]
    %v6394 = vld [vmem:[%s16 + $0x5dc] sm:$0xff]
    %v6395 = vld [vmem:[%s16 + $0x5e4] sm:$0xf]
    %v6396 = vld [vmem:[%s16 + $0x5e8] sm:$0xff]
    %v6397 = vld [vmem:[%s16 + $0x5f0] sm:$0xff]
    %v6398 = vld [vmem:[%s16 + $0x5f8] sm:$0xff]
    %v6399 = vld [vmem:[%s16 + $0x600] sm:$0xf]
    %v6400 = vld [vmem:[%s16 + $0x604] sm:$0xff]
    %v6401 = vld [vmem:[%s16 + $0x60c] sm:$0xff]
    %v6402 = vld [vmem:[%s16 + $0x614] sm:$0xff]
    %v6403 = vld [vmem:[%s16 + $0x61c] sm:$0xf]
    %v6404 = vld [vmem:[%s16 + $0x620] sm:$0xff]
    %v6405 = vld [vmem:[%s16 + $0x628] sm:$0xff]
    %v6406 = vld [vmem:[%s16 + $0x630] sm:$0xff]
    %v6407 = vld [vmem:[%s16 + $0x638] sm:$0xf]
    %v6408 = vld [vmem:[%s16 + $0x63c] sm:$0xff]
    %v6409 = vld [vmem:[%s16 + $0x644] sm:$0xff]
    %v6410 = vld [vmem:[%s16 + $0x64c] sm:$0xff]
    %v6411 = vld [vmem:[%s16 + $0x654] sm:$0xf]
    %v6412 = vld [vmem:[%s16 + $0x658] sm:$0xff]
    %v6413 = vld [vmem:[%s16 + $0x660] sm:$0xff]
    %v6414 = vld [vmem:[%s16 + $0x668] sm:$0xff]
    %v6415 = vld [vmem:[%s16 + $0x670] sm:$0xf]
    %v6416 = vld [vmem:[%s16 + $0x674] sm:$0xff]
    %v6417 = vld [vmem:[%s16 + $0x67c] sm:$0xff]
    %v6418 = vld [vmem:[%s16 + $0x684] sm:$0xff]
    %v6419 = vld [vmem:[%s16 + $0x68c] sm:$0xf]
    %v6420 = vld [vmem:[%s16 + $0x690] sm:$0xff]
    %v6421 = vld [vmem:[%s16 + $0x698] sm:$0xff]
    %v6422 = vld [vmem:[%s16 + $0x6a0] sm:$0xff]
    %v6423 = vld [vmem:[%s16 + $0x6a8] sm:$0xf]
    %v6424 = vld [vmem:[%s16 + $0x6ac] sm:$0xff]
    %v6425 = vld [vmem:[%s16 + $0x6b4] sm:$0xff]
    %v6426 = vld [vmem:[%s16 + $0x6bc] sm:$0xff]
    %v6427 = vld [vmem:[%s16 + $0x6c4] sm:$0xf]
    %v6428 = vld [vmem:[%s16 + $0x6c8] sm:$0xff]
    %v6429 = vld [vmem:[%s16 + $0x6d0] sm:$0xff]
    %v6430 = vld [vmem:[%s16 + $0x6d8] sm:$0xff]
    %v6431 = vld [vmem:[%s16 + $0x6e0] sm:$0xf]
    %v6432 = vld [vmem:[%s16 + $0x6e4] sm:$0xff]
    %v6433 = vld [vmem:[%s16 + $0x6ec] sm:$0xff]
    %v6434 = vld [vmem:[%s16 + $0x6f4] sm:$0xff]
    %v6435 = vld [vmem:[%s16 + $0x6fc] sm:$0xf]
    %v6436 = vld [vmem:[%s17] sm:$0x7f]
    %v6438 = vlaneseq
    %v6439 = vshrl.u32 %v6438, 7
    %v6440 = vsub.s32 0, %v6439
    %v6441 = vrot.slane %v6436, %v6440
    %v6442 = vlaneseq
    %v6443 = vshrl.u32 %v6442, 7
    %v6444 = vsub.s32 1, %v6443
    %v6445 = vrot.slane %v6436, %v6444
    %v6446 = vlaneseq
    %v6447 = vshrl.u32 %v6446, 7
    %v6448 = vsub.s32 2, %v6447
    %v6449 = vrot.slane %v6436, %v6448
    %v6450 = vlaneseq
    %v6451 = vshrl.u32 %v6450, 7
    %v6452 = vsub.s32 3, %v6451
    %v6453 = vrot.slane %v6436, %v6452
    %v6454 = vlaneseq
    %v6455 = vshrl.u32 %v6454, 7
    %v6456 = vsub.s32 4, %v6455
    %v6457 = vrot.slane %v6436, %v6456
    %v6458 = vlaneseq
    %v6459 = vshrl.u32 %v6458, 7
    %v6460 = vsub.s32 5, %v6459
    %v6461 = vrot.slane %v6436, %v6460
    %v6462 = vlaneseq
    %v6463 = vshrl.u32 %v6462, 7
    %v6464 = vsub.s32 6, %v6463
    %v6465 = vrot.slane %v6436, %v6464
    %v6729 = vunpack.c.l.b16 %v6180
    %v6730 = vunpack.c.h.b16 %v6180
    %v6731 = vunpack.c.l.b16 %v6181
    %v6732 = vunpack.c.h.b16 %v6181
    %v6733 = vunpack.c.l.b16 %v6182
    %v6734 = vunpack.c.h.b16 %v6182
    %v6735 = vunpack.c.l.b16 %v6183
    %v6736 = vunpack.c.l.b16 %v6184
    %v6737 = vunpack.c.h.b16 %v6184
    %v6738 = vunpack.c.l.b16 %v6185
    %v6739 = vunpack.c.h.b16 %v6185
    %v6740 = vunpack.c.l.b16 %v6186
    %v6741 = vunpack.c.h.b16 %v6186
    %v6742 = vunpack.c.l.b16 %v6187
    %v6743 = vunpack.c.l.b16 %v6188
    %v6744 = vunpack.c.h.b16 %v6188
    %v6745 = vunpack.c.l.b16 %v6189
    %v6746 = vunpack.c.h.b16 %v6189
    %v6747 = vunpack.c.l.b16 %v6190
    %v6748 = vunpack.c.h.b16 %v6190
    %v6749 = vunpack.c.l.b16 %v6191
    %v6750 = vunpack.c.l.b16 %v6192
    %v6751 = vunpack.c.h.b16 %v6192
    %v6752 = vunpack.c.l.b16 %v6193
    %v6753 = vunpack.c.h.b16 %v6193
    %v6754 = vunpack.c.l.b16 %v6194
    %v6755 = vunpack.c.h.b16 %v6194
    %v6756 = vunpack.c.l.b16 %v6195
    %v6757 = vunpack.c.l.b16 %v6196
    %v6758 = vunpack.c.h.b16 %v6196
    %v6759 = vunpack.c.l.b16 %v6197
    %v6760 = vunpack.c.h.b16 %v6197
    %v6761 = vunpack.c.l.b16 %v6198
    %v6762 = vunpack.c.h.b16 %v6198
    %v6763 = vunpack.c.l.b16 %v6199
    %v6764 = vunpack.c.l.b16 %v6200
    %v6765 = vunpack.c.h.b16 %v6200
    %v6766 = vunpack.c.l.b16 %v6201
    %v6767 = vunpack.c.h.b16 %v6201
    %v6768 = vunpack.c.l.b16 %v6202
    %v6769 = vunpack.c.h.b16 %v6202
    %v6770 = vunpack.c.l.b16 %v6203
    %v6771 = vunpack.c.l.b16 %v6204
    %v6772 = vunpack.c.h.b16 %v6204
    %v6773 = vunpack.c.l.b16 %v6205
    %v6774 = vunpack.c.h.b16 %v6205
    %v6775 = vunpack.c.l.b16 %v6206
    %v6776 = vunpack.c.h.b16 %v6206
    %v6777 = vunpack.c.l.b16 %v6207
    %v6778 = vunpack.c.l.b16 %v6208
    %v6779 = vunpack.c.h.b16 %v6208
    %v6780 = vunpack.c.l.b16 %v6209
    %v6781 = vunpack.c.h.b16 %v6209
    %v6782 = vunpack.c.l.b16 %v6210
    %v6783 = vunpack.c.h.b16 %v6210
    %v6784 = vunpack.c.l.b16 %v6211
    %v6785 = vunpack.c.l.b16 %v6212
    %v6786 = vunpack.c.h.b16 %v6212
    %v6787 = vunpack.c.l.b16 %v6213
    %v6788 = vunpack.c.h.b16 %v6213
    %v6789 = vunpack.c.l.b16 %v6214
    %v6790 = vunpack.c.h.b16 %v6214
    %v6791 = vunpack.c.l.b16 %v6215
    %v6792 = vunpack.c.l.b16 %v6216
    %v6793 = vunpack.c.h.b16 %v6216
    %v6794 = vunpack.c.l.b16 %v6217
    %v6795 = vunpack.c.h.b16 %v6217
    %v6796 = vunpack.c.l.b16 %v6218
    %v6797 = vunpack.c.h.b16 %v6218
    %v6798 = vunpack.c.l.b16 %v6219
    %v6799 = vunpack.c.l.b16 %v6220
    %v6800 = vunpack.c.h.b16 %v6220
    %v6801 = vunpack.c.l.b16 %v6221
    %v6802 = vunpack.c.h.b16 %v6221
    %v6803 = vunpack.c.l.b16 %v6222
    %v6804 = vunpack.c.h.b16 %v6222
    %v6805 = vunpack.c.l.b16 %v6223
    %v6806 = vunpack.c.l.b16 %v6224
    %v6807 = vunpack.c.h.b16 %v6224
    %v6808 = vunpack.c.l.b16 %v6225
    %v6809 = vunpack.c.h.b16 %v6225
    %v6810 = vunpack.c.l.b16 %v6226
    %v6811 = vunpack.c.h.b16 %v6226
    %v6812 = vunpack.c.l.b16 %v6227
    %v6813 = vunpack.c.l.b16 %v6228
    %v6814 = vunpack.c.h.b16 %v6228
    %v6815 = vunpack.c.l.b16 %v6229
    %v6816 = vunpack.c.h.b16 %v6229
    %v6817 = vunpack.c.l.b16 %v6230
    %v6818 = vunpack.c.h.b16 %v6230
    %v6819 = vunpack.c.l.b16 %v6231
    %v6820 = vunpack.c.l.b16 %v6232
    %v6821 = vunpack.c.h.b16 %v6232
    %v6822 = vunpack.c.l.b16 %v6233
    %v6823 = vunpack.c.h.b16 %v6233
    %v6824 = vunpack.c.l.b16 %v6234
    %v6825 = vunpack.c.h.b16 %v6234
    %v6826 = vunpack.c.l.b16 %v6235
    %v6827 = vunpack.c.l.b16 %v6236
    %v6828 = vunpack.c.h.b16 %v6236
    %v6829 = vunpack.c.l.b16 %v6237
    %v6830 = vunpack.c.h.b16 %v6237
    %v6831 = vunpack.c.l.b16 %v6238
    %v6832 = vunpack.c.h.b16 %v6238
    %v6833 = vunpack.c.l.b16 %v6239
    %v6834 = vunpack.c.l.b16 %v6240
    %v6835 = vunpack.c.h.b16 %v6240
    %v6836 = vunpack.c.l.b16 %v6241
    %v6837 = vunpack.c.h.b16 %v6241
    %v6838 = vunpack.c.l.b16 %v6242
    %v6839 = vunpack.c.h.b16 %v6242
    %v6840 = vunpack.c.l.b16 %v6243
    %v6841 = vunpack.c.l.b16 %v6244
    %v6842 = vunpack.c.h.b16 %v6244
    %v6843 = vunpack.c.l.b16 %v6245
    %v6844 = vunpack.c.h.b16 %v6245
    %v6845 = vunpack.c.l.b16 %v6246
    %v6846 = vunpack.c.h.b16 %v6246
    %v6847 = vunpack.c.l.b16 %v6247
    %v6848 = vunpack.c.l.b16 %v6248
    %v6849 = vunpack.c.h.b16 %v6248
    %v6850 = vunpack.c.l.b16 %v6249
    %v6851 = vunpack.c.h.b16 %v6249
    %v6852 = vunpack.c.l.b16 %v6250
    %v6853 = vunpack.c.h.b16 %v6250
    %v6854 = vunpack.c.l.b16 %v6251
    %v6855 = vunpack.c.l.b16 %v6252
    %v6856 = vunpack.c.h.b16 %v6252
    %v6857 = vunpack.c.l.b16 %v6253
    %v6858 = vunpack.c.h.b16 %v6253
    %v6859 = vunpack.c.l.b16 %v6254
    %v6860 = vunpack.c.h.b16 %v6254
    %v6861 = vunpack.c.l.b16 %v6255
    %v6862 = vunpack.c.l.b16 %v6256
    %v6863 = vunpack.c.h.b16 %v6256
    %v6864 = vunpack.c.l.b16 %v6257
    %v6865 = vunpack.c.h.b16 %v6257
    %v6866 = vunpack.c.l.b16 %v6258
    %v6867 = vunpack.c.h.b16 %v6258
    %v6868 = vunpack.c.l.b16 %v6259
    %v6869 = vunpack.c.l.b16 %v6260
    %v6870 = vunpack.c.h.b16 %v6260
    %v6871 = vunpack.c.l.b16 %v6261
    %v6872 = vunpack.c.h.b16 %v6261
    %v6873 = vunpack.c.l.b16 %v6262
    %v6874 = vunpack.c.h.b16 %v6262
    %v6875 = vunpack.c.l.b16 %v6263
    %v6876 = vunpack.c.l.b16 %v6264
    %v6877 = vunpack.c.h.b16 %v6264
    %v6878 = vunpack.c.l.b16 %v6265
    %v6879 = vunpack.c.h.b16 %v6265
    %v6880 = vunpack.c.l.b16 %v6266
    %v6881 = vunpack.c.h.b16 %v6266
    %v6882 = vunpack.c.l.b16 %v6267
    %v6883 = vunpack.c.l.b16 %v6268
    %v6884 = vunpack.c.h.b16 %v6268
    %v6885 = vunpack.c.l.b16 %v6269
    %v6886 = vunpack.c.h.b16 %v6269
    %v6887 = vunpack.c.l.b16 %v6270
    %v6888 = vunpack.c.h.b16 %v6270
    %v6889 = vunpack.c.l.b16 %v6271
    %v6890 = vunpack.c.l.b16 %v6272
    %v6891 = vunpack.c.h.b16 %v6272
    %v6892 = vunpack.c.l.b16 %v6273
    %v6893 = vunpack.c.h.b16 %v6273
    %v6894 = vunpack.c.l.b16 %v6274
    %v6895 = vunpack.c.h.b16 %v6274
    %v6896 = vunpack.c.l.b16 %v6275
    %v6897 = vunpack.c.l.b16 %v6276
    %v6898 = vunpack.c.h.b16 %v6276
    %v6899 = vunpack.c.l.b16 %v6277
    %v6900 = vunpack.c.h.b16 %v6277
    %v6901 = vunpack.c.l.b16 %v6278
    %v6902 = vunpack.c.h.b16 %v6278
    %v6903 = vunpack.c.l.b16 %v6279
    %v6904 = vunpack.c.l.b16 %v6280
    %v6905 = vunpack.c.h.b16 %v6280
    %v6906 = vunpack.c.l.b16 %v6281
    %v6907 = vunpack.c.h.b16 %v6281
    %v6908 = vunpack.c.l.b16 %v6282
    %v6909 = vunpack.c.h.b16 %v6282
    %v6910 = vunpack.c.l.b16 %v6283
    %v6911 = vunpack.c.l.b16 %v6284
    %v6912 = vunpack.c.h.b16 %v6284
    %v6913 = vunpack.c.l.b16 %v6285
    %v6914 = vunpack.c.h.b16 %v6285
    %v6915 = vunpack.c.l.b16 %v6286
    %v6916 = vunpack.c.h.b16 %v6286
    %v6917 = vunpack.c.l.b16 %v6287
    %v6918 = vunpack.c.l.b16 %v6288
    %v6919 = vunpack.c.h.b16 %v6288
    %v6920 = vunpack.c.l.b16 %v6289
    %v6921 = vunpack.c.h.b16 %v6289
    %v6922 = vunpack.c.l.b16 %v6290
    %v6923 = vunpack.c.h.b16 %v6290
    %v6924 = vunpack.c.l.b16 %v6291
    %v6925 = vunpack.c.l.b16 %v6292
    %v6926 = vunpack.c.h.b16 %v6292
    %v6927 = vunpack.c.l.b16 %v6293
    %v6928 = vunpack.c.h.b16 %v6293
    %v6929 = vunpack.c.l.b16 %v6294
    %v6930 = vunpack.c.h.b16 %v6294
    %v6931 = vunpack.c.l.b16 %v6295
    %v6932 = vunpack.c.l.b16 %v6296
    %v6933 = vunpack.c.h.b16 %v6296
    %v6934 = vunpack.c.l.b16 %v6297
    %v6935 = vunpack.c.h.b16 %v6297
    %v6936 = vunpack.c.l.b16 %v6298
    %v6937 = vunpack.c.h.b16 %v6298
    %v6938 = vunpack.c.l.b16 %v6299
    %v6939 = vunpack.c.l.b16 %v6300
    %v6940 = vunpack.c.h.b16 %v6300
    %v6941 = vunpack.c.l.b16 %v6301
    %v6942 = vunpack.c.h.b16 %v6301
    %v6943 = vunpack.c.l.b16 %v6302
    %v6944 = vunpack.c.h.b16 %v6302
    %v6945 = vunpack.c.l.b16 %v6303
    %v6946 = vunpack.c.l.b16 %v6304
    %v6947 = vunpack.c.h.b16 %v6304
    %v6948 = vunpack.c.l.b16 %v6305
    %v6949 = vunpack.c.h.b16 %v6305
    %v6950 = vunpack.c.l.b16 %v6306
    %v6951 = vunpack.c.h.b16 %v6306
    %v6952 = vunpack.c.l.b16 %v6307
    %v6953 = vunpack.c.l.b16 %v6308
    %v6954 = vunpack.c.h.b16 %v6308
    %v6955 = vunpack.c.l.b16 %v6309
    %v6956 = vunpack.c.h.b16 %v6309
    %v6957 = vunpack.c.l.b16 %v6310
    %v6958 = vunpack.c.h.b16 %v6310
    %v6959 = vunpack.c.l.b16 %v6311
    %v6960 = vunpack.c.l.b16 %v6312
    %v6961 = vunpack.c.h.b16 %v6312
    %v6962 = vunpack.c.l.b16 %v6313
    %v6963 = vunpack.c.h.b16 %v6313
    %v6964 = vunpack.c.l.b16 %v6314
    %v6965 = vunpack.c.h.b16 %v6314
    %v6966 = vunpack.c.l.b16 %v6315
    %v6967 = vunpack.c.l.b16 %v6316
    %v6968 = vunpack.c.h.b16 %v6316
    %v6969 = vunpack.c.l.b16 %v6317
    %v6970 = vunpack.c.h.b16 %v6317
    %v6971 = vunpack.c.l.b16 %v6318
    %v6972 = vunpack.c.h.b16 %v6318
    %v6973 = vunpack.c.l.b16 %v6319
    %v6974 = vunpack.c.l.b16 %v6320
    %v6975 = vunpack.c.h.b16 %v6320
    %v6976 = vunpack.c.l.b16 %v6321
    %v6977 = vunpack.c.h.b16 %v6321
    %v6978 = vunpack.c.l.b16 %v6322
    %v6979 = vunpack.c.h.b16 %v6322
    %v6980 = vunpack.c.l.b16 %v6323
    %v6981 = vunpack.c.l.b16 %v6324
    %v6982 = vunpack.c.h.b16 %v6324
    %v6983 = vunpack.c.l.b16 %v6325
    %v6984 = vunpack.c.h.b16 %v6325
    %v6985 = vunpack.c.l.b16 %v6326
    %v6986 = vunpack.c.h.b16 %v6326
    %v6987 = vunpack.c.l.b16 %v6327
    %v6988 = vunpack.c.l.b16 %v6328
    %v6989 = vunpack.c.h.b16 %v6328
    %v6990 = vunpack.c.l.b16 %v6329
    %v6991 = vunpack.c.h.b16 %v6329
    %v6992 = vunpack.c.l.b16 %v6330
    %v6993 = vunpack.c.h.b16 %v6330
    %v6994 = vunpack.c.l.b16 %v6331
    %v6995 = vunpack.c.l.b16 %v6332
    %v6996 = vunpack.c.h.b16 %v6332
    %v6997 = vunpack.c.l.b16 %v6333
    %v6998 = vunpack.c.h.b16 %v6333
    %v6999 = vunpack.c.l.b16 %v6334
    %v7000 = vunpack.c.h.b16 %v6334
    %v7001 = vunpack.c.l.b16 %v6335
    %v7002 = vunpack.c.l.b16 %v6336
    %v7003 = vunpack.c.h.b16 %v6336
    %v7004 = vunpack.c.l.b16 %v6337
    %v7005 = vunpack.c.h.b16 %v6337
    %v7006 = vunpack.c.l.b16 %v6338
    %v7007 = vunpack.c.h.b16 %v6338
    %v7008 = vunpack.c.l.b16 %v6339
    %v7009 = vunpack.c.l.b16 %v6340
    %v7010 = vunpack.c.h.b16 %v6340
    %v7011 = vunpack.c.l.b16 %v6341
    %v7012 = vunpack.c.h.b16 %v6341
    %v7013 = vunpack.c.l.b16 %v6342
    %v7014 = vunpack.c.h.b16 %v6342
    %v7015 = vunpack.c.l.b16 %v6343
    %v7016 = vunpack.c.l.b16 %v6344
    %v7017 = vunpack.c.h.b16 %v6344
    %v7018 = vunpack.c.l.b16 %v6345
    %v7019 = vunpack.c.h.b16 %v6345
    %v7020 = vunpack.c.l.b16 %v6346
    %v7021 = vunpack.c.h.b16 %v6346
    %v7022 = vunpack.c.l.b16 %v6347
    %v7023 = vunpack.c.l.b16 %v6348
    %v7024 = vunpack.c.h.b16 %v6348
    %v7025 = vunpack.c.l.b16 %v6349
    %v7026 = vunpack.c.h.b16 %v6349
    %v7027 = vunpack.c.l.b16 %v6350
    %v7028 = vunpack.c.h.b16 %v6350
    %v7029 = vunpack.c.l.b16 %v6351
    %v7030 = vunpack.c.l.b16 %v6352
    %v7031 = vunpack.c.h.b16 %v6352
    %v7032 = vunpack.c.l.b16 %v6353
    %v7033 = vunpack.c.h.b16 %v6353
    %v7034 = vunpack.c.l.b16 %v6354
    %v7035 = vunpack.c.h.b16 %v6354
    %v7036 = vunpack.c.l.b16 %v6355
    %v7037 = vunpack.c.l.b16 %v6356
    %v7038 = vunpack.c.h.b16 %v6356
    %v7039 = vunpack.c.l.b16 %v6357
    %v7040 = vunpack.c.h.b16 %v6357
    %v7041 = vunpack.c.l.b16 %v6358
    %v7042 = vunpack.c.h.b16 %v6358
    %v7043 = vunpack.c.l.b16 %v6359
    %v7044 = vunpack.c.l.b16 %v6360
    %v7045 = vunpack.c.h.b16 %v6360
    %v7046 = vunpack.c.l.b16 %v6361
    %v7047 = vunpack.c.h.b16 %v6361
    %v7048 = vunpack.c.l.b16 %v6362
    %v7049 = vunpack.c.h.b16 %v6362
    %v7050 = vunpack.c.l.b16 %v6363
    %v7051 = vunpack.c.l.b16 %v6364
    %v7052 = vunpack.c.h.b16 %v6364
    %v7053 = vunpack.c.l.b16 %v6365
    %v7054 = vunpack.c.h.b16 %v6365
    %v7055 = vunpack.c.l.b16 %v6366
    %v7056 = vunpack.c.h.b16 %v6366
    %v7057 = vunpack.c.l.b16 %v6367
    %v7058 = vunpack.c.l.b16 %v6368
    %v7059 = vunpack.c.h.b16 %v6368
    %v7060 = vunpack.c.l.b16 %v6369
    %v7061 = vunpack.c.h.b16 %v6369
    %v7062 = vunpack.c.l.b16 %v6370
    %v7063 = vunpack.c.h.b16 %v6370
    %v7064 = vunpack.c.l.b16 %v6371
    %v7065 = vunpack.c.l.b16 %v6372
    %v7066 = vunpack.c.h.b16 %v6372
    %v7067 = vunpack.c.l.b16 %v6373
    %v7068 = vunpack.c.h.b16 %v6373
    %v7069 = vunpack.c.l.b16 %v6374
    %v7070 = vunpack.c.h.b16 %v6374
    %v7071 = vunpack.c.l.b16 %v6375
    %v7072 = vunpack.c.l.b16 %v6376
    %v7073 = vunpack.c.h.b16 %v6376
    %v7074 = vunpack.c.l.b16 %v6377
    %v7075 = vunpack.c.h.b16 %v6377
    %v7076 = vunpack.c.l.b16 %v6378
    %v7077 = vunpack.c.h.b16 %v6378
    %v7078 = vunpack.c.l.b16 %v6379
    %v7079 = vunpack.c.l.b16 %v6380
    %v7080 = vunpack.c.h.b16 %v6380
    %v7081 = vunpack.c.l.b16 %v6381
    %v7082 = vunpack.c.h.b16 %v6381
    %v7083 = vunpack.c.l.b16 %v6382
    %v7084 = vunpack.c.h.b16 %v6382
    %v7085 = vunpack.c.l.b16 %v6383
    %v7086 = vunpack.c.l.b16 %v6384
    %v7087 = vunpack.c.h.b16 %v6384
    %v7088 = vunpack.c.l.b16 %v6385
    %v7089 = vunpack.c.h.b16 %v6385
    %v7090 = vunpack.c.l.b16 %v6386
    %v7091 = vunpack.c.h.b16 %v6386
    %v7092 = vunpack.c.l.b16 %v6387
    %v7093 = vunpack.c.l.b16 %v6388
    %v7094 = vunpack.c.h.b16 %v6388
    %v7095 = vunpack.c.l.b16 %v6389
    %v7096 = vunpack.c.h.b16 %v6389
    %v7097 = vunpack.c.l.b16 %v6390
    %v7098 = vunpack.c.h.b16 %v6390
    %v7099 = vunpack.c.l.b16 %v6391
    %v7100 = vunpack.c.l.b16 %v6392
    %v7101 = vunpack.c.h.b16 %v6392
    %v7102 = vunpack.c.l.b16 %v6393
    %v7103 = vunpack.c.h.b16 %v6393
    %v7104 = vunpack.c.l.b16 %v6394
    %v7105 = vunpack.c.h.b16 %v6394
    %v7106 = vunpack.c.l.b16 %v6395
    %v7107 = vunpack.c.l.b16 %v6396
    %v7108 = vunpack.c.h.b16 %v6396
    %v7109 = vunpack.c.l.b16 %v6397
    %v7110 = vunpack.c.h.b16 %v6397
    %v7111 = vunpack.c.l.b16 %v6398
    %v7112 = vunpack.c.h.b16 %v6398
    %v7113 = vunpack.c.l.b16 %v6399
    %v7114 = vunpack.c.l.b16 %v6400
    %v7115 = vunpack.c.h.b16 %v6400
    %v7116 = vunpack.c.l.b16 %v6401
    %v7117 = vunpack.c.h.b16 %v6401
    %v7118 = vunpack.c.l.b16 %v6402
    %v7119 = vunpack.c.h.b16 %v6402
    %v7120 = vunpack.c.l.b16 %v6403
    %v7121 = vunpack.c.l.b16 %v6404
    %v7122 = vunpack.c.h.b16 %v6404
    %v7123 = vunpack.c.l.b16 %v6405
    %v7124 = vunpack.c.h.b16 %v6405
    %v7125 = vunpack.c.l.b16 %v6406
    %v7126 = vunpack.c.h.b16 %v6406
    %v7127 = vunpack.c.l.b16 %v6407
    %v7128 = vunpack.c.l.b16 %v6408
    %v7129 = vunpack.c.h.b16 %v6408
    %v7130 = vunpack.c.l.b16 %v6409
    %v7131 = vunpack.c.h.b16 %v6409
    %v7132 = vunpack.c.l.b16 %v6410
    %v7133 = vunpack.c.h.b16 %v6410
    %v7134 = vunpack.c.l.b16 %v6411
    %v7135 = vunpack.c.l.b16 %v6412
    %v7136 = vunpack.c.h.b16 %v6412
    %v7137 = vunpack.c.l.b16 %v6413
    %v7138 = vunpack.c.h.b16 %v6413
    %v7139 = vunpack.c.l.b16 %v6414
    %v7140 = vunpack.c.h.b16 %v6414
    %v7141 = vunpack.c.l.b16 %v6415
    %v7142 = vunpack.c.l.b16 %v6416
    %v7143 = vunpack.c.h.b16 %v6416
    %v7144 = vunpack.c.l.b16 %v6417
    %v7145 = vunpack.c.h.b16 %v6417
    %v7146 = vunpack.c.l.b16 %v6418
    %v7147 = vunpack.c.h.b16 %v6418
    %v7148 = vunpack.c.l.b16 %v6419
    %v7149 = vunpack.c.l.b16 %v6420
    %v7150 = vunpack.c.h.b16 %v6420
    %v7151 = vunpack.c.l.b16 %v6421
    %v7152 = vunpack.c.h.b16 %v6421
    %v7153 = vunpack.c.l.b16 %v6422
    %v7154 = vunpack.c.h.b16 %v6422
    %v7155 = vunpack.c.l.b16 %v6423
    %v7156 = vunpack.c.l.b16 %v6424
    %v7157 = vunpack.c.h.b16 %v6424
    %v7158 = vunpack.c.l.b16 %v6425
    %v7159 = vunpack.c.h.b16 %v6425
    %v7160 = vunpack.c.l.b16 %v6426
    %v7161 = vunpack.c.h.b16 %v6426
    %v7162 = vunpack.c.l.b16 %v6427
    %v7163 = vunpack.c.l.b16 %v6428
    %v7164 = vunpack.c.h.b16 %v6428
    %v7165 = vunpack.c.l.b16 %v6429
    %v7166 = vunpack.c.h.b16 %v6429
    %v7167 = vunpack.c.l.b16 %v6430
    %v7168 = vunpack.c.h.b16 %v6430
    %v7169 = vunpack.c.l.b16 %v6431
    %v7170 = vunpack.c.l.b16 %v6432
    %v7171 = vunpack.c.h.b16 %v6432
    %v7172 = vunpack.c.l.b16 %v6433
    %v7173 = vunpack.c.h.b16 %v6433
    %v7174 = vunpack.c.l.b16 %v6434
    %v7175 = vunpack.c.h.b16 %v6434
    %v7176 = vunpack.c.l.b16 %v6435
    %v7177 = vpack.c.b16 %v6736, %v6729
    %v7178 = vpack.c.b16 %v6737, %v6730
    %v7179 = vpack.c.b16 %v6738, %v6731
    %v7180 = vpack.c.b16 %v6739, %v6732
    %v7181 = vpack.c.b16 %v6740, %v6733
    %v7182 = vpack.c.b16 %v6741, %v6734
    %v7183 = vpack.c.b16 %v6742, %v6735
    %v7184 = vpack.c.b16 %v6750, %v6743
    %v7185 = vpack.c.b16 %v6751, %v6744
    %v7186 = vpack.c.b16 %v6752, %v6745
    %v7187 = vpack.c.b16 %v6753, %v6746
    %v7188 = vpack.c.b16 %v6754, %v6747
    %v7189 = vpack.c.b16 %v6755, %v6748
    %v7190 = vpack.c.b16 %v6756, %v6749
    %v7191 = vpack.c.b16 %v6764, %v6757
    %v7192 = vpack.c.b16 %v6765, %v6758
    %v7193 = vpack.c.b16 %v6766, %v6759
    %v7194 = vpack.c.b16 %v6767, %v6760
    %v7195 = vpack.c.b16 %v6768, %v6761
    %v7196 = vpack.c.b16 %v6769, %v6762
    %v7197 = vpack.c.b16 %v6770, %v6763
    %v7198 = vpack.c.b16 %v6778, %v6771
    %v7199 = vpack.c.b16 %v6779, %v6772
    %v7200 = vpack.c.b16 %v6780, %v6773
    %v7201 = vpack.c.b16 %v6781, %v6774
    %v7202 = vpack.c.b16 %v6782, %v6775
    %v7203 = vpack.c.b16 %v6783, %v6776
    %v7204 = vpack.c.b16 %v6784, %v6777
    %v7205 = vpack.c.b16 %v6792, %v6785
    %v7206 = vpack.c.b16 %v6793, %v6786
    %v7207 = vpack.c.b16 %v6794, %v6787
    %v7208 = vpack.c.b16 %v6795, %v6788
    %v7209 = vpack.c.b16 %v6796, %v6789
    %v7210 = vpack.c.b16 %v6797, %v6790
    %v7211 = vpack.c.b16 %v6798, %v6791
    %v7212 = vpack.c.b16 %v6806, %v6799
    %v7213 = vpack.c.b16 %v6807, %v6800
    %v7214 = vpack.c.b16 %v6808, %v6801
    %v7215 = vpack.c.b16 %v6809, %v6802
    %v7216 = vpack.c.b16 %v6810, %v6803
    %v7217 = vpack.c.b16 %v6811, %v6804
    %v7218 = vpack.c.b16 %v6812, %v6805
    %v7219 = vpack.c.b16 %v6820, %v6813
    %v7220 = vpack.c.b16 %v6821, %v6814
    %v7221 = vpack.c.b16 %v6822, %v6815
    %v7222 = vpack.c.b16 %v6823, %v6816
    %v7223 = vpack.c.b16 %v6824, %v6817
    %v7224 = vpack.c.b16 %v6825, %v6818
    %v7225 = vpack.c.b16 %v6826, %v6819
    %v7226 = vpack.c.b16 %v6834, %v6827
    %v7227 = vpack.c.b16 %v6835, %v6828
    %v7228 = vpack.c.b16 %v6836, %v6829
    %v7229 = vpack.c.b16 %v6837, %v6830
    %v7230 = vpack.c.b16 %v6838, %v6831
    %v7231 = vpack.c.b16 %v6839, %v6832
    %v7232 = vpack.c.b16 %v6840, %v6833
    %v7233 = vpack.c.b16 %v6848, %v6841
    %v7234 = vpack.c.b16 %v6849, %v6842
    %v7235 = vpack.c.b16 %v6850, %v6843
    %v7236 = vpack.c.b16 %v6851, %v6844
    %v7237 = vpack.c.b16 %v6852, %v6845
    %v7238 = vpack.c.b16 %v6853, %v6846
    %v7239 = vpack.c.b16 %v6854, %v6847
    %v7240 = vpack.c.b16 %v6862, %v6855
    %v7241 = vpack.c.b16 %v6863, %v6856
    %v7242 = vpack.c.b16 %v6864, %v6857
    %v7243 = vpack.c.b16 %v6865, %v6858
    %v7244 = vpack.c.b16 %v6866, %v6859
    %v7245 = vpack.c.b16 %v6867, %v6860
    %v7246 = vpack.c.b16 %v6868, %v6861
    %v7247 = vpack.c.b16 %v6876, %v6869
    %v7248 = vpack.c.b16 %v6877, %v6870
    %v7249 = vpack.c.b16 %v6878, %v6871
    %v7250 = vpack.c.b16 %v6879, %v6872
    %v7251 = vpack.c.b16 %v6880, %v6873
    %v7252 = vpack.c.b16 %v6881, %v6874
    %v7253 = vpack.c.b16 %v6882, %v6875
    %v7254 = vpack.c.b16 %v6890, %v6883
    %v7255 = vpack.c.b16 %v6891, %v6884
    %v7256 = vpack.c.b16 %v6892, %v6885
    %v7257 = vpack.c.b16 %v6893, %v6886
    %v7258 = vpack.c.b16 %v6894, %v6887
    %v7259 = vpack.c.b16 %v6895, %v6888
    %v7260 = vpack.c.b16 %v6896, %v6889
    %v7261 = vpack.c.b16 %v6904, %v6897
    %v7262 = vpack.c.b16 %v6905, %v6898
    %v7263 = vpack.c.b16 %v6906, %v6899
    %v7264 = vpack.c.b16 %v6907, %v6900
    %v7265 = vpack.c.b16 %v6908, %v6901
    %v7266 = vpack.c.b16 %v6909, %v6902
    %v7267 = vpack.c.b16 %v6910, %v6903
    %v7268 = vpack.c.b16 %v6918, %v6911
    %v7269 = vpack.c.b16 %v6919, %v6912
    %v7270 = vpack.c.b16 %v6920, %v6913
    %v7271 = vpack.c.b16 %v6921, %v6914
    %v7272 = vpack.c.b16 %v6922, %v6915
    %v7273 = vpack.c.b16 %v6923, %v6916
    %v7274 = vpack.c.b16 %v6924, %v6917
    %v7275 = vpack.c.b16 %v6932, %v6925
    %v7276 = vpack.c.b16 %v6933, %v6926
    %v7277 = vpack.c.b16 %v6934, %v6927
    %v7278 = vpack.c.b16 %v6935, %v6928
    %v7279 = vpack.c.b16 %v6936, %v6929
    %v7280 = vpack.c.b16 %v6937, %v6930
    %v7281 = vpack.c.b16 %v6938, %v6931
    %v7282 = vpack.c.b16 %v6946, %v6939
    %v7283 = vpack.c.b16 %v6947, %v6940
    %v7284 = vpack.c.b16 %v6948, %v6941
    %v7285 = vpack.c.b16 %v6949, %v6942
    %v7286 = vpack.c.b16 %v6950, %v6943
    %v7287 = vpack.c.b16 %v6951, %v6944
    %v7288 = vpack.c.b16 %v6952, %v6945
    %v7289 = vpack.c.b16 %v6960, %v6953
    %v7290 = vpack.c.b16 %v6961, %v6954
    %v7291 = vpack.c.b16 %v6962, %v6955
    %v7292 = vpack.c.b16 %v6963, %v6956
    %v7293 = vpack.c.b16 %v6964, %v6957
    %v7294 = vpack.c.b16 %v6965, %v6958
    %v7295 = vpack.c.b16 %v6966, %v6959
    %v7296 = vpack.c.b16 %v6974, %v6967
    %v7297 = vpack.c.b16 %v6975, %v6968
    %v7298 = vpack.c.b16 %v6976, %v6969
    %v7299 = vpack.c.b16 %v6977, %v6970
    %v7300 = vpack.c.b16 %v6978, %v6971
    %v7301 = vpack.c.b16 %v6979, %v6972
    %v7302 = vpack.c.b16 %v6980, %v6973
    %v7303 = vpack.c.b16 %v6988, %v6981
    %v7304 = vpack.c.b16 %v6989, %v6982
    %v7305 = vpack.c.b16 %v6990, %v6983
    %v7306 = vpack.c.b16 %v6991, %v6984
    %v7307 = vpack.c.b16 %v6992, %v6985
    %v7308 = vpack.c.b16 %v6993, %v6986
    %v7309 = vpack.c.b16 %v6994, %v6987
    %v7310 = vpack.c.b16 %v7002, %v6995
    %v7311 = vpack.c.b16 %v7003, %v6996
    %v7312 = vpack.c.b16 %v7004, %v6997
    %v7313 = vpack.c.b16 %v7005, %v6998
    %v7314 = vpack.c.b16 %v7006, %v6999
    %v7315 = vpack.c.b16 %v7007, %v7000
    %v7316 = vpack.c.b16 %v7008, %v7001
    %v7317 = vpack.c.b16 %v7016, %v7009
    %v7318 = vpack.c.b16 %v7017, %v7010
    %v7319 = vpack.c.b16 %v7018, %v7011
    %v7320 = vpack.c.b16 %v7019, %v7012
    %v7321 = vpack.c.b16 %v7020, %v7013
    %v7322 = vpack.c.b16 %v7021, %v7014
    %v7323 = vpack.c.b16 %v7022, %v7015
    %v7324 = vpack.c.b16 %v7030, %v7023
    %v7325 = vpack.c.b16 %v7031, %v7024
    %v7326 = vpack.c.b16 %v7032, %v7025
    %v7327 = vpack.c.b16 %v7033, %v7026
    %v7328 = vpack.c.b16 %v7034, %v7027
    %v7329 = vpack.c.b16 %v7035, %v7028
    %v7330 = vpack.c.b16 %v7036, %v7029
    %v7331 = vpack.c.b16 %v7044, %v7037
    %v7332 = vpack.c.b16 %v7045, %v7038
    %v7333 = vpack.c.b16 %v7046, %v7039
    %v7334 = vpack.c.b16 %v7047, %v7040
    %v7335 = vpack.c.b16 %v7048, %v7041
    %v7336 = vpack.c.b16 %v7049, %v7042
    %v7337 = vpack.c.b16 %v7050, %v7043
    %v7338 = vpack.c.b16 %v7058, %v7051
    %v7339 = vpack.c.b16 %v7059, %v7052
    %v7340 = vpack.c.b16 %v7060, %v7053
    %v7341 = vpack.c.b16 %v7061, %v7054
    %v7342 = vpack.c.b16 %v7062, %v7055
    %v7343 = vpack.c.b16 %v7063, %v7056
    %v7344 = vpack.c.b16 %v7064, %v7057
    %v7345 = vpack.c.b16 %v7072, %v7065
    %v7346 = vpack.c.b16 %v7073, %v7066
    %v7347 = vpack.c.b16 %v7074, %v7067
    %v7348 = vpack.c.b16 %v7075, %v7068
    %v7349 = vpack.c.b16 %v7076, %v7069
    %v7350 = vpack.c.b16 %v7077, %v7070
    %v7351 = vpack.c.b16 %v7078, %v7071
    %v7352 = vpack.c.b16 %v7086, %v7079
    %v7353 = vpack.c.b16 %v7087, %v7080
    %v7354 = vpack.c.b16 %v7088, %v7081
    %v7355 = vpack.c.b16 %v7089, %v7082
    %v7356 = vpack.c.b16 %v7090, %v7083
    %v7357 = vpack.c.b16 %v7091, %v7084
    %v7358 = vpack.c.b16 %v7092, %v7085
    %v7359 = vpack.c.b16 %v7100, %v7093
    %v7360 = vpack.c.b16 %v7101, %v7094
    %v7361 = vpack.c.b16 %v7102, %v7095
    %v7362 = vpack.c.b16 %v7103, %v7096
    %v7363 = vpack.c.b16 %v7104, %v7097
    %v7364 = vpack.c.b16 %v7105, %v7098
    %v7365 = vpack.c.b16 %v7106, %v7099
    %v7366 = vpack.c.b16 %v7114, %v7107
    %v7367 = vpack.c.b16 %v7115, %v7108
    %v7368 = vpack.c.b16 %v7116, %v7109
    %v7369 = vpack.c.b16 %v7117, %v7110
    %v7370 = vpack.c.b16 %v7118, %v7111
    %v7371 = vpack.c.b16 %v7119, %v7112
    %v7372 = vpack.c.b16 %v7120, %v7113
    %v7373 = vpack.c.b16 %v7128, %v7121
    %v7374 = vpack.c.b16 %v7129, %v7122
    %v7375 = vpack.c.b16 %v7130, %v7123
    %v7376 = vpack.c.b16 %v7131, %v7124
    %v7377 = vpack.c.b16 %v7132, %v7125
    %v7378 = vpack.c.b16 %v7133, %v7126
    %v7379 = vpack.c.b16 %v7134, %v7127
    %v7380 = vpack.c.b16 %v7142, %v7135
    %v7381 = vpack.c.b16 %v7143, %v7136
    %v7382 = vpack.c.b16 %v7144, %v7137
    %v7383 = vpack.c.b16 %v7145, %v7138
    %v7384 = vpack.c.b16 %v7146, %v7139
    %v7385 = vpack.c.b16 %v7147, %v7140
    %v7386 = vpack.c.b16 %v7148, %v7141
    %v7387 = vpack.c.b16 %v7156, %v7149
    %v7388 = vpack.c.b16 %v7157, %v7150
    %v7389 = vpack.c.b16 %v7158, %v7151
    %v7390 = vpack.c.b16 %v7159, %v7152
    %v7391 = vpack.c.b16 %v7160, %v7153
    %v7392 = vpack.c.b16 %v7161, %v7154
    %v7393 = vpack.c.b16 %v7162, %v7155
    %v7394 = vpack.c.b16 %v7170, %v7163
    %v7395 = vpack.c.b16 %v7171, %v7164
    %v7396 = vpack.c.b16 %v7172, %v7165
    %v7397 = vpack.c.b16 %v7173, %v7166
    %v7398 = vpack.c.b16 %v7174, %v7167
    %v7399 = vpack.c.b16 %v7175, %v7168
    %v7400 = vpack.c.b16 %v7176, %v7169
    %7625 = vmatprep.subr.bf16.mxu0 %v7178
    %7626 = vmatpush1.bf16.msra.mxu0 %v7177
    %7627 = vmatprep.subr.bf16.mxu0 %v7185
    %7628 = vmatpush1.bf16.msra.mxu0 %v7184
    %7629 = vmatprep.subr.bf16.mxu0 %v7192
    %7630 = vmatpush1.bf16.msra.mxu0 %v7191
    %7631 = vmatprep.subr.bf16.mxu0 %v7199
    %7632 = vmatpush1.bf16.msra.mxu0 %v7198
    %7633 = vmatprep.subr.bf16.mxu0 %v7206
    %7634 = vmatpush1.bf16.msra.mxu0 %v7205
    %7635 = vmatprep.subr.bf16.mxu0 %v7213
    %7636 = vmatpush1.bf16.msra.mxu0 %v7212
    %7637 = vmatprep.subr.bf16.mxu0 %v7220
    %7638 = vmatpush1.bf16.msra.mxu0 %v7219
    %7639 = vmatprep.subr.bf16.mxu0 %v7227
    %7640 = vmatpush1.bf16.msra.mxu0 %v7226
    %7641 = vmatprep.subr.bf16.mxu0 %v7234
    %7642 = vmatpush1.bf16.msra.mxu0 %v7233
    %7643 = vmatprep.subr.bf16.mxu0 %v7241
    %7644 = vmatpush1.bf16.msra.mxu0 %v7240
    %7645 = vmatprep.subr.bf16.mxu0 %v7248
    %7646 = vmatpush1.bf16.msra.mxu0 %v7247
    %7647 = vmatprep.subr.bf16.mxu0 %v7255
    %7648 = vmatpush1.bf16.msra.mxu0 %v7254
    %7649 = vmatprep.subr.bf16.mxu0 %v7262
    %7650 = vmatpush1.bf16.msra.mxu0 %v7261
    %7651 = vmatprep.subr.bf16.mxu0 %v7269
    %7652 = vmatpush1.bf16.msra.mxu0 %v7268
    %7653 = vmatprep.subr.bf16.mxu0 %v7276
    %7654 = vmatpush1.bf16.msra.mxu0 %v7275
    %7655 = vmatprep.subr.bf16.mxu0 %v7283
    %7656 = vmatpush1.bf16.msra.mxu0 %v7282
    %7657 = vmatprep.mubr.bf16.mxu0 %v6177
    %7658 = vmatmul.mubr.bf16.gmra.mrb[0].mxu0 %v6176
    %v7659 = vpop.f32.mrb[0].mxu0
    %v7660 = vadd.f32 %v6441, %v7659
    %v7661 = vpop.f32.mrb[0].mxu0
    %v7662 = vadd.f32 %v6445, %v7661
    %v7663 = vpop.f32.mrb[0].mxu0
    %v7664 = vpop.f32.mrb[0].mxu0
    %7665 = vdwg.mxu0
    %7666 = vmatprep.subr.bf16.mxu0 %v7290
    %7667 = vmatpush1.bf16.msra.mxu0 %v7289
    %7668 = vmatprep.subr.bf16.mxu0 %v7297
    %7669 = vmatpush1.bf16.msra.mxu0 %v7296
    %7670 = vmatprep.subr.bf16.mxu0 %v7304
    %7671 = vmatpush1.bf16.msra.mxu0 %v7303
    %7672 = vmatprep.subr.bf16.mxu0 %v7311
    %7673 = vmatpush1.bf16.msra.mxu0 %v7310
    %7674 = vmatprep.subr.bf16.mxu0 %v7318
    %7675 = vmatpush1.bf16.msra.mxu0 %v7317
    %7676 = vmatprep.subr.bf16.mxu0 %v7325
    %7677 = vmatpush1.bf16.msra.mxu0 %v7324
    %7678 = vmatprep.subr.bf16.mxu0 %v7332
    %7679 = vmatpush1.bf16.msra.mxu0 %v7331
    %7680 = vmatprep.subr.bf16.mxu0 %v7339
    %7681 = vmatpush1.bf16.msra.mxu0 %v7338
    %7682 = vmatprep.subr.bf16.mxu0 %v7346
    %7683 = vmatpush1.bf16.msra.mxu0 %v7345
    %7684 = vmatprep.subr.bf16.mxu0 %v7353
    %7685 = vmatpush1.bf16.msra.mxu0 %v7352
    %7686 = vmatprep.subr.bf16.mxu0 %v7360
    %7687 = vmatpush1.bf16.msra.mxu0 %v7359
    %7688 = vmatprep.subr.bf16.mxu0 %v7367
    %7689 = vmatpush1.bf16.msra.mxu0 %v7366
    %7690 = vmatprep.subr.bf16.mxu0 %v7374
    %7691 = vmatpush1.bf16.msra.mxu0 %v7373
    %7692 = vmatprep.subr.bf16.mxu0 %v7381
    %7693 = vmatpush1.bf16.msra.mxu0 %v7380
    %7694 = vmatprep.subr.bf16.mxu0 %v7388
    %7695 = vmatpush1.bf16.msra.mxu0 %v7387
    %7696 = vmatprep.subr.bf16.mxu0 %v7395
    %7697 = vmatpush1.bf16.msra.mxu0 %v7394
    %7698 = vmatprep.mubr.bf16.mxu0 %v6179
    %7699 = vmatmul.mubr.bf16.gmra.mrb[0].mxu0 %v6178
    %v7700 = vpop.f32.mrb[0].mxu0
    %v7701 = vadd.f32 %v7660, %v7700
    %v7702 = vpop.f32.mrb[0].mxu0
    %v7703 = vadd.f32 %v7662, %v7702
    %v7704 = vpop.f32.mrb[0].mxu0
    %v7705 = vpop.f32.mrb[0].mxu0
    %7706 = vdwg.mxu0
    %7707 = vmatprep.subr.bf16.mxu0 %v7180
    %7708 = vmatpush1.bf16.msra.mxu0 %v7179
    %7709 = vmatprep.subr.bf16.mxu0 %v7187
    %7710 = vmatpush1.bf16.msra.mxu0 %v7186
    %7711 = vmatprep.subr.bf16.mxu0 %v7194
    %7712 = vmatpush1.bf16.msra.mxu0 %v7193
    %7713 = vmatprep.subr.bf16.mxu0 %v7201
    %7714 = vmatpush1.bf16.msra.mxu0 %v7200
    %7715 = vmatprep.subr.bf16.mxu0 %v7208
    %7716 = vmatpush1.bf16.msra.mxu0 %v7207
    %7717 = vmatprep.subr.bf16.mxu0 %v7215
    %7718 = vmatpush1.bf16.msra.mxu0 %v7214
    %7719 = vmatprep.subr.bf16.mxu0 %v7222
    %7720 = vmatpush1.bf16.msra.mxu0 %v7221
    %7721 = vmatprep.subr.bf16.mxu0 %v7229
    %7722 = vmatpush1.bf16.msra.mxu0 %v7228
    %7723 = vmatprep.subr.bf16.mxu0 %v7236
    %7724 = vmatpush1.bf16.msra.mxu0 %v7235
    %7725 = vmatprep.subr.bf16.mxu0 %v7243
    %7726 = vmatpush1.bf16.msra.mxu0 %v7242
    %7727 = vmatprep.subr.bf16.mxu0 %v7250
    %7728 = vmatpush1.bf16.msra.mxu0 %v7249
    %7729 = vmatprep.subr.bf16.mxu0 %v7257
    %7730 = vmatpush1.bf16.msra.mxu0 %v7256
    %7731 = vmatprep.subr.bf16.mxu0 %v7264
    %7732 = vmatpush1.bf16.msra.mxu0 %v7263
    %7733 = vmatprep.subr.bf16.mxu0 %v7271
    %7734 = vmatpush1.bf16.msra.mxu0 %v7270
    %7735 = vmatprep.subr.bf16.mxu0 %v7278
    %7736 = vmatpush1.bf16.msra.mxu0 %v7277
    %7737 = vmatprep.subr.bf16.mxu0 %v7285
    %7738 = vmatpush1.bf16.msra.mxu0 %v7284
    %7739 = vmatprep.mubr.bf16.mxu0 %v6177
    %7740 = vmatmul.mubr.bf16.gmra.mrb[0].mxu0 %v6176
    %v7741 = vpop.f32.mrb[0].mxu0
    %v7742 = vadd.f32 %v6449, %v7741
    %v7743 = vpop.f32.mrb[0].mxu0
    %v7744 = vadd.f32 %v6453, %v7743
    %v7745 = vpop.f32.mrb[0].mxu0
    %v7746 = vpop.f32.mrb[0].mxu0
    %7747 = vdwg.mxu0
    %7748 = vmatprep.subr.bf16.mxu0 %v7292
    %7749 = vmatpush1.bf16.msra.mxu0 %v7291
    %7750 = vmatprep.subr.bf16.mxu0 %v7299
    %7751 = vmatpush1.bf16.msra.mxu0 %v7298
    %7752 = vmatprep.subr.bf16.mxu0 %v7306
    %7753 = vmatpush1.bf16.msra.mxu0 %v7305
    %7754 = vmatprep.subr.bf16.mxu0 %v7313
    %7755 = vmatpush1.bf16.msra.mxu0 %v7312
    %7756 = vmatprep.subr.bf16.mxu0 %v7320
    %7757 = vmatpush1.bf16.msra.mxu0 %v7319
    %7758 = vmatprep.subr.bf16.mxu0 %v7327
    %7759 = vmatpush1.bf16.msra.mxu0 %v7326
    %7760 = vmatprep.subr.bf16.mxu0 %v7334
    %7761 = vmatpush1.bf16.msra.mxu0 %v7333
    %7762 = vmatprep.subr.bf16.mxu0 %v7341
    %7763 = vmatpush1.bf16.msra.mxu0 %v7340
    %7764 = vmatprep.subr.bf16.mxu0 %v7348
    %7765 = vmatpush1.bf16.msra.mxu0 %v7347
    %7766 = vmatprep.subr.bf16.mxu0 %v7355
    %7767 = vmatpush1.bf16.msra.mxu0 %v7354
    %7768 = vmatprep.subr.bf16.mxu0 %v7362
    %7769 = vmatpush1.bf16.msra.mxu0 %v7361
    %7770 = vmatprep.subr.bf16.mxu0 %v7369
    %7771 = vmatpush1.bf16.msra.mxu0 %v7368
    %7772 = vmatprep.subr.bf16.mxu0 %v7376
    %7773 = vmatpush1.bf16.msra.mxu0 %v7375
    %7774 = vmatprep.subr.bf16.mxu0 %v7383
    %7775 = vmatpush1.bf16.msra.mxu0 %v7382
    %7776 = vmatprep.subr.bf16.mxu0 %v7390
    %7777 = vmatpush1.bf16.msra.mxu0 %v7389
    %7778 = vmatprep.subr.bf16.mxu0 %v7397
    %7779 = vmatpush1.bf16.msra.mxu0 %v7396
    %7780 = vmatprep.mubr.bf16.mxu0 %v6179
    %7781 = vmatmul.mubr.bf16.gmra.mrb[0].mxu0 %v6178
    %v7782 = vpop.f32.mrb[0].mxu0
    %v7783 = vadd.f32 %v7742, %v7782
    %v7784 = vpop.f32.mrb[0].mxu0
    %v7785 = vadd.f32 %v7744, %v7784
    %v7786 = vpop.f32.mrb[0].mxu0
    %v7787 = vpop.f32.mrb[0].mxu0
    %7788 = vdwg.mxu0
    %7789 = vmatprep.subr.bf16.mxu0 %v7182
    %7790 = vmatpush1.bf16.msra.mxu0 %v7181
    %7791 = vmatprep.subr.bf16.mxu0 %v7189
    %7792 = vmatpush1.bf16.msra.mxu0 %v7188
    %7793 = vmatprep.subr.bf16.mxu0 %v7196
    %7794 = vmatpush1.bf16.msra.mxu0 %v7195
    %7795 = vmatprep.subr.bf16.mxu0 %v7203
    %7796 = vmatpush1.bf16.msra.mxu0 %v7202
    %7797 = vmatprep.subr.bf16.mxu0 %v7210
    %7798 = vmatpush1.bf16.msra.mxu0 %v7209
    %7799 = vmatprep.subr.bf16.mxu0 %v7217
    %7800 = vmatpush1.bf16.msra.mxu0 %v7216
    %7801 = vmatprep.subr.bf16.mxu0 %v7224
    %7802 = vmatpush1.bf16.msra.mxu0 %v7223
    %7803 = vmatprep.subr.bf16.mxu0 %v7231
    %7804 = vmatpush1.bf16.msra.mxu0 %v7230
    %7805 = vmatprep.subr.bf16.mxu0 %v7238
    %7806 = vmatpush1.bf16.msra.mxu0 %v7237
    %7807 = vmatprep.subr.bf16.mxu0 %v7245
    %7808 = vmatpush1.bf16.msra.mxu0 %v7244
    %7809 = vmatprep.subr.bf16.mxu0 %v7252
    %7810 = vmatpush1.bf16.msra.mxu0 %v7251
    %7811 = vmatprep.subr.bf16.mxu0 %v7259
    %7812 = vmatpush1.bf16.msra.mxu0 %v7258
    %7813 = vmatprep.subr.bf16.mxu0 %v7266
    %7814 = vmatpush1.bf16.msra.mxu0 %v7265
    %7815 = vmatprep.subr.bf16.mxu0 %v7273
    %7816 = vmatpush1.bf16.msra.mxu0 %v7272
    %7817 = vmatprep.subr.bf16.mxu0 %v7280
    %7818 = vmatpush1.bf16.msra.mxu0 %v7279
    %7819 = vmatprep.subr.bf16.mxu0 %v7287
    %7820 = vmatpush1.bf16.msra.mxu0 %v7286
    %7821 = vmatprep.mubr.bf16.mxu0 %v6177
    %7822 = vmatmul.mubr.bf16.gmra.mrb[0].mxu0 %v6176
    %v7823 = vpop.f32.mrb[0].mxu0
    %v7824 = vadd.f32 %v6457, %v7823
    %v7825 = vpop.f32.mrb[0].mxu0
    %v7826 = vadd.f32 %v6461, %v7825
    %v7827 = vpop.f32.mrb[0].mxu0
    %v7828 = vpop.f32.mrb[0].mxu0
    %7829 = vdwg.mxu0
    %7830 = vmatprep.subr.bf16.mxu0 %v7294
    %7831 = vmatpush1.bf16.msra.mxu0 %v7293
    %7832 = vmatprep.subr.bf16.mxu0 %v7301
    %7833 = vmatpush1.bf16.msra.mxu0 %v7300
    %7834 = vmatprep.subr.bf16.mxu0 %v7308
    %7835 = vmatpush1.bf16.msra.mxu0 %v7307
    %7836 = vmatprep.subr.bf16.mxu0 %v7315
    %7837 = vmatpush1.bf16.msra.mxu0 %v7314
    %7838 = vmatprep.subr.bf16.mxu0 %v7322
    %7839 = vmatpush1.bf16.msra.mxu0 %v7321
    %7840 = vmatprep.subr.bf16.mxu0 %v7329
    %7841 = vmatpush1.bf16.msra.mxu0 %v7328
    %7842 = vmatprep.subr.bf16.mxu0 %v7336
    %7843 = vmatpush1.bf16.msra.mxu0 %v7335
    %7844 = vmatprep.subr.bf16.mxu0 %v7343
    %7845 = vmatpush1.bf16.msra.mxu0 %v7342
    %7846 = vmatprep.subr.bf16.mxu0 %v7350
    %7847 = vmatpush1.bf16.msra.mxu0 %v7349
    %7848 = vmatprep.subr.bf16.mxu0 %v7357
    %7849 = vmatpush1.bf16.msra.mxu0 %v7356
    %7850 = vmatprep.subr.bf16.mxu0 %v7364
    %7851 = vmatpush1.bf16.msra.mxu0 %v7363
    %7852 = vmatprep.subr.bf16.mxu0 %v7371
    %7853 = vmatpush1.bf16.msra.mxu0 %v7370
    %7854 = vmatprep.subr.bf16.mxu0 %v7378
    %7855 = vmatpush1.bf16.msra.mxu0 %v7377
    %7856 = vmatprep.subr.bf16.mxu0 %v7385
    %7857 = vmatpush1.bf16.msra.mxu0 %v7384
    %7858 = vmatprep.subr.bf16.mxu0 %v7392
    %7859 = vmatpush1.bf16.msra.mxu0 %v7391
    %7860 = vmatprep.subr.bf16.mxu0 %v7399
    %7861 = vmatpush1.bf16.msra.mxu0 %v7398
    %7862 = vmatprep.mubr.bf16.mxu0 %v6179
    %7863 = vmatmul.mubr.bf16.gmra.mrb[0].mxu0 %v6178
    %v7864 = vpop.f32.mrb[0].mxu0
    %v7865 = vadd.f32 %v7824, %v7864
    %v7866 = vpop.f32.mrb[0].mxu0
    %v7867 = vadd.f32 %v7826, %v7866
    %v7868 = vpop.f32.mrb[0].mxu0
    %v7869 = vpop.f32.mrb[0].mxu0
    %7870 = vdwg.mxu0
    %7871 = vmatprep.subr.bf16.mxu0 0
    %7872 = vmatpush1.bf16.msra.mxu0 %v7183
    %7873 = vmatprep.subr.bf16.mxu0 0
    %7874 = vmatpush1.bf16.msra.mxu0 %v7190
    %7875 = vmatprep.subr.bf16.mxu0 0
    %7876 = vmatpush1.bf16.msra.mxu0 %v7197
    %7877 = vmatprep.subr.bf16.mxu0 0
    %7878 = vmatpush1.bf16.msra.mxu0 %v7204
    %7879 = vmatprep.subr.bf16.mxu0 0
    %7880 = vmatpush1.bf16.msra.mxu0 %v7211
    %7881 = vmatprep.subr.bf16.mxu0 0
    %7882 = vmatpush1.bf16.msra.mxu0 %v7218
    %7883 = vmatprep.subr.bf16.mxu0 0
    %7884 = vmatpush1.bf16.msra.mxu0 %v7225
    %7885 = vmatprep.subr.bf16.mxu0 0
    %7886 = vmatpush1.bf16.msra.mxu0 %v7232
    %7887 = vmatprep.subr.bf16.mxu0 0
    %7888 = vmatpush1.bf16.msra.mxu0 %v7239
    %7889 = vmatprep.subr.bf16.mxu0 0
    %7890 = vmatpush1.bf16.msra.mxu0 %v7246
    %7891 = vmatprep.subr.bf16.mxu0 0
    %7892 = vmatpush1.bf16.msra.mxu0 %v7253
    %7893 = vmatprep.subr.bf16.mxu0 0
    %7894 = vmatpush1.bf16.msra.mxu0 %v7260
    %7895 = vmatprep.subr.bf16.mxu0 0
    %7896 = vmatpush1.bf16.msra.mxu0 %v7267
    %7897 = vmatprep.subr.bf16.mxu0 0
    %7898 = vmatpush1.bf16.msra.mxu0 %v7274
    %7899 = vmatprep.subr.bf16.mxu0 0
    %7900 = vmatpush1.bf16.msra.mxu0 %v7281
    %7901 = vmatprep.subr.bf16.mxu0 0
    %7902 = vmatpush1.bf16.msra.mxu0 %v7288
    %7903 = vmatprep.mubr.bf16.mxu0 %v6177
    %7904 = vmatmul.mubr.bf16.gmra.mrb[0].mxu0 %v6176
    %v7905 = vpop.f32.mrb[0].mxu0
    %v7906 = vadd.f32 %v6465, %v7905
    %v7907 = vpop.f32.mrb[0].mxu0
    %v7908 = vpop.f32.mrb[0].mxu0
    %v7909 = vpop.f32.mrb[0].mxu0
    %7910 = vdwg.mxu0
    %7911 = vmatprep.subr.bf16.mxu0 0
    %7912 = vmatpush1.bf16.msra.mxu0 %v7295
    %7913 = vmatprep.subr.bf16.mxu0 0
    %7914 = vmatpush1.bf16.msra.mxu0 %v7302
    %7915 = vmatprep.subr.bf16.mxu0 0
    %7916 = vmatpush1.bf16.msra.mxu0 %v7309
    %7917 = vmatprep.subr.bf16.mxu0 0
    %7918 = vmatpush1.bf16.msra.mxu0 %v7316
    %7919 = vmatprep.subr.bf16.mxu0 0
    %7920 = vmatpush1.bf16.msra.mxu0 %v7323
    %7921 = vmatprep.subr.bf16.mxu0 0
    %7922 = vmatpush1.bf16.msra.mxu0 %v7330
    %7923 = vmatprep.subr.bf16.mxu0 0
    %7924 = vmatpush1.bf16.msra.mxu0 %v7337
    %7925 = vmatprep.subr.bf16.mxu0 0
    %7926 = vmatpush1.bf16.msra.mxu0 %v7344
    %7927 = vmatprep.subr.bf16.mxu0 0
    %7928 = vmatpush1.bf16.msra.mxu0 %v7351
    %7929 = vmatprep.subr.bf16.mxu0 0
    %7930 = vmatpush1.bf16.msra.mxu0 %v7358
    %7931 = vmatprep.subr.bf16.mxu0 0
    %7932 = vmatpush1.bf16.msra.mxu0 %v7365
    %7933 = vmatprep.subr.bf16.mxu0 0
    %7934 = vmatpush1.bf16.msra.mxu0 %v7372
    %7935 = vmatprep.subr.bf16.mxu0 0
    %7936 = vmatpush1.bf16.msra.mxu0 %v7379
    %7937 = vmatprep.subr.bf16.mxu0 0
    %7938 = vmatpush1.bf16.msra.mxu0 %v7386
    %7939 = vmatprep.subr.bf16.mxu0 0
    %7940 = vmatpush1.bf16.msra.mxu0 %v7393
    %7941 = vmatprep.subr.bf16.mxu0 0
    %7942 = vmatpush1.bf16.msra.mxu0 %v7400
    %7943 = vmatprep.mubr.bf16.mxu0 %v6179
    %7944 = vmatmul.mubr.bf16.gmra.mrb[0].mxu0 %v6178
    %v7945 = vpop.f32.mrb[0].mxu0
    %v7946 = vadd.f32 %v7906, %v7945
    %v7947 = vpop.f32.mrb[0].mxu0
    %v7948 = vpop.f32.mrb[0].mxu0
    %v7949 = vpop.f32.mrb[0].mxu0
    %7950 = vdwg.mxu0
    %v7951 = vxor.u32 %v7701, 2147483648
    %v7952 = vxor.u32 %v7703, 2147483648
    %v7953 = vxor.u32 %v7783, 2147483648
    %v7954 = vxor.u32 %v7785, 2147483648
    %v7955 = vxor.u32 %v7865, 2147483648
    %v7956 = vxor.u32 %v7867, 2147483648
    %v7957 = vxor.u32 %v7946, 2147483648
    %v7958 = vmul.f32 %v7951, 1.442695
    %v7959 = vpow.pop %v7958
    %v7960 = vmul.f32 %v7952, 1.442695
    %v7961 = vpow.pop %v7960
    %v7962 = vmul.f32 %v7953, 1.442695
    %v7963 = vpow.pop %v7962
    %v7964 = vmul.f32 %v7954, 1.442695
    %v7965 = vpow.pop %v7964
    %v7966 = vmul.f32 %v7955, 1.442695
    %v7967 = vpow.pop %v7966
    %v7968 = vmul.f32 %v7956, 1.442695
    %v7969 = vpow.pop %v7968
    %v7970 = vmul.f32 %v7957, 1.442695
    %v7971 = vpow.pop %v7970
    %v7972 = vadd.f32 %v7959, 1.0
    %v7973 = vadd.f32 %v7961, 1.0
    %v7974 = vadd.f32 %v7963, 1.0
    %v7975 = vadd.f32 %v7965, 1.0
    %v7976 = vadd.f32 %v7967, 1.0
    %v7977 = vadd.f32 %v7969, 1.0
    %v7978 = vadd.f32 %v7971, 1.0
    %v7979 = vrcp.pop %v7972
    %v7980 = vmul.f32 1.0, %v7979
    %v7981 = vrcp.pop %v7973
    %v7982 = vmul.f32 1.0, %v7981
    %v7983 = vrcp.pop %v7974
    %v7984 = vmul.f32 1.0, %v7983
    %v7985 = vrcp.pop %v7975
    %v7986 = vmul.f32 1.0, %v7985
    %v7987 = vrcp.pop %v7976
    %v7988 = vmul.f32 1.0, %v7987
    %v7989 = vrcp.pop %v7977
    %v7990 = vmul.f32 1.0, %v7989
    %v7991 = vrcp.pop %v7978
    %v7992 = vmul.f32 1.0, %v7991
    %v7993 = vpack.c.bf16 %v7980, %v7980
    %v7994 = vpack.c.bf16 %v7982, %v7982
    %v7995 = vpack.c.bf16 %v7984, %v7984
    %v7996 = vpack.c.bf16 %v7986, %v7986
    %v7997 = vpack.c.bf16 %v7988, %v7988
    %v7998 = vpack.c.bf16 %v7990, %v7990
    %v7999 = vpack.c.bf16 %v7992, %v7992
    %v8007 = vunpack.c.l.b16 %v7993
    %v8008 = vunpack.c.l.b16 %v7994
    %v8009 = vunpack.c.l.b16 %v7995
    %v8010 = vunpack.c.l.b16 %v7996
    %v8011 = vunpack.c.l.b16 %v7997
    %v8012 = vunpack.c.l.b16 %v7998
    %v8013 = vunpack.c.l.b16 %v7999
    %v8014 = vpack.c.b16 %v8008, %v8007
    %v8015 = vpack.c.b16 %v8010, %v8009
    %v8016 = vpack.c.b16 %v8012, %v8011
    %v8017 = vpack.c.b16 %v8013, %v8013
    %8022 = vst [vmem:[#allocation8] sm:$0xff] %v8014
    %8023 = vst [vmem:[#allocation8 + $0x8] sm:$0xff] %v8015
    %8024 = vst [vmem:[#allocation8 + $0x10] sm:$0xff] %v8016
    %vm8025 = vcmask 125952
    %8026 = vst.msk [vmem:[#allocation8 + $0x18] sm:$0xf] %vm8025, %v8017
    // Predicated region
    $region86: #{tpu_custom_call.1} parent=1 // pred_check
      _
    $region87: #{tpu_custom_call.1} parent=1 // pred_check_branch
      %8028 = sbr.rel (0) target = $region89
    $region88: #{tpu_custom_call.1} parent=1 // pred_region
      %s8030 = ssub.s32 448, 448
      %8031 = vsyncadd [#allocation4], %s8030
      %s8033 = sshll.u32 [#allocation8], 4
      %s8034 = int_to_ptr.vmem [resolvable:$true] %s8033
      %8036 = dma.vmem_to_hbm [thread:$0]  %s8034, 448, %s18, [#allocation4]
    $region89: #{tpu_custom_call.1} parent=1 // pred_fallthru
      _
    // Predicated region
    $region90: #{tpu_custom_call.1} parent=1 // pred_check
      _
    $region91: #{tpu_custom_call.1} parent=1 // pred_check_branch
      %8038 = sbr.rel (0) target = $region93
    $region92: #{tpu_custom_call.1} parent=1 // pred_region
      %s8040 = ssub.s32 128, 128
      %8041 = vsyncadd [#allocation10], %s8040
      %s8043 = sshll.u32 [#allocation9], 4
      %s8044 = int_to_ptr.vmem [resolvable:$true] %s8043
      %8046 = dma.vmem_to_hbm [thread:$0]  %s8044, 128, %s19, [#allocation10]
    $region93: #{tpu_custom_call.1} parent=1 // pred_fallthru
      _
    // Predicated region
    $region94: #{tpu_custom_call.1} parent=1 // pred_check
      _
    $region95: #{tpu_custom_call.1} parent=1 // pred_check_branch
      %8048 = sbr.rel (0) target = $region97
    $region96: #{tpu_custom_call.1} parent=1 // pred_region
      %8049 = dma.done [#allocation4], 448
    $region97: #{tpu_custom_call.1} parent=1 // pred_fallthru
      _
    // Predicated region
    $region98: #{tpu_custom_call.1} parent=1 // pred_check
      _
    $region99: #{tpu_custom_call.1} parent=1 // pred_check_branch
      %8051 = sbr.rel (0) target = $region101
    $region100: #{tpu_custom_call.1} parent=1 // pred_region
      %8052 = dma.done [#allocation10], 128
    $region101: #{tpu_custom_call.1} parent=1 // pred_fallthru
      _
    %8053 = vsyncpa [#allocation3], 1
    %8054 = vsyncpa [#allocation6], 1
    %8055 = vsyncpa [#allocation4], 1
    %8056 = vsyncpa [#allocation10], 1

</llo_original>
